<compile_context>
chip_gen: v7x
topology: tpu7x:2x2x1
jax: 0.10.0
libtpu: 0.0.40
codegen_flags: <defaults>
</compile_context>

<pallas_src>
import functools
import numpy as np
import jax
import jax.numpy as jnp
from jax.experimental import pallas as pl
from jax.experimental.pallas import tpu as pltpu

N_WAY = 5          # kept for parity with MetaTemplate.__init__ (unused by forward)
N_SUPPORT = 5
N_QUERY = 16
HIDDEN = 32        # Conv4 backbone width (64 in the original paper, shrunk for demo)
NUM_BLOCKS = 4
BN_EPS = 1e-5


# ----------------------------- Pallas kernel ------------------------------- #

def _conv4_fused_kernel(x_ref, w_ref, scale_ref, shift_ref, o_ref, *scratch,
                        H, W, n_layers, C):
    """Entire Conv4 backbone for ONE image, fully fused in VMEM.

    x_ref:     (H*W, C) bf16          input image, rows = (h, w) flattened,
                                      channels zero-padded to C
    w_ref:     (L, 9*C, C) bf16       per-layer weights, tap-major im2col layout
    scale_ref: (L, 1, C) f32          gamma / sqrt(var + eps)
    shift_ref: (L, 1, C) f32          beta + scale * (conv_bias - mean)
    o_ref:     (ho_f*wo_f, C)         final pooled feature map (f32)
    scratch:   n_layers zero-padded activation buffers (bf16), then
               im2col slab (bf16), post-BN/ReLU slab (f32), h-pooled slab (f32)
    """
    pads = scratch[:n_layers]
    col_ref, act_ref, hm_ref = scratch[n_layers:]

    # Zero every padded-activation scratch each grid step: the 1-px border (and
    # the 2 overrun rows, see below) must be 0 for the 'same' conv.  Interiors
    # are fully overwritten.  (Cannot zero only on step 0: with a "parallel"
    # grid axis each TensorCore owns its own scratch instance.)
    for p in pads:
        p[...] = jnp.zeros_like(p)

    # Scatter the input image into pad[0]'s interior (static, contiguous rows).
    Wp0 = W + 2
    for h in range(H):
        pads[0][pl.ds((h + 1) * Wp0 + 1, W), :] = x_ref[pl.ds(h * W, W), :]

    h_l, w_l = H, W
    for l in range(n_layers):
        Wp = w_l + 2
        M = h_l * Wp            # conv rows incl. 2 throwaway cols (w in {W, W+1})
        Ho, Wo = h_l // 2, w_l // 2
        Wp2 = Wp // 2
        src = pads[l]

        # --- 3x3 'same' conv as ONE MXU matmul with K = 9*C: build the (M, 9C)
        # im2col slab from 9 shifted whole-image views of the zero-padded image.
        # Tap (ky,kx) for output row m = h*Wp + w reads padded flat row
        # m + ky*Wp + kx = (h+ky)*Wp + (w+kx); the 2 extra zero rows at the end
        # of each pad scratch keep the (ky=2,kx=2) view in-bounds, and those
        # rows only ever feed the throwaway columns.
        for k in range(9):
            ky, kx = divmod(k, 3)
            col_ref[pl.ds(0, M), pl.ds(k * C, C)] = src[pl.ds(ky * Wp + kx, M), :]
        acc = jnp.dot(col_ref[pl.ds(0, M), :], w_ref[l],
                      preferred_element_type=jnp.float32)            # (M, C) f32

        # --- folded eval-mode BatchNorm + ReLU (f32, VPU), kept in VMEM.
        act_ref[pl.ds(0, M), :] = jnp.maximum(acc * scale_ref[l] + shift_ref[l], 0.0)

        # --- 2x2 / stride-2 max pool.
        # Horizontal: ONE whole-slab strided pass over consecutive (w, w+1) row
        # pairs (Wp is even, so a pair never straddles two image rows).
        hm_ref[pl.ds(0, M // 2), :] = jnp.maximum(
            act_ref[pl.ds(0, M // 2, stride=2), :],
            act_ref[pl.ds(1, M // 2, stride=2), :])
        # Vertical: Ho contiguous strips (valid cols j < Wo; j == Wo holds the
        # throwaway pad cols and is never read).  Pooled rows go straight into
        # the next layer's padded interior — they never leave VMEM — or into
        # the output block on the last layer.
        if l + 1 < n_layers:
            dst, Wp_n = pads[l + 1], Wo + 2
            for ho in range(Ho):
                row = jnp.maximum(hm_ref[pl.ds((2 * ho) * Wp2, Wo), :],
                                  hm_ref[pl.ds((2 * ho + 1) * Wp2, Wo), :])
                dst[pl.ds((ho + 1) * Wp_n + 1, Wo), :] = row.astype(dst.dtype)
        else:
            for ho in range(Ho):
                row = jnp.maximum(hm_ref[pl.ds((2 * ho) * Wp2, Wo), :],
                                  hm_ref[pl.ds((2 * ho + 1) * Wp2, Wo), :])
                o_ref[pl.ds(ho * Wo, Wo), :] = row.astype(o_ref.dtype)

        h_l, w_l = Ho, Wo


# ----------------------------- kernel wrapper ------------------------------ #

def conv4_fused(x_flat, w9, scale, shift, *, H, W):
    """Run the whole backbone in one pallas_call; grid=(N,), one image per step."""
    N, HW, C = x_flat.shape
    n_layers = w9.shape[0]
    assert HW == H * W and w9.shape == (n_layers, 9 * C, C)

    hs, ws = [H], [W]
    for _ in range(n_layers):
        assert hs[-1] % 2 == 0 and ws[-1] % 2 == 0, "spatial dims must halve cleanly"
        hs.append(hs[-1] // 2)
        ws.append(ws[-1] // 2)
    ho_f, wo_f = hs[-1], ws[-1]
    m_max = max(hs[l] * (ws[l] + 2) for l in range(n_layers))

    kernel = functools.partial(_conv4_fused_kernel, H=H, W=W,
                               n_layers=n_layers, C=C)

    # Per-layer zero-padded activation scratch: (H+2)*(W+2) rows + 2 overrun rows.
    pad_scratch = [
        pltpu.VMEM(((hs[l] + 2) * (ws[l] + 2) + 2, C), jnp.bfloat16)
        for l in range(n_layers)
    ]
    scratch = pad_scratch + [
        pltpu.VMEM((m_max, 9 * C), jnp.bfloat16),   # im2col slab (1 matmul / layer)
        pltpu.VMEM((m_max, C), jnp.float32),        # post-BN/ReLU activation
        pltpu.VMEM((m_max // 2, C), jnp.float32),   # horizontally-pooled intermediate
    ]

    # Explicit VMEM budget: scratch + double-buffered I/O blocks + resident consts.
    bf2, f4 = 2, 4
    scratch_bytes = (sum(((hs[l] + 2) * (ws[l] + 2) + 2) * C * bf2
                         for l in range(n_layers))
                     + m_max * 9 * C * bf2 + m_max * C * f4 + (m_max // 2) * C * f4)
    block_bytes = 2 * (HW * C * bf2 + ho_f * wo_f * C * f4)
    const_bytes = n_layers * 9 * C * C * bf2 + 2 * n_layers * C * f4
    vmem_limit = int(min(64 * 1024 * 1024,
                         max(8 * 1024 * 1024,
                             4 * (scratch_bytes + block_bytes + const_bytes))))

    flops = 2 * N * sum(hs[l] * ws[l] for l in range(n_layers)) * 9 * C * C
    bytes_accessed = int(N * HW * C * bf2 + n_layers * 9 * C * C * bf2
                         + 2 * n_layers * C * f4 + N * ho_f * wo_f * C * f4)

    return pl.pallas_call(
        kernel,
        out_shape=jax.ShapeDtypeStruct((N, ho_f * wo_f, C), jnp.float32),
        grid=(N,),                                   # >=2 steps -> both v7x TCs busy
        in_specs=[
            pl.BlockSpec((None, HW, C), lambda n: (n, 0, 0)),         # per-image block
            pl.BlockSpec((n_layers, 9 * C, C), lambda n: (0, 0, 0)),  # resident weights
            pl.BlockSpec((n_layers, 1, C), lambda n: (0, 0, 0)),      # resident BN scale
            pl.BlockSpec((n_layers, 1, C), lambda n: (0, 0, 0)),      # resident BN shift
        ],
        out_specs=pl.BlockSpec((None, ho_f * wo_f, C), lambda n: (n, 0, 0)),
        scratch_shapes=scratch,
        compiler_params=pltpu.CompilerParams(
            dimension_semantics=("parallel",),
            vmem_limit_bytes=vmem_limit),
        cost_estimate=pl.CostEstimate(flops=flops, transcendentals=0,
                                      bytes_accessed=bytes_accessed),
    )(x_flat, w9, scale, shift)


# --------------------------------- glue ------------------------------------ #

def init_backbone_params(key, in_channels):
    """Deterministic synthetic Conv4 parameters (conv + eval-mode BatchNorm)."""
    params = []
    cin = in_channels
    for _ in range(NUM_BLOCKS):
        cout = HIDDEN
        key, kw, kb, kg, kbt = jax.random.split(key, 5)
        params.append(dict(
            w=jax.random.normal(kw, (3, 3, cin, cout), jnp.float32) / np.sqrt(9 * cin),
            b=0.01 * jax.random.normal(kb, (cout,), jnp.float32),
            gamma=1.0 + 0.1 * jax.random.normal(kg, (cout,), jnp.float32),
            beta=0.1 * jax.random.normal(kbt, (cout,), jnp.float32),
            mean=jnp.zeros((cout,), jnp.float32),
            var=jnp.ones((cout,), jnp.float32),
        ))
        cin = cout
    return params


def backbone_forward(x_nchw, params, flatten=True):
    """self.feature.forward(x) — the whole Conv4 backbone in ONE fused Pallas call."""
    C = params[0]["w"].shape[-1]
    assert all(p["w"].shape[-1] == C for p in params)
    n_layers = len(params)

    x = jnp.transpose(x_nchw, (0, 2, 3, 1)).astype(jnp.bfloat16)     # NCHW -> NHWC
    N, H, W, cin = x.shape
    # Channel-pad the input to C so every layer shares K = 9*C and a single
    # stacked weight tensor; the matching weight rows are zero => same result.
    if cin < C:
        x = jnp.pad(x, ((0, 0), (0, 0), (0, 0), (0, C - cin)))
    x_flat = x.reshape(N, H * W, C)                                   # metadata reshape

    w_l, s_l, t_l = [], [], []
    for p in params:
        w = p["w"].astype(jnp.float32)
        ci = w.shape[2]
        if ci < C:
            w = jnp.pad(w, ((0, 0), (0, 0), (0, C - ci), (0, 0)))
        w_l.append(w.reshape(9 * C, C).astype(jnp.bfloat16))          # tap-major (9C, C)
        scale = p["gamma"] / jnp.sqrt(p["var"] + BN_EPS)
        s_l.append(scale.reshape(1, C))
        t_l.append((p["beta"] + scale * (p["b"] - p["mean"])).reshape(1, C))
    w9 = jnp.stack(w_l)                                               # (L, 9C, C) bf16
    scale = jnp.stack(s_l).astype(jnp.float32)                        # (L, 1, C)
    shift = jnp.stack(t_l).astype(jnp.float32)                        # (L, 1, C)

    feat = conv4_fused(x_flat, w9, scale, shift, H=H, W=W)            # (N, ho*wo, C)
    ho_f, wo_f = H >> n_layers, W >> n_layers
    feat = jnp.transpose(feat.reshape(N, ho_f, wo_f, C), (0, 3, 1, 2))  # -> NCHW
    if flatten:
        feat = feat.reshape(N, -1)
    return feat


class MetaTemplatePallas:
    """JAX/Pallas counterpart of MetaTemplate (forward pass only)."""

    def __init__(self, params, n_way, n_support, flatten=True):
        self.n_way = n_way
        self.n_support = n_support
        self.n_query = N_QUERY
        self.params = params
        self.flatten = flatten

    def forward(self, x_nchw):
        return backbone_forward(x_nchw, self.params, self.flatten)

    # TODO(synk): set_forward / set_forward_loss are abstract in the PyTorch module
    # and correct()/test_loop() are host-side numpy eval loops; not kernel work.


# ------------------------------- reference --------------------------------- #

def reference_forward(x_nchw, params, flatten=True):
    x = jnp.transpose(x_nchw, (0, 2, 3, 1)).astype(jnp.float32)
    for p in params:
        y = jax.lax.conv_general_dilated(
            x, p["w"], window_strides=(1, 1), padding="SAME",
            dimension_numbers=("NHWC", "HWIO", "NHWC"))
        y = y + p["b"]
        y = p["gamma"] * (y - p["mean"]) / jnp.sqrt(p["var"] + BN_EPS) + p["beta"]
        y = jnp.maximum(y, 0.0)
        x = jax.lax.reduce_window(y, -jnp.inf, jax.lax.max,
                                  (1, 2, 2, 1), (1, 2, 2, 1), "VALID")
    if flatten:
        x = jnp.transpose(x, (0, 3, 1, 2)).reshape(x.shape[0], -1)
    return x


# ---------------------------------- main ------------------------------------ #

if __name__ == "__main__":
    key = jax.random.PRNGKey(0)
    kx, kp = jax.random.split(key)
    x = jax.random.normal(kx, (2, 4, 16, 16), jnp.float32)        # NCHW, like PyTorch
    params = init_backbone_params(kp, in_channels=4)

    model = MetaTemplatePallas(params, n_way=N_WAY, n_support=N_SUPPORT, flatten=True)
    fwd = jax.jit(functools.partial(backbone_forward, flatten=True))
    out = jax.block_until_ready(fwd(x, params))

    ref = reference_forward(x, params)
    assert out.shape == (2, HIDDEN), out.shape
    # bf16 matmul operands + bf16 inter-layer activations vs pure-f32 reference
    assert jnp.allclose(out.astype(jnp.float32), ref, rtol=3e-2, atol=3e-2), \
        float(jnp.max(jnp.abs(out.astype(jnp.float32) - ref)))
    print("KERNEL_OK")
</pallas_src>

<mosaic_0001>
module attributes {stable_mosaic.version = 11 : i64} {
  func.func @_conv4_fused_kernel(%arg0: i32, %arg1: memref<1x256x32xbf16, #tpu.memory_space<vmem>>, %arg2: memref<4x288x32xbf16, #tpu.memory_space<vmem>>, %arg3: memref<4x1x32xf32, #tpu.memory_space<vmem>>, %arg4: memref<4x1x32xf32, #tpu.memory_space<vmem>>, %arg5: memref<1x1x32xf32, #tpu.memory_space<vmem>>, %arg6: memref<326x32xbf16, #tpu.memory_space<vmem>>, %arg7: memref<102x32xbf16, #tpu.memory_space<vmem>>, %arg8: memref<38x32xbf16, #tpu.memory_space<vmem>>, %arg9: memref<18x32xbf16, #tpu.memory_space<vmem>>, %arg10: memref<288x288xbf16, #tpu.memory_space<vmem>>, %arg11: memref<288x32xf32, #tpu.memory_space<vmem>>, %arg12: memref<144x32xf32, #tpu.memory_space<vmem>>) attributes {dimension_semantics = [#tpu.dimension_semantics<parallel>], iteration_bounds = array<i64: 2>, scalar_prefetch = 0 : i64, scratch_operands = 7 : i64, tpu.core_type = #tpu.core_type<tc>, window_params = [{transform_indices = @transform_0, window_bounds = array<i64: 1, 256, 32>}, {pipeline_mode = #tpu.pipeline_mode<synchronous>, transform_indices = @transform_1, window_bounds = array<i64: 4, 288, 32>}, {pipeline_mode = #tpu.pipeline_mode<synchronous>, transform_indices = @transform_2, window_bounds = array<i64: 4, 1, 32>}, {pipeline_mode = #tpu.pipeline_mode<synchronous>, transform_indices = @transform_3, window_bounds = array<i64: 4, 1, 32>}, {transform_indices = @transform_4, window_bounds = array<i64: 1, 1, 32>}]} {
    %cst = arith.constant 0.000000e+00 : bf16
    %0 = vector.broadcast %cst : bf16 to vector<326x32xbf16>
    %c0 = arith.constant 0 : index
    %c0_0 = arith.constant 0 : index
    %1 = vector.load %arg6[%c0, %c0_0] : memref<326x32xbf16, #tpu.memory_space<vmem>>, vector<326x32xbf16>
    tpu.vector_store %arg6[%c0, %c0_0], %0 {strides = array<i32>} : memref<326x32xbf16, #tpu.memory_space<vmem>>, vector<326x32xbf16>,
    %cst_1 = arith.constant 0.000000e+00 : bf16
    %2 = vector.broadcast %cst_1 : bf16 to vector<102x32xbf16>
    %c0_2 = arith.constant 0 : index
    %c0_3 = arith.constant 0 : index
    %3 = vector.load %arg7[%c0_2, %c0_3] : memref<102x32xbf16, #tpu.memory_space<vmem>>, vector<102x32xbf16>
    tpu.vector_store %arg7[%c0_2, %c0_3], %2 {strides = array<i32>} : memref<102x32xbf16, #tpu.memory_space<vmem>>, vector<102x32xbf16>,
    %cst_4 = arith.constant 0.000000e+00 : bf16
    %4 = vector.broadcast %cst_4 : bf16 to vector<38x32xbf16>
    %c0_5 = arith.constant 0 : index
    %c0_6 = arith.constant 0 : index
    %5 = vector.load %arg8[%c0_5, %c0_6] : memref<38x32xbf16, #tpu.memory_space<vmem>>, vector<38x32xbf16>
    tpu.vector_store %arg8[%c0_5, %c0_6], %4 {strides = array<i32>} : memref<38x32xbf16, #tpu.memory_space<vmem>>, vector<38x32xbf16>,
    %cst_7 = arith.constant 0.000000e+00 : bf16
    %6 = vector.broadcast %cst_7 : bf16 to vector<18x32xbf16>
    %c0_8 = arith.constant 0 : index
    %c0_9 = arith.constant 0 : index
    %7 = vector.load %arg9[%c0_8, %c0_9] : memref<18x32xbf16, #tpu.memory_space<vmem>>, vector<18x32xbf16>
    tpu.vector_store %arg9[%c0_8, %c0_9], %6 {strides = array<i32>} : memref<18x32xbf16, #tpu.memory_space<vmem>>, vector<18x32xbf16>,
    %c0_10 = arith.constant 0 : index
    %c0_11 = arith.constant 0 : index
    %c0_12 = arith.constant 0 : index
    %8 = vector.load %arg1[%c0_10, %c0_11, %c0_12] : memref<1x256x32xbf16, #tpu.memory_space<vmem>>, vector<1x16x32xbf16>
    %9 = vector.shape_cast %8 : vector<1x16x32xbf16> to vector<16x32xbf16>
    %c19 = arith.constant 19 : index
    %c0_13 = arith.constant 0 : index
    %10 = vector.load %arg6[%c19, %c0_13] : memref<326x32xbf16, #tpu.memory_space<vmem>>, vector<16x32xbf16>
    tpu.vector_store %arg6[%c19, %c0_13], %9 {strides = array<i32>} : memref<326x32xbf16, #tpu.memory_space<vmem>>, vector<16x32xbf16>,
    %c0_14 = arith.constant 0 : index
    %c16 = arith.constant 16 : index
    %c0_15 = arith.constant 0 : index
    %11 = vector.load %arg1[%c0_14, %c16, %c0_15] : memref<1x256x32xbf16, #tpu.memory_space<vmem>>, vector<1x16x32xbf16>
    %12 = vector.shape_cast %11 : vector<1x16x32xbf16> to vector<16x32xbf16>
    %c37 = arith.constant 37 : index
    %c0_16 = arith.constant 0 : index
    %13 = vector.load %arg6[%c37, %c0_16] : memref<326x32xbf16, #tpu.memory_space<vmem>>, vector<16x32xbf16>
    tpu.vector_store %arg6[%c37, %c0_16], %12 {strides = array<i32>} : memref<326x32xbf16, #tpu.memory_space<vmem>>, vector<16x32xbf16>,
    %c0_17 = arith.constant 0 : index
    %c32 = arith.constant 32 : index
    %c0_18 = arith.constant 0 : index
    %14 = vector.load %arg1[%c0_17, %c32, %c0_18] : memref<1x256x32xbf16, #tpu.memory_space<vmem>>, vector<1x16x32xbf16>
    %15 = vector.shape_cast %14 : vector<1x16x32xbf16> to vector<16x32xbf16>
    %c55 = arith.constant 55 : index
    %c0_19 = arith.constant 0 : index
    %16 = vector.load %arg6[%c55, %c0_19] : memref<326x32xbf16, #tpu.memory_space<vmem>>, vector<16x32xbf16>
    tpu.vector_store %arg6[%c55, %c0_19], %15 {strides = array<i32>} : memref<326x32xbf16, #tpu.memory_space<vmem>>, vector<16x32xbf16>,
    %c0_20 = arith.constant 0 : index
    %c48 = arith.constant 48 : index
    %c0_21 = arith.constant 0 : index
    %17 = vector.load %arg1[%c0_20, %c48, %c0_21] : memref<1x256x32xbf16, #tpu.memory_space<vmem>>, vector<1x16x32xbf16>
    %18 = vector.shape_cast %17 : vector<1x16x32xbf16> to vector<16x32xbf16>
    %c73 = arith.constant 73 : index
    %c0_22 = arith.constant 0 : index
    %19 = vector.load %arg6[%c73, %c0_22] : memref<326x32xbf16, #tpu.memory_space<vmem>>, vector<16x32xbf16>
    tpu.vector_store %arg6[%c73, %c0_22], %18 {strides = array<i32>} : memref<326x32xbf16, #tpu.memory_space<vmem>>, vector<16x32xbf16>,
    %c0_23 = arith.constant 0 : index
    %c64 = arith.constant 64 : index
    %c0_24 = arith.constant 0 : index
    %20 = vector.load %arg1[%c0_23, %c64, %c0_24] : memref<1x256x32xbf16, #tpu.memory_space<vmem>>, vector<1x16x32xbf16>
    %21 = vector.shape_cast %20 : vector<1x16x32xbf16> to vector<16x32xbf16>
    %c91 = arith.constant 91 : index
    %c0_25 = arith.constant 0 : index
    %22 = vector.load %arg6[%c91, %c0_25] : memref<326x32xbf16, #tpu.memory_space<vmem>>, vector<16x32xbf16>
    tpu.vector_store %arg6[%c91, %c0_25], %21 {strides = array<i32>} : memref<326x32xbf16, #tpu.memory_space<vmem>>, vector<16x32xbf16>,
    %c0_26 = arith.constant 0 : index
    %c80 = arith.constant 80 : index
    %c0_27 = arith.constant 0 : index
    %23 = vector.load %arg1[%c0_26, %c80, %c0_27] : memref<1x256x32xbf16, #tpu.memory_space<vmem>>, vector<1x16x32xbf16>
    %24 = vector.shape_cast %23 : vector<1x16x32xbf16> to vector<16x32xbf16>
    %c109 = arith.constant 109 : index
    %c0_28 = arith.constant 0 : index
    %25 = vector.load %arg6[%c109, %c0_28] : memref<326x32xbf16, #tpu.memory_space<vmem>>, vector<16x32xbf16>
    tpu.vector_store %arg6[%c109, %c0_28], %24 {strides = array<i32>} : memref<326x32xbf16, #tpu.memory_space<vmem>>, vector<16x32xbf16>,
    %c0_29 = arith.constant 0 : index
    %c96 = arith.constant 96 : index
    %c0_30 = arith.constant 0 : index
    %26 = vector.load %arg1[%c0_29, %c96, %c0_30] : memref<1x256x32xbf16, #tpu.memory_space<vmem>>, vector<1x16x32xbf16>
    %27 = vector.shape_cast %26 : vector<1x16x32xbf16> to vector<16x32xbf16>
    %c127 = arith.constant 127 : index
    %c0_31 = arith.constant 0 : index
    %28 = vector.load %arg6[%c127, %c0_31] : memref<326x32xbf16, #tpu.memory_space<vmem>>, vector<16x32xbf16>
    tpu.vector_store %arg6[%c127, %c0_31], %27 {strides = array<i32>} : memref<326x32xbf16, #tpu.memory_space<vmem>>, vector<16x32xbf16>,
    %c0_32 = arith.constant 0 : index
    %c112 = arith.constant 112 : index
    %c0_33 = arith.constant 0 : index
    %29 = vector.load %arg1[%c0_32, %c112, %c0_33] : memref<1x256x32xbf16, #tpu.memory_space<vmem>>, vector<1x16x32xbf16>
    %30 = vector.shape_cast %29 : vector<1x16x32xbf16> to vector<16x32xbf16>
    %c145 = arith.constant 145 : index
    %c0_34 = arith.constant 0 : index
    %31 = vector.load %arg6[%c145, %c0_34] : memref<326x32xbf16, #tpu.memory_space<vmem>>, vector<16x32xbf16>
    tpu.vector_store %arg6[%c145, %c0_34], %30 {strides = array<i32>} : memref<326x32xbf16, #tpu.memory_space<vmem>>, vector<16x32xbf16>,
    %c0_35 = arith.constant 0 : index
    %c128 = arith.constant 128 : index
    %c0_36 = arith.constant 0 : index
    %32 = vector.load %arg1[%c0_35, %c128, %c0_36] : memref<1x256x32xbf16, #tpu.memory_space<vmem>>, vector<1x16x32xbf16>
    %33 = vector.shape_cast %32 : vector<1x16x32xbf16> to vector<16x32xbf16>
    %c163 = arith.constant 163 : index
    %c0_37 = arith.constant 0 : index
    %34 = vector.load %arg6[%c163, %c0_37] : memref<326x32xbf16, #tpu.memory_space<vmem>>, vector<16x32xbf16>
    tpu.vector_store %arg6[%c163, %c0_37], %33 {strides = array<i32>} : memref<326x32xbf16, #tpu.memory_space<vmem>>, vector<16x32xbf16>,
    %c0_38 = arith.constant 0 : index
    %c144 = arith.constant 144 : index
    %c0_39 = arith.constant 0 : index
    %35 = vector.load %arg1[%c0_38, %c144, %c0_39] : memref<1x256x32xbf16, #tpu.memory_space<vmem>>, vector<1x16x32xbf16>
    %36 = vector.shape_cast %35 : vector<1x16x32xbf16> to vector<16x32xbf16>
    %c181 = arith.constant 181 : index
    %c0_40 = arith.constant 0 : index
    %37 = vector.load %arg6[%c181, %c0_40] : memref<326x32xbf16, #tpu.memory_space<vmem>>, vector<16x32xbf16>
    tpu.vector_store %arg6[%c181, %c0_40], %36 {strides = array<i32>} : memref<326x32xbf16, #tpu.memory_space<vmem>>, vector<16x32xbf16>,
    %c0_41 = arith.constant 0 : index
    %c160 = arith.constant 160 : index
    %c0_42 = arith.constant 0 : index
    %38 = vector.load %arg1[%c0_41, %c160, %c0_42] : memref<1x256x32xbf16, #tpu.memory_space<vmem>>, vector<1x16x32xbf16>
    %39 = vector.shape_cast %38 : vector<1x16x32xbf16> to vector<16x32xbf16>
    %c199 = arith.constant 199 : index
    %c0_43 = arith.constant 0 : index
    %40 = vector.load %arg6[%c199, %c0_43] : memref<326x32xbf16, #tpu.memory_space<vmem>>, vector<16x32xbf16>
    tpu.vector_store %arg6[%c199, %c0_43], %39 {strides = array<i32>} : memref<326x32xbf16, #tpu.memory_space<vmem>>, vector<16x32xbf16>,
    %c0_44 = arith.constant 0 : index
    %c176 = arith.constant 176 : index
    %c0_45 = arith.constant 0 : index
    %41 = vector.load %arg1[%c0_44, %c176, %c0_45] : memref<1x256x32xbf16, #tpu.memory_space<vmem>>, vector<1x16x32xbf16>
    %42 = vector.shape_cast %41 : vector<1x16x32xbf16> to vector<16x32xbf16>
    %c217 = arith.constant 217 : index
    %c0_46 = arith.constant 0 : index
    %43 = vector.load %arg6[%c217, %c0_46] : memref<326x32xbf16, #tpu.memory_space<vmem>>, vector<16x32xbf16>
    tpu.vector_store %arg6[%c217, %c0_46], %42 {strides = array<i32>} : memref<326x32xbf16, #tpu.memory_space<vmem>>, vector<16x32xbf16>,
    %c0_47 = arith.constant 0 : index
    %c192 = arith.constant 192 : index
    %c0_48 = arith.constant 0 : index
    %44 = vector.load %arg1[%c0_47, %c192, %c0_48] : memref<1x256x32xbf16, #tpu.memory_space<vmem>>, vector<1x16x32xbf16>
    %45 = vector.shape_cast %44 : vector<1x16x32xbf16> to vector<16x32xbf16>
    %c235 = arith.constant 235 : index
    %c0_49 = arith.constant 0 : index
    %46 = vector.load %arg6[%c235, %c0_49] : memref<326x32xbf16, #tpu.memory_space<vmem>>, vector<16x32xbf16>
    tpu.vector_store %arg6[%c235, %c0_49], %45 {strides = array<i32>} : memref<326x32xbf16, #tpu.memory_space<vmem>>, vector<16x32xbf16>,
    %c0_50 = arith.constant 0 : index
    %c208 = arith.constant 208 : index
    %c0_51 = arith.constant 0 : index
    %47 = vector.load %arg1[%c0_50, %c208, %c0_51] : memref<1x256x32xbf16, #tpu.memory_space<vmem>>, vector<1x16x32xbf16>
    %48 = vector.shape_cast %47 : vector<1x16x32xbf16> to vector<16x32xbf16>
    %c253 = arith.constant 253 : index
    %c0_52 = arith.constant 0 : index
    %49 = vector.load %arg6[%c253, %c0_52] : memref<326x32xbf16, #tpu.memory_space<vmem>>, vector<16x32xbf16>
    tpu.vector_store %arg6[%c253, %c0_52], %48 {strides = array<i32>} : memref<326x32xbf16, #tpu.memory_space<vmem>>, vector<16x32xbf16>,
    %c0_53 = arith.constant 0 : index
    %c224 = arith.constant 224 : index
    %c0_54 = arith.constant 0 : index
    %50 = vector.load %arg1[%c0_53, %c224, %c0_54] : memref<1x256x32xbf16, #tpu.memory_space<vmem>>, vector<1x16x32xbf16>
    %51 = vector.shape_cast %50 : vector<1x16x32xbf16> to vector<16x32xbf16>
    %c271 = arith.constant 271 : index
    %c0_55 = arith.constant 0 : index
    %52 = vector.load %arg6[%c271, %c0_55] : memref<326x32xbf16, #tpu.memory_space<vmem>>, vector<16x32xbf16>
    tpu.vector_store %arg6[%c271, %c0_55], %51 {strides = array<i32>} : memref<326x32xbf16, #tpu.memory_space<vmem>>, vector<16x32xbf16>,
    %c0_56 = arith.constant 0 : index
    %c240 = arith.constant 240 : index
    %c0_57 = arith.constant 0 : index
    %53 = vector.load %arg1[%c0_56, %c240, %c0_57] : memref<1x256x32xbf16, #tpu.memory_space<vmem>>, vector<1x16x32xbf16>
    %54 = vector.shape_cast %53 : vector<1x16x32xbf16> to vector<16x32xbf16>
    %c289 = arith.constant 289 : index
    %c0_58 = arith.constant 0 : index
    %55 = vector.load %arg6[%c289, %c0_58] : memref<326x32xbf16, #tpu.memory_space<vmem>>, vector<16x32xbf16>
    tpu.vector_store %arg6[%c289, %c0_58], %54 {strides = array<i32>} : memref<326x32xbf16, #tpu.memory_space<vmem>>, vector<16x32xbf16>,
    %c0_59 = arith.constant 0 : index
    %c0_60 = arith.constant 0 : index
    %56 = vector.load %arg6[%c0_59, %c0_60] : memref<326x32xbf16, #tpu.memory_space<vmem>>, vector<288x32xbf16>
    %c0_61 = arith.constant 0 : index
    %c0_62 = arith.constant 0 : index
    %57 = vector.load %arg10[%c0_61, %c0_62] : memref<288x288xbf16, #tpu.memory_space<vmem>>, vector<288x32xbf16>
    tpu.vector_store %arg10[%c0_61, %c0_62], %56 {strides = array<i32>} : memref<288x288xbf16, #tpu.memory_space<vmem>>, vector<288x32xbf16>,
    %c1 = arith.constant 1 : index
    %c0_63 = arith.constant 0 : index
    %58 = vector.load %arg6[%c1, %c0_63] : memref<326x32xbf16, #tpu.memory_space<vmem>>, vector<288x32xbf16>
    %c0_64 = arith.constant 0 : index
    %c32_65 = arith.constant 32 : index
    %59 = vector.load %arg10[%c0_64, %c32_65] : memref<288x288xbf16, #tpu.memory_space<vmem>>, vector<288x32xbf16>
    tpu.vector_store %arg10[%c0_64, %c32_65], %58 {strides = array<i32>} : memref<288x288xbf16, #tpu.memory_space<vmem>>, vector<288x32xbf16>,
    %c2 = arith.constant 2 : index
    %c0_66 = arith.constant 0 : index
    %60 = vector.load %arg6[%c2, %c0_66] : memref<326x32xbf16, #tpu.memory_space<vmem>>, vector<288x32xbf16>
    %c0_67 = arith.constant 0 : index
    %c64_68 = arith.constant 64 : index
    %61 = vector.load %arg10[%c0_67, %c64_68] : memref<288x288xbf16, #tpu.memory_space<vmem>>, vector<288x32xbf16>
    tpu.vector_store %arg10[%c0_67, %c64_68], %60 {strides = array<i32>} : memref<288x288xbf16, #tpu.memory_space<vmem>>, vector<288x32xbf16>,
    %c18 = arith.constant 18 : index
    %c0_69 = arith.constant 0 : index
    %62 = vector.load %arg6[%c18, %c0_69] : memref<326x32xbf16, #tpu.memory_space<vmem>>, vector<288x32xbf16>
    %c0_70 = arith.constant 0 : index
    %c96_71 = arith.constant 96 : index
    %63 = vector.load %arg10[%c0_70, %c96_71] : memref<288x288xbf16, #tpu.memory_space<vmem>>, vector<288x32xbf16>
    tpu.vector_store %arg10[%c0_70, %c96_71], %62 {strides = array<i32>} : memref<288x288xbf16, #tpu.memory_space<vmem>>, vector<288x32xbf16>,
    %c19_72 = arith.constant 19 : index
    %c0_73 = arith.constant 0 : index
    %64 = vector.load %arg6[%c19_72, %c0_73] : memref<326x32xbf16, #tpu.memory_space<vmem>>, vector<288x32xbf16>
    %c0_74 = arith.constant 0 : index
    %c128_75 = arith.constant 128 : index
    %65 = vector.load %arg10[%c0_74, %c128_75] : memref<288x288xbf16, #tpu.memory_space<vmem>>, vector<288x32xbf16>
    tpu.vector_store %arg10[%c0_74, %c128_75], %64 {strides = array<i32>} : memref<288x288xbf16, #tpu.memory_space<vmem>>, vector<288x32xbf16>,
    %c20 = arith.constant 20 : index
    %c0_76 = arith.constant 0 : index
    %66 = vector.load %arg6[%c20, %c0_76] : memref<326x32xbf16, #tpu.memory_space<vmem>>, vector<288x32xbf16>
    %c0_77 = arith.constant 0 : index
    %c160_78 = arith.constant 160 : index
    %67 = vector.load %arg10[%c0_77, %c160_78] : memref<288x288xbf16, #tpu.memory_space<vmem>>, vector<288x32xbf16>
    tpu.vector_store %arg10[%c0_77, %c160_78], %66 {strides = array<i32>} : memref<288x288xbf16, #tpu.memory_space<vmem>>, vector<288x32xbf16>,
    %c36 = arith.constant 36 : index
    %c0_79 = arith.constant 0 : index
    %68 = vector.load %arg6[%c36, %c0_79] : memref<326x32xbf16, #tpu.memory_space<vmem>>, vector<288x32xbf16>
    %c0_80 = arith.constant 0 : index
    %c192_81 = arith.constant 192 : index
    %69 = vector.load %arg10[%c0_80, %c192_81] : memref<288x288xbf16, #tpu.memory_space<vmem>>, vector<288x32xbf16>
    tpu.vector_store %arg10[%c0_80, %c192_81], %68 {strides = array<i32>} : memref<288x288xbf16, #tpu.memory_space<vmem>>, vector<288x32xbf16>,
    %c37_82 = arith.constant 37 : index
    %c0_83 = arith.constant 0 : index
    %70 = vector.load %arg6[%c37_82, %c0_83] : memref<326x32xbf16, #tpu.memory_space<vmem>>, vector<288x32xbf16>
    %c0_84 = arith.constant 0 : index
    %c224_85 = arith.constant 224 : index
    %71 = vector.load %arg10[%c0_84, %c224_85] : memref<288x288xbf16, #tpu.memory_space<vmem>>, vector<288x32xbf16>
    tpu.vector_store %arg10[%c0_84, %c224_85], %70 {strides = array<i32>} : memref<288x288xbf16, #tpu.memory_space<vmem>>, vector<288x32xbf16>,
    %c38 = arith.constant 38 : index
    %c0_86 = arith.constant 0 : index
    %72 = vector.load %arg6[%c38, %c0_86] : memref<326x32xbf16, #tpu.memory_space<vmem>>, vector<288x32xbf16>
    %c0_87 = arith.constant 0 : index
    %c256 = arith.constant 256 : index
    %73 = vector.load %arg10[%c0_87, %c256] : memref<288x288xbf16, #tpu.memory_space<vmem>>, vector<288x32xbf16>
    tpu.vector_store %arg10[%c0_87, %c256], %72 {strides = array<i32>} : memref<288x288xbf16, #tpu.memory_space<vmem>>, vector<288x32xbf16>,
    %c0_88 = arith.constant 0 : index
    %c0_89 = arith.constant 0 : index
    %74 = vector.load %arg10[%c0_88, %c0_89] : memref<288x288xbf16, #tpu.memory_space<vmem>>, vector<288x288xbf16>
    %c0_90 = arith.constant 0 : index
    %c0_91 = arith.constant 0 : index
    %c0_92 = arith.constant 0 : index
    %75 = vector.load %arg2[%c0_90, %c0_91, %c0_92] : memref<4x288x32xbf16, #tpu.memory_space<vmem>>, vector<1x288x32xbf16>
    %76 = vector.shape_cast %75 : vector<1x288x32xbf16> to vector<288x32xbf16>
    %cst_93 = arith.constant dense<0.000000e+00> : vector<288x32xf32>
    %77 = tpu.matmul %74, %76, %cst_93 {dimension_numbers = #tpu.dot_dimension_numbers<[1], [0], [0], [1], [0, 0, 1, 1], [], []>} : vector<288x288xbf16>, vector<288x32xbf16>, vector<288x32xf32> -> vector<288x32xf32>
    %c0_94 = arith.constant 0 : index
    %c0_95 = arith.constant 0 : index
    %c0_96 = arith.constant 0 : index
    %78 = vector.load %arg3[%c0_94, %c0_95, %c0_96] : memref<4x1x32xf32, #tpu.memory_space<vmem>>, vector<1x1x32xf32>
    %79 = vector.shape_cast %78 : vector<1x1x32xf32> to vector<1x32xf32>
    %80 = vector.broadcast %79 : vector<1x32xf32> to vector<288x32xf32>
    %81 = arith.mulf %77, %80 : vector<288x32xf32>
    %c0_97 = arith.constant 0 : index
    %c0_98 = arith.constant 0 : index
    %c0_99 = arith.constant 0 : index
    %82 = vector.load %arg4[%c0_97, %c0_98, %c0_99] : memref<4x1x32xf32, #tpu.memory_space<vmem>>, vector<1x1x32xf32>
    %83 = vector.shape_cast %82 : vector<1x1x32xf32> to vector<1x32xf32>
    %84 = vector.broadcast %83 : vector<1x32xf32> to vector<288x32xf32>
    %85 = arith.addf %81, %84 : vector<288x32xf32>
    %cst_100 = arith.constant 0.000000e+00 : f32
    %86 = vector.broadcast %cst_100 : f32 to vector<288x32xf32>
    %87 = arith.maximumf %85, %86 : vector<288x32xf32>
    %c0_101 = arith.constant 0 : index
    %c0_102 = arith.constant 0 : index
    %88 = vector.load %arg11[%c0_101, %c0_102] : memref<288x32xf32, #tpu.memory_space<vmem>>, vector<288x32xf32>
    tpu.vector_store %arg11[%c0_101, %c0_102], %87 {strides = array<i32>} : memref<288x32xf32, #tpu.memory_space<vmem>>, vector<288x32xf32>,
    %c0_103 = arith.constant 0 : index
    %c0_104 = arith.constant 0 : index
    %89 = tpu.strided_load %arg11[%c0_103, %c0_104] {strides = array<i32: 2, 1>} : memref<288x32xf32, #tpu.memory_space<vmem>>, vector<144x32xf32>
    %c1_105 = arith.constant 1 : index
    %c0_106 = arith.constant 0 : index
    %90 = tpu.strided_load %arg11[%c1_105, %c0_106] {strides = array<i32: 2, 1>} : memref<288x32xf32, #tpu.memory_space<vmem>>, vector<144x32xf32>
    %91 = arith.maximumf %89, %90 : vector<144x32xf32>
    %c0_107 = arith.constant 0 : index
    %c0_108 = arith.constant 0 : index
    %92 = vector.load %arg12[%c0_107, %c0_108] : memref<144x32xf32, #tpu.memory_space<vmem>>, vector<144x32xf32>
    tpu.vector_store %arg12[%c0_107, %c0_108], %91 {strides = array<i32>} : memref<144x32xf32, #tpu.memory_space<vmem>>, vector<144x32xf32>,
    %c0_109 = arith.constant 0 : index
    %c0_110 = arith.constant 0 : index
    %93 = vector.load %arg12[%c0_109, %c0_110] : memref<144x32xf32, #tpu.memory_space<vmem>>, vector<8x32xf32>
    %c9 = arith.constant 9 : index
    %c0_111 = arith.constant 0 : index
    %94 = vector.load %arg12[%c9, %c0_111] : memref<144x32xf32, #tpu.memory_space<vmem>>, vector<8x32xf32>
    %95 = arith.maximumf %93, %94 : vector<8x32xf32>
    %96 = arith.truncf %95 : vector<8x32xf32> to vector<8x32xbf16>
    %c11 = arith.constant 11 : index
    %c0_112 = arith.constant 0 : index
    %97 = vector.load %arg7[%c11, %c0_112] : memref<102x32xbf16, #tpu.memory_space<vmem>>, vector<8x32xbf16>
    tpu.vector_store %arg7[%c11, %c0_112], %96 {strides = array<i32>} : memref<102x32xbf16, #tpu.memory_space<vmem>>, vector<8x32xbf16>,
    %c18_113 = arith.constant 18 : index
    %c0_114 = arith.constant 0 : index
    %98 = vector.load %arg12[%c18_113, %c0_114] : memref<144x32xf32, #tpu.memory_space<vmem>>, vector<8x32xf32>
    %c27 = arith.constant 27 : index
    %c0_115 = arith.constant 0 : index
    %99 = vector.load %arg12[%c27, %c0_115] : memref<144x32xf32, #tpu.memory_space<vmem>>, vector<8x32xf32>
    %100 = arith.maximumf %98, %99 : vector<8x32xf32>
    %101 = arith.truncf %100 : vector<8x32xf32> to vector<8x32xbf16>
    %c21 = arith.constant 21 : index
    %c0_116 = arith.constant 0 : index
    %102 = vector.load %arg7[%c21, %c0_116] : memref<102x32xbf16, #tpu.memory_space<vmem>>, vector<8x32xbf16>
    tpu.vector_store %arg7[%c21, %c0_116], %101 {strides = array<i32>} : memref<102x32xbf16, #tpu.memory_space<vmem>>, vector<8x32xbf16>,
    %c36_117 = arith.constant 36 : index
    %c0_118 = arith.constant 0 : index
    %103 = vector.load %arg12[%c36_117, %c0_118] : memref<144x32xf32, #tpu.memory_space<vmem>>, vector<8x32xf32>
    %c45 = arith.constant 45 : index
    %c0_119 = arith.constant 0 : index
    %104 = vector.load %arg12[%c45, %c0_119] : memref<144x32xf32, #tpu.memory_space<vmem>>, vector<8x32xf32>
    %105 = arith.maximumf %103, %104 : vector<8x32xf32>
    %106 = arith.truncf %105 : vector<8x32xf32> to vector<8x32xbf16>
    %c31 = arith.constant 31 : index
    %c0_120 = arith.constant 0 : index
    %107 = vector.load %arg7[%c31, %c0_120] : memref<102x32xbf16, #tpu.memory_space<vmem>>, vector<8x32xbf16>
    tpu.vector_store %arg7[%c31, %c0_120], %106 {strides = array<i32>} : memref<102x32xbf16, #tpu.memory_space<vmem>>, vector<8x32xbf16>,
    %c54 = arith.constant 54 : index
    %c0_121 = arith.constant 0 : index
    %108 = vector.load %arg12[%c54, %c0_121] : memref<144x32xf32, #tpu.memory_space<vmem>>, vector<8x32xf32>
    %c63 = arith.constant 63 : index
    %c0_122 = arith.constant 0 : index
    %109 = vector.load %arg12[%c63, %c0_122] : memref<144x32xf32, #tpu.memory_space<vmem>>, vector<8x32xf32>
    %110 = arith.maximumf %108, %109 : vector<8x32xf32>
    %111 = arith.truncf %110 : vector<8x32xf32> to vector<8x32xbf16>
    %c41 = arith.constant 41 : index
    %c0_123 = arith.constant 0 : index
    %112 = vector.load %arg7[%c41, %c0_123] : memref<102x32xbf16, #tpu.memory_space<vmem>>, vector<8x32xbf16>
    tpu.vector_store %arg7[%c41, %c0_123], %111 {strides = array<i32>} : memref<102x32xbf16, #tpu.memory_space<vmem>>, vector<8x32xbf16>,
    %c72 = arith.constant 72 : index
    %c0_124 = arith.constant 0 : index
    %113 = vector.load %arg12[%c72, %c0_124] : memref<144x32xf32, #tpu.memory_space<vmem>>, vector<8x32xf32>
    %c81 = arith.constant 81 : index
    %c0_125 = arith.constant 0 : index
    %114 = vector.load %arg12[%c81, %c0_125] : memref<144x32xf32, #tpu.memory_space<vmem>>, vector<8x32xf32>
    %115 = arith.maximumf %113, %114 : vector<8x32xf32>
    %116 = arith.truncf %115 : vector<8x32xf32> to vector<8x32xbf16>
    %c51 = arith.constant 51 : index
    %c0_126 = arith.constant 0 : index
    %117 = vector.load %arg7[%c51, %c0_126] : memref<102x32xbf16, #tpu.memory_space<vmem>>, vector<8x32xbf16>
    tpu.vector_store %arg7[%c51, %c0_126], %116 {strides = array<i32>} : memref<102x32xbf16, #tpu.memory_space<vmem>>, vector<8x32xbf16>,
    %c90 = arith.constant 90 : index
    %c0_127 = arith.constant 0 : index
    %118 = vector.load %arg12[%c90, %c0_127] : memref<144x32xf32, #tpu.memory_space<vmem>>, vector<8x32xf32>
    %c99 = arith.constant 99 : index
    %c0_128 = arith.constant 0 : index
    %119 = vector.load %arg12[%c99, %c0_128] : memref<144x32xf32, #tpu.memory_space<vmem>>, vector<8x32xf32>
    %120 = arith.maximumf %118, %119 : vector<8x32xf32>
    %121 = arith.truncf %120 : vector<8x32xf32> to vector<8x32xbf16>
    %c61 = arith.constant 61 : index
    %c0_129 = arith.constant 0 : index
    %122 = vector.load %arg7[%c61, %c0_129] : memref<102x32xbf16, #tpu.memory_space<vmem>>, vector<8x32xbf16>
    tpu.vector_store %arg7[%c61, %c0_129], %121 {strides = array<i32>} : memref<102x32xbf16, #tpu.memory_space<vmem>>, vector<8x32xbf16>,
    %c108 = arith.constant 108 : index
    %c0_130 = arith.constant 0 : index
    %123 = vector.load %arg12[%c108, %c0_130] : memref<144x32xf32, #tpu.memory_space<vmem>>, vector<8x32xf32>
    %c117 = arith.constant 117 : index
    %c0_131 = arith.constant 0 : index
    %124 = vector.load %arg12[%c117, %c0_131] : memref<144x32xf32, #tpu.memory_space<vmem>>, vector<8x32xf32>
    %125 = arith.maximumf %123, %124 : vector<8x32xf32>
    %126 = arith.truncf %125 : vector<8x32xf32> to vector<8x32xbf16>
    %c71 = arith.constant 71 : index
    %c0_132 = arith.constant 0 : index
    %127 = vector.load %arg7[%c71, %c0_132] : memref<102x32xbf16, #tpu.memory_space<vmem>>, vector<8x32xbf16>
    tpu.vector_store %arg7[%c71, %c0_132], %126 {strides = array<i32>} : memref<102x32xbf16, #tpu.memory_space<vmem>>, vector<8x32xbf16>,
    %c126 = arith.constant 126 : index
    %c0_133 = arith.constant 0 : index
    %128 = vector.load %arg12[%c126, %c0_133] : memref<144x32xf32, #tpu.memory_space<vmem>>, vector<8x32xf32>
    %c135 = arith.constant 135 : index
    %c0_134 = arith.constant 0 : index
    %129 = vector.load %arg12[%c135, %c0_134] : memref<144x32xf32, #tpu.memory_space<vmem>>, vector<8x32xf32>
    %130 = arith.maximumf %128, %129 : vector<8x32xf32>
    %131 = arith.truncf %130 : vector<8x32xf32> to vector<8x32xbf16>
    %c81_135 = arith.constant 81 : index
    %c0_136 = arith.constant 0 : index
    %132 = vector.load %arg7[%c81_135, %c0_136] : memref<102x32xbf16, #tpu.memory_space<vmem>>, vector<8x32xbf16>
    tpu.vector_store %arg7[%c81_135, %c0_136], %131 {strides = array<i32>} : memref<102x32xbf16, #tpu.memory_space<vmem>>, vector<8x32xbf16>,
    %c0_137 = arith.constant 0 : index
    %c0_138 = arith.constant 0 : index
    %133 = vector.load %arg7[%c0_137, %c0_138] : memref<102x32xbf16, #tpu.memory_space<vmem>>, vector<80x32xbf16>
    %c0_139 = arith.constant 0 : index
    %c0_140 = arith.constant 0 : index
    %134 = vector.load %arg10[%c0_139, %c0_140] : memref<288x288xbf16, #tpu.memory_space<vmem>>, vector<80x32xbf16>
    tpu.vector_store %arg10[%c0_139, %c0_140], %133 {strides = array<i32>} : memref<288x288xbf16, #tpu.memory_space<vmem>>, vector<80x32xbf16>,
    %c1_141 = arith.constant 1 : index
    %c0_142 = arith.constant 0 : index
    %135 = vector.load %arg7[%c1_141, %c0_142] : memref<102x32xbf16, #tpu.memory_space<vmem>>, vector<80x32xbf16>
    %c0_143 = arith.constant 0 : index
    %c32_144 = arith.constant 32 : index
    %136 = vector.load %arg10[%c0_143, %c32_144] : memref<288x288xbf16, #tpu.memory_space<vmem>>, vector<80x32xbf16>
    tpu.vector_store %arg10[%c0_143, %c32_144], %135 {strides = array<i32>} : memref<288x288xbf16, #tpu.memory_space<vmem>>, vector<80x32xbf16>,
    %c2_145 = arith.constant 2 : index
    %c0_146 = arith.constant 0 : index
    %137 = vector.load %arg7[%c2_145, %c0_146] : memref<102x32xbf16, #tpu.memory_space<vmem>>, vector<80x32xbf16>
    %c0_147 = arith.constant 0 : index
    %c64_148 = arith.constant 64 : index
    %138 = vector.load %arg10[%c0_147, %c64_148] : memref<288x288xbf16, #tpu.memory_space<vmem>>, vector<80x32xbf16>
    tpu.vector_store %arg10[%c0_147, %c64_148], %137 {strides = array<i32>} : memref<288x288xbf16, #tpu.memory_space<vmem>>, vector<80x32xbf16>,
    %c10 = arith.constant 10 : index
    %c0_149 = arith.constant 0 : index
    %139 = vector.load %arg7[%c10, %c0_149] : memref<102x32xbf16, #tpu.memory_space<vmem>>, vector<80x32xbf16>
    %c0_150 = arith.constant 0 : index
    %c96_151 = arith.constant 96 : index
    %140 = vector.load %arg10[%c0_150, %c96_151] : memref<288x288xbf16, #tpu.memory_space<vmem>>, vector<80x32xbf16>
    tpu.vector_store %arg10[%c0_150, %c96_151], %139 {strides = array<i32>} : memref<288x288xbf16, #tpu.memory_space<vmem>>, vector<80x32xbf16>,
    %c11_152 = arith.constant 11 : index
    %c0_153 = arith.constant 0 : index
    %141 = vector.load %arg7[%c11_152, %c0_153] : memref<102x32xbf16, #tpu.memory_space<vmem>>, vector<80x32xbf16>
    %c0_154 = arith.constant 0 : index
    %c128_155 = arith.constant 128 : index
    %142 = vector.load %arg10[%c0_154, %c128_155] : memref<288x288xbf16, #tpu.memory_space<vmem>>, vector<80x32xbf16>
    tpu.vector_store %arg10[%c0_154, %c128_155], %141 {strides = array<i32>} : memref<288x288xbf16, #tpu.memory_space<vmem>>, vector<80x32xbf16>,
    %c12 = arith.constant 12 : index
    %c0_156 = arith.constant 0 : index
    %143 = vector.load %arg7[%c12, %c0_156] : memref<102x32xbf16, #tpu.memory_space<vmem>>, vector<80x32xbf16>
    %c0_157 = arith.constant 0 : index
    %c160_158 = arith.constant 160 : index
    %144 = vector.load %arg10[%c0_157, %c160_158] : memref<288x288xbf16, #tpu.memory_space<vmem>>, vector<80x32xbf16>
    tpu.vector_store %arg10[%c0_157, %c160_158], %143 {strides = array<i32>} : memref<288x288xbf16, #tpu.memory_space<vmem>>, vector<80x32xbf16>,
    %c20_159 = arith.constant 20 : index
    %c0_160 = arith.constant 0 : index
    %145 = vector.load %arg7[%c20_159, %c0_160] : memref<102x32xbf16, #tpu.memory_space<vmem>>, vector<80x32xbf16>
    %c0_161 = arith.constant 0 : index
    %c192_162 = arith.constant 192 : index
    %146 = vector.load %arg10[%c0_161, %c192_162] : memref<288x288xbf16, #tpu.memory_space<vmem>>, vector<80x32xbf16>
    tpu.vector_store %arg10[%c0_161, %c192_162], %145 {strides = array<i32>} : memref<288x288xbf16, #tpu.memory_space<vmem>>, vector<80x32xbf16>,
    %c21_163 = arith.constant 21 : index
    %c0_164 = arith.constant 0 : index
    %147 = vector.load %arg7[%c21_163, %c0_164] : memref<102x32xbf16, #tpu.memory_space<vmem>>, vector<80x32xbf16>
    %c0_165 = arith.constant 0 : index
    %c224_166 = arith.constant 224 : index
    %148 = vector.load %arg10[%c0_165, %c224_166] : memref<288x288xbf16, #tpu.memory_space<vmem>>, vector<80x32xbf16>
    tpu.vector_store %arg10[%c0_165, %c224_166], %147 {strides = array<i32>} : memref<288x288xbf16, #tpu.memory_space<vmem>>, vector<80x32xbf16>,
    %c22 = arith.constant 22 : index
    %c0_167 = arith.constant 0 : index
    %149 = vector.load %arg7[%c22, %c0_167] : memref<102x32xbf16, #tpu.memory_space<vmem>>, vector<80x32xbf16>
    %c0_168 = arith.constant 0 : index
    %c256_169 = arith.constant 256 : index
    %150 = vector.load %arg10[%c0_168, %c256_169] : memref<288x288xbf16, #tpu.memory_space<vmem>>, vector<80x32xbf16>
    tpu.vector_store %arg10[%c0_168, %c256_169], %149 {strides = array<i32>} : memref<288x288xbf16, #tpu.memory_space<vmem>>, vector<80x32xbf16>,
    %c0_170 = arith.constant 0 : index
    %c0_171 = arith.constant 0 : index
    %151 = vector.load %arg10[%c0_170, %c0_171] : memref<288x288xbf16, #tpu.memory_space<vmem>>, vector<80x288xbf16>
    %c1_172 = arith.constant 1 : index
    %c0_173 = arith.constant 0 : index
    %c0_174 = arith.constant 0 : index
    %152 = vector.load %arg2[%c1_172, %c0_173, %c0_174] : memref<4x288x32xbf16, #tpu.memory_space<vmem>>, vector<1x288x32xbf16>
    %153 = vector.shape_cast %152 : vector<1x288x32xbf16> to vector<288x32xbf16>
    %cst_175 = arith.constant dense<0.000000e+00> : vector<80x32xf32>
    %154 = tpu.matmul %151, %153, %cst_175 {dimension_numbers = #tpu.dot_dimension_numbers<[1], [0], [0], [1], [0, 0, 1, 1], [], []>} : vector<80x288xbf16>, vector<288x32xbf16>, vector<80x32xf32> -> vector<80x32xf32>
    %c1_176 = arith.constant 1 : index
    %c0_177 = arith.constant 0 : index
    %c0_178 = arith.constant 0 : index
    %155 = vector.load %arg3[%c1_176, %c0_177, %c0_178] : memref<4x1x32xf32, #tpu.memory_space<vmem>>, vector<1x1x32xf32>
    %156 = vector.shape_cast %155 : vector<1x1x32xf32> to vector<1x32xf32>
    %157 = vector.broadcast %156 : vector<1x32xf32> to vector<80x32xf32>
    %158 = arith.mulf %154, %157 : vector<80x32xf32>
    %c1_179 = arith.constant 1 : index
    %c0_180 = arith.constant 0 : index
    %c0_181 = arith.constant 0 : index
    %159 = vector.load %arg4[%c1_179, %c0_180, %c0_181] : memref<4x1x32xf32, #tpu.memory_space<vmem>>, vector<1x1x32xf32>
    %160 = vector.shape_cast %159 : vector<1x1x32xf32> to vector<1x32xf32>
    %161 = vector.broadcast %160 : vector<1x32xf32> to vector<80x32xf32>
    %162 = arith.addf %158, %161 : vector<80x32xf32>
    %cst_182 = arith.constant 0.000000e+00 : f32
    %163 = vector.broadcast %cst_182 : f32 to vector<80x32xf32>
    %164 = arith.maximumf %162, %163 : vector<80x32xf32>
    %c0_183 = arith.constant 0 : index
    %c0_184 = arith.constant 0 : index
    %165 = vector.load %arg11[%c0_183, %c0_184] : memref<288x32xf32, #tpu.memory_space<vmem>>, vector<80x32xf32>
    tpu.vector_store %arg11[%c0_183, %c0_184], %164 {strides = array<i32>} : memref<288x32xf32, #tpu.memory_space<vmem>>, vector<80x32xf32>,
    %c0_185 = arith.constant 0 : index
    %c0_186 = arith.constant 0 : index
    %166 = tpu.strided_load %arg11[%c0_185, %c0_186] {strides = array<i32: 2, 1>} : memref<288x32xf32, #tpu.memory_space<vmem>>, vector<40x32xf32>
    %c1_187 = arith.constant 1 : index
    %c0_188 = arith.constant 0 : index
    %167 = tpu.strided_load %arg11[%c1_187, %c0_188] {strides = array<i32: 2, 1>} : memref<288x32xf32, #tpu.memory_space<vmem>>, vector<40x32xf32>
    %168 = arith.maximumf %166, %167 : vector<40x32xf32>
    %c0_189 = arith.constant 0 : index
    %c0_190 = arith.constant 0 : index
    %169 = vector.load %arg12[%c0_189, %c0_190] : memref<144x32xf32, #tpu.memory_space<vmem>>, vector<40x32xf32>
    tpu.vector_store %arg12[%c0_189, %c0_190], %168 {strides = array<i32>} : memref<144x32xf32, #tpu.memory_space<vmem>>, vector<40x32xf32>,
    %c0_191 = arith.constant 0 : index
    %c0_192 = arith.constant 0 : index
    %170 = vector.load %arg12[%c0_191, %c0_192] : memref<144x32xf32, #tpu.memory_space<vmem>>, vector<4x32xf32>
    %c5 = arith.constant 5 : index
    %c0_193 = arith.constant 0 : index
    %171 = vector.load %arg12[%c5, %c0_193] : memref<144x32xf32, #tpu.memory_space<vmem>>, vector<4x32xf32>
    %172 = arith.maximumf %170, %171 : vector<4x32xf32>
    %173 = arith.truncf %172 : vector<4x32xf32> to vector<4x32xbf16>
    %c7 = arith.constant 7 : index
    %c0_194 = arith.constant 0 : index
    %174 = vector.load %arg8[%c7, %c0_194] : memref<38x32xbf16, #tpu.memory_space<vmem>>, vector<4x32xbf16>
    tpu.vector_store %arg8[%c7, %c0_194], %173 {strides = array<i32>} : memref<38x32xbf16, #tpu.memory_space<vmem>>, vector<4x32xbf16>,
    %c10_195 = arith.constant 10 : index
    %c0_196 = arith.constant 0 : index
    %175 = vector.load %arg12[%c10_195, %c0_196] : memref<144x32xf32, #tpu.memory_space<vmem>>, vector<4x32xf32>
    %c15 = arith.constant 15 : index
    %c0_197 = arith.constant 0 : index
    %176 = vector.load %arg12[%c15, %c0_197] : memref<144x32xf32, #tpu.memory_space<vmem>>, vector<4x32xf32>
    %177 = arith.maximumf %175, %176 : vector<4x32xf32>
    %178 = arith.truncf %177 : vector<4x32xf32> to vector<4x32xbf16>
    %c13 = arith.constant 13 : index
    %c0_198 = arith.constant 0 : index
    %179 = vector.load %arg8[%c13, %c0_198] : memref<38x32xbf16, #tpu.memory_space<vmem>>, vector<4x32xbf16>
    tpu.vector_store %arg8[%c13, %c0_198], %178 {strides = array<i32>} : memref<38x32xbf16, #tpu.memory_space<vmem>>, vector<4x32xbf16>,
    %c20_199 = arith.constant 20 : index
    %c0_200 = arith.constant 0 : index
    %180 = vector.load %arg12[%c20_199, %c0_200] : memref<144x32xf32, #tpu.memory_space<vmem>>, vector<4x32xf32>
    %c25 = arith.constant 25 : index
    %c0_201 = arith.constant 0 : index
    %181 = vector.load %arg12[%c25, %c0_201] : memref<144x32xf32, #tpu.memory_space<vmem>>, vector<4x32xf32>
    %182 = arith.maximumf %180, %181 : vector<4x32xf32>
    %183 = arith.truncf %182 : vector<4x32xf32> to vector<4x32xbf16>
    %c19_202 = arith.constant 19 : index
    %c0_203 = arith.constant 0 : index
    %184 = vector.load %arg8[%c19_202, %c0_203] : memref<38x32xbf16, #tpu.memory_space<vmem>>, vector<4x32xbf16>
    tpu.vector_store %arg8[%c19_202, %c0_203], %183 {strides = array<i32>} : memref<38x32xbf16, #tpu.memory_space<vmem>>, vector<4x32xbf16>,
    %c30 = arith.constant 30 : index
    %c0_204 = arith.constant 0 : index
    %185 = vector.load %arg12[%c30, %c0_204] : memref<144x32xf32, #tpu.memory_space<vmem>>, vector<4x32xf32>
    %c35 = arith.constant 35 : index
    %c0_205 = arith.constant 0 : index
    %186 = vector.load %arg12[%c35, %c0_205] : memref<144x32xf32, #tpu.memory_space<vmem>>, vector<4x32xf32>
    %187 = arith.maximumf %185, %186 : vector<4x32xf32>
    %188 = arith.truncf %187 : vector<4x32xf32> to vector<4x32xbf16>
    %c25_206 = arith.constant 25 : index
    %c0_207 = arith.constant 0 : index
    %189 = vector.load %arg8[%c25_206, %c0_207] : memref<38x32xbf16, #tpu.memory_space<vmem>>, vector<4x32xbf16>
    tpu.vector_store %arg8[%c25_206, %c0_207], %188 {strides = array<i32>} : memref<38x32xbf16, #tpu.memory_space<vmem>>, vector<4x32xbf16>,
    %c0_208 = arith.constant 0 : index
    %c0_209 = arith.constant 0 : index
    %190 = vector.load %arg8[%c0_208, %c0_209] : memref<38x32xbf16, #tpu.memory_space<vmem>>, vector<24x32xbf16>
    %c0_210 = arith.constant 0 : index
    %c0_211 = arith.constant 0 : index
    %191 = vector.load %arg10[%c0_210, %c0_211] : memref<288x288xbf16, #tpu.memory_space<vmem>>, vector<24x32xbf16>
    tpu.vector_store %arg10[%c0_210, %c0_211], %190 {strides = array<i32>} : memref<288x288xbf16, #tpu.memory_space<vmem>>, vector<24x32xbf16>,
    %c1_212 = arith.constant 1 : index
    %c0_213 = arith.constant 0 : index
    %192 = vector.load %arg8[%c1_212, %c0_213] : memref<38x32xbf16, #tpu.memory_space<vmem>>, vector<24x32xbf16>
    %c0_214 = arith.constant 0 : index
    %c32_215 = arith.constant 32 : index
    %193 = vector.load %arg10[%c0_214, %c32_215] : memref<288x288xbf16, #tpu.memory_space<vmem>>, vector<24x32xbf16>
    tpu.vector_store %arg10[%c0_214, %c32_215], %192 {strides = array<i32>} : memref<288x288xbf16, #tpu.memory_space<vmem>>, vector<24x32xbf16>,
    %c2_216 = arith.constant 2 : index
    %c0_217 = arith.constant 0 : index
    %194 = vector.load %arg8[%c2_216, %c0_217] : memref<38x32xbf16, #tpu.memory_space<vmem>>, vector<24x32xbf16>
    %c0_218 = arith.constant 0 : index
    %c64_219 = arith.constant 64 : index
    %195 = vector.load %arg10[%c0_218, %c64_219] : memref<288x288xbf16, #tpu.memory_space<vmem>>, vector<24x32xbf16>
    tpu.vector_store %arg10[%c0_218, %c64_219], %194 {strides = array<i32>} : memref<288x288xbf16, #tpu.memory_space<vmem>>, vector<24x32xbf16>,
    %c6 = arith.constant 6 : index
    %c0_220 = arith.constant 0 : index
    %196 = vector.load %arg8[%c6, %c0_220] : memref<38x32xbf16, #tpu.memory_space<vmem>>, vector<24x32xbf16>
    %c0_221 = arith.constant 0 : index
    %c96_222 = arith.constant 96 : index
    %197 = vector.load %arg10[%c0_221, %c96_222] : memref<288x288xbf16, #tpu.memory_space<vmem>>, vector<24x32xbf16>
    tpu.vector_store %arg10[%c0_221, %c96_222], %196 {strides = array<i32>} : memref<288x288xbf16, #tpu.memory_space<vmem>>, vector<24x32xbf16>,
    %c7_223 = arith.constant 7 : index
    %c0_224 = arith.constant 0 : index
    %198 = vector.load %arg8[%c7_223, %c0_224] : memref<38x32xbf16, #tpu.memory_space<vmem>>, vector<24x32xbf16>
    %c0_225 = arith.constant 0 : index
    %c128_226 = arith.constant 128 : index
    %199 = vector.load %arg10[%c0_225, %c128_226] : memref<288x288xbf16, #tpu.memory_space<vmem>>, vector<24x32xbf16>
    tpu.vector_store %arg10[%c0_225, %c128_226], %198 {strides = array<i32>} : memref<288x288xbf16, #tpu.memory_space<vmem>>, vector<24x32xbf16>,
    %c8 = arith.constant 8 : index
    %c0_227 = arith.constant 0 : index
    %200 = vector.load %arg8[%c8, %c0_227] : memref<38x32xbf16, #tpu.memory_space<vmem>>, vector<24x32xbf16>
    %c0_228 = arith.constant 0 : index
    %c160_229 = arith.constant 160 : index
    %201 = vector.load %arg10[%c0_228, %c160_229] : memref<288x288xbf16, #tpu.memory_space<vmem>>, vector<24x32xbf16>
    tpu.vector_store %arg10[%c0_228, %c160_229], %200 {strides = array<i32>} : memref<288x288xbf16, #tpu.memory_space<vmem>>, vector<24x32xbf16>,
    %c12_230 = arith.constant 12 : index
    %c0_231 = arith.constant 0 : index
    %202 = vector.load %arg8[%c12_230, %c0_231] : memref<38x32xbf16, #tpu.memory_space<vmem>>, vector<24x32xbf16>
    %c0_232 = arith.constant 0 : index
    %c192_233 = arith.constant 192 : index
    %203 = vector.load %arg10[%c0_232, %c192_233] : memref<288x288xbf16, #tpu.memory_space<vmem>>, vector<24x32xbf16>
    tpu.vector_store %arg10[%c0_232, %c192_233], %202 {strides = array<i32>} : memref<288x288xbf16, #tpu.memory_space<vmem>>, vector<24x32xbf16>,
    %c13_234 = arith.constant 13 : index
    %c0_235 = arith.constant 0 : index
    %204 = vector.load %arg8[%c13_234, %c0_235] : memref<38x32xbf16, #tpu.memory_space<vmem>>, vector<24x32xbf16>
    %c0_236 = arith.constant 0 : index
    %c224_237 = arith.constant 224 : index
    %205 = vector.load %arg10[%c0_236, %c224_237] : memref<288x288xbf16, #tpu.memory_space<vmem>>, vector<24x32xbf16>
    tpu.vector_store %arg10[%c0_236, %c224_237], %204 {strides = array<i32>} : memref<288x288xbf16, #tpu.memory_space<vmem>>, vector<24x32xbf16>,
    %c14 = arith.constant 14 : index
    %c0_238 = arith.constant 0 : index
    %206 = vector.load %arg8[%c14, %c0_238] : memref<38x32xbf16, #tpu.memory_space<vmem>>, vector<24x32xbf16>
    %c0_239 = arith.constant 0 : index
    %c256_240 = arith.constant 256 : index
    %207 = vector.load %arg10[%c0_239, %c256_240] : memref<288x288xbf16, #tpu.memory_space<vmem>>, vector<24x32xbf16>
    tpu.vector_store %arg10[%c0_239, %c256_240], %206 {strides = array<i32>} : memref<288x288xbf16, #tpu.memory_space<vmem>>, vector<24x32xbf16>,
    %c0_241 = arith.constant 0 : index
    %c0_242 = arith.constant 0 : index
    %208 = vector.load %arg10[%c0_241, %c0_242] : memref<288x288xbf16, #tpu.memory_space<vmem>>, vector<24x288xbf16>
    %c2_243 = arith.constant 2 : index
    %c0_244 = arith.constant 0 : index
    %c0_245 = arith.constant 0 : index
    %209 = vector.load %arg2[%c2_243, %c0_244, %c0_245] : memref<4x288x32xbf16, #tpu.memory_space<vmem>>, vector<1x288x32xbf16>
    %210 = vector.shape_cast %209 : vector<1x288x32xbf16> to vector<288x32xbf16>
    %cst_246 = arith.constant dense<0.000000e+00> : vector<24x32xf32>
    %211 = tpu.matmul %208, %210, %cst_246 {dimension_numbers = #tpu.dot_dimension_numbers<[1], [0], [0], [1], [0, 0, 1, 1], [], []>} : vector<24x288xbf16>, vector<288x32xbf16>, vector<24x32xf32> -> vector<24x32xf32>
    %c2_247 = arith.constant 2 : index
    %c0_248 = arith.constant 0 : index
    %c0_249 = arith.constant 0 : index
    %212 = vector.load %arg3[%c2_247, %c0_248, %c0_249] : memref<4x1x32xf32, #tpu.memory_space<vmem>>, vector<1x1x32xf32>
    %213 = vector.shape_cast %212 : vector<1x1x32xf32> to vector<1x32xf32>
    %214 = vector.broadcast %213 : vector<1x32xf32> to vector<24x32xf32>
    %215 = arith.mulf %211, %214 : vector<24x32xf32>
    %c2_250 = arith.constant 2 : index
    %c0_251 = arith.constant 0 : index
    %c0_252 = arith.constant 0 : index
    %216 = vector.load %arg4[%c2_250, %c0_251, %c0_252] : memref<4x1x32xf32, #tpu.memory_space<vmem>>, vector<1x1x32xf32>
    %217 = vector.shape_cast %216 : vector<1x1x32xf32> to vector<1x32xf32>
    %218 = vector.broadcast %217 : vector<1x32xf32> to vector<24x32xf32>
    %219 = arith.addf %215, %218 : vector<24x32xf32>
    %cst_253 = arith.constant 0.000000e+00 : f32
    %220 = vector.broadcast %cst_253 : f32 to vector<24x32xf32>
    %221 = arith.maximumf %219, %220 : vector<24x32xf32>
    %c0_254 = arith.constant 0 : index
    %c0_255 = arith.constant 0 : index
    %222 = vector.load %arg11[%c0_254, %c0_255] : memref<288x32xf32, #tpu.memory_space<vmem>>, vector<24x32xf32>
    tpu.vector_store %arg11[%c0_254, %c0_255], %221 {strides = array<i32>} : memref<288x32xf32, #tpu.memory_space<vmem>>, vector<24x32xf32>,
    %c0_256 = arith.constant 0 : index
    %c0_257 = arith.constant 0 : index
    %223 = tpu.strided_load %arg11[%c0_256, %c0_257] {strides = array<i32: 2, 1>} : memref<288x32xf32, #tpu.memory_space<vmem>>, vector<12x32xf32>
    %c1_258 = arith.constant 1 : index
    %c0_259 = arith.constant 0 : index
    %224 = tpu.strided_load %arg11[%c1_258, %c0_259] {strides = array<i32: 2, 1>} : memref<288x32xf32, #tpu.memory_space<vmem>>, vector<12x32xf32>
    %225 = arith.maximumf %223, %224 : vector<12x32xf32>
    %c0_260 = arith.constant 0 : index
    %c0_261 = arith.constant 0 : index
    %226 = vector.load %arg12[%c0_260, %c0_261] : memref<144x32xf32, #tpu.memory_space<vmem>>, vector<12x32xf32>
    tpu.vector_store %arg12[%c0_260, %c0_261], %225 {strides = array<i32>} : memref<144x32xf32, #tpu.memory_space<vmem>>, vector<12x32xf32>,
    %c0_262 = arith.constant 0 : index
    %c0_263 = arith.constant 0 : index
    %227 = vector.load %arg12[%c0_262, %c0_263] : memref<144x32xf32, #tpu.memory_space<vmem>>, vector<2x32xf32>
    %c3 = arith.constant 3 : index
    %c0_264 = arith.constant 0 : index
    %228 = vector.load %arg12[%c3, %c0_264] : memref<144x32xf32, #tpu.memory_space<vmem>>, vector<2x32xf32>
    %229 = arith.maximumf %227, %228 : vector<2x32xf32>
    %230 = arith.truncf %229 : vector<2x32xf32> to vector<2x32xbf16>
    %c5_265 = arith.constant 5 : index
    %c0_266 = arith.constant 0 : index
    %231 = vector.load %arg9[%c5_265, %c0_266] : memref<18x32xbf16, #tpu.memory_space<vmem>>, vector<2x32xbf16>
    tpu.vector_store %arg9[%c5_265, %c0_266], %230 {strides = array<i32>} : memref<18x32xbf16, #tpu.memory_space<vmem>>, vector<2x32xbf16>,
    %c6_267 = arith.constant 6 : index
    %c0_268 = arith.constant 0 : index
    %232 = vector.load %arg12[%c6_267, %c0_268] : memref<144x32xf32, #tpu.memory_space<vmem>>, vector<2x32xf32>
    %c9_269 = arith.constant 9 : index
    %c0_270 = arith.constant 0 : index
    %233 = vector.load %arg12[%c9_269, %c0_270] : memref<144x32xf32, #tpu.memory_space<vmem>>, vector<2x32xf32>
    %234 = arith.maximumf %232, %233 : vector<2x32xf32>
    %235 = arith.truncf %234 : vector<2x32xf32> to vector<2x32xbf16>
    %c9_271 = arith.constant 9 : index
    %c0_272 = arith.constant 0 : index
    %236 = vector.load %arg9[%c9_271, %c0_272] : memref<18x32xbf16, #tpu.memory_space<vmem>>, vector<2x32xbf16>
    tpu.vector_store %arg9[%c9_271, %c0_272], %235 {strides = array<i32>} : memref<18x32xbf16, #tpu.memory_space<vmem>>, vector<2x32xbf16>,
    %c0_273 = arith.constant 0 : index
    %c0_274 = arith.constant 0 : index
    %237 = vector.load %arg9[%c0_273, %c0_274] : memref<18x32xbf16, #tpu.memory_space<vmem>>, vector<8x32xbf16>
    %c0_275 = arith.constant 0 : index
    %c0_276 = arith.constant 0 : index
    %238 = vector.load %arg10[%c0_275, %c0_276] : memref<288x288xbf16, #tpu.memory_space<vmem>>, vector<8x32xbf16>
    tpu.vector_store %arg10[%c0_275, %c0_276], %237 {strides = array<i32>} : memref<288x288xbf16, #tpu.memory_space<vmem>>, vector<8x32xbf16>,
    %c1_277 = arith.constant 1 : index
    %c0_278 = arith.constant 0 : index
    %239 = vector.load %arg9[%c1_277, %c0_278] : memref<18x32xbf16, #tpu.memory_space<vmem>>, vector<8x32xbf16>
    %c0_279 = arith.constant 0 : index
    %c32_280 = arith.constant 32 : index
    %240 = vector.load %arg10[%c0_279, %c32_280] : memref<288x288xbf16, #tpu.memory_space<vmem>>, vector<8x32xbf16>
    tpu.vector_store %arg10[%c0_279, %c32_280], %239 {strides = array<i32>} : memref<288x288xbf16, #tpu.memory_space<vmem>>, vector<8x32xbf16>,
    %c2_281 = arith.constant 2 : index
    %c0_282 = arith.constant 0 : index
    %241 = vector.load %arg9[%c2_281, %c0_282] : memref<18x32xbf16, #tpu.memory_space<vmem>>, vector<8x32xbf16>
    %c0_283 = arith.constant 0 : index
    %c64_284 = arith.constant 64 : index
    %242 = vector.load %arg10[%c0_283, %c64_284] : memref<288x288xbf16, #tpu.memory_space<vmem>>, vector<8x32xbf16>
    tpu.vector_store %arg10[%c0_283, %c64_284], %241 {strides = array<i32>} : memref<288x288xbf16, #tpu.memory_space<vmem>>, vector<8x32xbf16>,
    %c4 = arith.constant 4 : index
    %c0_285 = arith.constant 0 : index
    %243 = vector.load %arg9[%c4, %c0_285] : memref<18x32xbf16, #tpu.memory_space<vmem>>, vector<8x32xbf16>
    %c0_286 = arith.constant 0 : index
    %c96_287 = arith.constant 96 : index
    %244 = vector.load %arg10[%c0_286, %c96_287] : memref<288x288xbf16, #tpu.memory_space<vmem>>, vector<8x32xbf16>
    tpu.vector_store %arg10[%c0_286, %c96_287], %243 {strides = array<i32>} : memref<288x288xbf16, #tpu.memory_space<vmem>>, vector<8x32xbf16>,
    %c5_288 = arith.constant 5 : index
    %c0_289 = arith.constant 0 : index
    %245 = vector.load %arg9[%c5_288, %c0_289] : memref<18x32xbf16, #tpu.memory_space<vmem>>, vector<8x32xbf16>
    %c0_290 = arith.constant 0 : index
    %c128_291 = arith.constant 128 : index
    %246 = vector.load %arg10[%c0_290, %c128_291] : memref<288x288xbf16, #tpu.memory_space<vmem>>, vector<8x32xbf16>
    tpu.vector_store %arg10[%c0_290, %c128_291], %245 {strides = array<i32>} : memref<288x288xbf16, #tpu.memory_space<vmem>>, vector<8x32xbf16>,
    %c6_292 = arith.constant 6 : index
    %c0_293 = arith.constant 0 : index
    %247 = vector.load %arg9[%c6_292, %c0_293] : memref<18x32xbf16, #tpu.memory_space<vmem>>, vector<8x32xbf16>
    %c0_294 = arith.constant 0 : index
    %c160_295 = arith.constant 160 : index
    %248 = vector.load %arg10[%c0_294, %c160_295] : memref<288x288xbf16, #tpu.memory_space<vmem>>, vector<8x32xbf16>
    tpu.vector_store %arg10[%c0_294, %c160_295], %247 {strides = array<i32>} : memref<288x288xbf16, #tpu.memory_space<vmem>>, vector<8x32xbf16>,
    %c8_296 = arith.constant 8 : index
    %c0_297 = arith.constant 0 : index
    %249 = vector.load %arg9[%c8_296, %c0_297] : memref<18x32xbf16, #tpu.memory_space<vmem>>, vector<8x32xbf16>
    %c0_298 = arith.constant 0 : index
    %c192_299 = arith.constant 192 : index
    %250 = vector.load %arg10[%c0_298, %c192_299] : memref<288x288xbf16, #tpu.memory_space<vmem>>, vector<8x32xbf16>
    tpu.vector_store %arg10[%c0_298, %c192_299], %249 {strides = array<i32>} : memref<288x288xbf16, #tpu.memory_space<vmem>>, vector<8x32xbf16>,
    %c9_300 = arith.constant 9 : index
    %c0_301 = arith.constant 0 : index
    %251 = vector.load %arg9[%c9_300, %c0_301] : memref<18x32xbf16, #tpu.memory_space<vmem>>, vector<8x32xbf16>
    %c0_302 = arith.constant 0 : index
    %c224_303 = arith.constant 224 : index
    %252 = vector.load %arg10[%c0_302, %c224_303] : memref<288x288xbf16, #tpu.memory_space<vmem>>, vector<8x32xbf16>
    tpu.vector_store %arg10[%c0_302, %c224_303], %251 {strides = array<i32>} : memref<288x288xbf16, #tpu.memory_space<vmem>>, vector<8x32xbf16>,
    %c10_304 = arith.constant 10 : index
    %c0_305 = arith.constant 0 : index
    %253 = vector.load %arg9[%c10_304, %c0_305] : memref<18x32xbf16, #tpu.memory_space<vmem>>, vector<8x32xbf16>
    %c0_306 = arith.constant 0 : index
    %c256_307 = arith.constant 256 : index
    %254 = vector.load %arg10[%c0_306, %c256_307] : memref<288x288xbf16, #tpu.memory_space<vmem>>, vector<8x32xbf16>
    tpu.vector_store %arg10[%c0_306, %c256_307], %253 {strides = array<i32>} : memref<288x288xbf16, #tpu.memory_space<vmem>>, vector<8x32xbf16>,
    %c0_308 = arith.constant 0 : index
    %c0_309 = arith.constant 0 : index
    %255 = vector.load %arg10[%c0_308, %c0_309] : memref<288x288xbf16, #tpu.memory_space<vmem>>, vector<8x288xbf16>
    %c3_310 = arith.constant 3 : index
    %c0_311 = arith.constant 0 : index
    %c0_312 = arith.constant 0 : index
    %256 = vector.load %arg2[%c3_310, %c0_311, %c0_312] : memref<4x288x32xbf16, #tpu.memory_space<vmem>>, vector<1x288x32xbf16>
    %257 = vector.shape_cast %256 : vector<1x288x32xbf16> to vector<288x32xbf16>
    %cst_313 = arith.constant dense<0.000000e+00> : vector<8x32xf32>
    %258 = tpu.matmul %255, %257, %cst_313 {dimension_numbers = #tpu.dot_dimension_numbers<[1], [0], [0], [1], [0, 0, 1, 1], [], []>} : vector<8x288xbf16>, vector<288x32xbf16>, vector<8x32xf32> -> vector<8x32xf32>
    %c3_314 = arith.constant 3 : index
    %c0_315 = arith.constant 0 : index
    %c0_316 = arith.constant 0 : index
    %259 = vector.load %arg3[%c3_314, %c0_315, %c0_316] : memref<4x1x32xf32, #tpu.memory_space<vmem>>, vector<1x1x32xf32>
    %260 = vector.shape_cast %259 : vector<1x1x32xf32> to vector<1x32xf32>
    %261 = vector.broadcast %260 : vector<1x32xf32> to vector<8x32xf32>
    %262 = arith.mulf %258, %261 : vector<8x32xf32>
    %c3_317 = arith.constant 3 : index
    %c0_318 = arith.constant 0 : index
    %c0_319 = arith.constant 0 : index
    %263 = vector.load %arg4[%c3_317, %c0_318, %c0_319] : memref<4x1x32xf32, #tpu.memory_space<vmem>>, vector<1x1x32xf32>
    %264 = vector.shape_cast %263 : vector<1x1x32xf32> to vector<1x32xf32>
    %265 = vector.broadcast %264 : vector<1x32xf32> to vector<8x32xf32>
    %266 = arith.addf %262, %265 : vector<8x32xf32>
    %cst_320 = arith.constant 0.000000e+00 : f32
    %267 = vector.broadcast %cst_320 : f32 to vector<8x32xf32>
    %268 = arith.maximumf %266, %267 : vector<8x32xf32>
    %c0_321 = arith.constant 0 : index
    %c0_322 = arith.constant 0 : index
    %269 = vector.load %arg11[%c0_321, %c0_322] : memref<288x32xf32, #tpu.memory_space<vmem>>, vector<8x32xf32>
    tpu.vector_store %arg11[%c0_321, %c0_322], %268 {strides = array<i32>} : memref<288x32xf32, #tpu.memory_space<vmem>>, vector<8x32xf32>,
    %c0_323 = arith.constant 0 : index
    %c0_324 = arith.constant 0 : index
    %270 = tpu.strided_load %arg11[%c0_323, %c0_324] {strides = array<i32: 2, 1>} : memref<288x32xf32, #tpu.memory_space<vmem>>, vector<4x32xf32>
    %c1_325 = arith.constant 1 : index
    %c0_326 = arith.constant 0 : index
    %271 = tpu.strided_load %arg11[%c1_325, %c0_326] {strides = array<i32: 2, 1>} : memref<288x32xf32, #tpu.memory_space<vmem>>, vector<4x32xf32>
    %272 = arith.maximumf %270, %271 : vector<4x32xf32>
    %c0_327 = arith.constant 0 : index
    %c0_328 = arith.constant 0 : index
    %273 = vector.load %arg12[%c0_327, %c0_328] : memref<144x32xf32, #tpu.memory_space<vmem>>, vector<4x32xf32>
    tpu.vector_store %arg12[%c0_327, %c0_328], %272 {strides = array<i32>} : memref<144x32xf32, #tpu.memory_space<vmem>>, vector<4x32xf32>,
    %c0_329 = arith.constant 0 : index
    %c0_330 = arith.constant 0 : index
    %274 = vector.load %arg12[%c0_329, %c0_330] : memref<144x32xf32, #tpu.memory_space<vmem>>, vector<1x32xf32>
    %c2_331 = arith.constant 2 : index
    %c0_332 = arith.constant 0 : index
    %275 = vector.load %arg12[%c2_331, %c0_332] : memref<144x32xf32, #tpu.memory_space<vmem>>, vector<1x32xf32>
    %276 = arith.maximumf %274, %275 : vector<1x32xf32>
    %c0_333 = arith.constant 0 : index
    %c0_334 = arith.constant 0 : index
    %c0_335 = arith.constant 0 : index
    %277 = vector.load %arg5[%c0_333, %c0_334, %c0_335] : memref<1x1x32xf32, #tpu.memory_space<vmem>>, vector<1x1x32xf32>
    %278 = vector.shape_cast %277 : vector<1x1x32xf32> to vector<1x32xf32>
    %279 = vector.shape_cast %276 : vector<1x32xf32> to vector<1x1x32xf32>
    tpu.vector_store %arg5[%c0_333, %c0_334, %c0_335], %279 {strides = array<i32>} : memref<1x1x32xf32, #tpu.memory_space<vmem>>, vector<1x1x32xf32>,
    return
  }
  func.func @transform_0(%arg0: i32) -> (i32, i32, i32) {
    %c0_i32 = arith.constant 0 : i32
    %c0_i32_0 = arith.constant 0 : i32
    %c0_i32_1 = arith.constant 0 : i32
    return %arg0, %c0_i32, %c0_i32_0 : i32, i32, i32
  }
  func.func @transform_1(%arg0: i32) -> (i32, i32, i32) {
    %c0_i32 = arith.constant 0 : i32
    %c0_i32_0 = arith.constant 0 : i32
    %c0_i32_1 = arith.constant 0 : i32
    %c0_i32_2 = arith.constant 0 : i32
    return %c0_i32, %c0_i32_0, %c0_i32_1 : i32, i32, i32
  }
  func.func @transform_2(%arg0: i32) -> (i32, i32, i32) {
    %c0_i32 = arith.constant 0 : i32
    %c0_i32_0 = arith.constant 0 : i32
    %c0_i32_1 = arith.constant 0 : i32
    %c0_i32_2 = arith.constant 0 : i32
    return %c0_i32, %c0_i32_0, %c0_i32_1 : i32, i32, i32
  }
  func.func @transform_3(%arg0: i32) -> (i32, i32, i32) {
    %c0_i32 = arith.constant 0 : i32
    %c0_i32_0 = arith.constant 0 : i32
    %c0_i32_1 = arith.constant 0 : i32
    %c0_i32_2 = arith.constant 0 : i32
    return %c0_i32, %c0_i32_0, %c0_i32_1 : i32, i32, i32
  }
  func.func @transform_4(%arg0: i32) -> (i32, i32, i32) {
    %c0_i32 = arith.constant 0 : i32
    %c0_i32_0 = arith.constant 0 : i32
    %c0_i32_1 = arith.constant 0 : i32
    return %arg0, %c0_i32, %c0_i32_0 : i32, i32, i32
  }
}

</mosaic_0001>

<llo_original>
// kernel: backbone_forward.1
$region0: #{backbone_forward.1}
  #allocation0 [shape = 'u32[]', space=smem, size = 0x4, offset = 0x4, fixed_abs, tag = 'smem constant byte address 0x4 - core index']
  #allocation1 [shape = 'u32[144,128]{1,0:T(1,128)}', space=vmem, size = 0x12000, scoped, tag = 'internal scratch']
  #allocation2 [shape = 'bf16[326,32]{1,0:T(8,128)(2,1)}', space=vmem, size = 0x14800, scoped, tag = 'scratch operand']
  #allocation3 [shape = 'bf16[102,32]{1,0:T(8,128)(2,1)}', space=vmem, size = 0x6800, scoped, tag = 'scratch operand']
  #allocation4 [shape = 'bf16[38,32]{1,0:T(8,128)(2,1)}', space=vmem, size = 0x2800, scoped, tag = 'scratch operand']
  #allocation5 [shape = 'bf16[18,32]{1,0:T(8,128)(2,1)}', space=vmem, size = 0x1800, scoped, tag = 'scratch operand']
  #allocation6 [shape = 'bf16[288,288]{1,0:T(16,128)(2,1)}', space=vmem, size = 0x36000, scoped, tag = 'scratch operand']
  #allocation7 [shape = 'f32[288,32]{1,0:T(8,128)}', space=vmem, size = 0x24000, scoped, tag = 'scratch operand']
  #allocation8 [shape = 'f32[144,32]{1,0:T(8,128)}', space=vmem, size = 0x12000, scoped, tag = 'scratch operand']
  %s0 = inlined_call_operand.vmem [shape: bf16[2,256,32], index: 0, kind: input, shape index: {}]
  %s1 = inlined_call_operand.vmem [shape: bf16[4,288,32], index: 1, kind: input, shape index: {}]
  %s2 = inlined_call_operand.vmem [shape: f32[4,1,32], index: 2, kind: input, shape index: {}]
  %s3 = inlined_call_operand.vmem [shape: f32[4,1,32], index: 3, kind: input, shape index: {}]
  %s4 = inlined_call_operand.hbm [shape: f32[2,1,32], index: 4, kind: output, shape index: {}]
  %s5 = sld [smem:[#allocation0]]
  $region49: #{backbone_forward.1} parent=0
    _
  %s7 = ssub.s32 1, %s5
  %s8 = scalar_select 0, %s7, %s5
  $region1: #{backbone_forward.1} parent=0
    #allocation9 [shape = 'u8[1024]{0}', space=vmem, size = 0x400, scoped, tag = 'output window, operand 0']
    #allocation10 [shape = 's32[2]{0}', space=sflag, size = 0x8, scoped, tag = 'scoped memory for backbone_forward.1']
    %9 = vsyncpa [#allocation10], 0
    %s10 = scalar_lea.sflag [#allocation10], 1
    %11 = vsyncpa %s10, 0
    loop: start=0, step=1, limit=4
    $region2: #{backbone_forward.1} parent=1 // loop_pre_header
      _
    $region3: #{backbone_forward.1} parent=1 // loop_header
      %s13 = sphi 0, %s17
      %p14 = scmp.ge.s32.totalorder %s13, 4
      %s23 = sphi 0, %s25
      %s26 = sphi 0, %s23
      %s27 = sphi 0, %s26
      %s43 = sphi 0, %s27
      %s47 = sphi 0, %s47
      %s49 = sphi 0, %s47
      %s50 = sphi 0, %s49
      %s64 = sphi 0, %s50
      %s68 = sphi 0, %s68
      %s70 = sphi 0, %s68
      %s71 = sphi 0, %s70
      %s85 = sphi 0, %s71
      %s89 = sphi 0, %s89
      %s91 = sphi 0, %s89
      %s92 = sphi 0, %s91
      %s106 = sphi 0, %s92
      %s112 = sphi 0, %s114
      %s115 = sphi 0, %s112
      %s116 = sphi 0, %s115
      %s132 = sphi 0, %s116
    $region4: #{backbone_forward.1} parent=1 // loop_header_branch
      %16 = sbr.rel (%p14) target = $region8
    $region5: #{backbone_forward.1} parent=1 // loop_body
      %s18 = ssub.s32 %s13, 1
      %s19 = ssub.s32 %s13, 2
      %s20 = sadd.s32 %s13, 1
      %s21 = ssub.s32 %s13, %s20
      %p22 = scmp.eq.s32.totalorder %s21, 0
      %s24 = sadd.s32 %s23, 1
      %s25 = scalar_select %p22, %s23, %s24
      %p28 = pneg %p22
      %p29 = scmp.eq.s32.totalorder %s13, 1
      %p30 = por %p28, %p29
      %p31 = scmp.ne.s32.totalorder %s23, %s26
      %p32 = scmp.eq.s32.totalorder %s13, 0
      %p33 = por %p31, %p32
      %p34 = scmp.ne.s32.totalorder %s23, %s26
      %p35 = scmp.eq.s32.totalorder %s18, 1
      %p36 = por %p34, %p35
      %p37 = scmp.ne.s32.totalorder %s26, %s27
      %p38 = scmp.eq.s32.totalorder %s18, 0
      %p39 = por %p37, %p38
      %p40 = scmp.ne.s32.totalorder %s26, %s27
      %p41 = scmp.eq.s32.totalorder %s19, 1
      %p42 = por %p40, %p41
      %p44 = scmp.ne.s32.totalorder %s27, %s43
      %p45 = scmp.eq.s32.totalorder %s19, 0
      %p46 = por %p44, %p45
      %s48 = sadd.s32 %s47, 1
      %p51 = scmp.eq.s32.totalorder %s13, 1
      %p52 = scmp.ne.s32.totalorder %s47, %s49
      %p53 = scmp.eq.s32.totalorder %s13, 0
      %p54 = por %p52, %p53
      %p55 = scmp.ne.s32.totalorder %s47, %s49
      %p56 = scmp.eq.s32.totalorder %s18, 1
      %p57 = por %p55, %p56
      %p58 = scmp.ne.s32.totalorder %s49, %s50
      %p59 = scmp.eq.s32.totalorder %s18, 0
      %p60 = por %p58, %p59
      %p61 = scmp.ne.s32.totalorder %s49, %s50
      %p62 = scmp.eq.s32.totalorder %s19, 1
      %p63 = por %p61, %p62
      %p65 = scmp.ne.s32.totalorder %s50, %s64
      %p66 = scmp.eq.s32.totalorder %s19, 0
      %p67 = por %p65, %p66
      %s69 = sadd.s32 %s68, 1
      %p72 = scmp.eq.s32.totalorder %s13, 1
      %p73 = scmp.ne.s32.totalorder %s68, %s70
      %p74 = scmp.eq.s32.totalorder %s13, 0
      %p75 = por %p73, %p74
      %p76 = scmp.ne.s32.totalorder %s68, %s70
      %p77 = scmp.eq.s32.totalorder %s18, 1
      %p78 = por %p76, %p77
      %p79 = scmp.ne.s32.totalorder %s70, %s71
      %p80 = scmp.eq.s32.totalorder %s18, 0
      %p81 = por %p79, %p80
      %p82 = scmp.ne.s32.totalorder %s70, %s71
      %p83 = scmp.eq.s32.totalorder %s19, 1
      %p84 = por %p82, %p83
      %p86 = scmp.ne.s32.totalorder %s71, %s85
      %p87 = scmp.eq.s32.totalorder %s19, 0
      %p88 = por %p86, %p87
      %s90 = sadd.s32 %s89, 1
      %p93 = scmp.eq.s32.totalorder %s13, 1
      %p94 = scmp.ne.s32.totalorder %s89, %s91
      %p95 = scmp.eq.s32.totalorder %s13, 0
      %p96 = por %p94, %p95
      %p97 = scmp.ne.s32.totalorder %s89, %s91
      %p98 = scmp.eq.s32.totalorder %s18, 1
      %p99 = por %p97, %p98
      %p100 = scmp.ne.s32.totalorder %s91, %s92
      %p101 = scmp.eq.s32.totalorder %s18, 0
      %p102 = por %p100, %p101
      %p103 = scmp.ne.s32.totalorder %s91, %s92
      %p104 = scmp.eq.s32.totalorder %s19, 1
      %p105 = por %p103, %p104
      %p107 = scmp.ne.s32.totalorder %s92, %s106
      %p108 = scmp.eq.s32.totalorder %s19, 0
      %p109 = por %p107, %p108
      %s110 = ssub.s32 %s13, %s20
      %p111 = scmp.eq.s32.totalorder %s110, 0
      %s113 = sadd.s32 %s112, 1
      %s114 = scalar_select %p111, %s112, %s113
      %p117 = pneg %p111
      %p118 = scmp.eq.s32.totalorder %s13, 1
      %p119 = por %p117, %p118
      %p120 = scmp.ne.s32.totalorder %s112, %s115
      %p121 = scmp.eq.s32.totalorder %s13, 0
      %p122 = por %p120, %p121
      %p123 = scmp.ne.s32.totalorder %s112, %s115
      %p124 = scmp.eq.s32.totalorder %s18, 1
      %p125 = por %p123, %p124
      %p126 = scmp.ne.s32.totalorder %s115, %s116
      %p127 = scmp.eq.s32.totalorder %s18, 0
      %p128 = por %p126, %p127
      %p129 = scmp.ne.s32.totalorder %s115, %s116
      %p130 = scmp.eq.s32.totalorder %s19, 1
      %p131 = por %p129, %p130
      %p133 = scmp.ne.s32.totalorder %s116, %s132
      %p134 = scmp.eq.s32.totalorder %s19, 0
      %p135 = por %p133, %p134
      %p136 = scmp.le.s32.totalorder 1, %s13
      %p137 = scmp.lt.s32.totalorder %s13, 3
      %p138 = pnand %p136, %p137
      %p139 = pneg %p138
      // Predicated region
      $region9: #{backbone_forward.1} parent=5 // pred_check
        _
      $region10: #{backbone_forward.1} parent=5 // pred_check_branch
        %141 = sbr.rel (%p138) target = $region12
      $region11: #{backbone_forward.1} parent=5 // pred_region
        %s142 = ssub.s32 %s13, 1
        // Predicated region
        $region13: #{backbone_forward.1} parent=11 // pred_check
          %p143 = pneg %p60
        $region14: #{backbone_forward.1} parent=11 // pred_check_branch
          %145 = sbr.rel (%p143) target = $region16
        $region15: #{backbone_forward.1} parent=11 // pred_region
          _
        $region16: #{backbone_forward.1} parent=11 // pred_fallthru
          _
        // Predicated region
        $region17: #{backbone_forward.1} parent=11 // pred_check
          %p146 = pneg %p81
        $region18: #{backbone_forward.1} parent=11 // pred_check_branch
          %148 = sbr.rel (%p146) target = $region20
        $region19: #{backbone_forward.1} parent=11 // pred_region
          _
        $region20: #{backbone_forward.1} parent=11 // pred_fallthru
          _
        // Predicated region
        $region21: #{backbone_forward.1} parent=11 // pred_check
          %p149 = pneg %p102
        $region22: #{backbone_forward.1} parent=11 // pred_check_branch
          %151 = sbr.rel (%p149) target = $region24
        $region23: #{backbone_forward.1} parent=11 // pred_region
          _
        $region24: #{backbone_forward.1} parent=11 // pred_fallthru
          _
      $region12: #{backbone_forward.1} parent=5 // pred_fallthru
        _
      %p152 = scmp.lt.s32.totalorder %s13, 2
      // Predicated region
      $region25: #{backbone_forward.1} parent=5 // pred_check
        %p153 = pneg %p152
      $region26: #{backbone_forward.1} parent=5 // pred_check_branch
        %155 = sbr.rel (%p153) target = $region28
      $region27: #{backbone_forward.1} parent=5 // pred_region
        // Predicated region
        $region29: #{backbone_forward.1} parent=27 // pred_check
          %p156 = pneg %p33
        $region30: #{backbone_forward.1} parent=27 // pred_check_branch
          %158 = sbr.rel (%p156) target = $region32
        $region31: #{backbone_forward.1} parent=27 // pred_region
          %p159 = scmp.lt.s32.totalorder %s13, 1
          %s160 = scalar_select %p159, %s13, 1
          %s161 = smul.addr %s160, 32
          %s162 = smul.addr %s161, 4
          %s163 = scalar_lea.vmem %s0, %s162
        $region32: #{backbone_forward.1} parent=27 // pred_fallthru
          _
      $region28: #{backbone_forward.1} parent=5 // pred_fallthru
        _
      %p164 = scmp.le.s32.totalorder 1, %s13
      %p165 = scmp.lt.s32.totalorder %s13, 3
      %p166 = pnand %p164, %p165
      %p167 = pneg %p166
      // Predicated region
      $region33: #{backbone_forward.1} parent=5 // pred_check
        _
      $region34: #{backbone_forward.1} parent=5 // pred_check_branch
        %169 = sbr.rel (%p166) target = $region36
      $region35: #{backbone_forward.1} parent=5 // pred_region
        %s170 = ssub.s32 %s13, 1
        %p171 = scmp.lt.s32.totalorder %s18, 1
        %s172 = scalar_select %p171, %s18, 1
        %s173 = smul.addr %s172, 32
        %s174 = smul.addr %s173, 4
        %s175 = scalar_lea.vmem %s0, %s174
        %p176 = pneg %p39
        %p177 = pneg %p36
        %p178 = pneg %p60
        %p179 = pneg %p57
        %p180 = pneg %p81
        %p181 = pneg %p78
        %p182 = pneg %p102
        %p183 = pneg %p99
        %p184 = pneg %p128
        %p185 = pneg %p125
        %s186 = sand.u32 %s115, 1
        %s187 = scalar_lea.sflag [#allocation10], %s186
        %s188 = sand.u32 %s115, 1
        %s189 = scalar_lea.vmem [#allocation9], %s188
        %p190 = scmp.lt.s32.totalorder %s18, 1
        %s191 = scalar_select %p190, %s18, 1
        %s192 = smul.addr %s191, 32
        %s193 = smul.addr %s192, 4
        %s194 = scalar_lea.vmem %s0, %s193
        %vm196 = vcmask 257024
        %197 = vst.msk [vmem:[#allocation2] sm:$0xf] %vm196, 0
        %198 = vst.msk [vmem:[#allocation2 + $0x4] sm:$0xf] %vm196, 0
        %199 = vst.msk [vmem:[#allocation2 + $0x8] sm:$0xf] %vm196, 0
        %200 = vst.msk [vmem:[#allocation2 + $0xc] sm:$0xf] %vm196, 0
        %201 = vst.msk [vmem:[#allocation2 + $0x10] sm:$0xf] %vm196, 0
        %202 = vst.msk [vmem:[#allocation2 + $0x14] sm:$0xf] %vm196, 0
        %203 = vst.msk [vmem:[#allocation2 + $0x18] sm:$0xf] %vm196, 0
        %204 = vst.msk [vmem:[#allocation2 + $0x1c] sm:$0xf] %vm196, 0
        %205 = vst.msk [vmem:[#allocation2 + $0x20] sm:$0xf] %vm196, 0
        %206 = vst.msk [vmem:[#allocation2 + $0x24] sm:$0xf] %vm196, 0
        %207 = vst.msk [vmem:[#allocation2 + $0x28] sm:$0xf] %vm196, 0
        %208 = vst.msk [vmem:[#allocation2 + $0x2c] sm:$0xf] %vm196, 0
        %209 = vst.msk [vmem:[#allocation2 + $0x30] sm:$0xf] %vm196, 0
        %210 = vst.msk [vmem:[#allocation2 + $0x34] sm:$0xf] %vm196, 0
        %211 = vst.msk [vmem:[#allocation2 + $0x38] sm:$0xf] %vm196, 0
        %212 = vst.msk [vmem:[#allocation2 + $0x3c] sm:$0xf] %vm196, 0
        %213 = vst.msk [vmem:[#allocation2 + $0x40] sm:$0xf] %vm196, 0
        %214 = vst.msk [vmem:[#allocation2 + $0x44] sm:$0xf] %vm196, 0
        %215 = vst.msk [vmem:[#allocation2 + $0x48] sm:$0xf] %vm196, 0
        %216 = vst.msk [vmem:[#allocation2 + $0x4c] sm:$0xf] %vm196, 0
        %217 = vst.msk [vmem:[#allocation2 + $0x50] sm:$0xf] %vm196, 0
        %218 = vst.msk [vmem:[#allocation2 + $0x54] sm:$0xf] %vm196, 0
        %219 = vst.msk [vmem:[#allocation2 + $0x58] sm:$0xf] %vm196, 0
        %220 = vst.msk [vmem:[#allocation2 + $0x5c] sm:$0xf] %vm196, 0
        %221 = vst.msk [vmem:[#allocation2 + $0x60] sm:$0xf] %vm196, 0
        %222 = vst.msk [vmem:[#allocation2 + $0x64] sm:$0xf] %vm196, 0
        %223 = vst.msk [vmem:[#allocation2 + $0x68] sm:$0xf] %vm196, 0
        %224 = vst.msk [vmem:[#allocation2 + $0x6c] sm:$0xf] %vm196, 0
        %225 = vst.msk [vmem:[#allocation2 + $0x70] sm:$0xf] %vm196, 0
        %226 = vst.msk [vmem:[#allocation2 + $0x74] sm:$0xf] %vm196, 0
        %227 = vst.msk [vmem:[#allocation2 + $0x78] sm:$0xf] %vm196, 0
        %228 = vst.msk [vmem:[#allocation2 + $0x7c] sm:$0xf] %vm196, 0
        %229 = vst.msk [vmem:[#allocation2 + $0x80] sm:$0xf] %vm196, 0
        %230 = vst.msk [vmem:[#allocation2 + $0x84] sm:$0xf] %vm196, 0
        %231 = vst.msk [vmem:[#allocation2 + $0x88] sm:$0xf] %vm196, 0
        %232 = vst.msk [vmem:[#allocation2 + $0x8c] sm:$0xf] %vm196, 0
        %233 = vst.msk [vmem:[#allocation2 + $0x90] sm:$0xf] %vm196, 0
        %234 = vst.msk [vmem:[#allocation2 + $0x94] sm:$0xf] %vm196, 0
        %235 = vst.msk [vmem:[#allocation2 + $0x98] sm:$0xf] %vm196, 0
        %236 = vst.msk [vmem:[#allocation2 + $0x9c] sm:$0xf] %vm196, 0
        %vm237 = vcmask 256000
        %238 = vst.msk [vmem:[#allocation2 + $0xa0] sm:$0x7] %vm237, 0
        %239 = vst.msk [vmem:[#allocation3] sm:$0xf] %vm196, 0
        %240 = vst.msk [vmem:[#allocation3 + $0x4] sm:$0xf] %vm196, 0
        %241 = vst.msk [vmem:[#allocation3 + $0x8] sm:$0xf] %vm196, 0
        %242 = vst.msk [vmem:[#allocation3 + $0xc] sm:$0xf] %vm196, 0
        %243 = vst.msk [vmem:[#allocation3 + $0x10] sm:$0xf] %vm196, 0
        %244 = vst.msk [vmem:[#allocation3 + $0x14] sm:$0xf] %vm196, 0
        %245 = vst.msk [vmem:[#allocation3 + $0x18] sm:$0xf] %vm196, 0
        %246 = vst.msk [vmem:[#allocation3 + $0x1c] sm:$0xf] %vm196, 0
        %247 = vst.msk [vmem:[#allocation3 + $0x20] sm:$0xf] %vm196, 0
        %248 = vst.msk [vmem:[#allocation3 + $0x24] sm:$0xf] %vm196, 0
        %249 = vst.msk [vmem:[#allocation3 + $0x28] sm:$0xf] %vm196, 0
        %250 = vst.msk [vmem:[#allocation3 + $0x2c] sm:$0xf] %vm196, 0
        %251 = vst.msk [vmem:[#allocation3 + $0x30] sm:$0x7] %vm237, 0
        %252 = vst.msk [vmem:[#allocation4] sm:$0xf] %vm196, 0
        %253 = vst.msk [vmem:[#allocation4 + $0x4] sm:$0xf] %vm196, 0
        %254 = vst.msk [vmem:[#allocation4 + $0x8] sm:$0xf] %vm196, 0
        %255 = vst.msk [vmem:[#allocation4 + $0xc] sm:$0xf] %vm196, 0
        %256 = vst.msk [vmem:[#allocation4 + $0x10] sm:$0x7] %vm237, 0
        %257 = vst.msk [vmem:[#allocation5] sm:$0xf] %vm196, 0
        %258 = vst.msk [vmem:[#allocation5 + $0x4] sm:$0xf] %vm196, 0
        %vm259 = vcmask 253952
        %260 = vst.msk [vmem:[#allocation5 + $0x8] sm:$0x1] %vm259, 0
        %v261 = vld [vmem:[%s194] sm:$0xf]
        %v262 = vld [vmem:[%s194 + $0x4] sm:$0xf]
        %vm263 = vsmask.f32 1280
        %vm264 = vsmask.f32 5392
        %vm265 = vmor %vm263, %vm264
        %v267 = vshrl.u32 %v261, 16
        %v269 = vrot.slane %v267, 6
        %v270 = vshll.u32 %v261, 16
        %v272 = vrot.slane %v270, 7
        %v273 = vor.u32 %v269, %v272
        %v274 = vrot.slane %v273, 4
        %v276 = vshrl.u32 %v262, 16
        %v278 = vrot.slane %v276, 6
        %v279 = vshll.u32 %v262, 16
        %v281 = vrot.slane %v279, 7
        %v282 = vor.u32 %v278, %v281
        %v283 = vsel %vm265, %v274, %v282
        %v284 = vrot.slane %v282, 4
        %vm288 = vcmask 257025
        %vm289 = vsmask.f32 7942
        %vm290 = vmand %vm288, %vm289
        %v291 = vld [vmem:[#allocation2 + $0x8] sm:$0xe]
        %v292 = vsel %vm290, %v273, %v291
        %293 = vst [vmem:[#allocation2 + $0x8] sm:$0xe] %v292
        %294 = vst.msk [vmem:[#allocation2 + $0xc] sm:$0xf] %vm196, %v283
        %vm295 = vcmask 254976
        %vm296 = vmand %vm295, %vm263
        %v297 = vld [vmem:[#allocation2 + $0x10] sm:$0x3]
        %v298 = vsel %vm296, %v284, %v297
        %299 = vst [vmem:[#allocation2 + $0x10] sm:$0x3] %v298
        %v300 = vld [vmem:[%s194 + $0x8] sm:$0xf]
        %v301 = vld [vmem:[%s194 + $0xc] sm:$0xf]
        %vm302 = vsmask.f32 2304
        %vm303 = vsmask.f32 6416
        %vm304 = vmor %vm302, %vm303
        %v306 = vshrl.u32 %v300, 16
        %v308 = vrot.slane %v306, 5
        %v309 = vshll.u32 %v300, 16
        %v311 = vrot.slane %v309, 6
        %v312 = vor.u32 %v308, %v311
        %v313 = vrot.slane %v312, 4
        %v315 = vshrl.u32 %v301, 16
        %v317 = vrot.slane %v315, 5
        %v318 = vshll.u32 %v301, 16
        %v320 = vrot.slane %v318, 6
        %v321 = vor.u32 %v317, %v320
        %v322 = vsel %vm304, %v313, %v321
        %v323 = vrot.slane %v321, 4
        %vm327 = vcmask 257026
        %vm328 = vsmask.f32 7946
        %vm329 = vmand %vm327, %vm328
        %v330 = vld [vmem:[#allocation2 + $0x10] sm:$0xc]
        %v331 = vsel %vm329, %v312, %v330
        %332 = vst [vmem:[#allocation2 + $0x10] sm:$0xc] %v331
        %333 = vst.msk [vmem:[#allocation2 + $0x14] sm:$0xf] %vm196, %v322
        %vm334 = vcmask 256000
        %vm335 = vmand %vm334, %vm302
        %v336 = vld [vmem:[#allocation2 + $0x18] sm:$0x7]
        %v337 = vsel %vm335, %v323, %v336
        %338 = vst [vmem:[#allocation2 + $0x18] sm:$0x7] %v337
        %v339 = vld [vmem:[%s194 + $0x10] sm:$0xf]
        %v340 = vld [vmem:[%s194 + $0x14] sm:$0xf]
        %vm341 = vsmask.f32 3328
        %vm342 = vsmask.f32 7440
        %vm343 = vmor %vm341, %vm342
        %v345 = vshll.u32 %v339, 16
        %v347 = vrot.slane %v345, 5
        %v348 = vshrl.u32 %v339, 16
        %v350 = vrot.slane %v348, 4
        %v351 = vor.u32 %v350, %v347
        %v352 = vrot.slane %v351, 4
        %v354 = vshll.u32 %v340, 16
        %v356 = vrot.slane %v354, 5
        %v357 = vsel %vm343, %v352, %v356
        %v358 = vshrl.u32 %v340, 16
        %v360 = vrot.slane %v358, 4
        %v361 = vor.u32 %v360, %v356
        %v362 = vrot.slane %v361, 4
        %vm366 = vcmask 257027
        %vm367 = vsmask.f32 7950
        %vm368 = vmand %vm366, %vm367
        %v369 = vld [vmem:[#allocation2 + $0x18] sm:$0x8]
        %v370 = vsel %vm368, %v347, %v369
        %371 = vst [vmem:[#allocation2 + $0x18] sm:$0x8] %v370
        %372 = vst.msk [vmem:[#allocation2 + $0x1c] sm:$0xf] %vm196, %v357
        %vm373 = vcmask 257024
        %vm374 = vmand %vm373, %vm341
        %v375 = vld [vmem:[#allocation2 + $0x20] sm:$0xf]
        %v376 = vsel %vm374, %v362, %v375
        %377 = vst [vmem:[#allocation2 + $0x20] sm:$0xf] %v376
        %v378 = vld [vmem:[%s194 + $0x18] sm:$0xf]
        %v379 = vld [vmem:[%s194 + $0x1c] sm:$0xf]
        %vm380 = vsmask.f32 256
        %vm381 = vsmask.f32 4368
        %vm382 = vmor %vm380, %vm381
        %v384 = vshrl.u32 %v378, 16
        %v386 = vrot.slane %v384, 7
        %v387 = vshll.u32 %v378, 16
        %v389 = vor.u32 %v386, %v387
        %v390 = vrot.slane %v386, 4
        %v392 = vshrl.u32 %v379, 16
        %v394 = vrot.slane %v392, 7
        %v395 = vshll.u32 %v379, 16
        %v397 = vor.u32 %v394, %v395
        %v398 = vsel %vm382, %v390, %v397
        %v399 = vrot.slane %v394, 4
        %vm403 = vsmask.f32 7938
        %vm404 = vmand %vm373, %vm403
        %v405 = vld [vmem:[#allocation2 + $0x24] sm:$0xf]
        %v406 = vsel %vm404, %v389, %v405
        %407 = vst [vmem:[#allocation2 + $0x24] sm:$0xf] %v406
        %408 = vst.msk [vmem:[#allocation2 + $0x28] sm:$0xf] %vm196, %v398
        %vm409 = vcmask 253952
        %vm410 = vmand %vm409, %vm380
        %v411 = vld [vmem:[#allocation2 + $0x2c] sm:$0x1]
        %v412 = vsel %vm410, %v399, %v411
        %413 = vst [vmem:[#allocation2 + $0x2c] sm:$0x1] %v412
        %v414 = vld [vmem:[%s194 + $0x20] sm:$0xf]
        %v415 = vld [vmem:[%s194 + $0x24] sm:$0xf]
        %v417 = vshrl.u32 %v414, 16
        %v419 = vrot.slane %v417, 6
        %v420 = vshll.u32 %v414, 16
        %v422 = vrot.slane %v420, 7
        %v423 = vor.u32 %v419, %v422
        %v424 = vrot.slane %v423, 4
        %v426 = vshrl.u32 %v415, 16
        %v428 = vrot.slane %v426, 6
        %v429 = vshll.u32 %v415, 16
        %v431 = vrot.slane %v429, 7
        %v432 = vor.u32 %v428, %v431
        %v433 = vsel %vm265, %v424, %v432
        %v434 = vrot.slane %v432, 4
        %v438 = vld [vmem:[#allocation2 + $0x2c] sm:$0xe]
        %v439 = vsel %vm290, %v423, %v438
        %440 = vst [vmem:[#allocation2 + $0x2c] sm:$0xe] %v439
        %441 = vst.msk [vmem:[#allocation2 + $0x30] sm:$0xf] %vm196, %v433
        %v442 = vld [vmem:[#allocation2 + $0x34] sm:$0x3]
        %v443 = vsel %vm296, %v434, %v442
        %444 = vst [vmem:[#allocation2 + $0x34] sm:$0x3] %v443
        %v445 = vld [vmem:[%s194 + $0x28] sm:$0xf]
        %v446 = vld [vmem:[%s194 + $0x2c] sm:$0xf]
        %v448 = vshrl.u32 %v445, 16
        %v450 = vrot.slane %v448, 5
        %v451 = vshll.u32 %v445, 16
        %v453 = vrot.slane %v451, 6
        %v454 = vor.u32 %v450, %v453
        %v455 = vrot.slane %v454, 4
        %v457 = vshrl.u32 %v446, 16
        %v459 = vrot.slane %v457, 5
        %v460 = vshll.u32 %v446, 16
        %v462 = vrot.slane %v460, 6
        %v463 = vor.u32 %v459, %v462
        %v464 = vsel %vm304, %v455, %v463
        %v465 = vrot.slane %v463, 4
        %v469 = vld [vmem:[#allocation2 + $0x34] sm:$0xc]
        %v470 = vsel %vm329, %v454, %v469
        %471 = vst [vmem:[#allocation2 + $0x34] sm:$0xc] %v470
        %472 = vst.msk [vmem:[#allocation2 + $0x38] sm:$0xf] %vm196, %v464
        %v473 = vld [vmem:[#allocation2 + $0x3c] sm:$0x7]
        %v474 = vsel %vm335, %v465, %v473
        %475 = vst [vmem:[#allocation2 + $0x3c] sm:$0x7] %v474
        %v476 = vld [vmem:[%s194 + $0x30] sm:$0xf]
        %v477 = vld [vmem:[%s194 + $0x34] sm:$0xf]
        %v479 = vshll.u32 %v476, 16
        %v481 = vrot.slane %v479, 5
        %v482 = vshrl.u32 %v476, 16
        %v484 = vrot.slane %v482, 4
        %v485 = vor.u32 %v484, %v481
        %v486 = vrot.slane %v485, 4
        %v488 = vshll.u32 %v477, 16
        %v490 = vrot.slane %v488, 5
        %v491 = vsel %vm343, %v486, %v490
        %v492 = vshrl.u32 %v477, 16
        %v494 = vrot.slane %v492, 4
        %v495 = vor.u32 %v494, %v490
        %v496 = vrot.slane %v495, 4
        %v500 = vld [vmem:[#allocation2 + $0x3c] sm:$0x8]
        %v501 = vsel %vm368, %v481, %v500
        %502 = vst [vmem:[#allocation2 + $0x3c] sm:$0x8] %v501
        %503 = vst.msk [vmem:[#allocation2 + $0x40] sm:$0xf] %vm196, %v491
        %v504 = vld [vmem:[#allocation2 + $0x44] sm:$0xf]
        %v505 = vsel %vm374, %v496, %v504
        %506 = vst [vmem:[#allocation2 + $0x44] sm:$0xf] %v505
        %v507 = vld [vmem:[%s194 + $0x38] sm:$0xf]
        %v508 = vld [vmem:[%s194 + $0x3c] sm:$0xf]
        %v510 = vshrl.u32 %v507, 16
        %v512 = vrot.slane %v510, 7
        %v513 = vshll.u32 %v507, 16
        %v515 = vor.u32 %v512, %v513
        %v516 = vrot.slane %v512, 4
        %v518 = vshrl.u32 %v508, 16
        %v520 = vrot.slane %v518, 7
        %v521 = vshll.u32 %v508, 16
        %v523 = vor.u32 %v520, %v521
        %v524 = vsel %vm382, %v516, %v523
        %v525 = vrot.slane %v520, 4
        %v529 = vld [vmem:[#allocation2 + $0x48] sm:$0xf]
        %v530 = vsel %vm404, %v515, %v529
        %531 = vst [vmem:[#allocation2 + $0x48] sm:$0xf] %v530
        %532 = vst.msk [vmem:[#allocation2 + $0x4c] sm:$0xf] %vm196, %v524
        %v533 = vld [vmem:[#allocation2 + $0x50] sm:$0x1]
        %v534 = vsel %vm410, %v525, %v533
        %535 = vst [vmem:[#allocation2 + $0x50] sm:$0x1] %v534
        %v536 = vld [vmem:[%s194 + $0x40] sm:$0xf]
        %v537 = vld [vmem:[%s194 + $0x44] sm:$0xf]
        %v539 = vshrl.u32 %v536, 16
        %v541 = vrot.slane %v539, 6
        %v542 = vshll.u32 %v536, 16
        %v544 = vrot.slane %v542, 7
        %v545 = vor.u32 %v541, %v544
        %v546 = vrot.slane %v545, 4
        %v548 = vshrl.u32 %v537, 16
        %v550 = vrot.slane %v548, 6
        %v551 = vshll.u32 %v537, 16
        %v553 = vrot.slane %v551, 7
        %v554 = vor.u32 %v550, %v553
        %v555 = vsel %vm265, %v546, %v554
        %v556 = vrot.slane %v554, 4
        %v560 = vld [vmem:[#allocation2 + $0x50] sm:$0xe]
        %v561 = vsel %vm290, %v545, %v560
        %562 = vst [vmem:[#allocation2 + $0x50] sm:$0xe] %v561
        %563 = vst.msk [vmem:[#allocation2 + $0x54] sm:$0xf] %vm196, %v555
        %v564 = vld [vmem:[#allocation2 + $0x58] sm:$0x3]
        %v565 = vsel %vm296, %v556, %v564
        %566 = vst [vmem:[#allocation2 + $0x58] sm:$0x3] %v565
        %v567 = vld [vmem:[%s194 + $0x48] sm:$0xf]
        %v568 = vld [vmem:[%s194 + $0x4c] sm:$0xf]
        %v570 = vshrl.u32 %v567, 16
        %v572 = vrot.slane %v570, 5
        %v573 = vshll.u32 %v567, 16
        %v575 = vrot.slane %v573, 6
        %v576 = vor.u32 %v572, %v575
        %v577 = vrot.slane %v576, 4
        %v579 = vshrl.u32 %v568, 16
        %v581 = vrot.slane %v579, 5
        %v582 = vshll.u32 %v568, 16
        %v584 = vrot.slane %v582, 6
        %v585 = vor.u32 %v581, %v584
        %v586 = vsel %vm304, %v577, %v585
        %v587 = vrot.slane %v585, 4
        %v591 = vld [vmem:[#allocation2 + $0x58] sm:$0xc]
        %v592 = vsel %vm329, %v576, %v591
        %593 = vst [vmem:[#allocation2 + $0x58] sm:$0xc] %v592
        %594 = vst.msk [vmem:[#allocation2 + $0x5c] sm:$0xf] %vm196, %v586
        %v595 = vld [vmem:[#allocation2 + $0x60] sm:$0x7]
        %v596 = vsel %vm335, %v587, %v595
        %597 = vst [vmem:[#allocation2 + $0x60] sm:$0x7] %v596
        %v598 = vld [vmem:[%s194 + $0x50] sm:$0xf]
        %v599 = vld [vmem:[%s194 + $0x54] sm:$0xf]
        %v601 = vshll.u32 %v598, 16
        %v603 = vrot.slane %v601, 5
        %v604 = vshrl.u32 %v598, 16
        %v606 = vrot.slane %v604, 4
        %v607 = vor.u32 %v606, %v603
        %v608 = vrot.slane %v607, 4
        %v610 = vshll.u32 %v599, 16
        %v612 = vrot.slane %v610, 5
        %v613 = vsel %vm343, %v608, %v612
        %v614 = vshrl.u32 %v599, 16
        %v616 = vrot.slane %v614, 4
        %v617 = vor.u32 %v616, %v612
        %v618 = vrot.slane %v617, 4
        %v622 = vld [vmem:[#allocation2 + $0x60] sm:$0x8]
        %v623 = vsel %vm368, %v603, %v622
        %624 = vst [vmem:[#allocation2 + $0x60] sm:$0x8] %v623
        %625 = vst.msk [vmem:[#allocation2 + $0x64] sm:$0xf] %vm196, %v613
        %v626 = vld [vmem:[#allocation2 + $0x68] sm:$0xf]
        %v627 = vsel %vm374, %v618, %v626
        %628 = vst [vmem:[#allocation2 + $0x68] sm:$0xf] %v627
        %v629 = vld [vmem:[%s194 + $0x58] sm:$0xf]
        %v630 = vld [vmem:[%s194 + $0x5c] sm:$0xf]
        %v632 = vshrl.u32 %v629, 16
        %v634 = vrot.slane %v632, 7
        %v635 = vshll.u32 %v629, 16
        %v637 = vor.u32 %v634, %v635
        %v638 = vrot.slane %v634, 4
        %v640 = vshrl.u32 %v630, 16
        %v642 = vrot.slane %v640, 7
        %v643 = vshll.u32 %v630, 16
        %v645 = vor.u32 %v642, %v643
        %v646 = vsel %vm382, %v638, %v645
        %v647 = vrot.slane %v642, 4
        %v651 = vld [vmem:[#allocation2 + $0x6c] sm:$0xf]
        %v652 = vsel %vm404, %v637, %v651
        %653 = vst [vmem:[#allocation2 + $0x6c] sm:$0xf] %v652
        %654 = vst.msk [vmem:[#allocation2 + $0x70] sm:$0xf] %vm196, %v646
        %v655 = vld [vmem:[#allocation2 + $0x74] sm:$0x1]
        %v656 = vsel %vm410, %v647, %v655
        %657 = vst [vmem:[#allocation2 + $0x74] sm:$0x1] %v656
        %v658 = vld [vmem:[%s194 + $0x60] sm:$0xf]
        %v659 = vld [vmem:[%s194 + $0x64] sm:$0xf]
        %v661 = vshrl.u32 %v658, 16
        %v663 = vrot.slane %v661, 6
        %v664 = vshll.u32 %v658, 16
        %v666 = vrot.slane %v664, 7
        %v667 = vor.u32 %v663, %v666
        %v668 = vrot.slane %v667, 4
        %v670 = vshrl.u32 %v659, 16
        %v672 = vrot.slane %v670, 6
        %v673 = vshll.u32 %v659, 16
        %v675 = vrot.slane %v673, 7
        %v676 = vor.u32 %v672, %v675
        %v677 = vsel %vm265, %v668, %v676
        %v678 = vrot.slane %v676, 4
        %v682 = vld [vmem:[#allocation2 + $0x74] sm:$0xe]
        %v683 = vsel %vm290, %v667, %v682
        %684 = vst [vmem:[#allocation2 + $0x74] sm:$0xe] %v683
        %685 = vst.msk [vmem:[#allocation2 + $0x78] sm:$0xf] %vm196, %v677
        %v686 = vld [vmem:[#allocation2 + $0x7c] sm:$0x3]
        %v687 = vsel %vm296, %v678, %v686
        %688 = vst [vmem:[#allocation2 + $0x7c] sm:$0x3] %v687
        %v689 = vld [vmem:[%s194 + $0x68] sm:$0xf]
        %v690 = vld [vmem:[%s194 + $0x6c] sm:$0xf]
        %v692 = vshrl.u32 %v689, 16
        %v694 = vrot.slane %v692, 5
        %v695 = vshll.u32 %v689, 16
        %v697 = vrot.slane %v695, 6
        %v698 = vor.u32 %v694, %v697
        %v699 = vrot.slane %v698, 4
        %v701 = vshrl.u32 %v690, 16
        %v703 = vrot.slane %v701, 5
        %v704 = vshll.u32 %v690, 16
        %v706 = vrot.slane %v704, 6
        %v707 = vor.u32 %v703, %v706
        %v708 = vsel %vm304, %v699, %v707
        %v709 = vrot.slane %v707, 4
        %v713 = vld [vmem:[#allocation2 + $0x7c] sm:$0xc]
        %v714 = vsel %vm329, %v698, %v713
        %715 = vst [vmem:[#allocation2 + $0x7c] sm:$0xc] %v714
        %716 = vst.msk [vmem:[#allocation2 + $0x80] sm:$0xf] %vm196, %v708
        %v717 = vld [vmem:[#allocation2 + $0x84] sm:$0x7]
        %v718 = vsel %vm335, %v709, %v717
        %719 = vst [vmem:[#allocation2 + $0x84] sm:$0x7] %v718
        %v720 = vld [vmem:[%s194 + $0x70] sm:$0xf]
        %v721 = vld [vmem:[%s194 + $0x74] sm:$0xf]
        %v723 = vshll.u32 %v720, 16
        %v725 = vrot.slane %v723, 5
        %v726 = vshrl.u32 %v720, 16
        %v728 = vrot.slane %v726, 4
        %v729 = vor.u32 %v728, %v725
        %v730 = vrot.slane %v729, 4
        %v732 = vshll.u32 %v721, 16
        %v734 = vrot.slane %v732, 5
        %v735 = vsel %vm343, %v730, %v734
        %v736 = vshrl.u32 %v721, 16
        %v738 = vrot.slane %v736, 4
        %v739 = vor.u32 %v738, %v734
        %v740 = vrot.slane %v739, 4
        %v744 = vld [vmem:[#allocation2 + $0x84] sm:$0x8]
        %v745 = vsel %vm368, %v725, %v744
        %746 = vst [vmem:[#allocation2 + $0x84] sm:$0x8] %v745
        %747 = vst.msk [vmem:[#allocation2 + $0x88] sm:$0xf] %vm196, %v735
        %v748 = vld [vmem:[#allocation2 + $0x8c] sm:$0xf]
        %v749 = vsel %vm374, %v740, %v748
        %750 = vst [vmem:[#allocation2 + $0x8c] sm:$0xf] %v749
        %v751 = vld [vmem:[%s194 + $0x78] sm:$0xf]
        %v752 = vld [vmem:[%s194 + $0x7c] sm:$0xf]
        %v754 = vshrl.u32 %v751, 16
        %v756 = vrot.slane %v754, 7
        %v757 = vshll.u32 %v751, 16
        %v759 = vor.u32 %v756, %v757
        %v760 = vrot.slane %v756, 4
        %v762 = vshrl.u32 %v752, 16
        %v764 = vrot.slane %v762, 7
        %v765 = vshll.u32 %v752, 16
        %v767 = vor.u32 %v764, %v765
        %v768 = vsel %vm382, %v760, %v767
        %v769 = vrot.slane %v764, 4
        %v773 = vld [vmem:[#allocation2 + $0x90] sm:$0xf]
        %v774 = vsel %vm404, %v759, %v773
        %775 = vst [vmem:[#allocation2 + $0x90] sm:$0xf] %v774
        %776 = vst.msk [vmem:[#allocation2 + $0x94] sm:$0xf] %vm196, %v768
        %v777 = vld [vmem:[#allocation2 + $0x98] sm:$0x1]
        %v778 = vsel %vm410, %v769, %v777
        %779 = vst [vmem:[#allocation2 + $0x98] sm:$0x1] %v778
        %v780 = vld [vmem:[#allocation2] sm:$0xf]
        %v781 = vld [vmem:[#allocation2 + $0x4] sm:$0xf]
        %v782 = vld [vmem:[#allocation2 + $0x8] sm:$0xf]
        %v783 = vld [vmem:[#allocation2 + $0xc] sm:$0xf]
        %v784 = vld [vmem:[#allocation2 + $0x10] sm:$0xf]
        %v785 = vld [vmem:[#allocation2 + $0x14] sm:$0xf]
        %v786 = vld [vmem:[#allocation2 + $0x18] sm:$0xf]
        %v787 = vld [vmem:[#allocation2 + $0x1c] sm:$0xf]
        %v788 = vld [vmem:[#allocation2 + $0x20] sm:$0xf]
        %v789 = vld [vmem:[#allocation2 + $0x24] sm:$0xf]
        %v790 = vld [vmem:[#allocation2 + $0x28] sm:$0xf]
        %v791 = vld [vmem:[#allocation2 + $0x2c] sm:$0xf]
        %v792 = vld [vmem:[#allocation2 + $0x30] sm:$0xf]
        %v793 = vld [vmem:[#allocation2 + $0x34] sm:$0xf]
        %v794 = vld [vmem:[#allocation2 + $0x38] sm:$0xf]
        %v795 = vld [vmem:[#allocation2 + $0x3c] sm:$0xf]
        %v796 = vld [vmem:[#allocation2 + $0x40] sm:$0xf]
        %v797 = vld [vmem:[#allocation2 + $0x44] sm:$0xf]
        %v798 = vld [vmem:[#allocation2 + $0x48] sm:$0xf]
        %v799 = vld [vmem:[#allocation2 + $0x4c] sm:$0xf]
        %v800 = vld [vmem:[#allocation2 + $0x50] sm:$0xf]
        %v801 = vld [vmem:[#allocation2 + $0x54] sm:$0xf]
        %v802 = vld [vmem:[#allocation2 + $0x58] sm:$0xf]
        %v803 = vld [vmem:[#allocation2 + $0x5c] sm:$0xf]
        %v804 = vld [vmem:[#allocation2 + $0x60] sm:$0xf]
        %v805 = vld [vmem:[#allocation2 + $0x64] sm:$0xf]
        %v806 = vld [vmem:[#allocation2 + $0x68] sm:$0xf]
        %v807 = vld [vmem:[#allocation2 + $0x6c] sm:$0xf]
        %v808 = vld [vmem:[#allocation2 + $0x70] sm:$0xf]
        %v809 = vld [vmem:[#allocation2 + $0x74] sm:$0xf]
        %v810 = vld [vmem:[#allocation2 + $0x78] sm:$0xf]
        %v811 = vld [vmem:[#allocation2 + $0x7c] sm:$0xf]
        %v812 = vld [vmem:[#allocation2 + $0x80] sm:$0xf]
        %v813 = vld [vmem:[#allocation2 + $0x84] sm:$0xf]
        %v814 = vld [vmem:[#allocation2 + $0x88] sm:$0xf]
        %v815 = vld [vmem:[#allocation2 + $0x8c] sm:$0xf]
        %v852 = vunpack.c.l.b16 %v780
        %v853 = vunpack.c.l.b16 %v781
        %v854 = vunpack.c.l.b16 %v782
        %v855 = vunpack.c.l.b16 %v783
        %v856 = vunpack.c.l.b16 %v784
        %v857 = vunpack.c.l.b16 %v785
        %v858 = vunpack.c.l.b16 %v786
        %v859 = vunpack.c.l.b16 %v787
        %v860 = vunpack.c.l.b16 %v788
        %v861 = vunpack.c.l.b16 %v789
        %v862 = vunpack.c.l.b16 %v790
        %v863 = vunpack.c.l.b16 %v791
        %v864 = vunpack.c.l.b16 %v792
        %v865 = vunpack.c.l.b16 %v793
        %v866 = vunpack.c.l.b16 %v794
        %v867 = vunpack.c.l.b16 %v795
        %v868 = vunpack.c.l.b16 %v796
        %v869 = vunpack.c.l.b16 %v797
        %v870 = vunpack.c.l.b16 %v798
        %v871 = vunpack.c.l.b16 %v799
        %v872 = vunpack.c.l.b16 %v800
        %v873 = vunpack.c.l.b16 %v801
        %v874 = vunpack.c.l.b16 %v802
        %v875 = vunpack.c.l.b16 %v803
        %v876 = vunpack.c.l.b16 %v804
        %v877 = vunpack.c.l.b16 %v805
        %v878 = vunpack.c.l.b16 %v806
        %v879 = vunpack.c.l.b16 %v807
        %v880 = vunpack.c.l.b16 %v808
        %v881 = vunpack.c.l.b16 %v809
        %v882 = vunpack.c.l.b16 %v810
        %v883 = vunpack.c.l.b16 %v811
        %v884 = vunpack.c.l.b16 %v812
        %v885 = vunpack.c.l.b16 %v813
        %v886 = vunpack.c.l.b16 %v814
        %v887 = vunpack.c.l.b16 %v815
        %v888 = vpack.c.b16 %v853, %v852
        %v889 = vpack.c.b16 %v855, %v854
        %v890 = vpack.c.b16 %v857, %v856
        %v891 = vpack.c.b16 %v859, %v858
        %v892 = vpack.c.b16 %v861, %v860
        %v893 = vpack.c.b16 %v863, %v862
        %v894 = vpack.c.b16 %v865, %v864
        %v895 = vpack.c.b16 %v867, %v866
        %v896 = vpack.c.b16 %v869, %v868
        %v897 = vpack.c.b16 %v871, %v870
        %v898 = vpack.c.b16 %v873, %v872
        %v899 = vpack.c.b16 %v875, %v874
        %v900 = vpack.c.b16 %v877, %v876
        %v901 = vpack.c.b16 %v879, %v878
        %v902 = vpack.c.b16 %v881, %v880
        %v903 = vpack.c.b16 %v883, %v882
        %v904 = vpack.c.b16 %v885, %v884
        %v905 = vpack.c.b16 %v887, %v886
        %vm924 = vcmask 261120
        %925 = vst.msk [vmem:[#allocation6] sm:$0xff] %vm924, %v888
        %926 = vst.msk [vmem:[#allocation6 + $0x18] sm:$0xff] %vm924, %v889
        %927 = vst.msk [vmem:[#allocation6 + $0x30] sm:$0xff] %vm924, %v890
        %928 = vst.msk [vmem:[#allocation6 + $0x48] sm:$0xff] %vm924, %v891
        %929 = vst.msk [vmem:[#allocation6 + $0x60] sm:$0xff] %vm924, %v892
        %930 = vst.msk [vmem:[#allocation6 + $0x78] sm:$0xff] %vm924, %v893
        %931 = vst.msk [vmem:[#allocation6 + $0x90] sm:$0xff] %vm924, %v894
        %932 = vst.msk [vmem:[#allocation6 + $0xa8] sm:$0xff] %vm924, %v895
        %933 = vst.msk [vmem:[#allocation6 + $0xc0] sm:$0xff] %vm924, %v896
        %934 = vst.msk [vmem:[#allocation6 + $0xd8] sm:$0xff] %vm924, %v897
        %935 = vst.msk [vmem:[#allocation6 + $0xf0] sm:$0xff] %vm924, %v898
        %936 = vst.msk [vmem:[#allocation6 + $0x108] sm:$0xff] %vm924, %v899
        %937 = vst.msk [vmem:[#allocation6 + $0x120] sm:$0xff] %vm924, %v900
        %938 = vst.msk [vmem:[#allocation6 + $0x138] sm:$0xff] %vm924, %v901
        %939 = vst.msk [vmem:[#allocation6 + $0x150] sm:$0xff] %vm924, %v902
        %940 = vst.msk [vmem:[#allocation6 + $0x168] sm:$0xff] %vm924, %v903
        %941 = vst.msk [vmem:[#allocation6 + $0x180] sm:$0xff] %vm924, %v904
        %942 = vst.msk [vmem:[#allocation6 + $0x198] sm:$0xff] %vm924, %v905
        %v943 = vld [vmem:[#allocation2] sm:$0xf]
        %v944 = vld [vmem:[#allocation2 + $0x4] sm:$0xf]
        %v945 = vld [vmem:[#allocation2 + $0x8] sm:$0xf]
        %v946 = vld [vmem:[#allocation2 + $0xc] sm:$0xf]
        %v947 = vld [vmem:[#allocation2 + $0x10] sm:$0xf]
        %v948 = vld [vmem:[#allocation2 + $0x14] sm:$0xf]
        %v949 = vld [vmem:[#allocation2 + $0x18] sm:$0xf]
        %v950 = vld [vmem:[#allocation2 + $0x1c] sm:$0xf]
        %v951 = vld [vmem:[#allocation2 + $0x20] sm:$0xf]
        %v952 = vld [vmem:[#allocation2 + $0x24] sm:$0xf]
        %v953 = vld [vmem:[#allocation2 + $0x28] sm:$0xf]
        %v954 = vld [vmem:[#allocation2 + $0x2c] sm:$0xf]
        %v955 = vld [vmem:[#allocation2 + $0x30] sm:$0xf]
        %v956 = vld [vmem:[#allocation2 + $0x34] sm:$0xf]
        %v957 = vld [vmem:[#allocation2 + $0x38] sm:$0xf]
        %v958 = vld [vmem:[#allocation2 + $0x3c] sm:$0xf]
        %v959 = vld [vmem:[#allocation2 + $0x40] sm:$0xf]
        %v960 = vld [vmem:[#allocation2 + $0x44] sm:$0xf]
        %v961 = vld [vmem:[#allocation2 + $0x48] sm:$0xf]
        %v962 = vld [vmem:[#allocation2 + $0x4c] sm:$0xf]
        %v963 = vld [vmem:[#allocation2 + $0x50] sm:$0xf]
        %v964 = vld [vmem:[#allocation2 + $0x54] sm:$0xf]
        %v965 = vld [vmem:[#allocation2 + $0x58] sm:$0xf]
        %v966 = vld [vmem:[#allocation2 + $0x5c] sm:$0xf]
        %v967 = vld [vmem:[#allocation2 + $0x60] sm:$0xf]
        %v968 = vld [vmem:[#allocation2 + $0x64] sm:$0xf]
        %v969 = vld [vmem:[#allocation2 + $0x68] sm:$0xf]
        %v970 = vld [vmem:[#allocation2 + $0x6c] sm:$0xf]
        %v971 = vld [vmem:[#allocation2 + $0x70] sm:$0xf]
        %v972 = vld [vmem:[#allocation2 + $0x74] sm:$0xf]
        %v973 = vld [vmem:[#allocation2 + $0x78] sm:$0xf]
        %v974 = vld [vmem:[#allocation2 + $0x7c] sm:$0xf]
        %v975 = vld [vmem:[#allocation2 + $0x80] sm:$0xf]
        %v976 = vld [vmem:[#allocation2 + $0x84] sm:$0xf]
        %v977 = vld [vmem:[#allocation2 + $0x88] sm:$0xf]
        %v978 = vld [vmem:[#allocation2 + $0x8c] sm:$0xf]
        %v979 = vld [vmem:[#allocation2 + $0x90] sm:$0x1]
        %v1017 = vunpack.c.l.b16 %v943
        %v1018 = vunpack.c.l.b16 %v944
        %v1019 = vunpack.c.l.b16 %v945
        %v1020 = vunpack.c.l.b16 %v946
        %v1021 = vunpack.c.l.b16 %v947
        %v1022 = vunpack.c.l.b16 %v948
        %v1023 = vunpack.c.l.b16 %v949
        %v1024 = vunpack.c.l.b16 %v950
        %v1025 = vunpack.c.l.b16 %v951
        %v1026 = vunpack.c.l.b16 %v952
        %v1027 = vunpack.c.l.b16 %v953
        %v1028 = vunpack.c.l.b16 %v954
        %v1029 = vunpack.c.l.b16 %v955
        %v1030 = vunpack.c.l.b16 %v956
        %v1031 = vunpack.c.l.b16 %v957
        %v1032 = vunpack.c.l.b16 %v958
        %v1033 = vunpack.c.l.b16 %v959
        %v1034 = vunpack.c.l.b16 %v960
        %v1035 = vunpack.c.l.b16 %v961
        %v1036 = vunpack.c.l.b16 %v962
        %v1037 = vunpack.c.l.b16 %v963
        %v1038 = vunpack.c.l.b16 %v964
        %v1039 = vunpack.c.l.b16 %v965
        %v1040 = vunpack.c.l.b16 %v966
        %v1041 = vunpack.c.l.b16 %v967
        %v1042 = vunpack.c.l.b16 %v968
        %v1043 = vunpack.c.l.b16 %v969
        %v1044 = vunpack.c.l.b16 %v970
        %v1045 = vunpack.c.l.b16 %v971
        %v1046 = vunpack.c.l.b16 %v972
        %v1047 = vunpack.c.l.b16 %v973
        %v1048 = vunpack.c.l.b16 %v974
        %v1049 = vunpack.c.l.b16 %v975
        %v1050 = vunpack.c.l.b16 %v976
        %v1051 = vunpack.c.l.b16 %v977
        %v1052 = vunpack.c.l.b16 %v978
        %v1053 = vunpack.c.l.b16 %v979
        %v1054 = vpack.c.b16 %v1018, %v1017
        %v1055 = vpack.c.b16 %v1020, %v1019
        %v1056 = vpack.c.b16 %v1022, %v1021
        %v1057 = vpack.c.b16 %v1024, %v1023
        %v1058 = vpack.c.b16 %v1026, %v1025
        %v1059 = vpack.c.b16 %v1028, %v1027
        %v1060 = vpack.c.b16 %v1030, %v1029
        %v1061 = vpack.c.b16 %v1032, %v1031
        %v1062 = vpack.c.b16 %v1034, %v1033
        %v1063 = vpack.c.b16 %v1036, %v1035
        %v1064 = vpack.c.b16 %v1038, %v1037
        %v1065 = vpack.c.b16 %v1040, %v1039
        %v1066 = vpack.c.b16 %v1042, %v1041
        %v1067 = vpack.c.b16 %v1044, %v1043
        %v1068 = vpack.c.b16 %v1046, %v1045
        %v1069 = vpack.c.b16 %v1048, %v1047
        %v1070 = vpack.c.b16 %v1050, %v1049
        %v1071 = vpack.c.b16 %v1052, %v1051
        %v1072 = vpack.c.b16 %v1053, %v1053
        %vm1073 = vsmask.f32 7424
        %v1075 = vshrl.u32 %v1054, 16
        %v1077 = vshll.u32 %v1054, 16
        %v1079 = vrot.slane %v1077, 1
        %v1080 = vor.u32 %v1075, %v1079
        %v1082 = vshll.u32 %v1055, 16
        %v1084 = vrot.slane %v1082, 1
        %v1085 = vsel %vm1073, %v1080, %v1084
        %v1086 = vshrl.u32 %v1055, 16
        %v1088 = vor.u32 %v1086, %v1084
        %v1090 = vshll.u32 %v1056, 16
        %v1092 = vrot.slane %v1090, 1
        %v1093 = vsel %vm1073, %v1088, %v1092
        %v1094 = vshrl.u32 %v1056, 16
        %v1096 = vor.u32 %v1094, %v1092
        %v1098 = vshll.u32 %v1057, 16
        %v1100 = vrot.slane %v1098, 1
        %v1101 = vsel %vm1073, %v1096, %v1100
        %v1102 = vshrl.u32 %v1057, 16
        %v1104 = vor.u32 %v1102, %v1100
        %v1106 = vshll.u32 %v1058, 16
        %v1108 = vrot.slane %v1106, 1
        %v1109 = vsel %vm1073, %v1104, %v1108
        %v1110 = vshrl.u32 %v1058, 16
        %v1112 = vor.u32 %v1110, %v1108
        %v1114 = vshll.u32 %v1059, 16
        %v1116 = vrot.slane %v1114, 1
        %v1117 = vsel %vm1073, %v1112, %v1116
        %v1118 = vshrl.u32 %v1059, 16
        %v1120 = vor.u32 %v1118, %v1116
        %v1122 = vshll.u32 %v1060, 16
        %v1124 = vrot.slane %v1122, 1
        %v1125 = vsel %vm1073, %v1120, %v1124
        %v1126 = vshrl.u32 %v1060, 16
        %v1128 = vor.u32 %v1126, %v1124
        %v1130 = vshll.u32 %v1061, 16
        %v1132 = vrot.slane %v1130, 1
        %v1133 = vsel %vm1073, %v1128, %v1132
        %v1134 = vshrl.u32 %v1061, 16
        %v1136 = vor.u32 %v1134, %v1132
        %v1138 = vshll.u32 %v1062, 16
        %v1140 = vrot.slane %v1138, 1
        %v1141 = vsel %vm1073, %v1136, %v1140
        %v1142 = vshrl.u32 %v1062, 16
        %v1144 = vor.u32 %v1142, %v1140
        %v1146 = vshll.u32 %v1063, 16
        %v1148 = vrot.slane %v1146, 1
        %v1149 = vsel %vm1073, %v1144, %v1148
        %v1150 = vshrl.u32 %v1063, 16
        %v1152 = vor.u32 %v1150, %v1148
        %v1154 = vshll.u32 %v1064, 16
        %v1156 = vrot.slane %v1154, 1
        %v1157 = vsel %vm1073, %v1152, %v1156
        %v1158 = vshrl.u32 %v1064, 16
        %v1160 = vor.u32 %v1158, %v1156
        %v1162 = vshll.u32 %v1065, 16
        %v1164 = vrot.slane %v1162, 1
        %v1165 = vsel %vm1073, %v1160, %v1164
        %v1166 = vshrl.u32 %v1065, 16
        %v1168 = vor.u32 %v1166, %v1164
        %v1170 = vshll.u32 %v1066, 16
        %v1172 = vrot.slane %v1170, 1
        %v1173 = vsel %vm1073, %v1168, %v1172
        %v1174 = vshrl.u32 %v1066, 16
        %v1176 = vor.u32 %v1174, %v1172
        %v1178 = vshll.u32 %v1067, 16
        %v1180 = vrot.slane %v1178, 1
        %v1181 = vsel %vm1073, %v1176, %v1180
        %v1182 = vshrl.u32 %v1067, 16
        %v1184 = vor.u32 %v1182, %v1180
        %v1186 = vshll.u32 %v1068, 16
        %v1188 = vrot.slane %v1186, 1
        %v1189 = vsel %vm1073, %v1184, %v1188
        %v1190 = vshrl.u32 %v1068, 16
        %v1192 = vor.u32 %v1190, %v1188
        %v1194 = vshll.u32 %v1069, 16
        %v1196 = vrot.slane %v1194, 1
        %v1197 = vsel %vm1073, %v1192, %v1196
        %v1198 = vshrl.u32 %v1069, 16
        %v1200 = vor.u32 %v1198, %v1196
        %v1202 = vshll.u32 %v1070, 16
        %v1204 = vrot.slane %v1202, 1
        %v1205 = vsel %vm1073, %v1200, %v1204
        %v1206 = vshrl.u32 %v1070, 16
        %v1208 = vor.u32 %v1206, %v1204
        %v1210 = vshll.u32 %v1071, 16
        %v1212 = vrot.slane %v1210, 1
        %v1213 = vsel %vm1073, %v1208, %v1212
        %v1214 = vshrl.u32 %v1071, 16
        %v1216 = vor.u32 %v1214, %v1212
        %v1218 = vshll.u32 %v1072, 16
        %v1220 = vrot.slane %v1218, 1
        %v1221 = vsel %vm1073, %v1216, %v1220
        %1222 = vrot.lane.b32.xlu0 %v1085, 32
        %v1223 = vpop.permute.xlu0 %1222
        %1224 = vrot.lane.b32.xlu0 %v1093, 32
        %v1225 = vpop.permute.xlu0 %1224
        %1226 = vrot.lane.b32.xlu0 %v1101, 32
        %v1227 = vpop.permute.xlu0 %1226
        %1228 = vrot.lane.b32.xlu0 %v1109, 32
        %v1229 = vpop.permute.xlu0 %1228
        %1230 = vrot.lane.b32.xlu0 %v1117, 32
        %v1231 = vpop.permute.xlu0 %1230
        %1232 = vrot.lane.b32.xlu0 %v1125, 32
        %v1233 = vpop.permute.xlu0 %1232
        %1234 = vrot.lane.b32.xlu0 %v1133, 32
        %v1235 = vpop.permute.xlu0 %1234
        %1236 = vrot.lane.b32.xlu0 %v1141, 32
        %v1237 = vpop.permute.xlu0 %1236
        %1238 = vrot.lane.b32.xlu0 %v1149, 32
        %v1239 = vpop.permute.xlu0 %1238
        %1240 = vrot.lane.b32.xlu0 %v1157, 32
        %v1241 = vpop.permute.xlu0 %1240
        %1242 = vrot.lane.b32.xlu0 %v1165, 32
        %v1243 = vpop.permute.xlu0 %1242
        %1244 = vrot.lane.b32.xlu0 %v1173, 32
        %v1245 = vpop.permute.xlu0 %1244
        %1246 = vrot.lane.b32.xlu0 %v1181, 32
        %v1247 = vpop.permute.xlu0 %1246
        %1248 = vrot.lane.b32.xlu0 %v1189, 32
        %v1249 = vpop.permute.xlu0 %1248
        %1250 = vrot.lane.b32.xlu0 %v1197, 32
        %v1251 = vpop.permute.xlu0 %1250
        %1252 = vrot.lane.b32.xlu0 %v1205, 32
        %v1253 = vpop.permute.xlu0 %1252
        %1254 = vrot.lane.b32.xlu0 %v1213, 32
        %v1255 = vpop.permute.xlu0 %1254
        %1256 = vrot.lane.b32.xlu0 %v1221, 32
        %v1257 = vpop.permute.xlu0 %1256
        %vm1276 = vcmask 523520
        %1277 = vst.msk [vmem:[#allocation6] sm:$0xff] %vm1276, %v1223
        %1278 = vst.msk [vmem:[#allocation6 + $0x18] sm:$0xff] %vm1276, %v1225
        %1279 = vst.msk [vmem:[#allocation6 + $0x30] sm:$0xff] %vm1276, %v1227
        %1280 = vst.msk [vmem:[#allocation6 + $0x48] sm:$0xff] %vm1276, %v1229
        %1281 = vst.msk [vmem:[#allocation6 + $0x60] sm:$0xff] %vm1276, %v1231
        %1282 = vst.msk [vmem:[#allocation6 + $0x78] sm:$0xff] %vm1276, %v1233
        %1283 = vst.msk [vmem:[#allocation6 + $0x90] sm:$0xff] %vm1276, %v1235
        %1284 = vst.msk [vmem:[#allocation6 + $0xa8] sm:$0xff] %vm1276, %v1237
        %1285 = vst.msk [vmem:[#allocation6 + $0xc0] sm:$0xff] %vm1276, %v1239
        %1286 = vst.msk [vmem:[#allocation6 + $0xd8] sm:$0xff] %vm1276, %v1241
        %1287 = vst.msk [vmem:[#allocation6 + $0xf0] sm:$0xff] %vm1276, %v1243
        %1288 = vst.msk [vmem:[#allocation6 + $0x108] sm:$0xff] %vm1276, %v1245
        %1289 = vst.msk [vmem:[#allocation6 + $0x120] sm:$0xff] %vm1276, %v1247
        %1290 = vst.msk [vmem:[#allocation6 + $0x138] sm:$0xff] %vm1276, %v1249
        %1291 = vst.msk [vmem:[#allocation6 + $0x150] sm:$0xff] %vm1276, %v1251
        %1292 = vst.msk [vmem:[#allocation6 + $0x168] sm:$0xff] %vm1276, %v1253
        %1293 = vst.msk [vmem:[#allocation6 + $0x180] sm:$0xff] %vm1276, %v1255
        %1294 = vst.msk [vmem:[#allocation6 + $0x198] sm:$0xff] %vm1276, %v1257
        %v1295 = vld [vmem:[#allocation2] sm:$0xe]
        %v1296 = vld [vmem:[#allocation2 + $0x4] sm:$0xf]
        %v1297 = vld [vmem:[#allocation2 + $0x8] sm:$0xf]
        %v1298 = vld [vmem:[#allocation2 + $0xc] sm:$0xf]
        %v1299 = vld [vmem:[#allocation2 + $0x10] sm:$0xf]
        %v1300 = vld [vmem:[#allocation2 + $0x14] sm:$0xf]
        %v1301 = vld [vmem:[#allocation2 + $0x18] sm:$0xf]
        %v1302 = vld [vmem:[#allocation2 + $0x1c] sm:$0xf]
        %v1303 = vld [vmem:[#allocation2 + $0x20] sm:$0xf]
        %v1304 = vld [vmem:[#allocation2 + $0x24] sm:$0xf]
        %v1305 = vld [vmem:[#allocation2 + $0x28] sm:$0xf]
        %v1306 = vld [vmem:[#allocation2 + $0x2c] sm:$0xf]
        %v1307 = vld [vmem:[#allocation2 + $0x30] sm:$0xf]
        %v1308 = vld [vmem:[#allocation2 + $0x34] sm:$0xf]
        %v1309 = vld [vmem:[#allocation2 + $0x38] sm:$0xf]
        %v1310 = vld [vmem:[#allocation2 + $0x3c] sm:$0xf]
        %v1311 = vld [vmem:[#allocation2 + $0x40] sm:$0xf]
        %v1312 = vld [vmem:[#allocation2 + $0x44] sm:$0xf]
        %v1313 = vld [vmem:[#allocation2 + $0x48] sm:$0xf]
        %v1314 = vld [vmem:[#allocation2 + $0x4c] sm:$0xf]
        %v1315 = vld [vmem:[#allocation2 + $0x50] sm:$0xf]
        %v1316 = vld [vmem:[#allocation2 + $0x54] sm:$0xf]
        %v1317 = vld [vmem:[#allocation2 + $0x58] sm:$0xf]
        %v1318 = vld [vmem:[#allocation2 + $0x5c] sm:$0xf]
        %v1319 = vld [vmem:[#allocation2 + $0x60] sm:$0xf]
        %v1320 = vld [vmem:[#allocation2 + $0x64] sm:$0xf]
        %v1321 = vld [vmem:[#allocation2 + $0x68] sm:$0xf]
        %v1322 = vld [vmem:[#allocation2 + $0x6c] sm:$0xf]
        %v1323 = vld [vmem:[#allocation2 + $0x70] sm:$0xf]
        %v1324 = vld [vmem:[#allocation2 + $0x74] sm:$0xf]
        %v1325 = vld [vmem:[#allocation2 + $0x78] sm:$0xf]
        %v1326 = vld [vmem:[#allocation2 + $0x7c] sm:$0xf]
        %v1327 = vld [vmem:[#allocation2 + $0x80] sm:$0xf]
        %v1328 = vld [vmem:[#allocation2 + $0x84] sm:$0xf]
        %v1329 = vld [vmem:[#allocation2 + $0x88] sm:$0xf]
        %v1330 = vld [vmem:[#allocation2 + $0x8c] sm:$0xf]
        %v1331 = vld [vmem:[#allocation2 + $0x90] sm:$0x1]
        %v1369 = vunpack.c.l.b16 %v1295
        %v1370 = vunpack.c.l.b16 %v1296
        %v1371 = vunpack.c.l.b16 %v1297
        %v1372 = vunpack.c.l.b16 %v1298
        %v1373 = vunpack.c.l.b16 %v1299
        %v1374 = vunpack.c.l.b16 %v1300
        %v1375 = vunpack.c.l.b16 %v1301
        %v1376 = vunpack.c.l.b16 %v1302
        %v1377 = vunpack.c.l.b16 %v1303
        %v1378 = vunpack.c.l.b16 %v1304
        %v1379 = vunpack.c.l.b16 %v1305
        %v1380 = vunpack.c.l.b16 %v1306
        %v1381 = vunpack.c.l.b16 %v1307
        %v1382 = vunpack.c.l.b16 %v1308
        %v1383 = vunpack.c.l.b16 %v1309
        %v1384 = vunpack.c.l.b16 %v1310
        %v1385 = vunpack.c.l.b16 %v1311
        %v1386 = vunpack.c.l.b16 %v1312
        %v1387 = vunpack.c.l.b16 %v1313
        %v1388 = vunpack.c.l.b16 %v1314
        %v1389 = vunpack.c.l.b16 %v1315
        %v1390 = vunpack.c.l.b16 %v1316
        %v1391 = vunpack.c.l.b16 %v1317
        %v1392 = vunpack.c.l.b16 %v1318
        %v1393 = vunpack.c.l.b16 %v1319
        %v1394 = vunpack.c.l.b16 %v1320
        %v1395 = vunpack.c.l.b16 %v1321
        %v1396 = vunpack.c.l.b16 %v1322
        %v1397 = vunpack.c.l.b16 %v1323
        %v1398 = vunpack.c.l.b16 %v1324
        %v1399 = vunpack.c.l.b16 %v1325
        %v1400 = vunpack.c.l.b16 %v1326
        %v1401 = vunpack.c.l.b16 %v1327
        %v1402 = vunpack.c.l.b16 %v1328
        %v1403 = vunpack.c.l.b16 %v1329
        %v1404 = vunpack.c.l.b16 %v1330
        %v1405 = vunpack.c.l.b16 %v1331
        %v1406 = vpack.c.b16 %v1370, %v1369
        %v1407 = vpack.c.b16 %v1372, %v1371
        %v1408 = vpack.c.b16 %v1374, %v1373
        %v1409 = vpack.c.b16 %v1376, %v1375
        %v1410 = vpack.c.b16 %v1378, %v1377
        %v1411 = vpack.c.b16 %v1380, %v1379
        %v1412 = vpack.c.b16 %v1382, %v1381
        %v1413 = vpack.c.b16 %v1384, %v1383
        %v1414 = vpack.c.b16 %v1386, %v1385
        %v1415 = vpack.c.b16 %v1388, %v1387
        %v1416 = vpack.c.b16 %v1390, %v1389
        %v1417 = vpack.c.b16 %v1392, %v1391
        %v1418 = vpack.c.b16 %v1394, %v1393
        %v1419 = vpack.c.b16 %v1396, %v1395
        %v1420 = vpack.c.b16 %v1398, %v1397
        %v1421 = vpack.c.b16 %v1400, %v1399
        %v1422 = vpack.c.b16 %v1402, %v1401
        %v1423 = vpack.c.b16 %v1404, %v1403
        %v1424 = vpack.c.b16 %v1405, %v1405
        %vm1425 = vcmask 1046528
        %v1426 = vrot.slane %v1406, 1
        %v1427 = vrot.slane %v1407, 1
        %v1428 = vsel %vm1425, %v1426, %v1427
        %v1429 = vrot.slane %v1408, 1
        %v1430 = vsel %vm1425, %v1427, %v1429
        %v1431 = vrot.slane %v1409, 1
        %v1432 = vsel %vm1425, %v1429, %v1431
        %v1433 = vrot.slane %v1410, 1
        %v1434 = vsel %vm1425, %v1431, %v1433
        %v1435 = vrot.slane %v1411, 1
        %v1436 = vsel %vm1425, %v1433, %v1435
        %v1437 = vrot.slane %v1412, 1
        %v1438 = vsel %vm1425, %v1435, %v1437
        %v1439 = vrot.slane %v1413, 1
        %v1440 = vsel %vm1425, %v1437, %v1439
        %v1441 = vrot.slane %v1414, 1
        %v1442 = vsel %vm1425, %v1439, %v1441
        %v1443 = vrot.slane %v1415, 1
        %v1444 = vsel %vm1425, %v1441, %v1443
        %v1445 = vrot.slane %v1416, 1
        %v1446 = vsel %vm1425, %v1443, %v1445
        %v1447 = vrot.slane %v1417, 1
        %v1448 = vsel %vm1425, %v1445, %v1447
        %v1449 = vrot.slane %v1418, 1
        %v1450 = vsel %vm1425, %v1447, %v1449
        %v1451 = vrot.slane %v1419, 1
        %v1452 = vsel %vm1425, %v1449, %v1451
        %v1453 = vrot.slane %v1420, 1
        %v1454 = vsel %vm1425, %v1451, %v1453
        %v1455 = vrot.slane %v1421, 1
        %v1456 = vsel %vm1425, %v1453, %v1455
        %v1457 = vrot.slane %v1422, 1
        %v1458 = vsel %vm1425, %v1455, %v1457
        %v1459 = vrot.slane %v1423, 1
        %v1460 = vsel %vm1425, %v1457, %v1459
        %v1461 = vrot.slane %v1424, 1
        %v1462 = vsel %vm1425, %v1459, %v1461
        %1463 = vrot.lane.b32.xlu0 %v1428, 64
        %v1464 = vpop.permute.xlu0 %1463
        %1465 = vrot.lane.b32.xlu0 %v1430, 64
        %v1466 = vpop.permute.xlu0 %1465
        %1467 = vrot.lane.b32.xlu0 %v1432, 64
        %v1468 = vpop.permute.xlu0 %1467
        %1469 = vrot.lane.b32.xlu0 %v1434, 64
        %v1470 = vpop.permute.xlu0 %1469
        %1471 = vrot.lane.b32.xlu0 %v1436, 64
        %v1472 = vpop.permute.xlu0 %1471
        %1473 = vrot.lane.b32.xlu0 %v1438, 64
        %v1474 = vpop.permute.xlu0 %1473
        %1475 = vrot.lane.b32.xlu0 %v1440, 64
        %v1476 = vpop.permute.xlu0 %1475
        %1477 = vrot.lane.b32.xlu0 %v1442, 64
        %v1478 = vpop.permute.xlu0 %1477
        %1479 = vrot.lane.b32.xlu0 %v1444, 64
        %v1480 = vpop.permute.xlu0 %1479
        %1481 = vrot.lane.b32.xlu0 %v1446, 64
        %v1482 = vpop.permute.xlu0 %1481
        %1483 = vrot.lane.b32.xlu0 %v1448, 64
        %v1484 = vpop.permute.xlu0 %1483
        %1485 = vrot.lane.b32.xlu0 %v1450, 64
        %v1486 = vpop.permute.xlu0 %1485
        %1487 = vrot.lane.b32.xlu0 %v1452, 64
        %v1488 = vpop.permute.xlu0 %1487
        %1489 = vrot.lane.b32.xlu0 %v1454, 64
        %v1490 = vpop.permute.xlu0 %1489
        %1491 = vrot.lane.b32.xlu0 %v1456, 64
        %v1492 = vpop.permute.xlu0 %1491
        %1493 = vrot.lane.b32.xlu0 %v1458, 64
        %v1494 = vpop.permute.xlu0 %1493
        %1495 = vrot.lane.b32.xlu0 %v1460, 64
        %v1496 = vpop.permute.xlu0 %1495
        %1497 = vrot.lane.b32.xlu0 %v1462, 64
        %v1498 = vpop.permute.xlu0 %1497
        %vm1517 = vcmask 785920
        %1518 = vst.msk [vmem:[#allocation6] sm:$0xff] %vm1517, %v1464
        %1519 = vst.msk [vmem:[#allocation6 + $0x18] sm:$0xff] %vm1517, %v1466
        %1520 = vst.msk [vmem:[#allocation6 + $0x30] sm:$0xff] %vm1517, %v1468
        %1521 = vst.msk [vmem:[#allocation6 + $0x48] sm:$0xff] %vm1517, %v1470
        %1522 = vst.msk [vmem:[#allocation6 + $0x60] sm:$0xff] %vm1517, %v1472
        %1523 = vst.msk [vmem:[#allocation6 + $0x78] sm:$0xff] %vm1517, %v1474
        %1524 = vst.msk [vmem:[#allocation6 + $0x90] sm:$0xff] %vm1517, %v1476
        %1525 = vst.msk [vmem:[#allocation6 + $0xa8] sm:$0xff] %vm1517, %v1478
        %1526 = vst.msk [vmem:[#allocation6 + $0xc0] sm:$0xff] %vm1517, %v1480
        %1527 = vst.msk [vmem:[#allocation6 + $0xd8] sm:$0xff] %vm1517, %v1482
        %1528 = vst.msk [vmem:[#allocation6 + $0xf0] sm:$0xff] %vm1517, %v1484
        %1529 = vst.msk [vmem:[#allocation6 + $0x108] sm:$0xff] %vm1517, %v1486
        %1530 = vst.msk [vmem:[#allocation6 + $0x120] sm:$0xff] %vm1517, %v1488
        %1531 = vst.msk [vmem:[#allocation6 + $0x138] sm:$0xff] %vm1517, %v1490
        %1532 = vst.msk [vmem:[#allocation6 + $0x150] sm:$0xff] %vm1517, %v1492
        %1533 = vst.msk [vmem:[#allocation6 + $0x168] sm:$0xff] %vm1517, %v1494
        %1534 = vst.msk [vmem:[#allocation6 + $0x180] sm:$0xff] %vm1517, %v1496
        %1535 = vst.msk [vmem:[#allocation6 + $0x198] sm:$0xff] %vm1517, %v1498
        %v1536 = vld [vmem:[#allocation2 + $0x8] sm:$0xe]
        %v1537 = vld [vmem:[#allocation2 + $0xc] sm:$0xf]
        %v1538 = vld [vmem:[#allocation2 + $0x10] sm:$0xf]
        %v1539 = vld [vmem:[#allocation2 + $0x14] sm:$0xf]
        %v1540 = vld [vmem:[#allocation2 + $0x18] sm:$0xf]
        %v1541 = vld [vmem:[#allocation2 + $0x1c] sm:$0xf]
        %v1542 = vld [vmem:[#allocation2 + $0x20] sm:$0xf]
        %v1543 = vld [vmem:[#allocation2 + $0x24] sm:$0xf]
        %v1544 = vld [vmem:[#allocation2 + $0x28] sm:$0xf]
        %v1545 = vld [vmem:[#allocation2 + $0x2c] sm:$0xf]
        %v1546 = vld [vmem:[#allocation2 + $0x30] sm:$0xf]
        %v1547 = vld [vmem:[#allocation2 + $0x34] sm:$0xf]
        %v1548 = vld [vmem:[#allocation2 + $0x38] sm:$0xf]
        %v1549 = vld [vmem:[#allocation2 + $0x3c] sm:$0xf]
        %v1550 = vld [vmem:[#allocation2 + $0x40] sm:$0xf]
        %v1551 = vld [vmem:[#allocation2 + $0x44] sm:$0xf]
        %v1552 = vld [vmem:[#allocation2 + $0x48] sm:$0xf]
        %v1553 = vld [vmem:[#allocation2 + $0x4c] sm:$0xf]
        %v1554 = vld [vmem:[#allocation2 + $0x50] sm:$0xf]
        %v1555 = vld [vmem:[#allocation2 + $0x54] sm:$0xf]
        %v1556 = vld [vmem:[#allocation2 + $0x58] sm:$0xf]
        %v1557 = vld [vmem:[#allocation2 + $0x5c] sm:$0xf]
        %v1558 = vld [vmem:[#allocation2 + $0x60] sm:$0xf]
        %v1559 = vld [vmem:[#allocation2 + $0x64] sm:$0xf]
        %v1560 = vld [vmem:[#allocation2 + $0x68] sm:$0xf]
        %v1561 = vld [vmem:[#allocation2 + $0x6c] sm:$0xf]
        %v1562 = vld [vmem:[#allocation2 + $0x70] sm:$0xf]
        %v1563 = vld [vmem:[#allocation2 + $0x74] sm:$0xf]
        %v1564 = vld [vmem:[#allocation2 + $0x78] sm:$0xf]
        %v1565 = vld [vmem:[#allocation2 + $0x7c] sm:$0xf]
        %v1566 = vld [vmem:[#allocation2 + $0x80] sm:$0xf]
        %v1567 = vld [vmem:[#allocation2 + $0x84] sm:$0xf]
        %v1568 = vld [vmem:[#allocation2 + $0x88] sm:$0xf]
        %v1569 = vld [vmem:[#allocation2 + $0x8c] sm:$0xf]
        %v1570 = vld [vmem:[#allocation2 + $0x90] sm:$0xf]
        %v1571 = vld [vmem:[#allocation2 + $0x94] sm:$0xf]
        %v1572 = vld [vmem:[#allocation2 + $0x98] sm:$0x1]
        %v1610 = vunpack.c.l.b16 %v1536
        %v1611 = vunpack.c.l.b16 %v1537
        %v1612 = vunpack.c.l.b16 %v1538
        %v1613 = vunpack.c.l.b16 %v1539
        %v1614 = vunpack.c.l.b16 %v1540
        %v1615 = vunpack.c.l.b16 %v1541
        %v1616 = vunpack.c.l.b16 %v1542
        %v1617 = vunpack.c.l.b16 %v1543
        %v1618 = vunpack.c.l.b16 %v1544
        %v1619 = vunpack.c.l.b16 %v1545
        %v1620 = vunpack.c.l.b16 %v1546
        %v1621 = vunpack.c.l.b16 %v1547
        %v1622 = vunpack.c.l.b16 %v1548
        %v1623 = vunpack.c.l.b16 %v1549
        %v1624 = vunpack.c.l.b16 %v1550
        %v1625 = vunpack.c.l.b16 %v1551
        %v1626 = vunpack.c.l.b16 %v1552
        %v1627 = vunpack.c.l.b16 %v1553
        %v1628 = vunpack.c.l.b16 %v1554
        %v1629 = vunpack.c.l.b16 %v1555
        %v1630 = vunpack.c.l.b16 %v1556
        %v1631 = vunpack.c.l.b16 %v1557
        %v1632 = vunpack.c.l.b16 %v1558
        %v1633 = vunpack.c.l.b16 %v1559
        %v1634 = vunpack.c.l.b16 %v1560
        %v1635 = vunpack.c.l.b16 %v1561
        %v1636 = vunpack.c.l.b16 %v1562
        %v1637 = vunpack.c.l.b16 %v1563
        %v1638 = vunpack.c.l.b16 %v1564
        %v1639 = vunpack.c.l.b16 %v1565
        %v1640 = vunpack.c.l.b16 %v1566
        %v1641 = vunpack.c.l.b16 %v1567
        %v1642 = vunpack.c.l.b16 %v1568
        %v1643 = vunpack.c.l.b16 %v1569
        %v1644 = vunpack.c.l.b16 %v1570
        %v1645 = vunpack.c.l.b16 %v1571
        %v1646 = vunpack.c.l.b16 %v1572
        %v1647 = vpack.c.b16 %v1611, %v1610
        %v1648 = vpack.c.b16 %v1613, %v1612
        %v1649 = vpack.c.b16 %v1615, %v1614
        %v1650 = vpack.c.b16 %v1617, %v1616
        %v1651 = vpack.c.b16 %v1619, %v1618
        %v1652 = vpack.c.b16 %v1621, %v1620
        %v1653 = vpack.c.b16 %v1623, %v1622
        %v1654 = vpack.c.b16 %v1625, %v1624
        %v1655 = vpack.c.b16 %v1627, %v1626
        %v1656 = vpack.c.b16 %v1629, %v1628
        %v1657 = vpack.c.b16 %v1631, %v1630
        %v1658 = vpack.c.b16 %v1633, %v1632
        %v1659 = vpack.c.b16 %v1635, %v1634
        %v1660 = vpack.c.b16 %v1637, %v1636
        %v1661 = vpack.c.b16 %v1639, %v1638
        %v1662 = vpack.c.b16 %v1641, %v1640
        %v1663 = vpack.c.b16 %v1643, %v1642
        %v1664 = vpack.c.b16 %v1645, %v1644
        %v1665 = vpack.c.b16 %v1646, %v1646
        %v1666 = vrot.slane %v1647, 1
        %v1667 = vrot.slane %v1648, 1
        %v1668 = vsel %vm1425, %v1666, %v1667
        %v1669 = vrot.slane %v1649, 1
        %v1670 = vsel %vm1425, %v1667, %v1669
        %v1671 = vrot.slane %v1650, 1
        %v1672 = vsel %vm1425, %v1669, %v1671
        %v1673 = vrot.slane %v1651, 1
        %v1674 = vsel %vm1425, %v1671, %v1673
        %v1675 = vrot.slane %v1652, 1
        %v1676 = vsel %vm1425, %v1673, %v1675
        %v1677 = vrot.slane %v1653, 1
        %v1678 = vsel %vm1425, %v1675, %v1677
        %v1679 = vrot.slane %v1654, 1
        %v1680 = vsel %vm1425, %v1677, %v1679
        %v1681 = vrot.slane %v1655, 1
        %v1682 = vsel %vm1425, %v1679, %v1681
        %v1683 = vrot.slane %v1656, 1
        %v1684 = vsel %vm1425, %v1681, %v1683
        %v1685 = vrot.slane %v1657, 1
        %v1686 = vsel %vm1425, %v1683, %v1685
        %v1687 = vrot.slane %v1658, 1
        %v1688 = vsel %vm1425, %v1685, %v1687
        %v1689 = vrot.slane %v1659, 1
        %v1690 = vsel %vm1425, %v1687, %v1689
        %v1691 = vrot.slane %v1660, 1
        %v1692 = vsel %vm1425, %v1689, %v1691
        %v1693 = vrot.slane %v1661, 1
        %v1694 = vsel %vm1425, %v1691, %v1693
        %v1695 = vrot.slane %v1662, 1
        %v1696 = vsel %vm1425, %v1693, %v1695
        %v1697 = vrot.slane %v1663, 1
        %v1698 = vsel %vm1425, %v1695, %v1697
        %v1699 = vrot.slane %v1664, 1
        %v1700 = vsel %vm1425, %v1697, %v1699
        %v1701 = vrot.slane %v1665, 1
        %v1702 = vsel %vm1425, %v1699, %v1701
        %1703 = vrot.lane.b32.xlu0 %v1668, 96
        %v1704 = vpop.permute.xlu0 %1703
        %1705 = vrot.lane.b32.xlu0 %v1670, 96
        %v1706 = vpop.permute.xlu0 %1705
        %1707 = vrot.lane.b32.xlu0 %v1672, 96
        %v1708 = vpop.permute.xlu0 %1707
        %1709 = vrot.lane.b32.xlu0 %v1674, 96
        %v1710 = vpop.permute.xlu0 %1709
        %1711 = vrot.lane.b32.xlu0 %v1676, 96
        %v1712 = vpop.permute.xlu0 %1711
        %1713 = vrot.lane.b32.xlu0 %v1678, 96
        %v1714 = vpop.permute.xlu0 %1713
        %1715 = vrot.lane.b32.xlu0 %v1680, 96
        %v1716 = vpop.permute.xlu0 %1715
        %1717 = vrot.lane.b32.xlu0 %v1682, 96
        %v1718 = vpop.permute.xlu0 %1717
        %1719 = vrot.lane.b32.xlu0 %v1684, 96
        %v1720 = vpop.permute.xlu0 %1719
        %1721 = vrot.lane.b32.xlu0 %v1686, 96
        %v1722 = vpop.permute.xlu0 %1721
        %1723 = vrot.lane.b32.xlu0 %v1688, 96
        %v1724 = vpop.permute.xlu0 %1723
        %1725 = vrot.lane.b32.xlu0 %v1690, 96
        %v1726 = vpop.permute.xlu0 %1725
        %1727 = vrot.lane.b32.xlu0 %v1692, 96
        %v1728 = vpop.permute.xlu0 %1727
        %1729 = vrot.lane.b32.xlu0 %v1694, 96
        %v1730 = vpop.permute.xlu0 %1729
        %1731 = vrot.lane.b32.xlu0 %v1696, 96
        %v1732 = vpop.permute.xlu0 %1731
        %1733 = vrot.lane.b32.xlu0 %v1698, 96
        %v1734 = vpop.permute.xlu0 %1733
        %1735 = vrot.lane.b32.xlu0 %v1700, 96
        %v1736 = vpop.permute.xlu0 %1735
        %1737 = vrot.lane.b32.xlu0 %v1702, 96
        %v1738 = vpop.permute.xlu0 %1737
        %vm1757 = vcmask 1048320
        %1758 = vst.msk [vmem:[#allocation6] sm:$0xff] %vm1757, %v1704
        %1759 = vst.msk [vmem:[#allocation6 + $0x18] sm:$0xff] %vm1757, %v1706
        %1760 = vst.msk [vmem:[#allocation6 + $0x30] sm:$0xff] %vm1757, %v1708
        %1761 = vst.msk [vmem:[#allocation6 + $0x48] sm:$0xff] %vm1757, %v1710
        %1762 = vst.msk [vmem:[#allocation6 + $0x60] sm:$0xff] %vm1757, %v1712
        %1763 = vst.msk [vmem:[#allocation6 + $0x78] sm:$0xff] %vm1757, %v1714
        %1764 = vst.msk [vmem:[#allocation6 + $0x90] sm:$0xff] %vm1757, %v1716
        %1765 = vst.msk [vmem:[#allocation6 + $0xa8] sm:$0xff] %vm1757, %v1718
        %1766 = vst.msk [vmem:[#allocation6 + $0xc0] sm:$0xff] %vm1757, %v1720
        %1767 = vst.msk [vmem:[#allocation6 + $0xd8] sm:$0xff] %vm1757, %v1722
        %1768 = vst.msk [vmem:[#allocation6 + $0xf0] sm:$0xff] %vm1757, %v1724
        %1769 = vst.msk [vmem:[#allocation6 + $0x108] sm:$0xff] %vm1757, %v1726
        %1770 = vst.msk [vmem:[#allocation6 + $0x120] sm:$0xff] %vm1757, %v1728
        %1771 = vst.msk [vmem:[#allocation6 + $0x138] sm:$0xff] %vm1757, %v1730
        %1772 = vst.msk [vmem:[#allocation6 + $0x150] sm:$0xff] %vm1757, %v1732
        %1773 = vst.msk [vmem:[#allocation6 + $0x168] sm:$0xff] %vm1757, %v1734
        %1774 = vst.msk [vmem:[#allocation6 + $0x180] sm:$0xff] %vm1757, %v1736
        %1775 = vst.msk [vmem:[#allocation6 + $0x198] sm:$0xff] %vm1757, %v1738
        %v1776 = vld [vmem:[#allocation2 + $0x8] sm:$0xe]
        %v1777 = vld [vmem:[#allocation2 + $0xc] sm:$0xf]
        %v1778 = vld [vmem:[#allocation2 + $0x10] sm:$0xf]
        %v1779 = vld [vmem:[#allocation2 + $0x14] sm:$0xf]
        %v1780 = vld [vmem:[#allocation2 + $0x18] sm:$0xf]
        %v1781 = vld [vmem:[#allocation2 + $0x1c] sm:$0xf]
        %v1782 = vld [vmem:[#allocation2 + $0x20] sm:$0xf]
        %v1783 = vld [vmem:[#allocation2 + $0x24] sm:$0xf]
        %v1784 = vld [vmem:[#allocation2 + $0x28] sm:$0xf]
        %v1785 = vld [vmem:[#allocation2 + $0x2c] sm:$0xf]
        %v1786 = vld [vmem:[#allocation2 + $0x30] sm:$0xf]
        %v1787 = vld [vmem:[#allocation2 + $0x34] sm:$0xf]
        %v1788 = vld [vmem:[#allocation2 + $0x38] sm:$0xf]
        %v1789 = vld [vmem:[#allocation2 + $0x3c] sm:$0xf]
        %v1790 = vld [vmem:[#allocation2 + $0x40] sm:$0xf]
        %v1791 = vld [vmem:[#allocation2 + $0x44] sm:$0xf]
        %v1792 = vld [vmem:[#allocation2 + $0x48] sm:$0xf]
        %v1793 = vld [vmem:[#allocation2 + $0x4c] sm:$0xf]
        %v1794 = vld [vmem:[#allocation2 + $0x50] sm:$0xf]
        %v1795 = vld [vmem:[#allocation2 + $0x54] sm:$0xf]
        %v1796 = vld [vmem:[#allocation2 + $0x58] sm:$0xf]
        %v1797 = vld [vmem:[#allocation2 + $0x5c] sm:$0xf]
        %v1798 = vld [vmem:[#allocation2 + $0x60] sm:$0xf]
        %v1799 = vld [vmem:[#allocation2 + $0x64] sm:$0xf]
        %v1800 = vld [vmem:[#allocation2 + $0x68] sm:$0xf]
        %v1801 = vld [vmem:[#allocation2 + $0x6c] sm:$0xf]
        %v1802 = vld [vmem:[#allocation2 + $0x70] sm:$0xf]
        %v1803 = vld [vmem:[#allocation2 + $0x74] sm:$0xf]
        %v1804 = vld [vmem:[#allocation2 + $0x78] sm:$0xf]
        %v1805 = vld [vmem:[#allocation2 + $0x7c] sm:$0xf]
        %v1806 = vld [vmem:[#allocation2 + $0x80] sm:$0xf]
        %v1807 = vld [vmem:[#allocation2 + $0x84] sm:$0xf]
        %v1808 = vld [vmem:[#allocation2 + $0x88] sm:$0xf]
        %v1809 = vld [vmem:[#allocation2 + $0x8c] sm:$0xf]
        %v1810 = vld [vmem:[#allocation2 + $0x90] sm:$0xf]
        %v1811 = vld [vmem:[#allocation2 + $0x94] sm:$0xf]
        %v1812 = vld [vmem:[#allocation2 + $0x98] sm:$0x3]
        %v1850 = vunpack.c.l.b16 %v1776
        %v1851 = vunpack.c.l.b16 %v1777
        %v1852 = vunpack.c.l.b16 %v1778
        %v1853 = vunpack.c.l.b16 %v1779
        %v1854 = vunpack.c.l.b16 %v1780
        %v1855 = vunpack.c.l.b16 %v1781
        %v1856 = vunpack.c.l.b16 %v1782
        %v1857 = vunpack.c.l.b16 %v1783
        %v1858 = vunpack.c.l.b16 %v1784
        %v1859 = vunpack.c.l.b16 %v1785
        %v1860 = vunpack.c.l.b16 %v1786
        %v1861 = vunpack.c.l.b16 %v1787
        %v1862 = vunpack.c.l.b16 %v1788
        %v1863 = vunpack.c.l.b16 %v1789
        %v1864 = vunpack.c.l.b16 %v1790
        %v1865 = vunpack.c.l.b16 %v1791
        %v1866 = vunpack.c.l.b16 %v1792
        %v1867 = vunpack.c.l.b16 %v1793
        %v1868 = vunpack.c.l.b16 %v1794
        %v1869 = vunpack.c.l.b16 %v1795
        %v1870 = vunpack.c.l.b16 %v1796
        %v1871 = vunpack.c.l.b16 %v1797
        %v1872 = vunpack.c.l.b16 %v1798
        %v1873 = vunpack.c.l.b16 %v1799
        %v1874 = vunpack.c.l.b16 %v1800
        %v1875 = vunpack.c.l.b16 %v1801
        %v1876 = vunpack.c.l.b16 %v1802
        %v1877 = vunpack.c.l.b16 %v1803
        %v1878 = vunpack.c.l.b16 %v1804
        %v1879 = vunpack.c.l.b16 %v1805
        %v1880 = vunpack.c.l.b16 %v1806
        %v1881 = vunpack.c.l.b16 %v1807
        %v1882 = vunpack.c.l.b16 %v1808
        %v1883 = vunpack.c.l.b16 %v1809
        %v1884 = vunpack.c.l.b16 %v1810
        %v1885 = vunpack.c.l.b16 %v1811
        %v1886 = vunpack.c.l.b16 %v1812
        %v1887 = vpack.c.b16 %v1851, %v1850
        %v1888 = vpack.c.b16 %v1853, %v1852
        %v1889 = vpack.c.b16 %v1855, %v1854
        %v1890 = vpack.c.b16 %v1857, %v1856
        %v1891 = vpack.c.b16 %v1859, %v1858
        %v1892 = vpack.c.b16 %v1861, %v1860
        %v1893 = vpack.c.b16 %v1863, %v1862
        %v1894 = vpack.c.b16 %v1865, %v1864
        %v1895 = vpack.c.b16 %v1867, %v1866
        %v1896 = vpack.c.b16 %v1869, %v1868
        %v1897 = vpack.c.b16 %v1871, %v1870
        %v1898 = vpack.c.b16 %v1873, %v1872
        %v1899 = vpack.c.b16 %v1875, %v1874
        %v1900 = vpack.c.b16 %v1877, %v1876
        %v1901 = vpack.c.b16 %v1879, %v1878
        %v1902 = vpack.c.b16 %v1881, %v1880
        %v1903 = vpack.c.b16 %v1883, %v1882
        %v1904 = vpack.c.b16 %v1885, %v1884
        %v1905 = vpack.c.b16 %v1886, %v1886
        %vm1906 = vsmask.f32 6400
        %v1908 = vshrl.u32 %v1887, 16
        %v1910 = vrot.slane %v1908, 1
        %v1911 = vshll.u32 %v1887, 16
        %v1913 = vrot.slane %v1911, 2
        %v1914 = vor.u32 %v1910, %v1913
        %v1916 = vshrl.u32 %v1888, 16
        %v1918 = vrot.slane %v1916, 1
        %v1919 = vshll.u32 %v1888, 16
        %v1921 = vrot.slane %v1919, 2
        %v1922 = vor.u32 %v1918, %v1921
        %v1923 = vsel %vm1906, %v1914, %v1922
        %v1925 = vshrl.u32 %v1889, 16
        %v1927 = vrot.slane %v1925, 1
        %v1928 = vshll.u32 %v1889, 16
        %v1930 = vrot.slane %v1928, 2
        %v1931 = vor.u32 %v1927, %v1930
        %v1932 = vsel %vm1906, %v1922, %v1931
        %v1934 = vshrl.u32 %v1890, 16
        %v1936 = vrot.slane %v1934, 1
        %v1937 = vshll.u32 %v1890, 16
        %v1939 = vrot.slane %v1937, 2
        %v1940 = vor.u32 %v1936, %v1939
        %v1941 = vsel %vm1906, %v1931, %v1940
        %v1943 = vshrl.u32 %v1891, 16
        %v1945 = vrot.slane %v1943, 1
        %v1946 = vshll.u32 %v1891, 16
        %v1948 = vrot.slane %v1946, 2
        %v1949 = vor.u32 %v1945, %v1948
        %v1950 = vsel %vm1906, %v1940, %v1949
        %v1952 = vshrl.u32 %v1892, 16
        %v1954 = vrot.slane %v1952, 1
        %v1955 = vshll.u32 %v1892, 16
        %v1957 = vrot.slane %v1955, 2
        %v1958 = vor.u32 %v1954, %v1957
        %v1959 = vsel %vm1906, %v1949, %v1958
        %v1961 = vshrl.u32 %v1893, 16
        %v1963 = vrot.slane %v1961, 1
        %v1964 = vshll.u32 %v1893, 16
        %v1966 = vrot.slane %v1964, 2
        %v1967 = vor.u32 %v1963, %v1966
        %v1968 = vsel %vm1906, %v1958, %v1967
        %v1970 = vshrl.u32 %v1894, 16
        %v1972 = vrot.slane %v1970, 1
        %v1973 = vshll.u32 %v1894, 16
        %v1975 = vrot.slane %v1973, 2
        %v1976 = vor.u32 %v1972, %v1975
        %v1977 = vsel %vm1906, %v1967, %v1976
        %v1979 = vshrl.u32 %v1895, 16
        %v1981 = vrot.slane %v1979, 1
        %v1982 = vshll.u32 %v1895, 16
        %v1984 = vrot.slane %v1982, 2
        %v1985 = vor.u32 %v1981, %v1984
        %v1986 = vsel %vm1906, %v1976, %v1985
        %v1988 = vshrl.u32 %v1896, 16
        %v1990 = vrot.slane %v1988, 1
        %v1991 = vshll.u32 %v1896, 16
        %v1993 = vrot.slane %v1991, 2
        %v1994 = vor.u32 %v1990, %v1993
        %v1995 = vsel %vm1906, %v1985, %v1994
        %v1997 = vshrl.u32 %v1897, 16
        %v1999 = vrot.slane %v1997, 1
        %v2000 = vshll.u32 %v1897, 16
        %v2002 = vrot.slane %v2000, 2
        %v2003 = vor.u32 %v1999, %v2002
        %v2004 = vsel %vm1906, %v1994, %v2003
        %v2006 = vshrl.u32 %v1898, 16
        %v2008 = vrot.slane %v2006, 1
        %v2009 = vshll.u32 %v1898, 16
        %v2011 = vrot.slane %v2009, 2
        %v2012 = vor.u32 %v2008, %v2011
        %v2013 = vsel %vm1906, %v2003, %v2012
        %v2015 = vshrl.u32 %v1899, 16
        %v2017 = vrot.slane %v2015, 1
        %v2018 = vshll.u32 %v1899, 16
        %v2020 = vrot.slane %v2018, 2
        %v2021 = vor.u32 %v2017, %v2020
        %v2022 = vsel %vm1906, %v2012, %v2021
        %v2024 = vshrl.u32 %v1900, 16
        %v2026 = vrot.slane %v2024, 1
        %v2027 = vshll.u32 %v1900, 16
        %v2029 = vrot.slane %v2027, 2
        %v2030 = vor.u32 %v2026, %v2029
        %v2031 = vsel %vm1906, %v2021, %v2030
        %v2033 = vshrl.u32 %v1901, 16
        %v2035 = vrot.slane %v2033, 1
        %v2036 = vshll.u32 %v1901, 16
        %v2038 = vrot.slane %v2036, 2
        %v2039 = vor.u32 %v2035, %v2038
        %v2040 = vsel %vm1906, %v2030, %v2039
        %v2042 = vshrl.u32 %v1902, 16
        %v2044 = vrot.slane %v2042, 1
        %v2045 = vshll.u32 %v1902, 16
        %v2047 = vrot.slane %v2045, 2
        %v2048 = vor.u32 %v2044, %v2047
        %v2049 = vsel %vm1906, %v2039, %v2048
        %v2051 = vshrl.u32 %v1903, 16
        %v2053 = vrot.slane %v2051, 1
        %v2054 = vshll.u32 %v1903, 16
        %v2056 = vrot.slane %v2054, 2
        %v2057 = vor.u32 %v2053, %v2056
        %v2058 = vsel %vm1906, %v2048, %v2057
        %v2060 = vshrl.u32 %v1904, 16
        %v2062 = vrot.slane %v2060, 1
        %v2063 = vshll.u32 %v1904, 16
        %v2065 = vrot.slane %v2063, 2
        %v2066 = vor.u32 %v2062, %v2065
        %v2067 = vsel %vm1906, %v2057, %v2066
        %v2069 = vshrl.u32 %v1905, 16
        %v2071 = vrot.slane %v2069, 1
        %v2072 = vshll.u32 %v1905, 16
        %v2074 = vrot.slane %v2072, 2
        %v2075 = vor.u32 %v2071, %v2074
        %v2076 = vsel %vm1906, %v2066, %v2075
        %2095 = vst.msk [vmem:[#allocation6 + $0x8] sm:$0xff] %vm924, %v1923
        %2096 = vst.msk [vmem:[#allocation6 + $0x20] sm:$0xff] %vm924, %v1932
        %2097 = vst.msk [vmem:[#allocation6 + $0x38] sm:$0xff] %vm924, %v1941
        %2098 = vst.msk [vmem:[#allocation6 + $0x50] sm:$0xff] %vm924, %v1950
        %2099 = vst.msk [vmem:[#allocation6 + $0x68] sm:$0xff] %vm924, %v1959
        %2100 = vst.msk [vmem:[#allocation6 + $0x80] sm:$0xff] %vm924, %v1968
        %2101 = vst.msk [vmem:[#allocation6 + $0x98] sm:$0xff] %vm924, %v1977
        %2102 = vst.msk [vmem:[#allocation6 + $0xb0] sm:$0xff] %vm924, %v1986
        %2103 = vst.msk [vmem:[#allocation6 + $0xc8] sm:$0xff] %vm924, %v1995
        %2104 = vst.msk [vmem:[#allocation6 + $0xe0] sm:$0xff] %vm924, %v2004
        %2105 = vst.msk [vmem:[#allocation6 + $0xf8] sm:$0xff] %vm924, %v2013
        %2106 = vst.msk [vmem:[#allocation6 + $0x110] sm:$0xff] %vm924, %v2022
        %2107 = vst.msk [vmem:[#allocation6 + $0x128] sm:$0xff] %vm924, %v2031
        %2108 = vst.msk [vmem:[#allocation6 + $0x140] sm:$0xff] %vm924, %v2040
        %2109 = vst.msk [vmem:[#allocation6 + $0x158] sm:$0xff] %vm924, %v2049
        %2110 = vst.msk [vmem:[#allocation6 + $0x170] sm:$0xff] %vm924, %v2058
        %2111 = vst.msk [vmem:[#allocation6 + $0x188] sm:$0xff] %vm924, %v2067
        %2112 = vst.msk [vmem:[#allocation6 + $0x1a0] sm:$0xff] %vm924, %v2076
        %v2113 = vld [vmem:[#allocation2 + $0x8] sm:$0xc]
        %v2114 = vld [vmem:[#allocation2 + $0xc] sm:$0xf]
        %v2115 = vld [vmem:[#allocation2 + $0x10] sm:$0xf]
        %v2116 = vld [vmem:[#allocation2 + $0x14] sm:$0xf]
        %v2117 = vld [vmem:[#allocation2 + $0x18] sm:$0xf]
        %v2118 = vld [vmem:[#allocation2 + $0x1c] sm:$0xf]
        %v2119 = vld [vmem:[#allocation2 + $0x20] sm:$0xf]
        %v2120 = vld [vmem:[#allocation2 + $0x24] sm:$0xf]
        %v2121 = vld [vmem:[#allocation2 + $0x28] sm:$0xf]
        %v2122 = vld [vmem:[#allocation2 + $0x2c] sm:$0xf]
        %v2123 = vld [vmem:[#allocation2 + $0x30] sm:$0xf]
        %v2124 = vld [vmem:[#allocation2 + $0x34] sm:$0xf]
        %v2125 = vld [vmem:[#allocation2 + $0x38] sm:$0xf]
        %v2126 = vld [vmem:[#allocation2 + $0x3c] sm:$0xf]
        %v2127 = vld [vmem:[#allocation2 + $0x40] sm:$0xf]
        %v2128 = vld [vmem:[#allocation2 + $0x44] sm:$0xf]
        %v2129 = vld [vmem:[#allocation2 + $0x48] sm:$0xf]
        %v2130 = vld [vmem:[#allocation2 + $0x4c] sm:$0xf]
        %v2131 = vld [vmem:[#allocation2 + $0x50] sm:$0xf]
        %v2132 = vld [vmem:[#allocation2 + $0x54] sm:$0xf]
        %v2133 = vld [vmem:[#allocation2 + $0x58] sm:$0xf]
        %v2134 = vld [vmem:[#allocation2 + $0x5c] sm:$0xf]
        %v2135 = vld [vmem:[#allocation2 + $0x60] sm:$0xf]
        %v2136 = vld [vmem:[#allocation2 + $0x64] sm:$0xf]
        %v2137 = vld [vmem:[#allocation2 + $0x68] sm:$0xf]
        %v2138 = vld [vmem:[#allocation2 + $0x6c] sm:$0xf]
        %v2139 = vld [vmem:[#allocation2 + $0x70] sm:$0xf]
        %v2140 = vld [vmem:[#allocation2 + $0x74] sm:$0xf]
        %v2141 = vld [vmem:[#allocation2 + $0x78] sm:$0xf]
        %v2142 = vld [vmem:[#allocation2 + $0x7c] sm:$0xf]
        %v2143 = vld [vmem:[#allocation2 + $0x80] sm:$0xf]
        %v2144 = vld [vmem:[#allocation2 + $0x84] sm:$0xf]
        %v2145 = vld [vmem:[#allocation2 + $0x88] sm:$0xf]
        %v2146 = vld [vmem:[#allocation2 + $0x8c] sm:$0xf]
        %v2147 = vld [vmem:[#allocation2 + $0x90] sm:$0xf]
        %v2148 = vld [vmem:[#allocation2 + $0x94] sm:$0xf]
        %v2149 = vld [vmem:[#allocation2 + $0x98] sm:$0x3]
        %v2187 = vunpack.c.l.b16 %v2113
        %v2188 = vunpack.c.l.b16 %v2114
        %v2189 = vunpack.c.l.b16 %v2115
        %v2190 = vunpack.c.l.b16 %v2116
        %v2191 = vunpack.c.l.b16 %v2117
        %v2192 = vunpack.c.l.b16 %v2118
        %v2193 = vunpack.c.l.b16 %v2119
        %v2194 = vunpack.c.l.b16 %v2120
        %v2195 = vunpack.c.l.b16 %v2121
        %v2196 = vunpack.c.l.b16 %v2122
        %v2197 = vunpack.c.l.b16 %v2123
        %v2198 = vunpack.c.l.b16 %v2124
        %v2199 = vunpack.c.l.b16 %v2125
        %v2200 = vunpack.c.l.b16 %v2126
        %v2201 = vunpack.c.l.b16 %v2127
        %v2202 = vunpack.c.l.b16 %v2128
        %v2203 = vunpack.c.l.b16 %v2129
        %v2204 = vunpack.c.l.b16 %v2130
        %v2205 = vunpack.c.l.b16 %v2131
        %v2206 = vunpack.c.l.b16 %v2132
        %v2207 = vunpack.c.l.b16 %v2133
        %v2208 = vunpack.c.l.b16 %v2134
        %v2209 = vunpack.c.l.b16 %v2135
        %v2210 = vunpack.c.l.b16 %v2136
        %v2211 = vunpack.c.l.b16 %v2137
        %v2212 = vunpack.c.l.b16 %v2138
        %v2213 = vunpack.c.l.b16 %v2139
        %v2214 = vunpack.c.l.b16 %v2140
        %v2215 = vunpack.c.l.b16 %v2141
        %v2216 = vunpack.c.l.b16 %v2142
        %v2217 = vunpack.c.l.b16 %v2143
        %v2218 = vunpack.c.l.b16 %v2144
        %v2219 = vunpack.c.l.b16 %v2145
        %v2220 = vunpack.c.l.b16 %v2146
        %v2221 = vunpack.c.l.b16 %v2147
        %v2222 = vunpack.c.l.b16 %v2148
        %v2223 = vunpack.c.l.b16 %v2149
        %v2224 = vpack.c.b16 %v2188, %v2187
        %v2225 = vpack.c.b16 %v2190, %v2189
        %v2226 = vpack.c.b16 %v2192, %v2191
        %v2227 = vpack.c.b16 %v2194, %v2193
        %v2228 = vpack.c.b16 %v2196, %v2195
        %v2229 = vpack.c.b16 %v2198, %v2197
        %v2230 = vpack.c.b16 %v2200, %v2199
        %v2231 = vpack.c.b16 %v2202, %v2201
        %v2232 = vpack.c.b16 %v2204, %v2203
        %v2233 = vpack.c.b16 %v2206, %v2205
        %v2234 = vpack.c.b16 %v2208, %v2207
        %v2235 = vpack.c.b16 %v2210, %v2209
        %v2236 = vpack.c.b16 %v2212, %v2211
        %v2237 = vpack.c.b16 %v2214, %v2213
        %v2238 = vpack.c.b16 %v2216, %v2215
        %v2239 = vpack.c.b16 %v2218, %v2217
        %v2240 = vpack.c.b16 %v2220, %v2219
        %v2241 = vpack.c.b16 %v2222, %v2221
        %v2242 = vpack.c.b16 %v2223, %v2223
        %vm2243 = vcmask 1045504
        %v2244 = vrot.slane %v2224, 2
        %v2245 = vrot.slane %v2225, 2
        %v2246 = vsel %vm2243, %v2244, %v2245
        %v2247 = vrot.slane %v2226, 2
        %v2248 = vsel %vm2243, %v2245, %v2247
        %v2249 = vrot.slane %v2227, 2
        %v2250 = vsel %vm2243, %v2247, %v2249
        %v2251 = vrot.slane %v2228, 2
        %v2252 = vsel %vm2243, %v2249, %v2251
        %v2253 = vrot.slane %v2229, 2
        %v2254 = vsel %vm2243, %v2251, %v2253
        %v2255 = vrot.slane %v2230, 2
        %v2256 = vsel %vm2243, %v2253, %v2255
        %v2257 = vrot.slane %v2231, 2
        %v2258 = vsel %vm2243, %v2255, %v2257
        %v2259 = vrot.slane %v2232, 2
        %v2260 = vsel %vm2243, %v2257, %v2259
        %v2261 = vrot.slane %v2233, 2
        %v2262 = vsel %vm2243, %v2259, %v2261
        %v2263 = vrot.slane %v2234, 2
        %v2264 = vsel %vm2243, %v2261, %v2263
        %v2265 = vrot.slane %v2235, 2
        %v2266 = vsel %vm2243, %v2263, %v2265
        %v2267 = vrot.slane %v2236, 2
        %v2268 = vsel %vm2243, %v2265, %v2267
        %v2269 = vrot.slane %v2237, 2
        %v2270 = vsel %vm2243, %v2267, %v2269
        %v2271 = vrot.slane %v2238, 2
        %v2272 = vsel %vm2243, %v2269, %v2271
        %v2273 = vrot.slane %v2239, 2
        %v2274 = vsel %vm2243, %v2271, %v2273
        %v2275 = vrot.slane %v2240, 2
        %v2276 = vsel %vm2243, %v2273, %v2275
        %v2277 = vrot.slane %v2241, 2
        %v2278 = vsel %vm2243, %v2275, %v2277
        %v2279 = vrot.slane %v2242, 2
        %v2280 = vsel %vm2243, %v2277, %v2279
        %2281 = vrot.lane.b32.xlu0 %v2246, 32
        %v2282 = vpop.permute.xlu0 %2281
        %2283 = vrot.lane.b32.xlu0 %v2248, 32
        %v2284 = vpop.permute.xlu0 %2283
        %2285 = vrot.lane.b32.xlu0 %v2250, 32
        %v2286 = vpop.permute.xlu0 %2285
        %2287 = vrot.lane.b32.xlu0 %v2252, 32
        %v2288 = vpop.permute.xlu0 %2287
        %2289 = vrot.lane.b32.xlu0 %v2254, 32
        %v2290 = vpop.permute.xlu0 %2289
        %2291 = vrot.lane.b32.xlu0 %v2256, 32
        %v2292 = vpop.permute.xlu0 %2291
        %2293 = vrot.lane.b32.xlu0 %v2258, 32
        %v2294 = vpop.permute.xlu0 %2293
        %2295 = vrot.lane.b32.xlu0 %v2260, 32
        %v2296 = vpop.permute.xlu0 %2295
        %2297 = vrot.lane.b32.xlu0 %v2262, 32
        %v2298 = vpop.permute.xlu0 %2297
        %2299 = vrot.lane.b32.xlu0 %v2264, 32
        %v2300 = vpop.permute.xlu0 %2299
        %2301 = vrot.lane.b32.xlu0 %v2266, 32
        %v2302 = vpop.permute.xlu0 %2301
        %2303 = vrot.lane.b32.xlu0 %v2268, 32
        %v2304 = vpop.permute.xlu0 %2303
        %2305 = vrot.lane.b32.xlu0 %v2270, 32
        %v2306 = vpop.permute.xlu0 %2305
        %2307 = vrot.lane.b32.xlu0 %v2272, 32
        %v2308 = vpop.permute.xlu0 %2307
        %2309 = vrot.lane.b32.xlu0 %v2274, 32
        %v2310 = vpop.permute.xlu0 %2309
        %2311 = vrot.lane.b32.xlu0 %v2276, 32
        %v2312 = vpop.permute.xlu0 %2311
        %2313 = vrot.lane.b32.xlu0 %v2278, 32
        %v2314 = vpop.permute.xlu0 %2313
        %2315 = vrot.lane.b32.xlu0 %v2280, 32
        %v2316 = vpop.permute.xlu0 %2315
        %2335 = vst.msk [vmem:[#allocation6 + $0x8] sm:$0xff] %vm1276, %v2282
        %2336 = vst.msk [vmem:[#allocation6 + $0x20] sm:$0xff] %vm1276, %v2284
        %2337 = vst.msk [vmem:[#allocation6 + $0x38] sm:$0xff] %vm1276, %v2286
        %2338 = vst.msk [vmem:[#allocation6 + $0x50] sm:$0xff] %vm1276, %v2288
        %2339 = vst.msk [vmem:[#allocation6 + $0x68] sm:$0xff] %vm1276, %v2290
        %2340 = vst.msk [vmem:[#allocation6 + $0x80] sm:$0xff] %vm1276, %v2292
        %2341 = vst.msk [vmem:[#allocation6 + $0x98] sm:$0xff] %vm1276, %v2294
        %2342 = vst.msk [vmem:[#allocation6 + $0xb0] sm:$0xff] %vm1276, %v2296
        %2343 = vst.msk [vmem:[#allocation6 + $0xc8] sm:$0xff] %vm1276, %v2298
        %2344 = vst.msk [vmem:[#allocation6 + $0xe0] sm:$0xff] %vm1276, %v2300
        %2345 = vst.msk [vmem:[#allocation6 + $0xf8] sm:$0xff] %vm1276, %v2302
        %2346 = vst.msk [vmem:[#allocation6 + $0x110] sm:$0xff] %vm1276, %v2304
        %2347 = vst.msk [vmem:[#allocation6 + $0x128] sm:$0xff] %vm1276, %v2306
        %2348 = vst.msk [vmem:[#allocation6 + $0x140] sm:$0xff] %vm1276, %v2308
        %2349 = vst.msk [vmem:[#allocation6 + $0x158] sm:$0xff] %vm1276, %v2310
        %2350 = vst.msk [vmem:[#allocation6 + $0x170] sm:$0xff] %vm1276, %v2312
        %2351 = vst.msk [vmem:[#allocation6 + $0x188] sm:$0xff] %vm1276, %v2314
        %2352 = vst.msk [vmem:[#allocation6 + $0x1a0] sm:$0xff] %vm1276, %v2316
        %v2353 = vld [vmem:[#allocation2 + $0x10] sm:$0xc]
        %v2354 = vld [vmem:[#allocation2 + $0x14] sm:$0xf]
        %v2355 = vld [vmem:[#allocation2 + $0x18] sm:$0xf]
        %v2356 = vld [vmem:[#allocation2 + $0x1c] sm:$0xf]
        %v2357 = vld [vmem:[#allocation2 + $0x20] sm:$0xf]
        %v2358 = vld [vmem:[#allocation2 + $0x24] sm:$0xf]
        %v2359 = vld [vmem:[#allocation2 + $0x28] sm:$0xf]
        %v2360 = vld [vmem:[#allocation2 + $0x2c] sm:$0xf]
        %v2361 = vld [vmem:[#allocation2 + $0x30] sm:$0xf]
        %v2362 = vld [vmem:[#allocation2 + $0x34] sm:$0xf]
        %v2363 = vld [vmem:[#allocation2 + $0x38] sm:$0xf]
        %v2364 = vld [vmem:[#allocation2 + $0x3c] sm:$0xf]
        %v2365 = vld [vmem:[#allocation2 + $0x40] sm:$0xf]
        %v2366 = vld [vmem:[#allocation2 + $0x44] sm:$0xf]
        %v2367 = vld [vmem:[#allocation2 + $0x48] sm:$0xf]
        %v2368 = vld [vmem:[#allocation2 + $0x4c] sm:$0xf]
        %v2369 = vld [vmem:[#allocation2 + $0x50] sm:$0xf]
        %v2370 = vld [vmem:[#allocation2 + $0x54] sm:$0xf]
        %v2371 = vld [vmem:[#allocation2 + $0x58] sm:$0xf]
        %v2372 = vld [vmem:[#allocation2 + $0x5c] sm:$0xf]
        %v2373 = vld [vmem:[#allocation2 + $0x60] sm:$0xf]
        %v2374 = vld [vmem:[#allocation2 + $0x64] sm:$0xf]
        %v2375 = vld [vmem:[#allocation2 + $0x68] sm:$0xf]
        %v2376 = vld [vmem:[#allocation2 + $0x6c] sm:$0xf]
        %v2377 = vld [vmem:[#allocation2 + $0x70] sm:$0xf]
        %v2378 = vld [vmem:[#allocation2 + $0x74] sm:$0xf]
        %v2379 = vld [vmem:[#allocation2 + $0x78] sm:$0xf]
        %v2380 = vld [vmem:[#allocation2 + $0x7c] sm:$0xf]
        %v2381 = vld [vmem:[#allocation2 + $0x80] sm:$0xf]
        %v2382 = vld [vmem:[#allocation2 + $0x84] sm:$0xf]
        %v2383 = vld [vmem:[#allocation2 + $0x88] sm:$0xf]
        %v2384 = vld [vmem:[#allocation2 + $0x8c] sm:$0xf]
        %v2385 = vld [vmem:[#allocation2 + $0x90] sm:$0xf]
        %v2386 = vld [vmem:[#allocation2 + $0x94] sm:$0xf]
        %v2387 = vld [vmem:[#allocation2 + $0x98] sm:$0xf]
        %v2388 = vld [vmem:[#allocation2 + $0x9c] sm:$0xf]
        %v2389 = vld [vmem:[#allocation2 + $0xa0] sm:$0x3]
        %v2427 = vunpack.c.l.b16 %v2353
        %v2428 = vunpack.c.l.b16 %v2354
        %v2429 = vunpack.c.l.b16 %v2355
        %v2430 = vunpack.c.l.b16 %v2356
        %v2431 = vunpack.c.l.b16 %v2357
        %v2432 = vunpack.c.l.b16 %v2358
        %v2433 = vunpack.c.l.b16 %v2359
        %v2434 = vunpack.c.l.b16 %v2360
        %v2435 = vunpack.c.l.b16 %v2361
        %v2436 = vunpack.c.l.b16 %v2362
        %v2437 = vunpack.c.l.b16 %v2363
        %v2438 = vunpack.c.l.b16 %v2364
        %v2439 = vunpack.c.l.b16 %v2365
        %v2440 = vunpack.c.l.b16 %v2366
        %v2441 = vunpack.c.l.b16 %v2367
        %v2442 = vunpack.c.l.b16 %v2368
        %v2443 = vunpack.c.l.b16 %v2369
        %v2444 = vunpack.c.l.b16 %v2370
        %v2445 = vunpack.c.l.b16 %v2371
        %v2446 = vunpack.c.l.b16 %v2372
        %v2447 = vunpack.c.l.b16 %v2373
        %v2448 = vunpack.c.l.b16 %v2374
        %v2449 = vunpack.c.l.b16 %v2375
        %v2450 = vunpack.c.l.b16 %v2376
        %v2451 = vunpack.c.l.b16 %v2377
        %v2452 = vunpack.c.l.b16 %v2378
        %v2453 = vunpack.c.l.b16 %v2379
        %v2454 = vunpack.c.l.b16 %v2380
        %v2455 = vunpack.c.l.b16 %v2381
        %v2456 = vunpack.c.l.b16 %v2382
        %v2457 = vunpack.c.l.b16 %v2383
        %v2458 = vunpack.c.l.b16 %v2384
        %v2459 = vunpack.c.l.b16 %v2385
        %v2460 = vunpack.c.l.b16 %v2386
        %v2461 = vunpack.c.l.b16 %v2387
        %v2462 = vunpack.c.l.b16 %v2388
        %v2463 = vunpack.c.l.b16 %v2389
        %v2464 = vpack.c.b16 %v2428, %v2427
        %v2465 = vpack.c.b16 %v2430, %v2429
        %v2466 = vpack.c.b16 %v2432, %v2431
        %v2467 = vpack.c.b16 %v2434, %v2433
        %v2468 = vpack.c.b16 %v2436, %v2435
        %v2469 = vpack.c.b16 %v2438, %v2437
        %v2470 = vpack.c.b16 %v2440, %v2439
        %v2471 = vpack.c.b16 %v2442, %v2441
        %v2472 = vpack.c.b16 %v2444, %v2443
        %v2473 = vpack.c.b16 %v2446, %v2445
        %v2474 = vpack.c.b16 %v2448, %v2447
        %v2475 = vpack.c.b16 %v2450, %v2449
        %v2476 = vpack.c.b16 %v2452, %v2451
        %v2477 = vpack.c.b16 %v2454, %v2453
        %v2478 = vpack.c.b16 %v2456, %v2455
        %v2479 = vpack.c.b16 %v2458, %v2457
        %v2480 = vpack.c.b16 %v2460, %v2459
        %v2481 = vpack.c.b16 %v2462, %v2461
        %v2482 = vpack.c.b16 %v2463, %v2463
        %v2483 = vrot.slane %v2464, 2
        %v2484 = vrot.slane %v2465, 2
        %v2485 = vsel %vm2243, %v2483, %v2484
        %v2486 = vrot.slane %v2466, 2
        %v2487 = vsel %vm2243, %v2484, %v2486
        %v2488 = vrot.slane %v2467, 2
        %v2489 = vsel %vm2243, %v2486, %v2488
        %v2490 = vrot.slane %v2468, 2
        %v2491 = vsel %vm2243, %v2488, %v2490
        %v2492 = vrot.slane %v2469, 2
        %v2493 = vsel %vm2243, %v2490, %v2492
        %v2494 = vrot.slane %v2470, 2
        %v2495 = vsel %vm2243, %v2492, %v2494
        %v2496 = vrot.slane %v2471, 2
        %v2497 = vsel %vm2243, %v2494, %v2496
        %v2498 = vrot.slane %v2472, 2
        %v2499 = vsel %vm2243, %v2496, %v2498
        %v2500 = vrot.slane %v2473, 2
        %v2501 = vsel %vm2243, %v2498, %v2500
        %v2502 = vrot.slane %v2474, 2
        %v2503 = vsel %vm2243, %v2500, %v2502
        %v2504 = vrot.slane %v2475, 2
        %v2505 = vsel %vm2243, %v2502, %v2504
        %v2506 = vrot.slane %v2476, 2
        %v2507 = vsel %vm2243, %v2504, %v2506
        %v2508 = vrot.slane %v2477, 2
        %v2509 = vsel %vm2243, %v2506, %v2508
        %v2510 = vrot.slane %v2478, 2
        %v2511 = vsel %vm2243, %v2508, %v2510
        %v2512 = vrot.slane %v2479, 2
        %v2513 = vsel %vm2243, %v2510, %v2512
        %v2514 = vrot.slane %v2480, 2
        %v2515 = vsel %vm2243, %v2512, %v2514
        %v2516 = vrot.slane %v2481, 2
        %v2517 = vsel %vm2243, %v2514, %v2516
        %v2518 = vrot.slane %v2482, 2
        %v2519 = vsel %vm2243, %v2516, %v2518
        %2520 = vrot.lane.b32.xlu0 %v2485, 64
        %v2521 = vpop.permute.xlu0 %2520
        %2522 = vrot.lane.b32.xlu0 %v2487, 64
        %v2523 = vpop.permute.xlu0 %2522
        %2524 = vrot.lane.b32.xlu0 %v2489, 64
        %v2525 = vpop.permute.xlu0 %2524
        %2526 = vrot.lane.b32.xlu0 %v2491, 64
        %v2527 = vpop.permute.xlu0 %2526
        %2528 = vrot.lane.b32.xlu0 %v2493, 64
        %v2529 = vpop.permute.xlu0 %2528
        %2530 = vrot.lane.b32.xlu0 %v2495, 64
        %v2531 = vpop.permute.xlu0 %2530
        %2532 = vrot.lane.b32.xlu0 %v2497, 64
        %v2533 = vpop.permute.xlu0 %2532
        %2534 = vrot.lane.b32.xlu0 %v2499, 64
        %v2535 = vpop.permute.xlu0 %2534
        %2536 = vrot.lane.b32.xlu0 %v2501, 64
        %v2537 = vpop.permute.xlu0 %2536
        %2538 = vrot.lane.b32.xlu0 %v2503, 64
        %v2539 = vpop.permute.xlu0 %2538
        %2540 = vrot.lane.b32.xlu0 %v2505, 64
        %v2541 = vpop.permute.xlu0 %2540
        %2542 = vrot.lane.b32.xlu0 %v2507, 64
        %v2543 = vpop.permute.xlu0 %2542
        %2544 = vrot.lane.b32.xlu0 %v2509, 64
        %v2545 = vpop.permute.xlu0 %2544
        %2546 = vrot.lane.b32.xlu0 %v2511, 64
        %v2547 = vpop.permute.xlu0 %2546
        %2548 = vrot.lane.b32.xlu0 %v2513, 64
        %v2549 = vpop.permute.xlu0 %2548
        %2550 = vrot.lane.b32.xlu0 %v2515, 64
        %v2551 = vpop.permute.xlu0 %2550
        %2552 = vrot.lane.b32.xlu0 %v2517, 64
        %v2553 = vpop.permute.xlu0 %2552
        %2554 = vrot.lane.b32.xlu0 %v2519, 64
        %v2555 = vpop.permute.xlu0 %2554
        %2574 = vst.msk [vmem:[#allocation6 + $0x8] sm:$0xff] %vm1517, %v2521
        %2575 = vst.msk [vmem:[#allocation6 + $0x20] sm:$0xff] %vm1517, %v2523
        %2576 = vst.msk [vmem:[#allocation6 + $0x38] sm:$0xff] %vm1517, %v2525
        %2577 = vst.msk [vmem:[#allocation6 + $0x50] sm:$0xff] %vm1517, %v2527
        %2578 = vst.msk [vmem:[#allocation6 + $0x68] sm:$0xff] %vm1517, %v2529
        %2579 = vst.msk [vmem:[#allocation6 + $0x80] sm:$0xff] %vm1517, %v2531
        %2580 = vst.msk [vmem:[#allocation6 + $0x98] sm:$0xff] %vm1517, %v2533
        %2581 = vst.msk [vmem:[#allocation6 + $0xb0] sm:$0xff] %vm1517, %v2535
        %2582 = vst.msk [vmem:[#allocation6 + $0xc8] sm:$0xff] %vm1517, %v2537
        %2583 = vst.msk [vmem:[#allocation6 + $0xe0] sm:$0xff] %vm1517, %v2539
        %2584 = vst.msk [vmem:[#allocation6 + $0xf8] sm:$0xff] %vm1517, %v2541
        %2585 = vst.msk [vmem:[#allocation6 + $0x110] sm:$0xff] %vm1517, %v2543
        %2586 = vst.msk [vmem:[#allocation6 + $0x128] sm:$0xff] %vm1517, %v2545
        %2587 = vst.msk [vmem:[#allocation6 + $0x140] sm:$0xff] %vm1517, %v2547
        %2588 = vst.msk [vmem:[#allocation6 + $0x158] sm:$0xff] %vm1517, %v2549
        %2589 = vst.msk [vmem:[#allocation6 + $0x170] sm:$0xff] %vm1517, %v2551
        %2590 = vst.msk [vmem:[#allocation6 + $0x188] sm:$0xff] %vm1517, %v2553
        %2591 = vst.msk [vmem:[#allocation6 + $0x1a0] sm:$0xff] %vm1517, %v2555
        %v2592 = vld [vmem:[#allocation2 + $0x10] sm:$0xc]
        %v2593 = vld [vmem:[#allocation2 + $0x14] sm:$0xf]
        %v2594 = vld [vmem:[#allocation2 + $0x18] sm:$0xf]
        %v2595 = vld [vmem:[#allocation2 + $0x1c] sm:$0xf]
        %v2596 = vld [vmem:[#allocation2 + $0x20] sm:$0xf]
        %v2597 = vld [vmem:[#allocation2 + $0x24] sm:$0xf]
        %v2598 = vld [vmem:[#allocation2 + $0x28] sm:$0xf]
        %v2599 = vld [vmem:[#allocation2 + $0x2c] sm:$0xf]
        %v2600 = vld [vmem:[#allocation2 + $0x30] sm:$0xf]
        %v2601 = vld [vmem:[#allocation2 + $0x34] sm:$0xf]
        %v2602 = vld [vmem:[#allocation2 + $0x38] sm:$0xf]
        %v2603 = vld [vmem:[#allocation2 + $0x3c] sm:$0xf]
        %v2604 = vld [vmem:[#allocation2 + $0x40] sm:$0xf]
        %v2605 = vld [vmem:[#allocation2 + $0x44] sm:$0xf]
        %v2606 = vld [vmem:[#allocation2 + $0x48] sm:$0xf]
        %v2607 = vld [vmem:[#allocation2 + $0x4c] sm:$0xf]
        %v2608 = vld [vmem:[#allocation2 + $0x50] sm:$0xf]
        %v2609 = vld [vmem:[#allocation2 + $0x54] sm:$0xf]
        %v2610 = vld [vmem:[#allocation2 + $0x58] sm:$0xf]
        %v2611 = vld [vmem:[#allocation2 + $0x5c] sm:$0xf]
        %v2612 = vld [vmem:[#allocation2 + $0x60] sm:$0xf]
        %v2613 = vld [vmem:[#allocation2 + $0x64] sm:$0xf]
        %v2614 = vld [vmem:[#allocation2 + $0x68] sm:$0xf]
        %v2615 = vld [vmem:[#allocation2 + $0x6c] sm:$0xf]
        %v2616 = vld [vmem:[#allocation2 + $0x70] sm:$0xf]
        %v2617 = vld [vmem:[#allocation2 + $0x74] sm:$0xf]
        %v2618 = vld [vmem:[#allocation2 + $0x78] sm:$0xf]
        %v2619 = vld [vmem:[#allocation2 + $0x7c] sm:$0xf]
        %v2620 = vld [vmem:[#allocation2 + $0x80] sm:$0xf]
        %v2621 = vld [vmem:[#allocation2 + $0x84] sm:$0xf]
        %v2622 = vld [vmem:[#allocation2 + $0x88] sm:$0xf]
        %v2623 = vld [vmem:[#allocation2 + $0x8c] sm:$0xf]
        %v2624 = vld [vmem:[#allocation2 + $0x90] sm:$0xf]
        %v2625 = vld [vmem:[#allocation2 + $0x94] sm:$0xf]
        %v2626 = vld [vmem:[#allocation2 + $0x98] sm:$0xf]
        %v2627 = vld [vmem:[#allocation2 + $0x9c] sm:$0xf]
        %v2628 = vld [vmem:[#allocation2 + $0xa0] sm:$0x7]
        %v2666 = vunpack.c.l.b16 %v2592
        %v2667 = vunpack.c.l.b16 %v2593
        %v2668 = vunpack.c.l.b16 %v2594
        %v2669 = vunpack.c.l.b16 %v2595
        %v2670 = vunpack.c.l.b16 %v2596
        %v2671 = vunpack.c.l.b16 %v2597
        %v2672 = vunpack.c.l.b16 %v2598
        %v2673 = vunpack.c.l.b16 %v2599
        %v2674 = vunpack.c.l.b16 %v2600
        %v2675 = vunpack.c.l.b16 %v2601
        %v2676 = vunpack.c.l.b16 %v2602
        %v2677 = vunpack.c.l.b16 %v2603
        %v2678 = vunpack.c.l.b16 %v2604
        %v2679 = vunpack.c.l.b16 %v2605
        %v2680 = vunpack.c.l.b16 %v2606
        %v2681 = vunpack.c.l.b16 %v2607
        %v2682 = vunpack.c.l.b16 %v2608
        %v2683 = vunpack.c.l.b16 %v2609
        %v2684 = vunpack.c.l.b16 %v2610
        %v2685 = vunpack.c.l.b16 %v2611
        %v2686 = vunpack.c.l.b16 %v2612
        %v2687 = vunpack.c.l.b16 %v2613
        %v2688 = vunpack.c.l.b16 %v2614
        %v2689 = vunpack.c.l.b16 %v2615
        %v2690 = vunpack.c.l.b16 %v2616
        %v2691 = vunpack.c.l.b16 %v2617
        %v2692 = vunpack.c.l.b16 %v2618
        %v2693 = vunpack.c.l.b16 %v2619
        %v2694 = vunpack.c.l.b16 %v2620
        %v2695 = vunpack.c.l.b16 %v2621
        %v2696 = vunpack.c.l.b16 %v2622
        %v2697 = vunpack.c.l.b16 %v2623
        %v2698 = vunpack.c.l.b16 %v2624
        %v2699 = vunpack.c.l.b16 %v2625
        %v2700 = vunpack.c.l.b16 %v2626
        %v2701 = vunpack.c.l.b16 %v2627
        %v2702 = vunpack.c.l.b16 %v2628
        %v2703 = vpack.c.b16 %v2667, %v2666
        %v2704 = vpack.c.b16 %v2669, %v2668
        %v2705 = vpack.c.b16 %v2671, %v2670
        %v2706 = vpack.c.b16 %v2673, %v2672
        %v2707 = vpack.c.b16 %v2675, %v2674
        %v2708 = vpack.c.b16 %v2677, %v2676
        %v2709 = vpack.c.b16 %v2679, %v2678
        %v2710 = vpack.c.b16 %v2681, %v2680
        %v2711 = vpack.c.b16 %v2683, %v2682
        %v2712 = vpack.c.b16 %v2685, %v2684
        %v2713 = vpack.c.b16 %v2687, %v2686
        %v2714 = vpack.c.b16 %v2689, %v2688
        %v2715 = vpack.c.b16 %v2691, %v2690
        %v2716 = vpack.c.b16 %v2693, %v2692
        %v2717 = vpack.c.b16 %v2695, %v2694
        %v2718 = vpack.c.b16 %v2697, %v2696
        %v2719 = vpack.c.b16 %v2699, %v2698
        %v2720 = vpack.c.b16 %v2701, %v2700
        %v2721 = vpack.c.b16 %v2702, %v2702
        %vm2722 = vsmask.f32 5376
        %v2724 = vshrl.u32 %v2703, 16
        %v2726 = vrot.slane %v2724, 2
        %v2727 = vshll.u32 %v2703, 16
        %v2729 = vrot.slane %v2727, 3
        %v2730 = vor.u32 %v2726, %v2729
        %v2732 = vshrl.u32 %v2704, 16
        %v2734 = vrot.slane %v2732, 2
        %v2735 = vshll.u32 %v2704, 16
        %v2737 = vrot.slane %v2735, 3
        %v2738 = vor.u32 %v2734, %v2737
        %v2739 = vsel %vm2722, %v2730, %v2738
        %v2741 = vshrl.u32 %v2705, 16
        %v2743 = vrot.slane %v2741, 2
        %v2744 = vshll.u32 %v2705, 16
        %v2746 = vrot.slane %v2744, 3
        %v2747 = vor.u32 %v2743, %v2746
        %v2748 = vsel %vm2722, %v2738, %v2747
        %v2750 = vshrl.u32 %v2706, 16
        %v2752 = vrot.slane %v2750, 2
        %v2753 = vshll.u32 %v2706, 16
        %v2755 = vrot.slane %v2753, 3
        %v2756 = vor.u32 %v2752, %v2755
        %v2757 = vsel %vm2722, %v2747, %v2756
        %v2759 = vshrl.u32 %v2707, 16
        %v2761 = vrot.slane %v2759, 2
        %v2762 = vshll.u32 %v2707, 16
        %v2764 = vrot.slane %v2762, 3
        %v2765 = vor.u32 %v2761, %v2764
        %v2766 = vsel %vm2722, %v2756, %v2765
        %v2768 = vshrl.u32 %v2708, 16
        %v2770 = vrot.slane %v2768, 2
        %v2771 = vshll.u32 %v2708, 16
        %v2773 = vrot.slane %v2771, 3
        %v2774 = vor.u32 %v2770, %v2773
        %v2775 = vsel %vm2722, %v2765, %v2774
        %v2777 = vshrl.u32 %v2709, 16
        %v2779 = vrot.slane %v2777, 2
        %v2780 = vshll.u32 %v2709, 16
        %v2782 = vrot.slane %v2780, 3
        %v2783 = vor.u32 %v2779, %v2782
        %v2784 = vsel %vm2722, %v2774, %v2783
        %v2786 = vshrl.u32 %v2710, 16
        %v2788 = vrot.slane %v2786, 2
        %v2789 = vshll.u32 %v2710, 16
        %v2791 = vrot.slane %v2789, 3
        %v2792 = vor.u32 %v2788, %v2791
        %v2793 = vsel %vm2722, %v2783, %v2792
        %v2795 = vshrl.u32 %v2711, 16
        %v2797 = vrot.slane %v2795, 2
        %v2798 = vshll.u32 %v2711, 16
        %v2800 = vrot.slane %v2798, 3
        %v2801 = vor.u32 %v2797, %v2800
        %v2802 = vsel %vm2722, %v2792, %v2801
        %v2804 = vshrl.u32 %v2712, 16
        %v2806 = vrot.slane %v2804, 2
        %v2807 = vshll.u32 %v2712, 16
        %v2809 = vrot.slane %v2807, 3
        %v2810 = vor.u32 %v2806, %v2809
        %v2811 = vsel %vm2722, %v2801, %v2810
        %v2813 = vshrl.u32 %v2713, 16
        %v2815 = vrot.slane %v2813, 2
        %v2816 = vshll.u32 %v2713, 16
        %v2818 = vrot.slane %v2816, 3
        %v2819 = vor.u32 %v2815, %v2818
        %v2820 = vsel %vm2722, %v2810, %v2819
        %v2822 = vshrl.u32 %v2714, 16
        %v2824 = vrot.slane %v2822, 2
        %v2825 = vshll.u32 %v2714, 16
        %v2827 = vrot.slane %v2825, 3
        %v2828 = vor.u32 %v2824, %v2827
        %v2829 = vsel %vm2722, %v2819, %v2828
        %v2831 = vshrl.u32 %v2715, 16
        %v2833 = vrot.slane %v2831, 2
        %v2834 = vshll.u32 %v2715, 16
        %v2836 = vrot.slane %v2834, 3
        %v2837 = vor.u32 %v2833, %v2836
        %v2838 = vsel %vm2722, %v2828, %v2837
        %v2840 = vshrl.u32 %v2716, 16
        %v2842 = vrot.slane %v2840, 2
        %v2843 = vshll.u32 %v2716, 16
        %v2845 = vrot.slane %v2843, 3
        %v2846 = vor.u32 %v2842, %v2845
        %v2847 = vsel %vm2722, %v2837, %v2846
        %v2849 = vshrl.u32 %v2717, 16
        %v2851 = vrot.slane %v2849, 2
        %v2852 = vshll.u32 %v2717, 16
        %v2854 = vrot.slane %v2852, 3
        %v2855 = vor.u32 %v2851, %v2854
        %v2856 = vsel %vm2722, %v2846, %v2855
        %v2858 = vshrl.u32 %v2718, 16
        %v2860 = vrot.slane %v2858, 2
        %v2861 = vshll.u32 %v2718, 16
        %v2863 = vrot.slane %v2861, 3
        %v2864 = vor.u32 %v2860, %v2863
        %v2865 = vsel %vm2722, %v2855, %v2864
        %v2867 = vshrl.u32 %v2719, 16
        %v2869 = vrot.slane %v2867, 2
        %v2870 = vshll.u32 %v2719, 16
        %v2872 = vrot.slane %v2870, 3
        %v2873 = vor.u32 %v2869, %v2872
        %v2874 = vsel %vm2722, %v2864, %v2873
        %v2876 = vshrl.u32 %v2720, 16
        %v2878 = vrot.slane %v2876, 2
        %v2879 = vshll.u32 %v2720, 16
        %v2881 = vrot.slane %v2879, 3
        %v2882 = vor.u32 %v2878, %v2881
        %v2883 = vsel %vm2722, %v2873, %v2882
        %v2885 = vshrl.u32 %v2721, 16
        %v2887 = vrot.slane %v2885, 2
        %v2888 = vshll.u32 %v2721, 16
        %v2890 = vrot.slane %v2888, 3
        %v2891 = vor.u32 %v2887, %v2890
        %v2892 = vsel %vm2722, %v2882, %v2891
        %2893 = vrot.lane.b32.xlu0 %v2739, 96
        %v2894 = vpop.permute.xlu0 %2893
        %2895 = vrot.lane.b32.xlu0 %v2748, 96
        %v2896 = vpop.permute.xlu0 %2895
        %2897 = vrot.lane.b32.xlu0 %v2757, 96
        %v2898 = vpop.permute.xlu0 %2897
        %2899 = vrot.lane.b32.xlu0 %v2766, 96
        %v2900 = vpop.permute.xlu0 %2899
        %2901 = vrot.lane.b32.xlu0 %v2775, 96
        %v2902 = vpop.permute.xlu0 %2901
        %2903 = vrot.lane.b32.xlu0 %v2784, 96
        %v2904 = vpop.permute.xlu0 %2903
        %2905 = vrot.lane.b32.xlu0 %v2793, 96
        %v2906 = vpop.permute.xlu0 %2905
        %2907 = vrot.lane.b32.xlu0 %v2802, 96
        %v2908 = vpop.permute.xlu0 %2907
        %2909 = vrot.lane.b32.xlu0 %v2811, 96
        %v2910 = vpop.permute.xlu0 %2909
        %2911 = vrot.lane.b32.xlu0 %v2820, 96
        %v2912 = vpop.permute.xlu0 %2911
        %2913 = vrot.lane.b32.xlu0 %v2829, 96
        %v2914 = vpop.permute.xlu0 %2913
        %2915 = vrot.lane.b32.xlu0 %v2838, 96
        %v2916 = vpop.permute.xlu0 %2915
        %2917 = vrot.lane.b32.xlu0 %v2847, 96
        %v2918 = vpop.permute.xlu0 %2917
        %2919 = vrot.lane.b32.xlu0 %v2856, 96
        %v2920 = vpop.permute.xlu0 %2919
        %2921 = vrot.lane.b32.xlu0 %v2865, 96
        %v2922 = vpop.permute.xlu0 %2921
        %2923 = vrot.lane.b32.xlu0 %v2874, 96
        %v2924 = vpop.permute.xlu0 %2923
        %2925 = vrot.lane.b32.xlu0 %v2883, 96
        %v2926 = vpop.permute.xlu0 %2925
        %2927 = vrot.lane.b32.xlu0 %v2892, 96
        %v2928 = vpop.permute.xlu0 %2927
        %2947 = vst.msk [vmem:[#allocation6 + $0x8] sm:$0xff] %vm1757, %v2894
        %2948 = vst.msk [vmem:[#allocation6 + $0x20] sm:$0xff] %vm1757, %v2896
        %2949 = vst.msk [vmem:[#allocation6 + $0x38] sm:$0xff] %vm1757, %v2898
        %2950 = vst.msk [vmem:[#allocation6 + $0x50] sm:$0xff] %vm1757, %v2900
        %2951 = vst.msk [vmem:[#allocation6 + $0x68] sm:$0xff] %vm1757, %v2902
        %2952 = vst.msk [vmem:[#allocation6 + $0x80] sm:$0xff] %vm1757, %v2904
        %2953 = vst.msk [vmem:[#allocation6 + $0x98] sm:$0xff] %vm1757, %v2906
        %2954 = vst.msk [vmem:[#allocation6 + $0xb0] sm:$0xff] %vm1757, %v2908
        %2955 = vst.msk [vmem:[#allocation6 + $0xc8] sm:$0xff] %vm1757, %v2910
        %2956 = vst.msk [vmem:[#allocation6 + $0xe0] sm:$0xff] %vm1757, %v2912
        %2957 = vst.msk [vmem:[#allocation6 + $0xf8] sm:$0xff] %vm1757, %v2914
        %2958 = vst.msk [vmem:[#allocation6 + $0x110] sm:$0xff] %vm1757, %v2916
        %2959 = vst.msk [vmem:[#allocation6 + $0x128] sm:$0xff] %vm1757, %v2918
        %2960 = vst.msk [vmem:[#allocation6 + $0x140] sm:$0xff] %vm1757, %v2920
        %2961 = vst.msk [vmem:[#allocation6 + $0x158] sm:$0xff] %vm1757, %v2922
        %2962 = vst.msk [vmem:[#allocation6 + $0x170] sm:$0xff] %vm1757, %v2924
        %2963 = vst.msk [vmem:[#allocation6 + $0x188] sm:$0xff] %vm1757, %v2926
        %2964 = vst.msk [vmem:[#allocation6 + $0x1a0] sm:$0xff] %vm1757, %v2928
        %v2965 = vld [vmem:[#allocation2 + $0x10] sm:$0x8]
        %v2966 = vld [vmem:[#allocation2 + $0x14] sm:$0xf]
        %v2967 = vld [vmem:[#allocation2 + $0x18] sm:$0xf]
        %v2968 = vld [vmem:[#allocation2 + $0x1c] sm:$0xf]
        %v2969 = vld [vmem:[#allocation2 + $0x20] sm:$0xf]
        %v2970 = vld [vmem:[#allocation2 + $0x24] sm:$0xf]
        %v2971 = vld [vmem:[#allocation2 + $0x28] sm:$0xf]
        %v2972 = vld [vmem:[#allocation2 + $0x2c] sm:$0xf]
        %v2973 = vld [vmem:[#allocation2 + $0x30] sm:$0xf]
        %v2974 = vld [vmem:[#allocation2 + $0x34] sm:$0xf]
        %v2975 = vld [vmem:[#allocation2 + $0x38] sm:$0xf]
        %v2976 = vld [vmem:[#allocation2 + $0x3c] sm:$0xf]
        %v2977 = vld [vmem:[#allocation2 + $0x40] sm:$0xf]
        %v2978 = vld [vmem:[#allocation2 + $0x44] sm:$0xf]
        %v2979 = vld [vmem:[#allocation2 + $0x48] sm:$0xf]
        %v2980 = vld [vmem:[#allocation2 + $0x4c] sm:$0xf]
        %v2981 = vld [vmem:[#allocation2 + $0x50] sm:$0xf]
        %v2982 = vld [vmem:[#allocation2 + $0x54] sm:$0xf]
        %v2983 = vld [vmem:[#allocation2 + $0x58] sm:$0xf]
        %v2984 = vld [vmem:[#allocation2 + $0x5c] sm:$0xf]
        %v2985 = vld [vmem:[#allocation2 + $0x60] sm:$0xf]
        %v2986 = vld [vmem:[#allocation2 + $0x64] sm:$0xf]
        %v2987 = vld [vmem:[#allocation2 + $0x68] sm:$0xf]
        %v2988 = vld [vmem:[#allocation2 + $0x6c] sm:$0xf]
        %v2989 = vld [vmem:[#allocation2 + $0x70] sm:$0xf]
        %v2990 = vld [vmem:[#allocation2 + $0x74] sm:$0xf]
        %v2991 = vld [vmem:[#allocation2 + $0x78] sm:$0xf]
        %v2992 = vld [vmem:[#allocation2 + $0x7c] sm:$0xf]
        %v2993 = vld [vmem:[#allocation2 + $0x80] sm:$0xf]
        %v2994 = vld [vmem:[#allocation2 + $0x84] sm:$0xf]
        %v2995 = vld [vmem:[#allocation2 + $0x88] sm:$0xf]
        %v2996 = vld [vmem:[#allocation2 + $0x8c] sm:$0xf]
        %v2997 = vld [vmem:[#allocation2 + $0x90] sm:$0xf]
        %v2998 = vld [vmem:[#allocation2 + $0x94] sm:$0xf]
        %v2999 = vld [vmem:[#allocation2 + $0x98] sm:$0xf]
        %v3000 = vld [vmem:[#allocation2 + $0x9c] sm:$0xf]
        %v3001 = vld [vmem:[#allocation2 + $0xa0] sm:$0x7]
        %v3039 = vunpack.c.l.b16 %v2965
        %v3040 = vunpack.c.l.b16 %v2966
        %v3041 = vunpack.c.l.b16 %v2967
        %v3042 = vunpack.c.l.b16 %v2968
        %v3043 = vunpack.c.l.b16 %v2969
        %v3044 = vunpack.c.l.b16 %v2970
        %v3045 = vunpack.c.l.b16 %v2971
        %v3046 = vunpack.c.l.b16 %v2972
        %v3047 = vunpack.c.l.b16 %v2973
        %v3048 = vunpack.c.l.b16 %v2974
        %v3049 = vunpack.c.l.b16 %v2975
        %v3050 = vunpack.c.l.b16 %v2976
        %v3051 = vunpack.c.l.b16 %v2977
        %v3052 = vunpack.c.l.b16 %v2978
        %v3053 = vunpack.c.l.b16 %v2979
        %v3054 = vunpack.c.l.b16 %v2980
        %v3055 = vunpack.c.l.b16 %v2981
        %v3056 = vunpack.c.l.b16 %v2982
        %v3057 = vunpack.c.l.b16 %v2983
        %v3058 = vunpack.c.l.b16 %v2984
        %v3059 = vunpack.c.l.b16 %v2985
        %v3060 = vunpack.c.l.b16 %v2986
        %v3061 = vunpack.c.l.b16 %v2987
        %v3062 = vunpack.c.l.b16 %v2988
        %v3063 = vunpack.c.l.b16 %v2989
        %v3064 = vunpack.c.l.b16 %v2990
        %v3065 = vunpack.c.l.b16 %v2991
        %v3066 = vunpack.c.l.b16 %v2992
        %v3067 = vunpack.c.l.b16 %v2993
        %v3068 = vunpack.c.l.b16 %v2994
        %v3069 = vunpack.c.l.b16 %v2995
        %v3070 = vunpack.c.l.b16 %v2996
        %v3071 = vunpack.c.l.b16 %v2997
        %v3072 = vunpack.c.l.b16 %v2998
        %v3073 = vunpack.c.l.b16 %v2999
        %v3074 = vunpack.c.l.b16 %v3000
        %v3075 = vunpack.c.l.b16 %v3001
        %v3076 = vpack.c.b16 %v3040, %v3039
        %v3077 = vpack.c.b16 %v3042, %v3041
        %v3078 = vpack.c.b16 %v3044, %v3043
        %v3079 = vpack.c.b16 %v3046, %v3045
        %v3080 = vpack.c.b16 %v3048, %v3047
        %v3081 = vpack.c.b16 %v3050, %v3049
        %v3082 = vpack.c.b16 %v3052, %v3051
        %v3083 = vpack.c.b16 %v3054, %v3053
        %v3084 = vpack.c.b16 %v3056, %v3055
        %v3085 = vpack.c.b16 %v3058, %v3057
        %v3086 = vpack.c.b16 %v3060, %v3059
        %v3087 = vpack.c.b16 %v3062, %v3061
        %v3088 = vpack.c.b16 %v3064, %v3063
        %v3089 = vpack.c.b16 %v3066, %v3065
        %v3090 = vpack.c.b16 %v3068, %v3067
        %v3091 = vpack.c.b16 %v3070, %v3069
        %v3092 = vpack.c.b16 %v3072, %v3071
        %v3093 = vpack.c.b16 %v3074, %v3073
        %v3094 = vpack.c.b16 %v3075, %v3075
        %vm3095 = vcmask 1044480
        %v3096 = vrot.slane %v3076, 3
        %v3097 = vrot.slane %v3077, 3
        %v3098 = vsel %vm3095, %v3096, %v3097
        %v3099 = vrot.slane %v3078, 3
        %v3100 = vsel %vm3095, %v3097, %v3099
        %v3101 = vrot.slane %v3079, 3
        %v3102 = vsel %vm3095, %v3099, %v3101
        %v3103 = vrot.slane %v3080, 3
        %v3104 = vsel %vm3095, %v3101, %v3103
        %v3105 = vrot.slane %v3081, 3
        %v3106 = vsel %vm3095, %v3103, %v3105
        %v3107 = vrot.slane %v3082, 3
        %v3108 = vsel %vm3095, %v3105, %v3107
        %v3109 = vrot.slane %v3083, 3
        %v3110 = vsel %vm3095, %v3107, %v3109
        %v3111 = vrot.slane %v3084, 3
        %v3112 = vsel %vm3095, %v3109, %v3111
        %v3113 = vrot.slane %v3085, 3
        %v3114 = vsel %vm3095, %v3111, %v3113
        %v3115 = vrot.slane %v3086, 3
        %v3116 = vsel %vm3095, %v3113, %v3115
        %v3117 = vrot.slane %v3087, 3
        %v3118 = vsel %vm3095, %v3115, %v3117
        %v3119 = vrot.slane %v3088, 3
        %v3120 = vsel %vm3095, %v3117, %v3119
        %v3121 = vrot.slane %v3089, 3
        %v3122 = vsel %vm3095, %v3119, %v3121
        %v3123 = vrot.slane %v3090, 3
        %v3124 = vsel %vm3095, %v3121, %v3123
        %v3125 = vrot.slane %v3091, 3
        %v3126 = vsel %vm3095, %v3123, %v3125
        %v3127 = vrot.slane %v3092, 3
        %v3128 = vsel %vm3095, %v3125, %v3127
        %v3129 = vrot.slane %v3093, 3
        %v3130 = vsel %vm3095, %v3127, %v3129
        %v3131 = vrot.slane %v3094, 3
        %v3132 = vsel %vm3095, %v3129, %v3131
        %3151 = vst.msk [vmem:[#allocation6 + $0x10] sm:$0xff] %vm924, %v3098
        %3152 = vst.msk [vmem:[#allocation6 + $0x28] sm:$0xff] %vm924, %v3100
        %3153 = vst.msk [vmem:[#allocation6 + $0x40] sm:$0xff] %vm924, %v3102
        %3154 = vst.msk [vmem:[#allocation6 + $0x58] sm:$0xff] %vm924, %v3104
        %3155 = vst.msk [vmem:[#allocation6 + $0x70] sm:$0xff] %vm924, %v3106
        %3156 = vst.msk [vmem:[#allocation6 + $0x88] sm:$0xff] %vm924, %v3108
        %3157 = vst.msk [vmem:[#allocation6 + $0xa0] sm:$0xff] %vm924, %v3110
        %3158 = vst.msk [vmem:[#allocation6 + $0xb8] sm:$0xff] %vm924, %v3112
        %3159 = vst.msk [vmem:[#allocation6 + $0xd0] sm:$0xff] %vm924, %v3114
        %3160 = vst.msk [vmem:[#allocation6 + $0xe8] sm:$0xff] %vm924, %v3116
        %3161 = vst.msk [vmem:[#allocation6 + $0x100] sm:$0xff] %vm924, %v3118
        %3162 = vst.msk [vmem:[#allocation6 + $0x118] sm:$0xff] %vm924, %v3120
        %3163 = vst.msk [vmem:[#allocation6 + $0x130] sm:$0xff] %vm924, %v3122
        %3164 = vst.msk [vmem:[#allocation6 + $0x148] sm:$0xff] %vm924, %v3124
        %3165 = vst.msk [vmem:[#allocation6 + $0x160] sm:$0xff] %vm924, %v3126
        %3166 = vst.msk [vmem:[#allocation6 + $0x178] sm:$0xff] %vm924, %v3128
        %3167 = vst.msk [vmem:[#allocation6 + $0x190] sm:$0xff] %vm924, %v3130
        %3168 = vst.msk [vmem:[#allocation6 + $0x1a8] sm:$0xff] %vm924, %v3132
        %v3169 = vld [vmem:[#allocation6] sm:$0xff]
        %v3170 = vld [vmem:[#allocation6 + $0x8] sm:$0xff]
        %v3171 = vld [vmem:[#allocation6 + $0x10] sm:$0xff]
        %v3172 = vld [vmem:[#allocation6 + $0x18] sm:$0xff]
        %v3173 = vld [vmem:[#allocation6 + $0x20] sm:$0xff]
        %v3174 = vld [vmem:[#allocation6 + $0x28] sm:$0xff]
        %v3175 = vld [vmem:[#allocation6 + $0x30] sm:$0xff]
        %v3176 = vld [vmem:[#allocation6 + $0x38] sm:$0xff]
        %v3177 = vld [vmem:[#allocation6 + $0x40] sm:$0xff]
        %v3178 = vld [vmem:[#allocation6 + $0x48] sm:$0xff]
        %v3179 = vld [vmem:[#allocation6 + $0x50] sm:$0xff]
        %v3180 = vld [vmem:[#allocation6 + $0x58] sm:$0xff]
        %v3181 = vld [vmem:[#allocation6 + $0x60] sm:$0xff]
        %v3182 = vld [vmem:[#allocation6 + $0x68] sm:$0xff]
        %v3183 = vld [vmem:[#allocation6 + $0x70] sm:$0xff]
        %v3184 = vld [vmem:[#allocation6 + $0x78] sm:$0xff]
        %v3185 = vld [vmem:[#allocation6 + $0x80] sm:$0xff]
        %v3186 = vld [vmem:[#allocation6 + $0x88] sm:$0xff]
        %v3187 = vld [vmem:[#allocation6 + $0x90] sm:$0xff]
        %v3188 = vld [vmem:[#allocation6 + $0x98] sm:$0xff]
        %v3189 = vld [vmem:[#allocation6 + $0xa0] sm:$0xff]
        %v3190 = vld [vmem:[#allocation6 + $0xa8] sm:$0xff]
        %v3191 = vld [vmem:[#allocation6 + $0xb0] sm:$0xff]
        %v3192 = vld [vmem:[#allocation6 + $0xb8] sm:$0xff]
        %v3193 = vld [vmem:[#allocation6 + $0xc0] sm:$0xff]
        %v3194 = vld [vmem:[#allocation6 + $0xc8] sm:$0xff]
        %v3195 = vld [vmem:[#allocation6 + $0xd0] sm:$0xff]
        %v3196 = vld [vmem:[#allocation6 + $0xd8] sm:$0xff]
        %v3197 = vld [vmem:[#allocation6 + $0xe0] sm:$0xff]
        %v3198 = vld [vmem:[#allocation6 + $0xe8] sm:$0xff]
        %v3199 = vld [vmem:[#allocation6 + $0xf0] sm:$0xff]
        %v3200 = vld [vmem:[#allocation6 + $0xf8] sm:$0xff]
        %v3201 = vld [vmem:[#allocation6 + $0x100] sm:$0xff]
        %v3202 = vld [vmem:[#allocation6 + $0x108] sm:$0xff]
        %v3203 = vld [vmem:[#allocation6 + $0x110] sm:$0xff]
        %v3204 = vld [vmem:[#allocation6 + $0x118] sm:$0xff]
        %v3205 = vld [vmem:[#allocation6 + $0x120] sm:$0xff]
        %v3206 = vld [vmem:[#allocation6 + $0x128] sm:$0xff]
        %v3207 = vld [vmem:[#allocation6 + $0x130] sm:$0xff]
        %v3208 = vld [vmem:[#allocation6 + $0x138] sm:$0xff]
        %v3209 = vld [vmem:[#allocation6 + $0x140] sm:$0xff]
        %v3210 = vld [vmem:[#allocation6 + $0x148] sm:$0xff]
        %v3211 = vld [vmem:[#allocation6 + $0x150] sm:$0xff]
        %v3212 = vld [vmem:[#allocation6 + $0x158] sm:$0xff]
        %v3213 = vld [vmem:[#allocation6 + $0x160] sm:$0xff]
        %v3214 = vld [vmem:[#allocation6 + $0x168] sm:$0xff]
        %v3215 = vld [vmem:[#allocation6 + $0x170] sm:$0xff]
        %v3216 = vld [vmem:[#allocation6 + $0x178] sm:$0xff]
        %v3217 = vld [vmem:[#allocation6 + $0x180] sm:$0xff]
        %v3218 = vld [vmem:[#allocation6 + $0x188] sm:$0xff]
        %v3219 = vld [vmem:[#allocation6 + $0x190] sm:$0xff]
        %v3220 = vld [vmem:[#allocation6 + $0x198] sm:$0xff]
        %v3221 = vld [vmem:[#allocation6 + $0x1a0] sm:$0xff]
        %v3222 = vld [vmem:[#allocation6 + $0x1a8] sm:$0xff]
        %v3223 = vld [vmem:[%s1] sm:$0xf]
        %v3224 = vld [vmem:[%s1 + $0x4] sm:$0xf]
        %v3225 = vld [vmem:[%s1 + $0x8] sm:$0xf]
        %v3226 = vld [vmem:[%s1 + $0xc] sm:$0xf]
        %v3227 = vld [vmem:[%s1 + $0x10] sm:$0xf]
        %v3228 = vld [vmem:[%s1 + $0x14] sm:$0xf]
        %v3229 = vld [vmem:[%s1 + $0x18] sm:$0xf]
        %v3230 = vld [vmem:[%s1 + $0x1c] sm:$0xf]
        %v3231 = vld [vmem:[%s1 + $0x20] sm:$0xf]
        %v3232 = vld [vmem:[%s1 + $0x24] sm:$0xf]
        %v3233 = vld [vmem:[%s1 + $0x28] sm:$0xf]
        %v3234 = vld [vmem:[%s1 + $0x2c] sm:$0xf]
        %v3235 = vld [vmem:[%s1 + $0x30] sm:$0xf]
        %v3236 = vld [vmem:[%s1 + $0x34] sm:$0xf]
        %v3237 = vld [vmem:[%s1 + $0x38] sm:$0xf]
        %v3238 = vld [vmem:[%s1 + $0x3c] sm:$0xf]
        %v3239 = vld [vmem:[%s1 + $0x40] sm:$0xf]
        %v3240 = vld [vmem:[%s1 + $0x44] sm:$0xf]
        %v3241 = vld [vmem:[%s1 + $0x48] sm:$0xf]
        %v3242 = vld [vmem:[%s1 + $0x4c] sm:$0xf]
        %v3243 = vld [vmem:[%s1 + $0x50] sm:$0xf]
        %v3244 = vld [vmem:[%s1 + $0x54] sm:$0xf]
        %v3245 = vld [vmem:[%s1 + $0x58] sm:$0xf]
        %v3246 = vld [vmem:[%s1 + $0x5c] sm:$0xf]
        %v3247 = vld [vmem:[%s1 + $0x60] sm:$0xf]
        %v3248 = vld [vmem:[%s1 + $0x64] sm:$0xf]
        %v3249 = vld [vmem:[%s1 + $0x68] sm:$0xf]
        %v3250 = vld [vmem:[%s1 + $0x6c] sm:$0xf]
        %v3251 = vld [vmem:[%s1 + $0x70] sm:$0xf]
        %v3252 = vld [vmem:[%s1 + $0x74] sm:$0xf]
        %v3253 = vld [vmem:[%s1 + $0x78] sm:$0xf]
        %v3254 = vld [vmem:[%s1 + $0x7c] sm:$0xf]
        %v3255 = vld [vmem:[%s1 + $0x80] sm:$0xf]
        %v3256 = vld [vmem:[%s1 + $0x84] sm:$0xf]
        %v3257 = vld [vmem:[%s1 + $0x88] sm:$0xf]
        %v3258 = vld [vmem:[%s1 + $0x8c] sm:$0xf]
        %v3295 = vunpack.c.l.b16 %v3223
        %v3296 = vunpack.c.l.b16 %v3224
        %v3297 = vunpack.c.l.b16 %v3225
        %v3298 = vunpack.c.l.b16 %v3226
        %v3299 = vunpack.c.l.b16 %v3227
        %v3300 = vunpack.c.l.b16 %v3228
        %v3301 = vunpack.c.l.b16 %v3229
        %v3302 = vunpack.c.l.b16 %v3230
        %v3303 = vunpack.c.l.b16 %v3231
        %v3304 = vunpack.c.l.b16 %v3232
        %v3305 = vunpack.c.l.b16 %v3233
        %v3306 = vunpack.c.l.b16 %v3234
        %v3307 = vunpack.c.l.b16 %v3235
        %v3308 = vunpack.c.l.b16 %v3236
        %v3309 = vunpack.c.l.b16 %v3237
        %v3310 = vunpack.c.l.b16 %v3238
        %v3311 = vunpack.c.l.b16 %v3239
        %v3312 = vunpack.c.l.b16 %v3240
        %v3313 = vunpack.c.l.b16 %v3241
        %v3314 = vunpack.c.l.b16 %v3242
        %v3315 = vunpack.c.l.b16 %v3243
        %v3316 = vunpack.c.l.b16 %v3244
        %v3317 = vunpack.c.l.b16 %v3245
        %v3318 = vunpack.c.l.b16 %v3246
        %v3319 = vunpack.c.l.b16 %v3247
        %v3320 = vunpack.c.l.b16 %v3248
        %v3321 = vunpack.c.l.b16 %v3249
        %v3322 = vunpack.c.l.b16 %v3250
        %v3323 = vunpack.c.l.b16 %v3251
        %v3324 = vunpack.c.l.b16 %v3252
        %v3325 = vunpack.c.l.b16 %v3253
        %v3326 = vunpack.c.l.b16 %v3254
        %v3327 = vunpack.c.l.b16 %v3255
        %v3328 = vunpack.c.l.b16 %v3256
        %v3329 = vunpack.c.l.b16 %v3257
        %v3330 = vunpack.c.l.b16 %v3258
        %v3331 = vpack.c.b16 %v3296, %v3295
        %v3332 = vpack.c.b16 %v3298, %v3297
        %v3333 = vpack.c.b16 %v3300, %v3299
        %v3334 = vpack.c.b16 %v3302, %v3301
        %v3335 = vpack.c.b16 %v3304, %v3303
        %v3336 = vpack.c.b16 %v3306, %v3305
        %v3337 = vpack.c.b16 %v3308, %v3307
        %v3338 = vpack.c.b16 %v3310, %v3309
        %v3339 = vpack.c.b16 %v3312, %v3311
        %v3340 = vpack.c.b16 %v3314, %v3313
        %v3341 = vpack.c.b16 %v3316, %v3315
        %v3342 = vpack.c.b16 %v3318, %v3317
        %v3343 = vpack.c.b16 %v3320, %v3319
        %v3344 = vpack.c.b16 %v3322, %v3321
        %v3345 = vpack.c.b16 %v3324, %v3323
        %v3346 = vpack.c.b16 %v3326, %v3325
        %v3347 = vpack.c.b16 %v3328, %v3327
        %v3348 = vpack.c.b16 %v3330, %v3329
        %v3368 = vsel %vm924, %v3171, 0
        %v3371 = vsel %vm924, %v3174, 0
        %v3374 = vsel %vm924, %v3177, 0
        %v3377 = vsel %vm924, %v3180, 0
        %v3380 = vsel %vm924, %v3183, 0
        %v3383 = vsel %vm924, %v3186, 0
        %v3386 = vsel %vm924, %v3189, 0
        %v3389 = vsel %vm924, %v3192, 0
        %v3392 = vsel %vm924, %v3195, 0
        %v3395 = vsel %vm924, %v3198, 0
        %v3398 = vsel %vm924, %v3201, 0
        %v3401 = vsel %vm924, %v3204, 0
        %v3404 = vsel %vm924, %v3207, 0
        %v3407 = vsel %vm924, %v3210, 0
        %v3410 = vsel %vm924, %v3213, 0
        %v3413 = vsel %vm924, %v3216, 0
        %v3416 = vsel %vm924, %v3219, 0
        %v3419 = vsel %vm924, %v3222, 0
        %3421 = vmatprep.subr.bf16.mxu0 0
        %3422 = vmatpush1.bf16.msra.mxu0 %v3331
        %3423 = vmatprep.subr.bf16.mxu0 0
        %3424 = vmatpush1.bf16.msra.mxu0 %v3332
        %3425 = vmatprep.subr.bf16.mxu0 0
        %3426 = vmatpush1.bf16.msra.mxu0 %v3333
        %3427 = vmatprep.subr.bf16.mxu0 0
        %3428 = vmatpush1.bf16.msra.mxu0 %v3334
        %3429 = vmatprep.subr.bf16.mxu0 0
        %3430 = vmatpush1.bf16.msra.mxu0 %v3335
        %3431 = vmatprep.subr.bf16.mxu0 0
        %3432 = vmatpush1.bf16.msra.mxu0 %v3336
        %3433 = vmatprep.subr.bf16.mxu0 0
        %3434 = vmatpush1.bf16.msra.mxu0 %v3337
        %3435 = vmatprep.subr.bf16.mxu0 0
        %3436 = vmatpush1.bf16.msra.mxu0 %v3338
        %3437 = vmatprep.subr.bf16.mxu0 0
        %3438 = vmatpush1.bf16.msra.mxu0 %v3339
        %3439 = vmatprep.subr.bf16.mxu0 0
        %3440 = vmatpush1.bf16.msra.mxu0 %v3340
        %3441 = vmatprep.subr.bf16.mxu0 0
        %3442 = vmatpush1.bf16.msra.mxu0 %v3341
        %3443 = vmatprep.subr.bf16.mxu0 0
        %3444 = vmatpush1.bf16.msra.mxu0 %v3342
        %3445 = vmatprep.subr.bf16.mxu0 0
        %3446 = vmatpush1.bf16.msra.mxu0 %v3343
        %3447 = vmatprep.subr.bf16.mxu0 0
        %3448 = vmatpush1.bf16.msra.mxu0 %v3344
        %3449 = vmatprep.subr.bf16.mxu0 0
        %3450 = vmatpush1.bf16.msra.mxu0 %v3345
        %3451 = vmatprep.subr.bf16.mxu0 0
        %3452 = vmatpush1.bf16.msra.mxu0 %v3346
        %3453 = vmatprep.mubr.bf16.mxu0 %v3170
        %3454 = vmatmul.mubr.bf16.gmra.mrb[0].mxu0 %v3169
        %v3455 = vpop.f32.mrb[0].mxu0
        %v3456 = vadd.f32 0.0, %v3455
        %v3457 = vpop.f32.mrb[0].mxu0
        %v3458 = vpop.f32.mrb[0].mxu0
        %v3459 = vadd.f32 0.0, %v3458
        %v3460 = vpop.f32.mrb[0].mxu0
        %3461 = vmatprep.mubr.bf16.mxu0 %v3173
        %3462 = vmatmul.mubr.bf16.gmra.mrb[0].mxu0 %v3172
        %v3463 = vpop.f32.mrb[0].mxu0
        %v3464 = vadd.f32 0.0, %v3463
        %v3465 = vpop.f32.mrb[0].mxu0
        %v3466 = vpop.f32.mrb[0].mxu0
        %v3467 = vadd.f32 0.0, %v3466
        %v3468 = vpop.f32.mrb[0].mxu0
        %3469 = vmatprep.mubr.bf16.mxu0 %v3176
        %3470 = vmatmul.mubr.bf16.gmra.mrb[0].mxu0 %v3175
        %v3471 = vpop.f32.mrb[0].mxu0
        %v3472 = vadd.f32 0.0, %v3471
        %v3473 = vpop.f32.mrb[0].mxu0
        %v3474 = vpop.f32.mrb[0].mxu0
        %v3475 = vadd.f32 0.0, %v3474
        %v3476 = vpop.f32.mrb[0].mxu0
        %3477 = vmatprep.mubr.bf16.mxu0 %v3179
        %3478 = vmatmul.mubr.bf16.gmra.mrb[0].mxu0 %v3178
        %v3479 = vpop.f32.mrb[0].mxu0
        %v3480 = vadd.f32 0.0, %v3479
        %v3481 = vpop.f32.mrb[0].mxu0
        %v3482 = vpop.f32.mrb[0].mxu0
        %v3483 = vadd.f32 0.0, %v3482
        %v3484 = vpop.f32.mrb[0].mxu0
        %3485 = vmatprep.mubr.bf16.mxu0 %v3182
        %3486 = vmatmul.mubr.bf16.gmra.mrb[0].mxu0 %v3181
        %v3487 = vpop.f32.mrb[0].mxu0
        %v3488 = vadd.f32 0.0, %v3487
        %v3489 = vpop.f32.mrb[0].mxu0
        %v3490 = vpop.f32.mrb[0].mxu0
        %v3491 = vadd.f32 0.0, %v3490
        %v3492 = vpop.f32.mrb[0].mxu0
        %3493 = vmatprep.mubr.bf16.mxu0 %v3185
        %3494 = vmatmul.mubr.bf16.gmra.mrb[0].mxu0 %v3184
        %v3495 = vpop.f32.mrb[0].mxu0
        %v3496 = vadd.f32 0.0, %v3495
        %v3497 = vpop.f32.mrb[0].mxu0
        %v3498 = vpop.f32.mrb[0].mxu0
        %v3499 = vadd.f32 0.0, %v3498
        %v3500 = vpop.f32.mrb[0].mxu0
        %3501 = vmatprep.mubr.bf16.mxu0 %v3188
        %3502 = vmatmul.mubr.bf16.gmra.mrb[0].mxu0 %v3187
        %v3503 = vpop.f32.mrb[0].mxu0
        %v3504 = vadd.f32 0.0, %v3503
        %v3505 = vpop.f32.mrb[0].mxu0
        %v3506 = vpop.f32.mrb[0].mxu0
        %v3507 = vadd.f32 0.0, %v3506
        %v3508 = vpop.f32.mrb[0].mxu0
        %3509 = vmatprep.mubr.bf16.mxu0 %v3191
        %3510 = vmatmul.mubr.bf16.gmra.mrb[0].mxu0 %v3190
        %v3511 = vpop.f32.mrb[0].mxu0
        %v3512 = vadd.f32 0.0, %v3511
        %v3513 = vpop.f32.mrb[0].mxu0
        %v3514 = vpop.f32.mrb[0].mxu0
        %v3515 = vadd.f32 0.0, %v3514
        %v3516 = vpop.f32.mrb[0].mxu0
        %3517 = vmatprep.mubr.bf16.mxu0 %v3194
        %3518 = vmatmul.mubr.bf16.gmra.mrb[0].mxu0 %v3193
        %v3519 = vpop.f32.mrb[0].mxu0
        %v3520 = vadd.f32 0.0, %v3519
        %v3521 = vpop.f32.mrb[0].mxu0
        %v3522 = vpop.f32.mrb[0].mxu0
        %v3523 = vadd.f32 0.0, %v3522
        %v3524 = vpop.f32.mrb[0].mxu0
        %3525 = vmatprep.mubr.bf16.mxu0 %v3197
        %3526 = vmatmul.mubr.bf16.gmra.mrb[0].mxu0 %v3196
        %v3527 = vpop.f32.mrb[0].mxu0
        %v3528 = vadd.f32 0.0, %v3527
        %v3529 = vpop.f32.mrb[0].mxu0
        %v3530 = vpop.f32.mrb[0].mxu0
        %v3531 = vadd.f32 0.0, %v3530
        %v3532 = vpop.f32.mrb[0].mxu0
        %3533 = vmatprep.mubr.bf16.mxu0 %v3200
        %3534 = vmatmul.mubr.bf16.gmra.mrb[0].mxu0 %v3199
        %v3535 = vpop.f32.mrb[0].mxu0
        %v3536 = vadd.f32 0.0, %v3535
        %v3537 = vpop.f32.mrb[0].mxu0
        %v3538 = vpop.f32.mrb[0].mxu0
        %v3539 = vadd.f32 0.0, %v3538
        %v3540 = vpop.f32.mrb[0].mxu0
        %3541 = vmatprep.mubr.bf16.mxu0 %v3203
        %3542 = vmatmul.mubr.bf16.gmra.mrb[0].mxu0 %v3202
        %v3543 = vpop.f32.mrb[0].mxu0
        %v3544 = vadd.f32 0.0, %v3543
        %v3545 = vpop.f32.mrb[0].mxu0
        %v3546 = vpop.f32.mrb[0].mxu0
        %v3547 = vadd.f32 0.0, %v3546
        %v3548 = vpop.f32.mrb[0].mxu0
        %3549 = vmatprep.mubr.bf16.mxu0 %v3206
        %3550 = vmatmul.mubr.bf16.gmra.mrb[0].mxu0 %v3205
        %v3551 = vpop.f32.mrb[0].mxu0
        %v3552 = vadd.f32 0.0, %v3551
        %v3553 = vpop.f32.mrb[0].mxu0
        %v3554 = vpop.f32.mrb[0].mxu0
        %v3555 = vadd.f32 0.0, %v3554
        %v3556 = vpop.f32.mrb[0].mxu0
        %3557 = vmatprep.mubr.bf16.mxu0 %v3209
        %3558 = vmatmul.mubr.bf16.gmra.mrb[0].mxu0 %v3208
        %v3559 = vpop.f32.mrb[0].mxu0
        %v3560 = vadd.f32 0.0, %v3559
        %v3561 = vpop.f32.mrb[0].mxu0
        %v3562 = vpop.f32.mrb[0].mxu0
        %v3563 = vadd.f32 0.0, %v3562
        %v3564 = vpop.f32.mrb[0].mxu0
        %3565 = vmatprep.mubr.bf16.mxu0 %v3212
        %3566 = vmatmul.mubr.bf16.gmra.mrb[0].mxu0 %v3211
        %v3567 = vpop.f32.mrb[0].mxu0
        %v3568 = vadd.f32 0.0, %v3567
        %v3569 = vpop.f32.mrb[0].mxu0
        %v3570 = vpop.f32.mrb[0].mxu0
        %v3571 = vadd.f32 0.0, %v3570
        %v3572 = vpop.f32.mrb[0].mxu0
        %3573 = vmatprep.mubr.bf16.mxu0 %v3215
        %3574 = vmatmul.mubr.bf16.gmra.mrb[0].mxu0 %v3214
        %v3575 = vpop.f32.mrb[0].mxu0
        %v3576 = vadd.f32 0.0, %v3575
        %v3577 = vpop.f32.mrb[0].mxu0
        %v3578 = vpop.f32.mrb[0].mxu0
        %v3579 = vadd.f32 0.0, %v3578
        %v3580 = vpop.f32.mrb[0].mxu0
        %3581 = vmatprep.mubr.bf16.mxu0 %v3218
        %3582 = vmatmul.mubr.bf16.gmra.mrb[0].mxu0 %v3217
        %v3583 = vpop.f32.mrb[0].mxu0
        %v3584 = vadd.f32 0.0, %v3583
        %v3585 = vpop.f32.mrb[0].mxu0
        %v3586 = vpop.f32.mrb[0].mxu0
        %v3587 = vadd.f32 0.0, %v3586
        %v3588 = vpop.f32.mrb[0].mxu0
        %3589 = vmatprep.mubr.bf16.mxu0 %v3221
        %3590 = vmatmul.mubr.bf16.gmra.mrb[0].mxu0 %v3220
        %v3591 = vpop.f32.mrb[0].mxu0
        %v3592 = vadd.f32 0.0, %v3591
        %v3593 = vpop.f32.mrb[0].mxu0
        %v3594 = vpop.f32.mrb[0].mxu0
        %v3595 = vadd.f32 0.0, %v3594
        %v3596 = vpop.f32.mrb[0].mxu0
        %3597 = vdwg.mxu0
        %3598 = vmatprep.subr.bf16.mxu0 0
        %3599 = vmatpush1.bf16.msra.mxu0 %v3347
        %3600 = vmatprep.subr.bf16.mxu0 0
        %3601 = vmatpush1.bf16.msra.mxu0 %v3348
        %3602 = vmatprep.subr.bf16.mxu0 0
        %3603 = vmatpush1.bf16.msra.mxu0 0
        %3604 = vmatprep.subr.bf16.mxu0 0
        %3605 = vmatpush1.bf16.msra.mxu0 0
        %3606 = vmatprep.subr.bf16.mxu0 0
        %3607 = vmatpush1.bf16.msra.mxu0 0
        %3608 = vmatprep.subr.bf16.mxu0 0
        %3609 = vmatpush1.bf16.msra.mxu0 0
        %3610 = vmatprep.subr.bf16.mxu0 0
        %3611 = vmatpush1.bf16.msra.mxu0 0
        %3612 = vmatprep.subr.bf16.mxu0 0
        %3613 = vmatpush1.bf16.msra.mxu0 0
        %3614 = vmatprep.subr.bf16.mxu0 0
        %3615 = vmatpush1.bf16.msra.mxu0 0
        %3616 = vmatprep.subr.bf16.mxu0 0
        %3617 = vmatpush1.bf16.msra.mxu0 0
        %3618 = vmatprep.subr.bf16.mxu0 0
        %3619 = vmatpush1.bf16.msra.mxu0 0
        %3620 = vmatprep.subr.bf16.mxu0 0
        %3621 = vmatpush1.bf16.msra.mxu0 0
        %3622 = vmatprep.subr.bf16.mxu0 0
        %3623 = vmatpush1.bf16.msra.mxu0 0
        %3624 = vmatprep.subr.bf16.mxu0 0
        %3625 = vmatpush1.bf16.msra.mxu0 0
        %3626 = vmatprep.subr.bf16.mxu0 0
        %3627 = vmatpush1.bf16.msra.mxu0 0
        %3628 = vmatprep.subr.bf16.mxu0 0
        %3629 = vmatpush1.bf16.msra.mxu0 0
        %3630 = vmatprep.mubr.bf16.mxu0 0
        %3631 = vmatmul.mubr.bf16.gmra.mrb[0].mxu0 %v3368
        %v3632 = vpop.f32.mrb[0].mxu0
        %v3633 = vadd.f32 %v3456, %v3632
        %v3634 = vpop.f32.mrb[0].mxu0
        %v3635 = vpop.f32.mrb[0].mxu0
        %v3636 = vadd.f32 %v3459, %v3635
        %v3637 = vpop.f32.mrb[0].mxu0
        %3638 = vmatprep.mubr.bf16.mxu0 0
        %3639 = vmatmul.mubr.bf16.gmra.mrb[0].mxu0 %v3371
        %v3640 = vpop.f32.mrb[0].mxu0
        %v3641 = vadd.f32 %v3464, %v3640
        %v3642 = vpop.f32.mrb[0].mxu0
        %v3643 = vpop.f32.mrb[0].mxu0
        %v3644 = vadd.f32 %v3467, %v3643
        %v3645 = vpop.f32.mrb[0].mxu0
        %3646 = vmatprep.mubr.bf16.mxu0 0
        %3647 = vmatmul.mubr.bf16.gmra.mrb[0].mxu0 %v3374
        %v3648 = vpop.f32.mrb[0].mxu0
        %v3649 = vadd.f32 %v3472, %v3648
        %v3650 = vpop.f32.mrb[0].mxu0
        %v3651 = vpop.f32.mrb[0].mxu0
        %v3652 = vadd.f32 %v3475, %v3651
        %v3653 = vpop.f32.mrb[0].mxu0
        %3654 = vmatprep.mubr.bf16.mxu0 0
        %3655 = vmatmul.mubr.bf16.gmra.mrb[0].mxu0 %v3377
        %v3656 = vpop.f32.mrb[0].mxu0
        %v3657 = vadd.f32 %v3480, %v3656
        %v3658 = vpop.f32.mrb[0].mxu0
        %v3659 = vpop.f32.mrb[0].mxu0
        %v3660 = vadd.f32 %v3483, %v3659
        %v3661 = vpop.f32.mrb[0].mxu0
        %3662 = vmatprep.mubr.bf16.mxu0 0
        %3663 = vmatmul.mubr.bf16.gmra.mrb[0].mxu0 %v3380
        %v3664 = vpop.f32.mrb[0].mxu0
        %v3665 = vadd.f32 %v3488, %v3664
        %v3666 = vpop.f32.mrb[0].mxu0
        %v3667 = vpop.f32.mrb[0].mxu0
        %v3668 = vadd.f32 %v3491, %v3667
        %v3669 = vpop.f32.mrb[0].mxu0
        %3670 = vmatprep.mubr.bf16.mxu0 0
        %3671 = vmatmul.mubr.bf16.gmra.mrb[0].mxu0 %v3383
        %v3672 = vpop.f32.mrb[0].mxu0
        %v3673 = vadd.f32 %v3496, %v3672
        %v3674 = vpop.f32.mrb[0].mxu0
        %v3675 = vpop.f32.mrb[0].mxu0
        %v3676 = vadd.f32 %v3499, %v3675
        %v3677 = vpop.f32.mrb[0].mxu0
        %3678 = vmatprep.mubr.bf16.mxu0 0
        %3679 = vmatmul.mubr.bf16.gmra.mrb[0].mxu0 %v3386
        %v3680 = vpop.f32.mrb[0].mxu0
        %v3681 = vadd.f32 %v3504, %v3680
        %v3682 = vpop.f32.mrb[0].mxu0
        %v3683 = vpop.f32.mrb[0].mxu0
        %v3684 = vadd.f32 %v3507, %v3683
        %v3685 = vpop.f32.mrb[0].mxu0
        %3686 = vmatprep.mubr.bf16.mxu0 0
        %3687 = vmatmul.mubr.bf16.gmra.mrb[0].mxu0 %v3389
        %v3688 = vpop.f32.mrb[0].mxu0
        %v3689 = vadd.f32 %v3512, %v3688
        %v3690 = vpop.f32.mrb[0].mxu0
        %v3691 = vpop.f32.mrb[0].mxu0
        %v3692 = vadd.f32 %v3515, %v3691
        %v3693 = vpop.f32.mrb[0].mxu0
        %3694 = vmatprep.mubr.bf16.mxu0 0
        %3695 = vmatmul.mubr.bf16.gmra.mrb[0].mxu0 %v3392
        %v3696 = vpop.f32.mrb[0].mxu0
        %v3697 = vadd.f32 %v3520, %v3696
        %v3698 = vpop.f32.mrb[0].mxu0
        %v3699 = vpop.f32.mrb[0].mxu0
        %v3700 = vadd.f32 %v3523, %v3699
        %v3701 = vpop.f32.mrb[0].mxu0
        %3702 = vmatprep.mubr.bf16.mxu0 0
        %3703 = vmatmul.mubr.bf16.gmra.mrb[0].mxu0 %v3395
        %v3704 = vpop.f32.mrb[0].mxu0
        %v3705 = vadd.f32 %v3528, %v3704
        %v3706 = vpop.f32.mrb[0].mxu0
        %v3707 = vpop.f32.mrb[0].mxu0
        %v3708 = vadd.f32 %v3531, %v3707
        %v3709 = vpop.f32.mrb[0].mxu0
        %3710 = vmatprep.mubr.bf16.mxu0 0
        %3711 = vmatmul.mubr.bf16.gmra.mrb[0].mxu0 %v3398
        %v3712 = vpop.f32.mrb[0].mxu0
        %v3713 = vadd.f32 %v3536, %v3712
        %v3714 = vpop.f32.mrb[0].mxu0
        %v3715 = vpop.f32.mrb[0].mxu0
        %v3716 = vadd.f32 %v3539, %v3715
        %v3717 = vpop.f32.mrb[0].mxu0
        %3718 = vmatprep.mubr.bf16.mxu0 0
        %3719 = vmatmul.mubr.bf16.gmra.mrb[0].mxu0 %v3401
        %v3720 = vpop.f32.mrb[0].mxu0
        %v3721 = vadd.f32 %v3544, %v3720
        %v3722 = vpop.f32.mrb[0].mxu0
        %v3723 = vpop.f32.mrb[0].mxu0
        %v3724 = vadd.f32 %v3547, %v3723
        %v3725 = vpop.f32.mrb[0].mxu0
        %3726 = vmatprep.mubr.bf16.mxu0 0
        %3727 = vmatmul.mubr.bf16.gmra.mrb[0].mxu0 %v3404
        %v3728 = vpop.f32.mrb[0].mxu0
        %v3729 = vadd.f32 %v3552, %v3728
        %v3730 = vpop.f32.mrb[0].mxu0
        %v3731 = vpop.f32.mrb[0].mxu0
        %v3732 = vadd.f32 %v3555, %v3731
        %v3733 = vpop.f32.mrb[0].mxu0
        %3734 = vmatprep.mubr.bf16.mxu0 0
        %3735 = vmatmul.mubr.bf16.gmra.mrb[0].mxu0 %v3407
        %v3736 = vpop.f32.mrb[0].mxu0
        %v3737 = vadd.f32 %v3560, %v3736
        %v3738 = vpop.f32.mrb[0].mxu0
        %v3739 = vpop.f32.mrb[0].mxu0
        %v3740 = vadd.f32 %v3563, %v3739
        %v3741 = vpop.f32.mrb[0].mxu0
        %3742 = vmatprep.mubr.bf16.mxu0 0
        %3743 = vmatmul.mubr.bf16.gmra.mrb[0].mxu0 %v3410
        %v3744 = vpop.f32.mrb[0].mxu0
        %v3745 = vadd.f32 %v3568, %v3744
        %v3746 = vpop.f32.mrb[0].mxu0
        %v3747 = vpop.f32.mrb[0].mxu0
        %v3748 = vadd.f32 %v3571, %v3747
        %v3749 = vpop.f32.mrb[0].mxu0
        %3750 = vmatprep.mubr.bf16.mxu0 0
        %3751 = vmatmul.mubr.bf16.gmra.mrb[0].mxu0 %v3413
        %v3752 = vpop.f32.mrb[0].mxu0
        %v3753 = vadd.f32 %v3576, %v3752
        %v3754 = vpop.f32.mrb[0].mxu0
        %v3755 = vpop.f32.mrb[0].mxu0
        %v3756 = vadd.f32 %v3579, %v3755
        %v3757 = vpop.f32.mrb[0].mxu0
        %3758 = vmatprep.mubr.bf16.mxu0 0
        %3759 = vmatmul.mubr.bf16.gmra.mrb[0].mxu0 %v3416
        %v3760 = vpop.f32.mrb[0].mxu0
        %v3761 = vadd.f32 %v3584, %v3760
        %v3762 = vpop.f32.mrb[0].mxu0
        %v3763 = vpop.f32.mrb[0].mxu0
        %v3764 = vadd.f32 %v3587, %v3763
        %v3765 = vpop.f32.mrb[0].mxu0
        %3766 = vmatprep.mubr.bf16.mxu0 0
        %3767 = vmatmul.mubr.bf16.gmra.mrb[0].mxu0 %v3419
        %v3768 = vpop.f32.mrb[0].mxu0
        %v3769 = vadd.f32 %v3592, %v3768
        %v3770 = vpop.f32.mrb[0].mxu0
        %v3771 = vpop.f32.mrb[0].mxu0
        %v3772 = vadd.f32 %v3595, %v3771
        %v3773 = vpop.f32.mrb[0].mxu0
        %3774 = vdwg.mxu0
        %v3775 = vld [vmem:[%s2] sm:$0x1]
        %v3777 = vlaneseq
        %v3778 = vshrl.u32 %v3777, 7
        %v3779 = vsub.s32 0, %v3778
        %v3780 = vrot.slane %v3775, %v3779
        %v3782 = vmul.f32 %v3633, %v3780
        %v3783 = vmul.f32 %v3636, %v3780
        %v3784 = vmul.f32 %v3641, %v3780
        %v3785 = vmul.f32 %v3644, %v3780
        %v3786 = vmul.f32 %v3649, %v3780
        %v3787 = vmul.f32 %v3652, %v3780
        %v3788 = vmul.f32 %v3657, %v3780
        %v3789 = vmul.f32 %v3660, %v3780
        %v3790 = vmul.f32 %v3665, %v3780
        %v3791 = vmul.f32 %v3668, %v3780
        %v3792 = vmul.f32 %v3673, %v3780
        %v3793 = vmul.f32 %v3676, %v3780
        %v3794 = vmul.f32 %v3681, %v3780
        %v3795 = vmul.f32 %v3684, %v3780
        %v3796 = vmul.f32 %v3689, %v3780
        %v3797 = vmul.f32 %v3692, %v3780
        %v3798 = vmul.f32 %v3697, %v3780
        %v3799 = vmul.f32 %v3700, %v3780
        %v3800 = vmul.f32 %v3705, %v3780
        %v3801 = vmul.f32 %v3708, %v3780
        %v3802 = vmul.f32 %v3713, %v3780
        %v3803 = vmul.f32 %v3716, %v3780
        %v3804 = vmul.f32 %v3721, %v3780
        %v3805 = vmul.f32 %v3724, %v3780
        %v3806 = vmul.f32 %v3729, %v3780
        %v3807 = vmul.f32 %v3732, %v3780
        %v3808 = vmul.f32 %v3737, %v3780
        %v3809 = vmul.f32 %v3740, %v3780
        %v3810 = vmul.f32 %v3745, %v3780
        %v3811 = vmul.f32 %v3748, %v3780
        %v3812 = vmul.f32 %v3753, %v3780
        %v3813 = vmul.f32 %v3756, %v3780
        %v3814 = vmul.f32 %v3761, %v3780
        %v3815 = vmul.f32 %v3764, %v3780
        %v3816 = vmul.f32 %v3769, %v3780
        %v3817 = vmul.f32 %v3772, %v3780
        %v3818 = vld [vmem:[%s3] sm:$0x1]
        %v3820 = vlaneseq
        %v3821 = vshrl.u32 %v3820, 7
        %v3822 = vsub.s32 0, %v3821
        %v3823 = vrot.slane %v3818, %v3822
        %v3825 = vadd.f32 %v3782, %v3823
        %v3826 = vadd.f32 %v3783, %v3823
        %v3827 = vadd.f32 %v3784, %v3823
        %v3828 = vadd.f32 %v3785, %v3823
        %v3829 = vadd.f32 %v3786, %v3823
        %v3830 = vadd.f32 %v3787, %v3823
        %v3831 = vadd.f32 %v3788, %v3823
        %v3832 = vadd.f32 %v3789, %v3823
        %v3833 = vadd.f32 %v3790, %v3823
        %v3834 = vadd.f32 %v3791, %v3823
        %v3835 = vadd.f32 %v3792, %v3823
        %v3836 = vadd.f32 %v3793, %v3823
        %v3837 = vadd.f32 %v3794, %v3823
        %v3838 = vadd.f32 %v3795, %v3823
        %v3839 = vadd.f32 %v3796, %v3823
        %v3840 = vadd.f32 %v3797, %v3823
        %v3841 = vadd.f32 %v3798, %v3823
        %v3842 = vadd.f32 %v3799, %v3823
        %v3843 = vadd.f32 %v3800, %v3823
        %v3844 = vadd.f32 %v3801, %v3823
        %v3845 = vadd.f32 %v3802, %v3823
        %v3846 = vadd.f32 %v3803, %v3823
        %v3847 = vadd.f32 %v3804, %v3823
        %v3848 = vadd.f32 %v3805, %v3823
        %v3849 = vadd.f32 %v3806, %v3823
        %v3850 = vadd.f32 %v3807, %v3823
        %v3851 = vadd.f32 %v3808, %v3823
        %v3852 = vadd.f32 %v3809, %v3823
        %v3853 = vadd.f32 %v3810, %v3823
        %v3854 = vadd.f32 %v3811, %v3823
        %v3855 = vadd.f32 %v3812, %v3823
        %v3856 = vadd.f32 %v3813, %v3823
        %v3857 = vadd.f32 %v3814, %v3823
        %v3858 = vadd.f32 %v3815, %v3823
        %v3859 = vadd.f32 %v3816, %v3823
        %v3860 = vadd.f32 %v3817, %v3823
        %v3861 = vmax.f32 %v3825, 0.0
        %v3862 = vmax.f32 %v3826, 0.0
        %v3863 = vmax.f32 %v3827, 0.0
        %v3864 = vmax.f32 %v3828, 0.0
        %v3865 = vmax.f32 %v3829, 0.0
        %v3866 = vmax.f32 %v3830, 0.0
        %v3867 = vmax.f32 %v3831, 0.0
        %v3868 = vmax.f32 %v3832, 0.0
        %v3869 = vmax.f32 %v3833, 0.0
        %v3870 = vmax.f32 %v3834, 0.0
        %v3871 = vmax.f32 %v3835, 0.0
        %v3872 = vmax.f32 %v3836, 0.0
        %v3873 = vmax.f32 %v3837, 0.0
        %v3874 = vmax.f32 %v3838, 0.0
        %v3875 = vmax.f32 %v3839, 0.0
        %v3876 = vmax.f32 %v3840, 0.0
        %v3877 = vmax.f32 %v3841, 0.0
        %v3878 = vmax.f32 %v3842, 0.0
        %v3879 = vmax.f32 %v3843, 0.0
        %v3880 = vmax.f32 %v3844, 0.0
        %v3881 = vmax.f32 %v3845, 0.0
        %v3882 = vmax.f32 %v3846, 0.0
        %v3883 = vmax.f32 %v3847, 0.0
        %v3884 = vmax.f32 %v3848, 0.0
        %v3885 = vmax.f32 %v3849, 0.0
        %v3886 = vmax.f32 %v3850, 0.0
        %v3887 = vmax.f32 %v3851, 0.0
        %v3888 = vmax.f32 %v3852, 0.0
        %v3889 = vmax.f32 %v3853, 0.0
        %v3890 = vmax.f32 %v3854, 0.0
        %v3891 = vmax.f32 %v3855, 0.0
        %v3892 = vmax.f32 %v3856, 0.0
        %v3893 = vmax.f32 %v3857, 0.0
        %v3894 = vmax.f32 %v3858, 0.0
        %v3895 = vmax.f32 %v3859, 0.0
        %v3896 = vmax.f32 %v3860, 0.0
        %3897 = vst.msk [vmem:[#allocation7] sm:$0xff] %vm924, %v3861
        %3898 = vst.msk [vmem:[#allocation7 + $0x8] sm:$0xff] %vm924, %v3862
        %3899 = vst.msk [vmem:[#allocation7 + $0x10] sm:$0xff] %vm924, %v3863
        %3900 = vst.msk [vmem:[#allocation7 + $0x18] sm:$0xff] %vm924, %v3864
        %3901 = vst.msk [vmem:[#allocation7 + $0x20] sm:$0xff] %vm924, %v3865
        %3902 = vst.msk [vmem:[#allocation7 + $0x28] sm:$0xff] %vm924, %v3866
        %3903 = vst.msk [vmem:[#allocation7 + $0x30] sm:$0xff] %vm924, %v3867
        %3904 = vst.msk [vmem:[#allocation7 + $0x38] sm:$0xff] %vm924, %v3868
        %3905 = vst.msk [vmem:[#allocation7 + $0x40] sm:$0xff] %vm924, %v3869
        %3906 = vst.msk [vmem:[#allocation7 + $0x48] sm:$0xff] %vm924, %v3870
        %3907 = vst.msk [vmem:[#allocation7 + $0x50] sm:$0xff] %vm924, %v3871
        %3908 = vst.msk [vmem:[#allocation7 + $0x58] sm:$0xff] %vm924, %v3872
        %3909 = vst.msk [vmem:[#allocation7 + $0x60] sm:$0xff] %vm924, %v3873
        %3910 = vst.msk [vmem:[#allocation7 + $0x68] sm:$0xff] %vm924, %v3874
        %3911 = vst.msk [vmem:[#allocation7 + $0x70] sm:$0xff] %vm924, %v3875
        %3912 = vst.msk [vmem:[#allocation7 + $0x78] sm:$0xff] %vm924, %v3876
        %3913 = vst.msk [vmem:[#allocation7 + $0x80] sm:$0xff] %vm924, %v3877
        %3914 = vst.msk [vmem:[#allocation7 + $0x88] sm:$0xff] %vm924, %v3878
        %3915 = vst.msk [vmem:[#allocation7 + $0x90] sm:$0xff] %vm924, %v3879
        %3916 = vst.msk [vmem:[#allocation7 + $0x98] sm:$0xff] %vm924, %v3880
        %3917 = vst.msk [vmem:[#allocation7 + $0xa0] sm:$0xff] %vm924, %v3881
        %3918 = vst.msk [vmem:[#allocation7 + $0xa8] sm:$0xff] %vm924, %v3882
        %3919 = vst.msk [vmem:[#allocation7 + $0xb0] sm:$0xff] %vm924, %v3883
        %3920 = vst.msk [vmem:[#allocation7 + $0xb8] sm:$0xff] %vm924, %v3884
        %3921 = vst.msk [vmem:[#allocation7 + $0xc0] sm:$0xff] %vm924, %v3885
        %3922 = vst.msk [vmem:[#allocation7 + $0xc8] sm:$0xff] %vm924, %v3886
        %3923 = vst.msk [vmem:[#allocation7 + $0xd0] sm:$0xff] %vm924, %v3887
        %3924 = vst.msk [vmem:[#allocation7 + $0xd8] sm:$0xff] %vm924, %v3888
        %3925 = vst.msk [vmem:[#allocation7 + $0xe0] sm:$0xff] %vm924, %v3889
        %3926 = vst.msk [vmem:[#allocation7 + $0xe8] sm:$0xff] %vm924, %v3890
        %3927 = vst.msk [vmem:[#allocation7 + $0xf0] sm:$0xff] %vm924, %v3891
        %3928 = vst.msk [vmem:[#allocation7 + $0xf8] sm:$0xff] %vm924, %v3892
        %3929 = vst.msk [vmem:[#allocation7 + $0x100] sm:$0xff] %vm924, %v3893
        %3930 = vst.msk [vmem:[#allocation7 + $0x108] sm:$0xff] %vm924, %v3894
        %3931 = vst.msk [vmem:[#allocation7 + $0x110] sm:$0xff] %vm924, %v3895
        %3932 = vst.msk [vmem:[#allocation7 + $0x118] sm:$0xff] %vm924, %v3896
        %v3933 = vld [vmem:[#allocation7] ss:$2 sm:$0xff]
        %s3934 = scalar_lea.vmem [#allocation7], 16
        %v3935 = vld [vmem:[%s3934] ss:$2 sm:$0xff]
        %s3936 = scalar_lea.vmem [#allocation7], 32
        %v3937 = vld [vmem:[%s3936] ss:$2 sm:$0xff]
        %s3938 = scalar_lea.vmem [#allocation7], 48
        %v3939 = vld [vmem:[%s3938] ss:$2 sm:$0xff]
        %s3940 = scalar_lea.vmem [#allocation7], 64
        %v3941 = vld [vmem:[%s3940] ss:$2 sm:$0xff]
        %s3942 = scalar_lea.vmem [#allocation7], 80
        %v3943 = vld [vmem:[%s3942] ss:$2 sm:$0xff]
        %s3944 = scalar_lea.vmem [#allocation7], 96
        %v3945 = vld [vmem:[%s3944] ss:$2 sm:$0xff]
        %s3946 = scalar_lea.vmem [#allocation7], 112
        %v3947 = vld [vmem:[%s3946] ss:$2 sm:$0xff]
        %s3948 = scalar_lea.vmem [#allocation7], 128
        %v3949 = vld [vmem:[%s3948] ss:$2 sm:$0xff]
        %s3950 = scalar_lea.vmem [#allocation7], 144
        %v3951 = vld [vmem:[%s3950] ss:$2 sm:$0xff]
        %s3952 = scalar_lea.vmem [#allocation7], 160
        %v3953 = vld [vmem:[%s3952] ss:$2 sm:$0xff]
        %s3954 = scalar_lea.vmem [#allocation7], 176
        %v3955 = vld [vmem:[%s3954] ss:$2 sm:$0xff]
        %s3956 = scalar_lea.vmem [#allocation7], 192
        %v3957 = vld [vmem:[%s3956] ss:$2 sm:$0xff]
        %s3958 = scalar_lea.vmem [#allocation7], 208
        %v3959 = vld [vmem:[%s3958] ss:$2 sm:$0xff]
        %s3960 = scalar_lea.vmem [#allocation7], 224
        %v3961 = vld [vmem:[%s3960] ss:$2 sm:$0xff]
        %s3962 = scalar_lea.vmem [#allocation7], 240
        %v3963 = vld [vmem:[%s3962] ss:$2 sm:$0xff]
        %s3964 = scalar_lea.vmem [#allocation7], 256
        %v3965 = vld [vmem:[%s3964] ss:$2 sm:$0xff]
        %s3966 = scalar_lea.vmem [#allocation7], 272
        %v3967 = vld [vmem:[%s3966] ss:$2 sm:$0xff]
        %s3968 = scalar_lea.vmem [#allocation7], 1
        %v3969 = vld [vmem:[%s3968] ss:$2 sm:$0xff]
        %s3970 = scalar_lea.vmem [#allocation7], 17
        %v3971 = vld [vmem:[%s3970] ss:$2 sm:$0xff]
        %s3972 = scalar_lea.vmem [#allocation7], 33
        %v3973 = vld [vmem:[%s3972] ss:$2 sm:$0xff]
        %s3974 = scalar_lea.vmem [#allocation7], 49
        %v3975 = vld [vmem:[%s3974] ss:$2 sm:$0xff]
        %s3976 = scalar_lea.vmem [#allocation7], 65
        %v3977 = vld [vmem:[%s3976] ss:$2 sm:$0xff]
        %s3978 = scalar_lea.vmem [#allocation7], 81
        %v3979 = vld [vmem:[%s3978] ss:$2 sm:$0xff]
        %s3980 = scalar_lea.vmem [#allocation7], 97
        %v3981 = vld [vmem:[%s3980] ss:$2 sm:$0xff]
        %s3982 = scalar_lea.vmem [#allocation7], 113
        %v3983 = vld [vmem:[%s3982] ss:$2 sm:$0xff]
        %s3984 = scalar_lea.vmem [#allocation7], 129
        %v3985 = vld [vmem:[%s3984] ss:$2 sm:$0xff]
        %s3986 = scalar_lea.vmem [#allocation7], 145
        %v3987 = vld [vmem:[%s3986] ss:$2 sm:$0xff]
        %s3988 = scalar_lea.vmem [#allocation7], 161
        %v3989 = vld [vmem:[%s3988] ss:$2 sm:$0xff]
        %s3990 = scalar_lea.vmem [#allocation7], 177
        %v3991 = vld [vmem:[%s3990] ss:$2 sm:$0xff]
        %s3992 = scalar_lea.vmem [#allocation7], 193
        %v3993 = vld [vmem:[%s3992] ss:$2 sm:$0xff]
        %s3994 = scalar_lea.vmem [#allocation7], 209
        %v3995 = vld [vmem:[%s3994] ss:$2 sm:$0xff]
        %s3996 = scalar_lea.vmem [#allocation7], 225
        %v3997 = vld [vmem:[%s3996] ss:$2 sm:$0xff]
        %s3998 = scalar_lea.vmem [#allocation7], 241
        %v3999 = vld [vmem:[%s3998] ss:$2 sm:$0xff]
        %s4000 = scalar_lea.vmem [#allocation7], 257
        %v4001 = vld [vmem:[%s4000] ss:$2 sm:$0xff]
        %s4002 = scalar_lea.vmem [#allocation7], 273
        %v4003 = vld [vmem:[%s4002] ss:$2 sm:$0xff]
        %v4004 = vmax.f32 %v3933, %v3969
        %v4005 = vmax.f32 %v3935, %v3971
        %v4006 = vmax.f32 %v3937, %v3973
        %v4007 = vmax.f32 %v3939, %v3975
        %v4008 = vmax.f32 %v3941, %v3977
        %v4009 = vmax.f32 %v3943, %v3979
        %v4010 = vmax.f32 %v3945, %v3981
        %v4011 = vmax.f32 %v3947, %v3983
        %v4012 = vmax.f32 %v3949, %v3985
        %v4013 = vmax.f32 %v3951, %v3987
        %v4014 = vmax.f32 %v3953, %v3989
        %v4015 = vmax.f32 %v3955, %v3991
        %v4016 = vmax.f32 %v3957, %v3993
        %v4017 = vmax.f32 %v3959, %v3995
        %v4018 = vmax.f32 %v3961, %v3997
        %v4019 = vmax.f32 %v3963, %v3999
        %v4020 = vmax.f32 %v3965, %v4001
        %v4021 = vmax.f32 %v3967, %v4003
        %4022 = vst.msk [vmem:[#allocation8] sm:$0xff] %vm924, %v4004
        %4023 = vst.msk [vmem:[#allocation8 + $0x8] sm:$0xff] %vm924, %v4005
        %4024 = vst.msk [vmem:[#allocation8 + $0x10] sm:$0xff] %vm924, %v4006
        %4025 = vst.msk [vmem:[#allocation8 + $0x18] sm:$0xff] %vm924, %v4007
        %4026 = vst.msk [vmem:[#allocation8 + $0x20] sm:$0xff] %vm924, %v4008
        %4027 = vst.msk [vmem:[#allocation8 + $0x28] sm:$0xff] %vm924, %v4009
        %4028 = vst.msk [vmem:[#allocation8 + $0x30] sm:$0xff] %vm924, %v4010
        %4029 = vst.msk [vmem:[#allocation8 + $0x38] sm:$0xff] %vm924, %v4011
        %4030 = vst.msk [vmem:[#allocation8 + $0x40] sm:$0xff] %vm924, %v4012
        %4031 = vst.msk [vmem:[#allocation8 + $0x48] sm:$0xff] %vm924, %v4013
        %4032 = vst.msk [vmem:[#allocation8 + $0x50] sm:$0xff] %vm924, %v4014
        %4033 = vst.msk [vmem:[#allocation8 + $0x58] sm:$0xff] %vm924, %v4015
        %4034 = vst.msk [vmem:[#allocation8 + $0x60] sm:$0xff] %vm924, %v4016
        %4035 = vst.msk [vmem:[#allocation8 + $0x68] sm:$0xff] %vm924, %v4017
        %4036 = vst.msk [vmem:[#allocation8 + $0x70] sm:$0xff] %vm924, %v4018
        %4037 = vst.msk [vmem:[#allocation8 + $0x78] sm:$0xff] %vm924, %v4019
        %4038 = vst.msk [vmem:[#allocation8 + $0x80] sm:$0xff] %vm924, %v4020
        %4039 = vst.msk [vmem:[#allocation8 + $0x88] sm:$0xff] %vm924, %v4021
        %v4040 = vld [vmem:[#allocation8] sm:$0xff]
        %v4041 = vld [vmem:[#allocation8 + $0x9] sm:$0xff]
        %v4042 = vmax.f32 %v4040, %v4041
        %v4043 = vpack.c.bf16 %v4042, %v4042
        %v4045 = vunpack.c.l.b16 %v4043
        %v4046 = vpack.c.b16 %v4045, %v4045
        %v4048 = vshrl.u32 %v4046, 16
        %v4050 = vrot.slane %v4048, 6
        %v4051 = vshll.u32 %v4046, 16
        %v4053 = vrot.slane %v4051, 7
        %v4054 = vor.u32 %v4050, %v4053
        %v4055 = vrot.slane %v4054, 4
        %v4058 = vld [vmem:[#allocation3 + $0x4] sm:$0xe]
        %v4059 = vsel %vm290, %v4054, %v4058
        %4060 = vst [vmem:[#allocation3 + $0x4] sm:$0xe] %v4059
        %v4061 = vld [vmem:[#allocation3 + $0x8] sm:$0x3]
        %v4062 = vsel %vm296, %v4055, %v4061
        %4063 = vst [vmem:[#allocation3 + $0x8] sm:$0x3] %v4062
        %v4064 = vld [vmem:[#allocation8 + $0x12] sm:$0xff]
        %v4065 = vld [vmem:[#allocation8 + $0x1b] sm:$0xff]
        %v4066 = vmax.f32 %v4064, %v4065
        %v4067 = vpack.c.bf16 %v4066, %v4066
        %v4069 = vunpack.c.l.b16 %v4067
        %v4070 = vpack.c.b16 %v4069, %v4069
        %v4072 = vshrl.u32 %v4070, 16
        %v4074 = vrot.slane %v4072, 5
        %v4075 = vshll.u32 %v4070, 16
        %v4077 = vrot.slane %v4075, 6
        %v4078 = vor.u32 %v4074, %v4077
        %v4079 = vrot.slane %v4078, 4
        %v4082 = vld [vmem:[#allocation3 + $0x8] sm:$0xc]
        %v4083 = vsel %vm329, %v4078, %v4082
        %4084 = vst [vmem:[#allocation3 + $0x8] sm:$0xc] %v4083
        %v4085 = vld [vmem:[#allocation3 + $0xc] sm:$0x7]
        %v4086 = vsel %vm335, %v4079, %v4085
        %4087 = vst [vmem:[#allocation3 + $0xc] sm:$0x7] %v4086
        %v4088 = vld [vmem:[#allocation8 + $0x24] sm:$0xff]
        %v4089 = vld [vmem:[#allocation8 + $0x2d] sm:$0xff]
        %v4090 = vmax.f32 %v4088, %v4089
        %v4091 = vpack.c.bf16 %v4090, %v4090
        %v4093 = vunpack.c.l.b16 %v4091
        %v4094 = vpack.c.b16 %v4093, %v4093
        %v4096 = vshll.u32 %v4094, 16
        %v4098 = vrot.slane %v4096, 5
        %v4099 = vshrl.u32 %v4094, 16
        %v4101 = vrot.slane %v4099, 4
        %v4102 = vor.u32 %v4101, %v4098
        %v4103 = vrot.slane %v4102, 4
        %v4106 = vld [vmem:[#allocation3 + $0xc] sm:$0x8]
        %v4107 = vsel %vm368, %v4098, %v4106
        %4108 = vst [vmem:[#allocation3 + $0xc] sm:$0x8] %v4107
        %v4109 = vld [vmem:[#allocation3 + $0x10] sm:$0xf]
        %v4110 = vsel %vm374, %v4103, %v4109
        %4111 = vst [vmem:[#allocation3 + $0x10] sm:$0xf] %v4110
        %v4112 = vld [vmem:[#allocation8 + $0x36] sm:$0xff]
        %v4113 = vld [vmem:[#allocation8 + $0x3f] sm:$0xff]
        %v4114 = vmax.f32 %v4112, %v4113
        %v4115 = vpack.c.bf16 %v4114, %v4114
        %v4117 = vunpack.c.l.b16 %v4115
        %v4118 = vpack.c.b16 %v4117, %v4117
        %v4120 = vshrl.u32 %v4118, 16
        %v4122 = vrot.slane %v4120, 7
        %v4123 = vshll.u32 %v4118, 16
        %v4125 = vor.u32 %v4122, %v4123
        %v4126 = vrot.slane %v4122, 4
        %v4129 = vld [vmem:[#allocation3 + $0x14] sm:$0xf]
        %v4130 = vsel %vm404, %v4125, %v4129
        %4131 = vst [vmem:[#allocation3 + $0x14] sm:$0xf] %v4130
        %v4132 = vld [vmem:[#allocation3 + $0x18] sm:$0x1]
        %v4133 = vsel %vm410, %v4126, %v4132
        %4134 = vst [vmem:[#allocation3 + $0x18] sm:$0x1] %v4133
        %v4135 = vld [vmem:[#allocation8 + $0x48] sm:$0xff]
        %v4136 = vld [vmem:[#allocation8 + $0x51] sm:$0xff]
        %v4137 = vmax.f32 %v4135, %v4136
        %v4138 = vpack.c.bf16 %v4137, %v4137
        %v4140 = vunpack.c.l.b16 %v4138
        %v4141 = vpack.c.b16 %v4140, %v4140
        %v4143 = vshrl.u32 %v4141, 16
        %v4145 = vrot.slane %v4143, 6
        %v4146 = vshll.u32 %v4141, 16
        %v4148 = vrot.slane %v4146, 7
        %v4149 = vor.u32 %v4145, %v4148
        %v4150 = vrot.slane %v4149, 4
        %v4153 = vld [vmem:[#allocation3 + $0x18] sm:$0xe]
        %v4154 = vsel %vm290, %v4149, %v4153
        %4155 = vst [vmem:[#allocation3 + $0x18] sm:$0xe] %v4154
        %v4156 = vld [vmem:[#allocation3 + $0x1c] sm:$0x3]
        %v4157 = vsel %vm296, %v4150, %v4156
        %4158 = vst [vmem:[#allocation3 + $0x1c] sm:$0x3] %v4157
        %v4159 = vld [vmem:[#allocation8 + $0x5a] sm:$0xff]
        %v4160 = vld [vmem:[#allocation8 + $0x63] sm:$0xff]
        %v4161 = vmax.f32 %v4159, %v4160
        %v4162 = vpack.c.bf16 %v4161, %v4161
        %v4164 = vunpack.c.l.b16 %v4162
        %v4165 = vpack.c.b16 %v4164, %v4164
        %v4167 = vshrl.u32 %v4165, 16
        %v4169 = vrot.slane %v4167, 5
        %v4170 = vshll.u32 %v4165, 16
        %v4172 = vrot.slane %v4170, 6
        %v4173 = vor.u32 %v4169, %v4172
        %v4174 = vrot.slane %v4173, 4
        %v4177 = vld [vmem:[#allocation3 + $0x1c] sm:$0xc]
        %v4178 = vsel %vm329, %v4173, %v4177
        %4179 = vst [vmem:[#allocation3 + $0x1c] sm:$0xc] %v4178
        %v4180 = vld [vmem:[#allocation3 + $0x20] sm:$0x7]
        %v4181 = vsel %vm335, %v4174, %v4180
        %4182 = vst [vmem:[#allocation3 + $0x20] sm:$0x7] %v4181
        %v4183 = vld [vmem:[#allocation8 + $0x6c] sm:$0xff]
        %v4184 = vld [vmem:[#allocation8 + $0x75] sm:$0xff]
        %v4185 = vmax.f32 %v4183, %v4184
        %v4186 = vpack.c.bf16 %v4185, %v4185
        %v4188 = vunpack.c.l.b16 %v4186
        %v4189 = vpack.c.b16 %v4188, %v4188
        %v4191 = vshll.u32 %v4189, 16
        %v4193 = vrot.slane %v4191, 5
        %v4194 = vshrl.u32 %v4189, 16
        %v4196 = vrot.slane %v4194, 4
        %v4197 = vor.u32 %v4196, %v4193
        %v4198 = vrot.slane %v4197, 4
        %v4201 = vld [vmem:[#allocation3 + $0x20] sm:$0x8]
        %v4202 = vsel %vm368, %v4193, %v4201
        %4203 = vst [vmem:[#allocation3 + $0x20] sm:$0x8] %v4202
        %v4204 = vld [vmem:[#allocation3 + $0x24] sm:$0xf]
        %v4205 = vsel %vm374, %v4198, %v4204
        %4206 = vst [vmem:[#allocation3 + $0x24] sm:$0xf] %v4205
        %v4207 = vld [vmem:[#allocation8 + $0x7e] sm:$0xff]
        %v4208 = vld [vmem:[#allocation8 + $0x87] sm:$0xff]
        %v4209 = vmax.f32 %v4207, %v4208
        %v4210 = vpack.c.bf16 %v4209, %v4209
        %v4212 = vunpack.c.l.b16 %v4210
        %v4213 = vpack.c.b16 %v4212, %v4212
        %v4215 = vshrl.u32 %v4213, 16
        %v4217 = vrot.slane %v4215, 7
        %v4218 = vshll.u32 %v4213, 16
        %v4220 = vor.u32 %v4217, %v4218
        %v4221 = vrot.slane %v4217, 4
        %v4224 = vld [vmem:[#allocation3 + $0x28] sm:$0xf]
        %v4225 = vsel %vm404, %v4220, %v4224
        %4226 = vst [vmem:[#allocation3 + $0x28] sm:$0xf] %v4225
        %v4227 = vld [vmem:[#allocation3 + $0x2c] sm:$0x1]
        %v4228 = vsel %vm410, %v4221, %v4227
        %4229 = vst [vmem:[#allocation3 + $0x2c] sm:$0x1] %v4228
        %v4230 = vld [vmem:[#allocation3] sm:$0xf]
        %v4231 = vld [vmem:[#allocation3 + $0x4] sm:$0xf]
        %v4232 = vld [vmem:[#allocation3 + $0x8] sm:$0xf]
        %v4233 = vld [vmem:[#allocation3 + $0xc] sm:$0xf]
        %v4234 = vld [vmem:[#allocation3 + $0x10] sm:$0xf]
        %v4235 = vld [vmem:[#allocation3 + $0x14] sm:$0xf]
        %v4236 = vld [vmem:[#allocation3 + $0x18] sm:$0xf]
        %v4237 = vld [vmem:[#allocation3 + $0x1c] sm:$0xf]
        %v4238 = vld [vmem:[#allocation3 + $0x20] sm:$0xf]
        %v4239 = vld [vmem:[#allocation3 + $0x24] sm:$0xf]
        %v4250 = vunpack.c.l.b16 %v4230
        %v4251 = vunpack.c.l.b16 %v4231
        %v4252 = vunpack.c.l.b16 %v4232
        %v4253 = vunpack.c.l.b16 %v4233
        %v4254 = vunpack.c.l.b16 %v4234
        %v4255 = vunpack.c.l.b16 %v4235
        %v4256 = vunpack.c.l.b16 %v4236
        %v4257 = vunpack.c.l.b16 %v4237
        %v4258 = vunpack.c.l.b16 %v4238
        %v4259 = vunpack.c.l.b16 %v4239
        %v4260 = vpack.c.b16 %v4251, %v4250
        %v4261 = vpack.c.b16 %v4253, %v4252
        %v4262 = vpack.c.b16 %v4255, %v4254
        %v4263 = vpack.c.b16 %v4257, %v4256
        %v4264 = vpack.c.b16 %v4259, %v4258
        %4270 = vst.msk [vmem:[#allocation6] sm:$0xff] %vm924, %v4260
        %4271 = vst.msk [vmem:[#allocation6 + $0x18] sm:$0xff] %vm924, %v4261
        %4272 = vst.msk [vmem:[#allocation6 + $0x30] sm:$0xff] %vm924, %v4262
        %4273 = vst.msk [vmem:[#allocation6 + $0x48] sm:$0xff] %vm924, %v4263
        %4274 = vst.msk [vmem:[#allocation6 + $0x60] sm:$0xff] %vm924, %v4264
        %v4275 = vld [vmem:[#allocation3] sm:$0xf]
        %v4276 = vld [vmem:[#allocation3 + $0x4] sm:$0xf]
        %v4277 = vld [vmem:[#allocation3 + $0x8] sm:$0xf]
        %v4278 = vld [vmem:[#allocation3 + $0xc] sm:$0xf]
        %v4279 = vld [vmem:[#allocation3 + $0x10] sm:$0xf]
        %v4280 = vld [vmem:[#allocation3 + $0x14] sm:$0xf]
        %v4281 = vld [vmem:[#allocation3 + $0x18] sm:$0xf]
        %v4282 = vld [vmem:[#allocation3 + $0x1c] sm:$0xf]
        %v4283 = vld [vmem:[#allocation3 + $0x20] sm:$0xf]
        %v4284 = vld [vmem:[#allocation3 + $0x24] sm:$0xf]
        %v4285 = vld [vmem:[#allocation3 + $0x28] sm:$0x1]
        %v4297 = vunpack.c.l.b16 %v4275
        %v4298 = vunpack.c.l.b16 %v4276
        %v4299 = vunpack.c.l.b16 %v4277
        %v4300 = vunpack.c.l.b16 %v4278
        %v4301 = vunpack.c.l.b16 %v4279
        %v4302 = vunpack.c.l.b16 %v4280
        %v4303 = vunpack.c.l.b16 %v4281
        %v4304 = vunpack.c.l.b16 %v4282
        %v4305 = vunpack.c.l.b16 %v4283
        %v4306 = vunpack.c.l.b16 %v4284
        %v4307 = vunpack.c.l.b16 %v4285
        %v4308 = vpack.c.b16 %v4298, %v4297
        %v4309 = vpack.c.b16 %v4300, %v4299
        %v4310 = vpack.c.b16 %v4302, %v4301
        %v4311 = vpack.c.b16 %v4304, %v4303
        %v4312 = vpack.c.b16 %v4306, %v4305
        %v4313 = vpack.c.b16 %v4307, %v4307
        %v4315 = vshrl.u32 %v4308, 16
        %v4317 = vshll.u32 %v4308, 16
        %v4319 = vrot.slane %v4317, 1
        %v4320 = vor.u32 %v4315, %v4319
        %v4322 = vshll.u32 %v4309, 16
        %v4324 = vrot.slane %v4322, 1
        %v4325 = vsel %vm1073, %v4320, %v4324
        %v4326 = vshrl.u32 %v4309, 16
        %v4328 = vor.u32 %v4326, %v4324
        %v4330 = vshll.u32 %v4310, 16
        %v4332 = vrot.slane %v4330, 1
        %v4333 = vsel %vm1073, %v4328, %v4332
        %v4334 = vshrl.u32 %v4310, 16
        %v4336 = vor.u32 %v4334, %v4332
        %v4338 = vshll.u32 %v4311, 16
        %v4340 = vrot.slane %v4338, 1
        %v4341 = vsel %vm1073, %v4336, %v4340
        %v4342 = vshrl.u32 %v4311, 16
        %v4344 = vor.u32 %v4342, %v4340
        %v4346 = vshll.u32 %v4312, 16
        %v4348 = vrot.slane %v4346, 1
        %v4349 = vsel %vm1073, %v4344, %v4348
        %v4350 = vshrl.u32 %v4312, 16
        %v4352 = vor.u32 %v4350, %v4348
        %v4354 = vshll.u32 %v4313, 16
        %v4356 = vrot.slane %v4354, 1
        %v4357 = vsel %vm1073, %v4352, %v4356
        %4358 = vrot.lane.b32.xlu0 %v4325, 32
        %v4359 = vpop.permute.xlu0 %4358
        %4360 = vrot.lane.b32.xlu0 %v4333, 32
        %v4361 = vpop.permute.xlu0 %4360
        %4362 = vrot.lane.b32.xlu0 %v4341, 32
        %v4363 = vpop.permute.xlu0 %4362
        %4364 = vrot.lane.b32.xlu0 %v4349, 32
        %v4365 = vpop.permute.xlu0 %4364
        %4366 = vrot.lane.b32.xlu0 %v4357, 32
        %v4367 = vpop.permute.xlu0 %4366
        %4373 = vst.msk [vmem:[#allocation6] sm:$0xff] %vm1276, %v4359
        %4374 = vst.msk [vmem:[#allocation6 + $0x18] sm:$0xff] %vm1276, %v4361
        %4375 = vst.msk [vmem:[#allocation6 + $0x30] sm:$0xff] %vm1276, %v4363
        %4376 = vst.msk [vmem:[#allocation6 + $0x48] sm:$0xff] %vm1276, %v4365
        %4377 = vst.msk [vmem:[#allocation6 + $0x60] sm:$0xff] %vm1276, %v4367
        %v4378 = vld [vmem:[#allocation3] sm:$0xe]
        %v4379 = vld [vmem:[#allocation3 + $0x4] sm:$0xf]
        %v4380 = vld [vmem:[#allocation3 + $0x8] sm:$0xf]
        %v4381 = vld [vmem:[#allocation3 + $0xc] sm:$0xf]
        %v4382 = vld [vmem:[#allocation3 + $0x10] sm:$0xf]
        %v4383 = vld [vmem:[#allocation3 + $0x14] sm:$0xf]
        %v4384 = vld [vmem:[#allocation3 + $0x18] sm:$0xf]
        %v4385 = vld [vmem:[#allocation3 + $0x1c] sm:$0xf]
        %v4386 = vld [vmem:[#allocation3 + $0x20] sm:$0xf]
        %v4387 = vld [vmem:[#allocation3 + $0x24] sm:$0xf]
        %v4388 = vld [vmem:[#allocation3 + $0x28] sm:$0x1]
        %v4400 = vunpack.c.l.b16 %v4378
        %v4401 = vunpack.c.l.b16 %v4379
        %v4402 = vunpack.c.l.b16 %v4380
        %v4403 = vunpack.c.l.b16 %v4381
        %v4404 = vunpack.c.l.b16 %v4382
        %v4405 = vunpack.c.l.b16 %v4383
        %v4406 = vunpack.c.l.b16 %v4384
        %v4407 = vunpack.c.l.b16 %v4385
        %v4408 = vunpack.c.l.b16 %v4386
        %v4409 = vunpack.c.l.b16 %v4387
        %v4410 = vunpack.c.l.b16 %v4388
        %v4411 = vpack.c.b16 %v4401, %v4400
        %v4412 = vpack.c.b16 %v4403, %v4402
        %v4413 = vpack.c.b16 %v4405, %v4404
        %v4414 = vpack.c.b16 %v4407, %v4406
        %v4415 = vpack.c.b16 %v4409, %v4408
        %v4416 = vpack.c.b16 %v4410, %v4410
        %v4417 = vrot.slane %v4411, 1
        %v4418 = vrot.slane %v4412, 1
        %v4419 = vsel %vm1425, %v4417, %v4418
        %v4420 = vrot.slane %v4413, 1
        %v4421 = vsel %vm1425, %v4418, %v4420
        %v4422 = vrot.slane %v4414, 1
        %v4423 = vsel %vm1425, %v4420, %v4422
        %v4424 = vrot.slane %v4415, 1
        %v4425 = vsel %vm1425, %v4422, %v4424
        %v4426 = vrot.slane %v4416, 1
        %v4427 = vsel %vm1425, %v4424, %v4426
        %4428 = vrot.lane.b32.xlu0 %v4419, 64
        %v4429 = vpop.permute.xlu0 %4428
        %4430 = vrot.lane.b32.xlu0 %v4421, 64
        %v4431 = vpop.permute.xlu0 %4430
        %4432 = vrot.lane.b32.xlu0 %v4423, 64
        %v4433 = vpop.permute.xlu0 %4432
        %4434 = vrot.lane.b32.xlu0 %v4425, 64
        %v4435 = vpop.permute.xlu0 %4434
        %4436 = vrot.lane.b32.xlu0 %v4427, 64
        %v4437 = vpop.permute.xlu0 %4436
        %4443 = vst.msk [vmem:[#allocation6] sm:$0xff] %vm1517, %v4429
        %4444 = vst.msk [vmem:[#allocation6 + $0x18] sm:$0xff] %vm1517, %v4431
        %4445 = vst.msk [vmem:[#allocation6 + $0x30] sm:$0xff] %vm1517, %v4433
        %4446 = vst.msk [vmem:[#allocation6 + $0x48] sm:$0xff] %vm1517, %v4435
        %4447 = vst.msk [vmem:[#allocation6 + $0x60] sm:$0xff] %vm1517, %v4437
        %v4448 = vld [vmem:[#allocation3 + $0x4] sm:$0xe]
        %v4449 = vld [vmem:[#allocation3 + $0x8] sm:$0xf]
        %v4450 = vld [vmem:[#allocation3 + $0xc] sm:$0xf]
        %v4451 = vld [vmem:[#allocation3 + $0x10] sm:$0xf]
        %v4452 = vld [vmem:[#allocation3 + $0x14] sm:$0xf]
        %v4453 = vld [vmem:[#allocation3 + $0x18] sm:$0xf]
        %v4454 = vld [vmem:[#allocation3 + $0x1c] sm:$0xf]
        %v4455 = vld [vmem:[#allocation3 + $0x20] sm:$0xf]
        %v4456 = vld [vmem:[#allocation3 + $0x24] sm:$0xf]
        %v4457 = vld [vmem:[#allocation3 + $0x28] sm:$0xf]
        %v4458 = vld [vmem:[#allocation3 + $0x2c] sm:$0x1]
        %v4470 = vunpack.c.l.b16 %v4448
        %v4471 = vunpack.c.l.b16 %v4449
        %v4472 = vunpack.c.l.b16 %v4450
        %v4473 = vunpack.c.l.b16 %v4451
        %v4474 = vunpack.c.l.b16 %v4452
        %v4475 = vunpack.c.l.b16 %v4453
        %v4476 = vunpack.c.l.b16 %v4454
        %v4477 = vunpack.c.l.b16 %v4455
        %v4478 = vunpack.c.l.b16 %v4456
        %v4479 = vunpack.c.l.b16 %v4457
        %v4480 = vunpack.c.l.b16 %v4458
        %v4481 = vpack.c.b16 %v4471, %v4470
        %v4482 = vpack.c.b16 %v4473, %v4472
        %v4483 = vpack.c.b16 %v4475, %v4474
        %v4484 = vpack.c.b16 %v4477, %v4476
        %v4485 = vpack.c.b16 %v4479, %v4478
        %v4486 = vpack.c.b16 %v4480, %v4480
        %v4487 = vrot.slane %v4481, 1
        %v4488 = vrot.slane %v4482, 1
        %v4489 = vsel %vm1425, %v4487, %v4488
        %v4490 = vrot.slane %v4483, 1
        %v4491 = vsel %vm1425, %v4488, %v4490
        %v4492 = vrot.slane %v4484, 1
        %v4493 = vsel %vm1425, %v4490, %v4492
        %v4494 = vrot.slane %v4485, 1
        %v4495 = vsel %vm1425, %v4492, %v4494
        %v4496 = vrot.slane %v4486, 1
        %v4497 = vsel %vm1425, %v4494, %v4496
        %4498 = vrot.lane.b32.xlu0 %v4489, 96
        %v4499 = vpop.permute.xlu0 %4498
        %4500 = vrot.lane.b32.xlu0 %v4491, 96
        %v4501 = vpop.permute.xlu0 %4500
        %4502 = vrot.lane.b32.xlu0 %v4493, 96
        %v4503 = vpop.permute.xlu0 %4502
        %4504 = vrot.lane.b32.xlu0 %v4495, 96
        %v4505 = vpop.permute.xlu0 %4504
        %4506 = vrot.lane.b32.xlu0 %v4497, 96
        %v4507 = vpop.permute.xlu0 %4506
        %4513 = vst.msk [vmem:[#allocation6] sm:$0xff] %vm1757, %v4499
        %4514 = vst.msk [vmem:[#allocation6 + $0x18] sm:$0xff] %vm1757, %v4501
        %4515 = vst.msk [vmem:[#allocation6 + $0x30] sm:$0xff] %vm1757, %v4503
        %4516 = vst.msk [vmem:[#allocation6 + $0x48] sm:$0xff] %vm1757, %v4505
        %4517 = vst.msk [vmem:[#allocation6 + $0x60] sm:$0xff] %vm1757, %v4507
        %v4518 = vld [vmem:[#allocation3 + $0x4] sm:$0xe]
        %v4519 = vld [vmem:[#allocation3 + $0x8] sm:$0xf]
        %v4520 = vld [vmem:[#allocation3 + $0xc] sm:$0xf]
        %v4521 = vld [vmem:[#allocation3 + $0x10] sm:$0xf]
        %v4522 = vld [vmem:[#allocation3 + $0x14] sm:$0xf]
        %v4523 = vld [vmem:[#allocation3 + $0x18] sm:$0xf]
        %v4524 = vld [vmem:[#allocation3 + $0x1c] sm:$0xf]
        %v4525 = vld [vmem:[#allocation3 + $0x20] sm:$0xf]
        %v4526 = vld [vmem:[#allocation3 + $0x24] sm:$0xf]
        %v4527 = vld [vmem:[#allocation3 + $0x28] sm:$0xf]
        %v4528 = vld [vmem:[#allocation3 + $0x2c] sm:$0x3]
        %v4540 = vunpack.c.l.b16 %v4518
        %v4541 = vunpack.c.l.b16 %v4519
        %v4542 = vunpack.c.l.b16 %v4520
        %v4543 = vunpack.c.l.b16 %v4521
        %v4544 = vunpack.c.l.b16 %v4522
        %v4545 = vunpack.c.l.b16 %v4523
        %v4546 = vunpack.c.l.b16 %v4524
        %v4547 = vunpack.c.l.b16 %v4525
        %v4548 = vunpack.c.l.b16 %v4526
        %v4549 = vunpack.c.l.b16 %v4527
        %v4550 = vunpack.c.l.b16 %v4528
        %v4551 = vpack.c.b16 %v4541, %v4540
        %v4552 = vpack.c.b16 %v4543, %v4542
        %v4553 = vpack.c.b16 %v4545, %v4544
        %v4554 = vpack.c.b16 %v4547, %v4546
        %v4555 = vpack.c.b16 %v4549, %v4548
        %v4556 = vpack.c.b16 %v4550, %v4550
        %v4558 = vshrl.u32 %v4551, 16
        %v4560 = vrot.slane %v4558, 1
        %v4561 = vshll.u32 %v4551, 16
        %v4563 = vrot.slane %v4561, 2
        %v4564 = vor.u32 %v4560, %v4563
        %v4566 = vshrl.u32 %v4552, 16
        %v4568 = vrot.slane %v4566, 1
        %v4569 = vshll.u32 %v4552, 16
        %v4571 = vrot.slane %v4569, 2
        %v4572 = vor.u32 %v4568, %v4571
        %v4573 = vsel %vm1906, %v4564, %v4572
        %v4575 = vshrl.u32 %v4553, 16
        %v4577 = vrot.slane %v4575, 1
        %v4578 = vshll.u32 %v4553, 16
        %v4580 = vrot.slane %v4578, 2
        %v4581 = vor.u32 %v4577, %v4580
        %v4582 = vsel %vm1906, %v4572, %v4581
        %v4584 = vshrl.u32 %v4554, 16
        %v4586 = vrot.slane %v4584, 1
        %v4587 = vshll.u32 %v4554, 16
        %v4589 = vrot.slane %v4587, 2
        %v4590 = vor.u32 %v4586, %v4589
        %v4591 = vsel %vm1906, %v4581, %v4590
        %v4593 = vshrl.u32 %v4555, 16
        %v4595 = vrot.slane %v4593, 1
        %v4596 = vshll.u32 %v4555, 16
        %v4598 = vrot.slane %v4596, 2
        %v4599 = vor.u32 %v4595, %v4598
        %v4600 = vsel %vm1906, %v4590, %v4599
        %v4602 = vshrl.u32 %v4556, 16
        %v4604 = vrot.slane %v4602, 1
        %v4605 = vshll.u32 %v4556, 16
        %v4607 = vrot.slane %v4605, 2
        %v4608 = vor.u32 %v4604, %v4607
        %v4609 = vsel %vm1906, %v4599, %v4608
        %4615 = vst.msk [vmem:[#allocation6 + $0x8] sm:$0xff] %vm924, %v4573
        %4616 = vst.msk [vmem:[#allocation6 + $0x20] sm:$0xff] %vm924, %v4582
        %4617 = vst.msk [vmem:[#allocation6 + $0x38] sm:$0xff] %vm924, %v4591
        %4618 = vst.msk [vmem:[#allocation6 + $0x50] sm:$0xff] %vm924, %v4600
        %4619 = vst.msk [vmem:[#allocation6 + $0x68] sm:$0xff] %vm924, %v4609
        %v4620 = vld [vmem:[#allocation3 + $0x4] sm:$0xc]
        %v4621 = vld [vmem:[#allocation3 + $0x8] sm:$0xf]
        %v4622 = vld [vmem:[#allocation3 + $0xc] sm:$0xf]
        %v4623 = vld [vmem:[#allocation3 + $0x10] sm:$0xf]
        %v4624 = vld [vmem:[#allocation3 + $0x14] sm:$0xf]
        %v4625 = vld [vmem:[#allocation3 + $0x18] sm:$0xf]
        %v4626 = vld [vmem:[#allocation3 + $0x1c] sm:$0xf]
        %v4627 = vld [vmem:[#allocation3 + $0x20] sm:$0xf]
        %v4628 = vld [vmem:[#allocation3 + $0x24] sm:$0xf]
        %v4629 = vld [vmem:[#allocation3 + $0x28] sm:$0xf]
        %v4630 = vld [vmem:[#allocation3 + $0x2c] sm:$0x3]
        %v4642 = vunpack.c.l.b16 %v4620
        %v4643 = vunpack.c.l.b16 %v4621
        %v4644 = vunpack.c.l.b16 %v4622
        %v4645 = vunpack.c.l.b16 %v4623
        %v4646 = vunpack.c.l.b16 %v4624
        %v4647 = vunpack.c.l.b16 %v4625
        %v4648 = vunpack.c.l.b16 %v4626
        %v4649 = vunpack.c.l.b16 %v4627
        %v4650 = vunpack.c.l.b16 %v4628
        %v4651 = vunpack.c.l.b16 %v4629
        %v4652 = vunpack.c.l.b16 %v4630
        %v4653 = vpack.c.b16 %v4643, %v4642
        %v4654 = vpack.c.b16 %v4645, %v4644
        %v4655 = vpack.c.b16 %v4647, %v4646
        %v4656 = vpack.c.b16 %v4649, %v4648
        %v4657 = vpack.c.b16 %v4651, %v4650
        %v4658 = vpack.c.b16 %v4652, %v4652
        %v4659 = vrot.slane %v4653, 2
        %v4660 = vrot.slane %v4654, 2
        %v4661 = vsel %vm2243, %v4659, %v4660
        %v4662 = vrot.slane %v4655, 2
        %v4663 = vsel %vm2243, %v4660, %v4662
        %v4664 = vrot.slane %v4656, 2
        %v4665 = vsel %vm2243, %v4662, %v4664
        %v4666 = vrot.slane %v4657, 2
        %v4667 = vsel %vm2243, %v4664, %v4666
        %v4668 = vrot.slane %v4658, 2
        %v4669 = vsel %vm2243, %v4666, %v4668
        %4670 = vrot.lane.b32.xlu0 %v4661, 32
        %v4671 = vpop.permute.xlu0 %4670
        %4672 = vrot.lane.b32.xlu0 %v4663, 32
        %v4673 = vpop.permute.xlu0 %4672
        %4674 = vrot.lane.b32.xlu0 %v4665, 32
        %v4675 = vpop.permute.xlu0 %4674
        %4676 = vrot.lane.b32.xlu0 %v4667, 32
        %v4677 = vpop.permute.xlu0 %4676
        %4678 = vrot.lane.b32.xlu0 %v4669, 32
        %v4679 = vpop.permute.xlu0 %4678
        %4685 = vst.msk [vmem:[#allocation6 + $0x8] sm:$0xff] %vm1276, %v4671
        %4686 = vst.msk [vmem:[#allocation6 + $0x20] sm:$0xff] %vm1276, %v4673
        %4687 = vst.msk [vmem:[#allocation6 + $0x38] sm:$0xff] %vm1276, %v4675
        %4688 = vst.msk [vmem:[#allocation6 + $0x50] sm:$0xff] %vm1276, %v4677
        %4689 = vst.msk [vmem:[#allocation6 + $0x68] sm:$0xff] %vm1276, %v4679
        %v4690 = vld [vmem:[#allocation3 + $0x8] sm:$0xc]
        %v4691 = vld [vmem:[#allocation3 + $0xc] sm:$0xf]
        %v4692 = vld [vmem:[#allocation3 + $0x10] sm:$0xf]
        %v4693 = vld [vmem:[#allocation3 + $0x14] sm:$0xf]
        %v4694 = vld [vmem:[#allocation3 + $0x18] sm:$0xf]
        %v4695 = vld [vmem:[#allocation3 + $0x1c] sm:$0xf]
        %v4696 = vld [vmem:[#allocation3 + $0x20] sm:$0xf]
        %v4697 = vld [vmem:[#allocation3 + $0x24] sm:$0xf]
        %v4698 = vld [vmem:[#allocation3 + $0x28] sm:$0xf]
        %v4699 = vld [vmem:[#allocation3 + $0x2c] sm:$0xf]
        %v4700 = vld [vmem:[#allocation3 + $0x30] sm:$0x3]
        %v4712 = vunpack.c.l.b16 %v4690
        %v4713 = vunpack.c.l.b16 %v4691
        %v4714 = vunpack.c.l.b16 %v4692
        %v4715 = vunpack.c.l.b16 %v4693
        %v4716 = vunpack.c.l.b16 %v4694
        %v4717 = vunpack.c.l.b16 %v4695
        %v4718 = vunpack.c.l.b16 %v4696
        %v4719 = vunpack.c.l.b16 %v4697
        %v4720 = vunpack.c.l.b16 %v4698
        %v4721 = vunpack.c.l.b16 %v4699
        %v4722 = vunpack.c.l.b16 %v4700
        %v4723 = vpack.c.b16 %v4713, %v4712
        %v4724 = vpack.c.b16 %v4715, %v4714
        %v4725 = vpack.c.b16 %v4717, %v4716
        %v4726 = vpack.c.b16 %v4719, %v4718
        %v4727 = vpack.c.b16 %v4721, %v4720
        %v4728 = vpack.c.b16 %v4722, %v4722
        %v4729 = vrot.slane %v4723, 2
        %v4730 = vrot.slane %v4724, 2
        %v4731 = vsel %vm2243, %v4729, %v4730
        %v4732 = vrot.slane %v4725, 2
        %v4733 = vsel %vm2243, %v4730, %v4732
        %v4734 = vrot.slane %v4726, 2
        %v4735 = vsel %vm2243, %v4732, %v4734
        %v4736 = vrot.slane %v4727, 2
        %v4737 = vsel %vm2243, %v4734, %v4736
        %v4738 = vrot.slane %v4728, 2
        %v4739 = vsel %vm2243, %v4736, %v4738
        %4740 = vrot.lane.b32.xlu0 %v4731, 64
        %v4741 = vpop.permute.xlu0 %4740
        %4742 = vrot.lane.b32.xlu0 %v4733, 64
        %v4743 = vpop.permute.xlu0 %4742
        %4744 = vrot.lane.b32.xlu0 %v4735, 64
        %v4745 = vpop.permute.xlu0 %4744
        %4746 = vrot.lane.b32.xlu0 %v4737, 64
        %v4747 = vpop.permute.xlu0 %4746
        %4748 = vrot.lane.b32.xlu0 %v4739, 64
        %v4749 = vpop.permute.xlu0 %4748
        %4755 = vst.msk [vmem:[#allocation6 + $0x8] sm:$0xff] %vm1517, %v4741
        %4756 = vst.msk [vmem:[#allocation6 + $0x20] sm:$0xff] %vm1517, %v4743
        %4757 = vst.msk [vmem:[#allocation6 + $0x38] sm:$0xff] %vm1517, %v4745
        %4758 = vst.msk [vmem:[#allocation6 + $0x50] sm:$0xff] %vm1517, %v4747
        %4759 = vst.msk [vmem:[#allocation6 + $0x68] sm:$0xff] %vm1517, %v4749
        %v4760 = vld [vmem:[#allocation3 + $0x8] sm:$0xc]
        %v4761 = vld [vmem:[#allocation3 + $0xc] sm:$0xf]
        %v4762 = vld [vmem:[#allocation3 + $0x10] sm:$0xf]
        %v4763 = vld [vmem:[#allocation3 + $0x14] sm:$0xf]
        %v4764 = vld [vmem:[#allocation3 + $0x18] sm:$0xf]
        %v4765 = vld [vmem:[#allocation3 + $0x1c] sm:$0xf]
        %v4766 = vld [vmem:[#allocation3 + $0x20] sm:$0xf]
        %v4767 = vld [vmem:[#allocation3 + $0x24] sm:$0xf]
        %v4768 = vld [vmem:[#allocation3 + $0x28] sm:$0xf]
        %v4769 = vld [vmem:[#allocation3 + $0x2c] sm:$0xf]
        %v4770 = vld [vmem:[#allocation3 + $0x30] sm:$0x7]
        %v4782 = vunpack.c.l.b16 %v4760
        %v4783 = vunpack.c.l.b16 %v4761
        %v4784 = vunpack.c.l.b16 %v4762
        %v4785 = vunpack.c.l.b16 %v4763
        %v4786 = vunpack.c.l.b16 %v4764
        %v4787 = vunpack.c.l.b16 %v4765
        %v4788 = vunpack.c.l.b16 %v4766
        %v4789 = vunpack.c.l.b16 %v4767
        %v4790 = vunpack.c.l.b16 %v4768
        %v4791 = vunpack.c.l.b16 %v4769
        %v4792 = vunpack.c.l.b16 %v4770
        %v4793 = vpack.c.b16 %v4783, %v4782
        %v4794 = vpack.c.b16 %v4785, %v4784
        %v4795 = vpack.c.b16 %v4787, %v4786
        %v4796 = vpack.c.b16 %v4789, %v4788
        %v4797 = vpack.c.b16 %v4791, %v4790
        %v4798 = vpack.c.b16 %v4792, %v4792
        %v4800 = vshrl.u32 %v4793, 16
        %v4802 = vrot.slane %v4800, 2
        %v4803 = vshll.u32 %v4793, 16
        %v4805 = vrot.slane %v4803, 3
        %v4806 = vor.u32 %v4802, %v4805
        %v4808 = vshrl.u32 %v4794, 16
        %v4810 = vrot.slane %v4808, 2
        %v4811 = vshll.u32 %v4794, 16
        %v4813 = vrot.slane %v4811, 3
        %v4814 = vor.u32 %v4810, %v4813
        %v4815 = vsel %vm2722, %v4806, %v4814
        %v4817 = vshrl.u32 %v4795, 16
        %v4819 = vrot.slane %v4817, 2
        %v4820 = vshll.u32 %v4795, 16
        %v4822 = vrot.slane %v4820, 3
        %v4823 = vor.u32 %v4819, %v4822
        %v4824 = vsel %vm2722, %v4814, %v4823
        %v4826 = vshrl.u32 %v4796, 16
        %v4828 = vrot.slane %v4826, 2
        %v4829 = vshll.u32 %v4796, 16
        %v4831 = vrot.slane %v4829, 3
        %v4832 = vor.u32 %v4828, %v4831
        %v4833 = vsel %vm2722, %v4823, %v4832
        %v4835 = vshrl.u32 %v4797, 16
        %v4837 = vrot.slane %v4835, 2
        %v4838 = vshll.u32 %v4797, 16
        %v4840 = vrot.slane %v4838, 3
        %v4841 = vor.u32 %v4837, %v4840
        %v4842 = vsel %vm2722, %v4832, %v4841
        %v4844 = vshrl.u32 %v4798, 16
        %v4846 = vrot.slane %v4844, 2
        %v4847 = vshll.u32 %v4798, 16
        %v4849 = vrot.slane %v4847, 3
        %v4850 = vor.u32 %v4846, %v4849
        %v4851 = vsel %vm2722, %v4841, %v4850
        %4852 = vrot.lane.b32.xlu0 %v4815, 96
        %v4853 = vpop.permute.xlu0 %4852
        %4854 = vrot.lane.b32.xlu0 %v4824, 96
        %v4855 = vpop.permute.xlu0 %4854
        %4856 = vrot.lane.b32.xlu0 %v4833, 96
        %v4857 = vpop.permute.xlu0 %4856
        %4858 = vrot.lane.b32.xlu0 %v4842, 96
        %v4859 = vpop.permute.xlu0 %4858
        %4860 = vrot.lane.b32.xlu0 %v4851, 96
        %v4861 = vpop.permute.xlu0 %4860
        %4867 = vst.msk [vmem:[#allocation6 + $0x8] sm:$0xff] %vm1757, %v4853
        %4868 = vst.msk [vmem:[#allocation6 + $0x20] sm:$0xff] %vm1757, %v4855
        %4869 = vst.msk [vmem:[#allocation6 + $0x38] sm:$0xff] %vm1757, %v4857
        %4870 = vst.msk [vmem:[#allocation6 + $0x50] sm:$0xff] %vm1757, %v4859
        %4871 = vst.msk [vmem:[#allocation6 + $0x68] sm:$0xff] %vm1757, %v4861
        %v4872 = vld [vmem:[#allocation3 + $0x8] sm:$0x8]
        %v4873 = vld [vmem:[#allocation3 + $0xc] sm:$0xf]
        %v4874 = vld [vmem:[#allocation3 + $0x10] sm:$0xf]
        %v4875 = vld [vmem:[#allocation3 + $0x14] sm:$0xf]
        %v4876 = vld [vmem:[#allocation3 + $0x18] sm:$0xf]
        %v4877 = vld [vmem:[#allocation3 + $0x1c] sm:$0xf]
        %v4878 = vld [vmem:[#allocation3 + $0x20] sm:$0xf]
        %v4879 = vld [vmem:[#allocation3 + $0x24] sm:$0xf]
        %v4880 = vld [vmem:[#allocation3 + $0x28] sm:$0xf]
        %v4881 = vld [vmem:[#allocation3 + $0x2c] sm:$0xf]
        %v4882 = vld [vmem:[#allocation3 + $0x30] sm:$0x7]
        %v4894 = vunpack.c.l.b16 %v4872
        %v4895 = vunpack.c.l.b16 %v4873
        %v4896 = vunpack.c.l.b16 %v4874
        %v4897 = vunpack.c.l.b16 %v4875
        %v4898 = vunpack.c.l.b16 %v4876
        %v4899 = vunpack.c.l.b16 %v4877
        %v4900 = vunpack.c.l.b16 %v4878
        %v4901 = vunpack.c.l.b16 %v4879
        %v4902 = vunpack.c.l.b16 %v4880
        %v4903 = vunpack.c.l.b16 %v4881
        %v4904 = vunpack.c.l.b16 %v4882
        %v4905 = vpack.c.b16 %v4895, %v4894
        %v4906 = vpack.c.b16 %v4897, %v4896
        %v4907 = vpack.c.b16 %v4899, %v4898
        %v4908 = vpack.c.b16 %v4901, %v4900
        %v4909 = vpack.c.b16 %v4903, %v4902
        %v4910 = vpack.c.b16 %v4904, %v4904
        %v4911 = vrot.slane %v4905, 3
        %v4912 = vrot.slane %v4906, 3
        %v4913 = vsel %vm3095, %v4911, %v4912
        %v4914 = vrot.slane %v4907, 3
        %v4915 = vsel %vm3095, %v4912, %v4914
        %v4916 = vrot.slane %v4908, 3
        %v4917 = vsel %vm3095, %v4914, %v4916
        %v4918 = vrot.slane %v4909, 3
        %v4919 = vsel %vm3095, %v4916, %v4918
        %v4920 = vrot.slane %v4910, 3
        %v4921 = vsel %vm3095, %v4918, %v4920
        %4927 = vst.msk [vmem:[#allocation6 + $0x10] sm:$0xff] %vm924, %v4913
        %4928 = vst.msk [vmem:[#allocation6 + $0x28] sm:$0xff] %vm924, %v4915
        %4929 = vst.msk [vmem:[#allocation6 + $0x40] sm:$0xff] %vm924, %v4917
        %4930 = vst.msk [vmem:[#allocation6 + $0x58] sm:$0xff] %vm924, %v4919
        %4931 = vst.msk [vmem:[#allocation6 + $0x70] sm:$0xff] %vm924, %v4921
        %v4932 = vld [vmem:[#allocation6] sm:$0xff]
        %v4933 = vld [vmem:[#allocation6 + $0x8] sm:$0xff]
        %v4934 = vld [vmem:[#allocation6 + $0x10] sm:$0xff]
        %v4935 = vld [vmem:[#allocation6 + $0x18] sm:$0xff]
        %v4936 = vld [vmem:[#allocation6 + $0x20] sm:$0xff]
        %v4937 = vld [vmem:[#allocation6 + $0x28] sm:$0xff]
        %v4938 = vld [vmem:[#allocation6 + $0x30] sm:$0xff]
        %v4939 = vld [vmem:[#allocation6 + $0x38] sm:$0xff]
        %v4940 = vld [vmem:[#allocation6 + $0x40] sm:$0xff]
        %v4941 = vld [vmem:[#allocation6 + $0x48] sm:$0xff]
        %v4942 = vld [vmem:[#allocation6 + $0x50] sm:$0xff]
        %v4943 = vld [vmem:[#allocation6 + $0x58] sm:$0xff]
        %v4944 = vld [vmem:[#allocation6 + $0x60] sm:$0xff]
        %v4945 = vld [vmem:[#allocation6 + $0x68] sm:$0xff]
        %v4946 = vld [vmem:[#allocation6 + $0x70] sm:$0xff]
        %s4947 = scalar_lea.vmem %s1, 144
        %v4948 = vld [vmem:[%s4947] sm:$0xf]
        %v4949 = vld [vmem:[%s4947 + $0x4] sm:$0xf]
        %v4950 = vld [vmem:[%s4947 + $0x8] sm:$0xf]
        %v4951 = vld [vmem:[%s4947 + $0xc] sm:$0xf]
        %v4952 = vld [vmem:[%s4947 + $0x10] sm:$0xf]
        %v4953 = vld [vmem:[%s4947 + $0x14] sm:$0xf]
        %v4954 = vld [vmem:[%s4947 + $0x18] sm:$0xf]
        %v4955 = vld [vmem:[%s4947 + $0x1c] sm:$0xf]
        %v4956 = vld [vmem:[%s4947 + $0x20] sm:$0xf]
        %v4957 = vld [vmem:[%s4947 + $0x24] sm:$0xf]
        %v4958 = vld [vmem:[%s4947 + $0x28] sm:$0xf]
        %v4959 = vld [vmem:[%s4947 + $0x2c] sm:$0xf]
        %v4960 = vld [vmem:[%s4947 + $0x30] sm:$0xf]
        %v4961 = vld [vmem:[%s4947 + $0x34] sm:$0xf]
        %v4962 = vld [vmem:[%s4947 + $0x38] sm:$0xf]
        %v4963 = vld [vmem:[%s4947 + $0x3c] sm:$0xf]
        %v4964 = vld [vmem:[%s4947 + $0x40] sm:$0xf]
        %v4965 = vld [vmem:[%s4947 + $0x44] sm:$0xf]
        %v4966 = vld [vmem:[%s4947 + $0x48] sm:$0xf]
        %v4967 = vld [vmem:[%s4947 + $0x4c] sm:$0xf]
        %v4968 = vld [vmem:[%s4947 + $0x50] sm:$0xf]
        %v4969 = vld [vmem:[%s4947 + $0x54] sm:$0xf]
        %v4970 = vld [vmem:[%s4947 + $0x58] sm:$0xf]
        %v4971 = vld [vmem:[%s4947 + $0x5c] sm:$0xf]
        %v4972 = vld [vmem:[%s4947 + $0x60] sm:$0xf]
        %v4973 = vld [vmem:[%s4947 + $0x64] sm:$0xf]
        %v4974 = vld [vmem:[%s4947 + $0x68] sm:$0xf]
        %v4975 = vld [vmem:[%s4947 + $0x6c] sm:$0xf]
        %v4976 = vld [vmem:[%s4947 + $0x70] sm:$0xf]
        %v4977 = vld [vmem:[%s4947 + $0x74] sm:$0xf]
        %v4978 = vld [vmem:[%s4947 + $0x78] sm:$0xf]
        %v4979 = vld [vmem:[%s4947 + $0x7c] sm:$0xf]
        %v4980 = vld [vmem:[%s4947 + $0x80] sm:$0xf]
        %v4981 = vld [vmem:[%s4947 + $0x84] sm:$0xf]
        %v4982 = vld [vmem:[%s4947 + $0x88] sm:$0xf]
        %v4983 = vld [vmem:[%s4947 + $0x8c] sm:$0xf]
        %v5020 = vunpack.c.l.b16 %v4948
        %v5021 = vunpack.c.l.b16 %v4949
        %v5022 = vunpack.c.l.b16 %v4950
        %v5023 = vunpack.c.l.b16 %v4951
        %v5024 = vunpack.c.l.b16 %v4952
        %v5025 = vunpack.c.l.b16 %v4953
        %v5026 = vunpack.c.l.b16 %v4954
        %v5027 = vunpack.c.l.b16 %v4955
        %v5028 = vunpack.c.l.b16 %v4956
        %v5029 = vunpack.c.l.b16 %v4957
        %v5030 = vunpack.c.l.b16 %v4958
        %v5031 = vunpack.c.l.b16 %v4959
        %v5032 = vunpack.c.l.b16 %v4960
        %v5033 = vunpack.c.l.b16 %v4961
        %v5034 = vunpack.c.l.b16 %v4962
        %v5035 = vunpack.c.l.b16 %v4963
        %v5036 = vunpack.c.l.b16 %v4964
        %v5037 = vunpack.c.l.b16 %v4965
        %v5038 = vunpack.c.l.b16 %v4966
        %v5039 = vunpack.c.l.b16 %v4967
        %v5040 = vunpack.c.l.b16 %v4968
        %v5041 = vunpack.c.l.b16 %v4969
        %v5042 = vunpack.c.l.b16 %v4970
        %v5043 = vunpack.c.l.b16 %v4971
        %v5044 = vunpack.c.l.b16 %v4972
        %v5045 = vunpack.c.l.b16 %v4973
        %v5046 = vunpack.c.l.b16 %v4974
        %v5047 = vunpack.c.l.b16 %v4975
        %v5048 = vunpack.c.l.b16 %v4976
        %v5049 = vunpack.c.l.b16 %v4977
        %v5050 = vunpack.c.l.b16 %v4978
        %v5051 = vunpack.c.l.b16 %v4979
        %v5052 = vunpack.c.l.b16 %v4980
        %v5053 = vunpack.c.l.b16 %v4981
        %v5054 = vunpack.c.l.b16 %v4982
        %v5055 = vunpack.c.l.b16 %v4983
        %v5056 = vpack.c.b16 %v5021, %v5020
        %v5057 = vpack.c.b16 %v5023, %v5022
        %v5058 = vpack.c.b16 %v5025, %v5024
        %v5059 = vpack.c.b16 %v5027, %v5026
        %v5060 = vpack.c.b16 %v5029, %v5028
        %v5061 = vpack.c.b16 %v5031, %v5030
        %v5062 = vpack.c.b16 %v5033, %v5032
        %v5063 = vpack.c.b16 %v5035, %v5034
        %v5064 = vpack.c.b16 %v5037, %v5036
        %v5065 = vpack.c.b16 %v5039, %v5038
        %v5066 = vpack.c.b16 %v5041, %v5040
        %v5067 = vpack.c.b16 %v5043, %v5042
        %v5068 = vpack.c.b16 %v5045, %v5044
        %v5069 = vpack.c.b16 %v5047, %v5046
        %v5070 = vpack.c.b16 %v5049, %v5048
        %v5071 = vpack.c.b16 %v5051, %v5050
        %v5072 = vpack.c.b16 %v5053, %v5052
        %v5073 = vpack.c.b16 %v5055, %v5054
        %v5093 = vsel %vm924, %v4934, 0
        %v5096 = vsel %vm924, %v4937, 0
        %v5099 = vsel %vm924, %v4940, 0
        %v5102 = vsel %vm924, %v4943, 0
        %v5105 = vsel %vm924, %v4946, 0
        %5107 = vmatprep.subr.bf16.mxu0 0
        %5108 = vmatpush1.bf16.msra.mxu0 %v5056
        %5109 = vmatprep.subr.bf16.mxu0 0
        %5110 = vmatpush1.bf16.msra.mxu0 %v5057
        %5111 = vmatprep.subr.bf16.mxu0 0
        %5112 = vmatpush1.bf16.msra.mxu0 %v5058
        %5113 = vmatprep.subr.bf16.mxu0 0
        %5114 = vmatpush1.bf16.msra.mxu0 %v5059
        %5115 = vmatprep.subr.bf16.mxu0 0
        %5116 = vmatpush1.bf16.msra.mxu0 %v5060
        %5117 = vmatprep.subr.bf16.mxu0 0
        %5118 = vmatpush1.bf16.msra.mxu0 %v5061
        %5119 = vmatprep.subr.bf16.mxu0 0
        %5120 = vmatpush1.bf16.msra.mxu0 %v5062
        %5121 = vmatprep.subr.bf16.mxu0 0
        %5122 = vmatpush1.bf16.msra.mxu0 %v5063
        %5123 = vmatprep.subr.bf16.mxu0 0
        %5124 = vmatpush1.bf16.msra.mxu0 %v5064
        %5125 = vmatprep.subr.bf16.mxu0 0
        %5126 = vmatpush1.bf16.msra.mxu0 %v5065
        %5127 = vmatprep.subr.bf16.mxu0 0
        %5128 = vmatpush1.bf16.msra.mxu0 %v5066
        %5129 = vmatprep.subr.bf16.mxu0 0
        %5130 = vmatpush1.bf16.msra.mxu0 %v5067
        %5131 = vmatprep.subr.bf16.mxu0 0
        %5132 = vmatpush1.bf16.msra.mxu0 %v5068
        %5133 = vmatprep.subr.bf16.mxu0 0
        %5134 = vmatpush1.bf16.msra.mxu0 %v5069
        %5135 = vmatprep.subr.bf16.mxu0 0
        %5136 = vmatpush1.bf16.msra.mxu0 %v5070
        %5137 = vmatprep.subr.bf16.mxu0 0
        %5138 = vmatpush1.bf16.msra.mxu0 %v5071
        %5139 = vmatprep.mubr.bf16.mxu0 %v4933
        %5140 = vmatmul.mubr.bf16.gmra.mrb[0].mxu0 %v4932
        %v5141 = vpop.f32.mrb[0].mxu0
        %v5142 = vadd.f32 0.0, %v5141
        %v5143 = vpop.f32.mrb[0].mxu0
        %v5144 = vpop.f32.mrb[0].mxu0
        %v5145 = vadd.f32 0.0, %v5144
        %v5146 = vpop.f32.mrb[0].mxu0
        %5147 = vmatprep.mubr.bf16.mxu0 %v4936
        %5148 = vmatmul.mubr.bf16.gmra.mrb[0].mxu0 %v4935
        %v5149 = vpop.f32.mrb[0].mxu0
        %v5150 = vadd.f32 0.0, %v5149
        %v5151 = vpop.f32.mrb[0].mxu0
        %v5152 = vpop.f32.mrb[0].mxu0
        %v5153 = vadd.f32 0.0, %v5152
        %v5154 = vpop.f32.mrb[0].mxu0
        %5155 = vmatprep.mubr.bf16.mxu0 %v4939
        %5156 = vmatmul.mubr.bf16.gmra.mrb[0].mxu0 %v4938
        %v5157 = vpop.f32.mrb[0].mxu0
        %v5158 = vadd.f32 0.0, %v5157
        %v5159 = vpop.f32.mrb[0].mxu0
        %v5160 = vpop.f32.mrb[0].mxu0
        %v5161 = vadd.f32 0.0, %v5160
        %v5162 = vpop.f32.mrb[0].mxu0
        %5163 = vmatprep.mubr.bf16.mxu0 %v4942
        %5164 = vmatmul.mubr.bf16.gmra.mrb[0].mxu0 %v4941
        %v5165 = vpop.f32.mrb[0].mxu0
        %v5166 = vadd.f32 0.0, %v5165
        %v5167 = vpop.f32.mrb[0].mxu0
        %v5168 = vpop.f32.mrb[0].mxu0
        %v5169 = vadd.f32 0.0, %v5168
        %v5170 = vpop.f32.mrb[0].mxu0
        %5171 = vmatprep.mubr.bf16.mxu0 %v4945
        %5172 = vmatmul.mubr.bf16.gmra.mrb[0].mxu0 %v4944
        %v5173 = vpop.f32.mrb[0].mxu0
        %v5174 = vadd.f32 0.0, %v5173
        %v5175 = vpop.f32.mrb[0].mxu0
        %v5176 = vpop.f32.mrb[0].mxu0
        %v5177 = vadd.f32 0.0, %v5176
        %v5178 = vpop.f32.mrb[0].mxu0
        %5179 = vdwg.mxu0
        %5180 = vmatprep.subr.bf16.mxu0 0
        %5181 = vmatpush1.bf16.msra.mxu0 %v5072
        %5182 = vmatprep.subr.bf16.mxu0 0
        %5183 = vmatpush1.bf16.msra.mxu0 %v5073
        %5184 = vmatprep.subr.bf16.mxu0 0
        %5185 = vmatpush1.bf16.msra.mxu0 0
        %5186 = vmatprep.subr.bf16.mxu0 0
        %5187 = vmatpush1.bf16.msra.mxu0 0
        %5188 = vmatprep.subr.bf16.mxu0 0
        %5189 = vmatpush1.bf16.msra.mxu0 0
        %5190 = vmatprep.subr.bf16.mxu0 0
        %5191 = vmatpush1.bf16.msra.mxu0 0
        %5192 = vmatprep.subr.bf16.mxu0 0
        %5193 = vmatpush1.bf16.msra.mxu0 0
        %5194 = vmatprep.subr.bf16.mxu0 0
        %5195 = vmatpush1.bf16.msra.mxu0 0
        %5196 = vmatprep.subr.bf16.mxu0 0
        %5197 = vmatpush1.bf16.msra.mxu0 0
        %5198 = vmatprep.subr.bf16.mxu0 0
        %5199 = vmatpush1.bf16.msra.mxu0 0
        %5200 = vmatprep.subr.bf16.mxu0 0
        %5201 = vmatpush1.bf16.msra.mxu0 0
        %5202 = vmatprep.subr.bf16.mxu0 0
        %5203 = vmatpush1.bf16.msra.mxu0 0
        %5204 = vmatprep.subr.bf16.mxu0 0
        %5205 = vmatpush1.bf16.msra.mxu0 0
        %5206 = vmatprep.subr.bf16.mxu0 0
        %5207 = vmatpush1.bf16.msra.mxu0 0
        %5208 = vmatprep.subr.bf16.mxu0 0
        %5209 = vmatpush1.bf16.msra.mxu0 0
        %5210 = vmatprep.subr.bf16.mxu0 0
        %5211 = vmatpush1.bf16.msra.mxu0 0
        %5212 = vmatprep.mubr.bf16.mxu0 0
        %5213 = vmatmul.mubr.bf16.gmra.mrb[0].mxu0 %v5093
        %v5214 = vpop.f32.mrb[0].mxu0
        %v5215 = vadd.f32 %v5142, %v5214
        %v5216 = vpop.f32.mrb[0].mxu0
        %v5217 = vpop.f32.mrb[0].mxu0
        %v5218 = vadd.f32 %v5145, %v5217
        %v5219 = vpop.f32.mrb[0].mxu0
        %5220 = vmatprep.mubr.bf16.mxu0 0
        %5221 = vmatmul.mubr.bf16.gmra.mrb[0].mxu0 %v5096
        %v5222 = vpop.f32.mrb[0].mxu0
        %v5223 = vadd.f32 %v5150, %v5222
        %v5224 = vpop.f32.mrb[0].mxu0
        %v5225 = vpop.f32.mrb[0].mxu0
        %v5226 = vadd.f32 %v5153, %v5225
        %v5227 = vpop.f32.mrb[0].mxu0
        %5228 = vmatprep.mubr.bf16.mxu0 0
        %5229 = vmatmul.mubr.bf16.gmra.mrb[0].mxu0 %v5099
        %v5230 = vpop.f32.mrb[0].mxu0
        %v5231 = vadd.f32 %v5158, %v5230
        %v5232 = vpop.f32.mrb[0].mxu0
        %v5233 = vpop.f32.mrb[0].mxu0
        %v5234 = vadd.f32 %v5161, %v5233
        %v5235 = vpop.f32.mrb[0].mxu0
        %5236 = vmatprep.mubr.bf16.mxu0 0
        %5237 = vmatmul.mubr.bf16.gmra.mrb[0].mxu0 %v5102
        %v5238 = vpop.f32.mrb[0].mxu0
        %v5239 = vadd.f32 %v5166, %v5238
        %v5240 = vpop.f32.mrb[0].mxu0
        %v5241 = vpop.f32.mrb[0].mxu0
        %v5242 = vadd.f32 %v5169, %v5241
        %v5243 = vpop.f32.mrb[0].mxu0
        %5244 = vmatprep.mubr.bf16.mxu0 0
        %5245 = vmatmul.mubr.bf16.gmra.mrb[0].mxu0 %v5105
        %v5246 = vpop.f32.mrb[0].mxu0
        %v5247 = vadd.f32 %v5174, %v5246
        %v5248 = vpop.f32.mrb[0].mxu0
        %v5249 = vpop.f32.mrb[0].mxu0
        %v5250 = vadd.f32 %v5177, %v5249
        %v5251 = vpop.f32.mrb[0].mxu0
        %5252 = vdwg.mxu0
        %s5253 = scalar_lea.vmem %s2, 1
        %v5254 = vld [vmem:[%s5253] sm:$0x1]
        %v5256 = vlaneseq
        %v5257 = vshrl.u32 %v5256, 7
        %v5258 = vsub.s32 0, %v5257
        %v5259 = vrot.slane %v5254, %v5258
        %v5261 = vmul.f32 %v5215, %v5259
        %v5262 = vmul.f32 %v5218, %v5259
        %v5263 = vmul.f32 %v5223, %v5259
        %v5264 = vmul.f32 %v5226, %v5259
        %v5265 = vmul.f32 %v5231, %v5259
        %v5266 = vmul.f32 %v5234, %v5259
        %v5267 = vmul.f32 %v5239, %v5259
        %v5268 = vmul.f32 %v5242, %v5259
        %v5269 = vmul.f32 %v5247, %v5259
        %v5270 = vmul.f32 %v5250, %v5259
        %s5271 = scalar_lea.vmem %s3, 1
        %v5272 = vld [vmem:[%s5271] sm:$0x1]
        %v5274 = vlaneseq
        %v5275 = vshrl.u32 %v5274, 7
        %v5276 = vsub.s32 0, %v5275
        %v5277 = vrot.slane %v5272, %v5276
        %v5279 = vadd.f32 %v5261, %v5277
        %v5280 = vadd.f32 %v5262, %v5277
        %v5281 = vadd.f32 %v5263, %v5277
        %v5282 = vadd.f32 %v5264, %v5277
        %v5283 = vadd.f32 %v5265, %v5277
        %v5284 = vadd.f32 %v5266, %v5277
        %v5285 = vadd.f32 %v5267, %v5277
        %v5286 = vadd.f32 %v5268, %v5277
        %v5287 = vadd.f32 %v5269, %v5277
        %v5288 = vadd.f32 %v5270, %v5277
        %v5289 = vmax.f32 %v5279, 0.0
        %v5290 = vmax.f32 %v5280, 0.0
        %v5291 = vmax.f32 %v5281, 0.0
        %v5292 = vmax.f32 %v5282, 0.0
        %v5293 = vmax.f32 %v5283, 0.0
        %v5294 = vmax.f32 %v5284, 0.0
        %v5295 = vmax.f32 %v5285, 0.0
        %v5296 = vmax.f32 %v5286, 0.0
        %v5297 = vmax.f32 %v5287, 0.0
        %v5298 = vmax.f32 %v5288, 0.0
        %5299 = vst.msk [vmem:[#allocation7] sm:$0xff] %vm924, %v5289
        %5300 = vst.msk [vmem:[#allocation7 + $0x8] sm:$0xff] %vm924, %v5290
        %5301 = vst.msk [vmem:[#allocation7 + $0x10] sm:$0xff] %vm924, %v5291
        %5302 = vst.msk [vmem:[#allocation7 + $0x18] sm:$0xff] %vm924, %v5292
        %5303 = vst.msk [vmem:[#allocation7 + $0x20] sm:$0xff] %vm924, %v5293
        %5304 = vst.msk [vmem:[#allocation7 + $0x28] sm:$0xff] %vm924, %v5294
        %5305 = vst.msk [vmem:[#allocation7 + $0x30] sm:$0xff] %vm924, %v5295
        %5306 = vst.msk [vmem:[#allocation7 + $0x38] sm:$0xff] %vm924, %v5296
        %5307 = vst.msk [vmem:[#allocation7 + $0x40] sm:$0xff] %vm924, %v5297
        %5308 = vst.msk [vmem:[#allocation7 + $0x48] sm:$0xff] %vm924, %v5298
        %v5309 = vld [vmem:[#allocation7] ss:$2 sm:$0xff]
        %v5310 = vld [vmem:[%s3934] ss:$2 sm:$0xff]
        %v5311 = vld [vmem:[%s3936] ss:$2 sm:$0xff]
        %v5312 = vld [vmem:[%s3938] ss:$2 sm:$0xff]
        %v5313 = vld [vmem:[%s3940] ss:$2 sm:$0xff]
        %v5314 = vld [vmem:[%s3968] ss:$2 sm:$0xff]
        %v5315 = vld [vmem:[%s3970] ss:$2 sm:$0xff]
        %v5316 = vld [vmem:[%s3972] ss:$2 sm:$0xff]
        %v5317 = vld [vmem:[%s3974] ss:$2 sm:$0xff]
        %v5318 = vld [vmem:[%s3976] ss:$2 sm:$0xff]
        %v5319 = vmax.f32 %v5309, %v5314
        %v5320 = vmax.f32 %v5310, %v5315
        %v5321 = vmax.f32 %v5311, %v5316
        %v5322 = vmax.f32 %v5312, %v5317
        %v5323 = vmax.f32 %v5313, %v5318
        %5324 = vst.msk [vmem:[#allocation8] sm:$0xff] %vm924, %v5319
        %5325 = vst.msk [vmem:[#allocation8 + $0x8] sm:$0xff] %vm924, %v5320
        %5326 = vst.msk [vmem:[#allocation8 + $0x10] sm:$0xff] %vm924, %v5321
        %5327 = vst.msk [vmem:[#allocation8 + $0x18] sm:$0xff] %vm924, %v5322
        %5328 = vst.msk [vmem:[#allocation8 + $0x20] sm:$0xff] %vm924, %v5323
        %v5329 = vld [vmem:[#allocation8] sm:$0xf]
        %v5330 = vld [vmem:[#allocation8 + $0x5] sm:$0xf]
        %v5331 = vmax.f32 %v5329, %v5330
        %v5332 = vpack.c.bf16 %v5331, %v5331
        %v5334 = vunpack.c.l.b16 %v5332
        %v5335 = vpack.c.b16 %v5334, %v5334
        %v5337 = vshll.u32 %v5335, 16
        %v5339 = vrot.slane %v5337, 5
        %v5340 = vshrl.u32 %v5335, 16
        %v5342 = vrot.slane %v5340, 4
        %v5343 = vor.u32 %v5342, %v5339
        %v5344 = vrot.slane %v5343, 4
        %v5347 = vld [vmem:[#allocation4] sm:$0x8]
        %v5348 = vsel %vm368, %v5339, %v5347
        %5349 = vst [vmem:[#allocation4] sm:$0x8] %v5348
        %v5350 = vld [vmem:[#allocation4 + $0x4] sm:$0x3]
        %v5351 = vsel %vm296, %v5344, %v5350
        %5352 = vst [vmem:[#allocation4 + $0x4] sm:$0x3] %v5351
        %v5353 = vld [vmem:[#allocation8 + $0xa] sm:$0xf]
        %v5354 = vld [vmem:[#allocation8 + $0xf] sm:$0xf]
        %v5355 = vmax.f32 %v5353, %v5354
        %v5356 = vpack.c.bf16 %v5355, %v5355
        %v5358 = vunpack.c.l.b16 %v5356
        %v5359 = vpack.c.b16 %v5358, %v5358
        %v5361 = vshrl.u32 %v5359, 16
        %v5363 = vrot.slane %v5361, 5
        %v5364 = vshll.u32 %v5359, 16
        %v5366 = vrot.slane %v5364, 6
        %v5367 = vor.u32 %v5363, %v5366
        %v5368 = vrot.slane %v5363, 4
        %v5371 = vld [vmem:[#allocation4 + $0x4] sm:$0xc]
        %v5372 = vsel %vm329, %v5367, %v5371
        %5373 = vst [vmem:[#allocation4 + $0x4] sm:$0xc] %v5372
        %v5374 = vld [vmem:[#allocation4 + $0x8] sm:$0x1]
        %v5375 = vsel %vm410, %v5368, %v5374
        %5376 = vst [vmem:[#allocation4 + $0x8] sm:$0x1] %v5375
        %v5377 = vld [vmem:[#allocation8 + $0x14] sm:$0xf]
        %v5378 = vld [vmem:[#allocation8 + $0x19] sm:$0xf]
        %v5379 = vmax.f32 %v5377, %v5378
        %v5380 = vpack.c.bf16 %v5379, %v5379
        %v5382 = vunpack.c.l.b16 %v5380
        %v5383 = vpack.c.b16 %v5382, %v5382
        %v5385 = vshrl.u32 %v5383, 16
        %v5387 = vrot.slane %v5385, 6
        %v5388 = vshll.u32 %v5383, 16
        %v5390 = vrot.slane %v5388, 7
        %v5391 = vor.u32 %v5387, %v5390
        %vm5393 = vsmask.f32 3334
        %vm5394 = vmand %vm288, %vm5393
        %v5395 = vld [vmem:[#allocation4 + $0x8] sm:$0xe]
        %v5396 = vsel %vm5394, %v5391, %v5395
        %5397 = vst [vmem:[#allocation4 + $0x8] sm:$0xe] %v5396
        %v5398 = vld [vmem:[#allocation8 + $0x1e] sm:$0xf]
        %v5399 = vld [vmem:[#allocation8 + $0x23] sm:$0xf]
        %v5400 = vmax.f32 %v5398, %v5399
        %v5401 = vpack.c.bf16 %v5400, %v5400
        %v5403 = vunpack.c.l.b16 %v5401
        %v5404 = vpack.c.b16 %v5403, %v5403
        %v5406 = vshrl.u32 %v5404, 16
        %v5408 = vrot.slane %v5406, 7
        %v5409 = vshll.u32 %v5404, 16
        %v5411 = vor.u32 %v5408, %v5409
        %vm5413 = vsmask.f32 2306
        %vm5414 = vmand %vm334, %vm5413
        %v5415 = vld [vmem:[#allocation4 + $0xc] sm:$0x7]
        %v5416 = vsel %vm5414, %v5411, %v5415
        %5417 = vst [vmem:[#allocation4 + $0xc] sm:$0x7] %v5416
        %v5418 = vld [vmem:[#allocation4] sm:$0xf]
        %v5419 = vld [vmem:[#allocation4 + $0x4] sm:$0xf]
        %v5420 = vld [vmem:[#allocation4 + $0x8] sm:$0xf]
        %v5424 = vunpack.c.l.b16 %v5418
        %v5425 = vunpack.c.l.b16 %v5419
        %v5426 = vunpack.c.l.b16 %v5420
        %v5427 = vpack.c.b16 %v5425, %v5424
        %v5428 = vpack.c.b16 %v5426, %v5426
        %5431 = vst.msk [vmem:[#allocation6] sm:$0xff] %vm924, %v5427
        %5432 = vst.msk [vmem:[#allocation6 + $0x18] sm:$0xf] %vm196, %v5428
        %v5433 = vld [vmem:[#allocation4] sm:$0xf]
        %v5434 = vld [vmem:[#allocation4 + $0x4] sm:$0xf]
        %v5435 = vld [vmem:[#allocation4 + $0x8] sm:$0xf]
        %v5436 = vld [vmem:[#allocation4 + $0xc] sm:$0x1]
        %v5441 = vunpack.c.l.b16 %v5433
        %v5442 = vunpack.c.l.b16 %v5434
        %v5443 = vunpack.c.l.b16 %v5435
        %v5444 = vunpack.c.l.b16 %v5436
        %v5445 = vpack.c.b16 %v5442, %v5441
        %v5446 = vpack.c.b16 %v5444, %v5443
        %v5448 = vshrl.u32 %v5445, 16
        %v5450 = vshll.u32 %v5445, 16
        %v5452 = vrot.slane %v5450, 1
        %v5453 = vor.u32 %v5448, %v5452
        %v5455 = vshll.u32 %v5446, 16
        %v5457 = vrot.slane %v5455, 1
        %v5458 = vsel %vm1073, %v5453, %v5457
        %v5459 = vshrl.u32 %v5446, 16
        %v5461 = vor.u32 %v5459, %v5457
        %5462 = vrot.lane.b32.xlu0 %v5458, 32
        %v5463 = vpop.permute.xlu0 %5462
        %5464 = vrot.lane.b32.xlu0 %v5461, 32
        %v5465 = vpop.permute.xlu0 %5464
        %5468 = vst.msk [vmem:[#allocation6] sm:$0xff] %vm1276, %v5463
        %vm5469 = vcmask 519424
        %5470 = vst.msk [vmem:[#allocation6 + $0x18] sm:$0xf] %vm5469, %v5465
        %v5471 = vld [vmem:[#allocation4] sm:$0xe]
        %v5472 = vld [vmem:[#allocation4 + $0x4] sm:$0xf]
        %v5473 = vld [vmem:[#allocation4 + $0x8] sm:$0xf]
        %v5474 = vld [vmem:[#allocation4 + $0xc] sm:$0x1]
        %v5479 = vunpack.c.l.b16 %v5471
        %v5480 = vunpack.c.l.b16 %v5472
        %v5481 = vunpack.c.l.b16 %v5473
        %v5482 = vunpack.c.l.b16 %v5474
        %v5483 = vpack.c.b16 %v5480, %v5479
        %v5484 = vpack.c.b16 %v5482, %v5481
        %v5485 = vrot.slane %v5483, 1
        %v5486 = vrot.slane %v5484, 1
        %v5487 = vsel %vm1425, %v5485, %v5486
        %5488 = vrot.lane.b32.xlu0 %v5487, 64
        %v5489 = vpop.permute.xlu0 %5488
        %5490 = vrot.lane.b32.xlu0 %v5486, 64
        %v5491 = vpop.permute.xlu0 %5490
        %5494 = vst.msk [vmem:[#allocation6] sm:$0xff] %vm1517, %v5489
        %vm5495 = vcmask 781824
        %5496 = vst.msk [vmem:[#allocation6 + $0x18] sm:$0xf] %vm5495, %v5491
        %v5497 = vld [vmem:[#allocation4] sm:$0x8]
        %v5498 = vld [vmem:[#allocation4 + $0x4] sm:$0xf]
        %v5499 = vld [vmem:[#allocation4 + $0x8] sm:$0xf]
        %v5500 = vld [vmem:[#allocation4 + $0xc] sm:$0x7]
        %v5505 = vunpack.c.l.b16 %v5497
        %v5506 = vunpack.c.l.b16 %v5498
        %v5507 = vunpack.c.l.b16 %v5499
        %v5508 = vunpack.c.l.b16 %v5500
        %v5509 = vpack.c.b16 %v5506, %v5505
        %v5510 = vpack.c.b16 %v5508, %v5507
        %v5511 = vrot.slane %v5509, 3
        %v5512 = vrot.slane %v5510, 3
        %v5513 = vsel %vm3095, %v5511, %v5512
        %5514 = vrot.lane.b32.xlu0 %v5513, 96
        %v5515 = vpop.permute.xlu0 %5514
        %5516 = vrot.lane.b32.xlu0 %v5512, 96
        %v5517 = vpop.permute.xlu0 %5516
        %5520 = vst.msk [vmem:[#allocation6] sm:$0xff] %vm1757, %v5515
        %vm5521 = vcmask 1044224
        %5522 = vst.msk [vmem:[#allocation6 + $0x18] sm:$0xf] %vm5521, %v5517
        %v5523 = vld [vmem:[#allocation4] sm:$0x8]
        %v5524 = vld [vmem:[#allocation4 + $0x4] sm:$0xf]
        %v5525 = vld [vmem:[#allocation4 + $0x8] sm:$0xf]
        %v5526 = vld [vmem:[#allocation4 + $0xc] sm:$0xf]
        %v5531 = vunpack.c.l.b16 %v5523
        %v5532 = vunpack.c.l.b16 %v5524
        %v5533 = vunpack.c.l.b16 %v5525
        %v5534 = vunpack.c.l.b16 %v5526
        %v5535 = vpack.c.b16 %v5532, %v5531
        %v5536 = vpack.c.b16 %v5534, %v5533
        %vm5537 = vsmask.f32 4352
        %v5539 = vshrl.u32 %v5535, 16
        %v5541 = vrot.slane %v5539, 3
        %v5542 = vshll.u32 %v5535, 16
        %v5544 = vrot.slane %v5542, 4
        %v5545 = vor.u32 %v5541, %v5544
        %v5547 = vshrl.u32 %v5536, 16
        %v5549 = vrot.slane %v5547, 3
        %v5550 = vshll.u32 %v5536, 16
        %v5552 = vrot.slane %v5550, 4
        %v5553 = vor.u32 %v5549, %v5552
        %v5554 = vsel %vm5537, %v5545, %v5553
        %5557 = vst.msk [vmem:[#allocation6 + $0x8] sm:$0xff] %vm924, %v5554
        %5558 = vst.msk [vmem:[#allocation6 + $0x20] sm:$0xf] %vm196, %v5553
        %v5559 = vld [vmem:[#allocation4 + $0x4] sm:$0xf]
        %v5560 = vld [vmem:[#allocation4 + $0x8] sm:$0xf]
        %v5561 = vld [vmem:[#allocation4 + $0xc] sm:$0xf]
        %v5565 = vunpack.c.l.b16 %v5559
        %v5566 = vunpack.c.l.b16 %v5560
        %v5567 = vunpack.c.l.b16 %v5561
        %v5568 = vpack.c.b16 %v5566, %v5565
        %v5569 = vpack.c.b16 %v5567, %v5567
        %5570 = vrot.lane.b32.xlu0 %v5568, 32
        %v5571 = vpop.permute.xlu0 %5570
        %5572 = vrot.lane.b32.xlu0 %v5569, 32
        %v5573 = vpop.permute.xlu0 %5572
        %5576 = vst.msk [vmem:[#allocation6 + $0x8] sm:$0xff] %vm1276, %v5571
        %5577 = vst.msk [vmem:[#allocation6 + $0x20] sm:$0xf] %vm5469, %v5573
        %v5578 = vld [vmem:[#allocation4 + $0x4] sm:$0xc]
        %v5579 = vld [vmem:[#allocation4 + $0x8] sm:$0xf]
        %v5580 = vld [vmem:[#allocation4 + $0xc] sm:$0xf]
        %v5581 = vld [vmem:[#allocation4 + $0x10] sm:$0x3]
        %v5586 = vunpack.c.l.b16 %v5578
        %v5587 = vunpack.c.l.b16 %v5579
        %v5588 = vunpack.c.l.b16 %v5580
        %v5589 = vunpack.c.l.b16 %v5581
        %v5590 = vpack.c.b16 %v5587, %v5586
        %v5591 = vpack.c.b16 %v5589, %v5588
        %v5592 = vrot.slane %v5590, 2
        %v5593 = vrot.slane %v5591, 2
        %v5594 = vsel %vm2243, %v5592, %v5593
        %5595 = vrot.lane.b32.xlu0 %v5594, 64
        %v5596 = vpop.permute.xlu0 %5595
        %5597 = vrot.lane.b32.xlu0 %v5593, 64
        %v5598 = vpop.permute.xlu0 %5597
        %5601 = vst.msk [vmem:[#allocation6 + $0x8] sm:$0xff] %vm1517, %v5596
        %5602 = vst.msk [vmem:[#allocation6 + $0x20] sm:$0xf] %vm5495, %v5598
        %v5603 = vld [vmem:[#allocation4 + $0x4] sm:$0xc]
        %v5604 = vld [vmem:[#allocation4 + $0x8] sm:$0xf]
        %v5605 = vld [vmem:[#allocation4 + $0xc] sm:$0xf]
        %v5606 = vld [vmem:[#allocation4 + $0x10] sm:$0x7]
        %v5611 = vunpack.c.l.b16 %v5603
        %v5612 = vunpack.c.l.b16 %v5604
        %v5613 = vunpack.c.l.b16 %v5605
        %v5614 = vunpack.c.l.b16 %v5606
        %v5615 = vpack.c.b16 %v5612, %v5611
        %v5616 = vpack.c.b16 %v5614, %v5613
        %v5618 = vshrl.u32 %v5615, 16
        %v5620 = vrot.slane %v5618, 2
        %v5621 = vshll.u32 %v5615, 16
        %v5623 = vrot.slane %v5621, 3
        %v5624 = vor.u32 %v5620, %v5623
        %v5626 = vshrl.u32 %v5616, 16
        %v5628 = vrot.slane %v5626, 2
        %v5629 = vshll.u32 %v5616, 16
        %v5631 = vrot.slane %v5629, 3
        %v5632 = vor.u32 %v5628, %v5631
        %v5633 = vsel %vm2722, %v5624, %v5632
        %5634 = vrot.lane.b32.xlu0 %v5633, 96
        %v5635 = vpop.permute.xlu0 %5634
        %5636 = vrot.lane.b32.xlu0 %v5632, 96
        %v5637 = vpop.permute.xlu0 %5636
        %5640 = vst.msk [vmem:[#allocation6 + $0x8] sm:$0xff] %vm1757, %v5635
        %5641 = vst.msk [vmem:[#allocation6 + $0x20] sm:$0xf] %vm5521, %v5637
        %v5642 = vld [vmem:[#allocation4 + $0x4] sm:$0x8]
        %v5643 = vld [vmem:[#allocation4 + $0x8] sm:$0xf]
        %v5644 = vld [vmem:[#allocation4 + $0xc] sm:$0xf]
        %v5645 = vld [vmem:[#allocation4 + $0x10] sm:$0x7]
        %v5650 = vunpack.c.l.b16 %v5642
        %v5651 = vunpack.c.l.b16 %v5643
        %v5652 = vunpack.c.l.b16 %v5644
        %v5653 = vunpack.c.l.b16 %v5645
        %v5654 = vpack.c.b16 %v5651, %v5650
        %v5655 = vpack.c.b16 %v5653, %v5652
        %v5656 = vrot.slane %v5654, 3
        %v5657 = vrot.slane %v5655, 3
        %v5658 = vsel %vm3095, %v5656, %v5657
        %5661 = vst.msk [vmem:[#allocation6 + $0x10] sm:$0xff] %vm924, %v5658
        %5662 = vst.msk [vmem:[#allocation6 + $0x28] sm:$0xf] %vm196, %v5657
        %v5663 = vld [vmem:[#allocation6] sm:$0xff]
        %v5664 = vld [vmem:[#allocation6 + $0x8] sm:$0xff]
        %v5665 = vld [vmem:[#allocation6 + $0x10] sm:$0xff]
        %v5666 = vld [vmem:[#allocation6 + $0x18] sm:$0xf]
        %v5667 = vld [vmem:[#allocation6 + $0x20] sm:$0xf]
        %v5668 = vld [vmem:[#allocation6 + $0x28] sm:$0xf]
        %s5669 = scalar_lea.vmem %s1, 288
        %v5670 = vld [vmem:[%s5669] sm:$0xf]
        %v5671 = vld [vmem:[%s5669 + $0x4] sm:$0xf]
        %v5672 = vld [vmem:[%s5669 + $0x8] sm:$0xf]
        %v5673 = vld [vmem:[%s5669 + $0xc] sm:$0xf]
        %v5674 = vld [vmem:[%s5669 + $0x10] sm:$0xf]
        %v5675 = vld [vmem:[%s5669 + $0x14] sm:$0xf]
        %v5676 = vld [vmem:[%s5669 + $0x18] sm:$0xf]
        %v5677 = vld [vmem:[%s5669 + $0x1c] sm:$0xf]
        %v5678 = vld [vmem:[%s5669 + $0x20] sm:$0xf]
        %v5679 = vld [vmem:[%s5669 + $0x24] sm:$0xf]
        %v5680 = vld [vmem:[%s5669 + $0x28] sm:$0xf]
        %v5681 = vld [vmem:[%s5669 + $0x2c] sm:$0xf]
        %v5682 = vld [vmem:[%s5669 + $0x30] sm:$0xf]
        %v5683 = vld [vmem:[%s5669 + $0x34] sm:$0xf]
        %v5684 = vld [vmem:[%s5669 + $0x38] sm:$0xf]
        %v5685 = vld [vmem:[%s5669 + $0x3c] sm:$0xf]
        %v5686 = vld [vmem:[%s5669 + $0x40] sm:$0xf]
        %v5687 = vld [vmem:[%s5669 + $0x44] sm:$0xf]
        %v5688 = vld [vmem:[%s5669 + $0x48] sm:$0xf]
        %v5689 = vld [vmem:[%s5669 + $0x4c] sm:$0xf]
        %v5690 = vld [vmem:[%s5669 + $0x50] sm:$0xf]
        %v5691 = vld [vmem:[%s5669 + $0x54] sm:$0xf]
        %v5692 = vld [vmem:[%s5669 + $0x58] sm:$0xf]
        %v5693 = vld [vmem:[%s5669 + $0x5c] sm:$0xf]
        %v5694 = vld [vmem:[%s5669 + $0x60] sm:$0xf]
        %v5695 = vld [vmem:[%s5669 + $0x64] sm:$0xf]
        %v5696 = vld [vmem:[%s5669 + $0x68] sm:$0xf]
        %v5697 = vld [vmem:[%s5669 + $0x6c] sm:$0xf]
        %v5698 = vld [vmem:[%s5669 + $0x70] sm:$0xf]
        %v5699 = vld [vmem:[%s5669 + $0x74] sm:$0xf]
        %v5700 = vld [vmem:[%s5669 + $0x78] sm:$0xf]
        %v5701 = vld [vmem:[%s5669 + $0x7c] sm:$0xf]
        %v5702 = vld [vmem:[%s5669 + $0x80] sm:$0xf]
        %v5703 = vld [vmem:[%s5669 + $0x84] sm:$0xf]
        %v5704 = vld [vmem:[%s5669 + $0x88] sm:$0xf]
        %v5705 = vld [vmem:[%s5669 + $0x8c] sm:$0xf]
        %v5742 = vunpack.c.l.b16 %v5670
        %v5743 = vunpack.c.l.b16 %v5671
        %v5744 = vunpack.c.l.b16 %v5672
        %v5745 = vunpack.c.l.b16 %v5673
        %v5746 = vunpack.c.l.b16 %v5674
        %v5747 = vunpack.c.l.b16 %v5675
        %v5748 = vunpack.c.l.b16 %v5676
        %v5749 = vunpack.c.l.b16 %v5677
        %v5750 = vunpack.c.l.b16 %v5678
        %v5751 = vunpack.c.l.b16 %v5679
        %v5752 = vunpack.c.l.b16 %v5680
        %v5753 = vunpack.c.l.b16 %v5681
        %v5754 = vunpack.c.l.b16 %v5682
        %v5755 = vunpack.c.l.b16 %v5683
        %v5756 = vunpack.c.l.b16 %v5684
        %v5757 = vunpack.c.l.b16 %v5685
        %v5758 = vunpack.c.l.b16 %v5686
        %v5759 = vunpack.c.l.b16 %v5687
        %v5760 = vunpack.c.l.b16 %v5688
        %v5761 = vunpack.c.l.b16 %v5689
        %v5762 = vunpack.c.l.b16 %v5690
        %v5763 = vunpack.c.l.b16 %v5691
        %v5764 = vunpack.c.l.b16 %v5692
        %v5765 = vunpack.c.l.b16 %v5693
        %v5766 = vunpack.c.l.b16 %v5694
        %v5767 = vunpack.c.l.b16 %v5695
        %v5768 = vunpack.c.l.b16 %v5696
        %v5769 = vunpack.c.l.b16 %v5697
        %v5770 = vunpack.c.l.b16 %v5698
        %v5771 = vunpack.c.l.b16 %v5699
        %v5772 = vunpack.c.l.b16 %v5700
        %v5773 = vunpack.c.l.b16 %v5701
        %v5774 = vunpack.c.l.b16 %v5702
        %v5775 = vunpack.c.l.b16 %v5703
        %v5776 = vunpack.c.l.b16 %v5704
        %v5777 = vunpack.c.l.b16 %v5705
        %v5778 = vpack.c.b16 %v5743, %v5742
        %v5779 = vpack.c.b16 %v5745, %v5744
        %v5780 = vpack.c.b16 %v5747, %v5746
        %v5781 = vpack.c.b16 %v5749, %v5748
        %v5782 = vpack.c.b16 %v5751, %v5750
        %v5783 = vpack.c.b16 %v5753, %v5752
        %v5784 = vpack.c.b16 %v5755, %v5754
        %v5785 = vpack.c.b16 %v5757, %v5756
        %v5786 = vpack.c.b16 %v5759, %v5758
        %v5787 = vpack.c.b16 %v5761, %v5760
        %v5788 = vpack.c.b16 %v5763, %v5762
        %v5789 = vpack.c.b16 %v5765, %v5764
        %v5790 = vpack.c.b16 %v5767, %v5766
        %v5791 = vpack.c.b16 %v5769, %v5768
        %v5792 = vpack.c.b16 %v5771, %v5770
        %v5793 = vpack.c.b16 %v5773, %v5772
        %v5794 = vpack.c.b16 %v5775, %v5774
        %v5795 = vpack.c.b16 %v5777, %v5776
        %v5815 = vsel %vm924, %v5665, 0
        %v5818 = vsel %vm924, %v5668, 0
        %5820 = vmatprep.subr.bf16.mxu0 0
        %5821 = vmatpush1.bf16.msra.mxu0 %v5778
        %5822 = vmatprep.subr.bf16.mxu0 0
        %5823 = vmatpush1.bf16.msra.mxu0 %v5779
        %5824 = vmatprep.subr.bf16.mxu0 0
        %5825 = vmatpush1.bf16.msra.mxu0 %v5780
        %5826 = vmatprep.subr.bf16.mxu0 0
        %5827 = vmatpush1.bf16.msra.mxu0 %v5781
        %5828 = vmatprep.subr.bf16.mxu0 0
        %5829 = vmatpush1.bf16.msra.mxu0 %v5782
        %5830 = vmatprep.subr.bf16.mxu0 0
        %5831 = vmatpush1.bf16.msra.mxu0 %v5783
        %5832 = vmatprep.subr.bf16.mxu0 0
        %5833 = vmatpush1.bf16.msra.mxu0 %v5784
        %5834 = vmatprep.subr.bf16.mxu0 0
        %5835 = vmatpush1.bf16.msra.mxu0 %v5785
        %5836 = vmatprep.subr.bf16.mxu0 0
        %5837 = vmatpush1.bf16.msra.mxu0 %v5786
        %5838 = vmatprep.subr.bf16.mxu0 0
        %5839 = vmatpush1.bf16.msra.mxu0 %v5787
        %5840 = vmatprep.subr.bf16.mxu0 0
        %5841 = vmatpush1.bf16.msra.mxu0 %v5788
        %5842 = vmatprep.subr.bf16.mxu0 0
        %5843 = vmatpush1.bf16.msra.mxu0 %v5789
        %5844 = vmatprep.subr.bf16.mxu0 0
        %5845 = vmatpush1.bf16.msra.mxu0 %v5790
        %5846 = vmatprep.subr.bf16.mxu0 0
        %5847 = vmatpush1.bf16.msra.mxu0 %v5791
        %5848 = vmatprep.subr.bf16.mxu0 0
        %5849 = vmatpush1.bf16.msra.mxu0 %v5792
        %5850 = vmatprep.subr.bf16.mxu0 0
        %5851 = vmatpush1.bf16.msra.mxu0 %v5793
        %5852 = vmatprep.mubr.bf16.mxu0 %v5664
        %5853 = vmatmul.mubr.bf16.gmra.mrb[0].mxu0 %v5663
        %v5854 = vpop.f32.mrb[0].mxu0
        %v5855 = vadd.f32 0.0, %v5854
        %v5856 = vpop.f32.mrb[0].mxu0
        %v5857 = vpop.f32.mrb[0].mxu0
        %v5858 = vadd.f32 0.0, %v5857
        %v5859 = vpop.f32.mrb[0].mxu0
        %5860 = vmatprep.mubr.bf16.mxu0 %v5667
        %5861 = vmatmul.mubr.bf16.gmra.mrb[0].mxu0 %v5666
        %v5862 = vpop.f32.mrb[0].mxu0
        %v5863 = vadd.f32 0.0, %v5862
        %v5864 = vpop.f32.mrb[0].mxu0
        %v5865 = vpop.f32.mrb[0].mxu0
        %v5866 = vpop.f32.mrb[0].mxu0
        %5867 = vdwg.mxu0
        %5868 = vmatprep.subr.bf16.mxu0 0
        %5869 = vmatpush1.bf16.msra.mxu0 %v5794
        %5870 = vmatprep.subr.bf16.mxu0 0
        %5871 = vmatpush1.bf16.msra.mxu0 %v5795
        %5872 = vmatprep.subr.bf16.mxu0 0
        %5873 = vmatpush1.bf16.msra.mxu0 0
        %5874 = vmatprep.subr.bf16.mxu0 0
        %5875 = vmatpush1.bf16.msra.mxu0 0
        %5876 = vmatprep.subr.bf16.mxu0 0
        %5877 = vmatpush1.bf16.msra.mxu0 0
        %5878 = vmatprep.subr.bf16.mxu0 0
        %5879 = vmatpush1.bf16.msra.mxu0 0
        %5880 = vmatprep.subr.bf16.mxu0 0
        %5881 = vmatpush1.bf16.msra.mxu0 0
        %5882 = vmatprep.subr.bf16.mxu0 0
        %5883 = vmatpush1.bf16.msra.mxu0 0
        %5884 = vmatprep.subr.bf16.mxu0 0
        %5885 = vmatpush1.bf16.msra.mxu0 0
        %5886 = vmatprep.subr.bf16.mxu0 0
        %5887 = vmatpush1.bf16.msra.mxu0 0
        %5888 = vmatprep.subr.bf16.mxu0 0
        %5889 = vmatpush1.bf16.msra.mxu0 0
        %5890 = vmatprep.subr.bf16.mxu0 0
        %5891 = vmatpush1.bf16.msra.mxu0 0
        %5892 = vmatprep.subr.bf16.mxu0 0
        %5893 = vmatpush1.bf16.msra.mxu0 0
        %5894 = vmatprep.subr.bf16.mxu0 0
        %5895 = vmatpush1.bf16.msra.mxu0 0
        %5896 = vmatprep.subr.bf16.mxu0 0
        %5897 = vmatpush1.bf16.msra.mxu0 0
        %5898 = vmatprep.subr.bf16.mxu0 0
        %5899 = vmatpush1.bf16.msra.mxu0 0
        %5900 = vmatprep.mubr.bf16.mxu0 0
        %5901 = vmatmul.mubr.bf16.gmra.mrb[0].mxu0 %v5815
        %v5902 = vpop.f32.mrb[0].mxu0
        %v5903 = vadd.f32 %v5855, %v5902
        %v5904 = vpop.f32.mrb[0].mxu0
        %v5905 = vpop.f32.mrb[0].mxu0
        %v5906 = vadd.f32 %v5858, %v5905
        %v5907 = vpop.f32.mrb[0].mxu0
        %5908 = vmatprep.mubr.bf16.mxu0 0
        %5909 = vmatmul.mubr.bf16.gmra.mrb[0].mxu0 %v5818
        %v5910 = vpop.f32.mrb[0].mxu0
        %v5911 = vadd.f32 %v5863, %v5910
        %v5912 = vpop.f32.mrb[0].mxu0
        %v5913 = vpop.f32.mrb[0].mxu0
        %v5914 = vpop.f32.mrb[0].mxu0
        %5915 = vdwg.mxu0
        %s5916 = scalar_lea.vmem %s2, 2
        %v5917 = vld [vmem:[%s5916] sm:$0x1]
        %v5919 = vlaneseq
        %v5920 = vshrl.u32 %v5919, 7
        %v5921 = vsub.s32 0, %v5920
        %v5922 = vrot.slane %v5917, %v5921
        %v5924 = vmul.f32 %v5903, %v5922
        %v5925 = vmul.f32 %v5906, %v5922
        %v5926 = vmul.f32 %v5911, %v5922
        %s5927 = scalar_lea.vmem %s3, 2
        %v5928 = vld [vmem:[%s5927] sm:$0x1]
        %v5930 = vlaneseq
        %v5931 = vshrl.u32 %v5930, 7
        %v5932 = vsub.s32 0, %v5931
        %v5933 = vrot.slane %v5928, %v5932
        %v5935 = vadd.f32 %v5924, %v5933
        %v5936 = vadd.f32 %v5925, %v5933
        %v5937 = vadd.f32 %v5926, %v5933
        %v5938 = vmax.f32 %v5935, 0.0
        %v5939 = vmax.f32 %v5936, 0.0
        %v5940 = vmax.f32 %v5937, 0.0
        %5941 = vst.msk [vmem:[#allocation7] sm:$0xff] %vm924, %v5938
        %5942 = vst.msk [vmem:[#allocation7 + $0x8] sm:$0xff] %vm924, %v5939
        %5943 = vst.msk [vmem:[#allocation7 + $0x10] sm:$0xff] %vm924, %v5940
        %v5944 = vld [vmem:[#allocation7] ss:$2 sm:$0xff]
        %v5945 = vld [vmem:[%s3934] ss:$2 sm:$0xf]
        %v5946 = vld [vmem:[%s3968] ss:$2 sm:$0xff]
        %v5947 = vld [vmem:[%s3970] ss:$2 sm:$0xf]
        %v5948 = vmax.f32 %v5944, %v5946
        %v5949 = vmax.f32 %v5945, %v5947
        %5950 = vst.msk [vmem:[#allocation8] sm:$0xff] %vm924, %v5948
        %5951 = vst.msk [vmem:[#allocation8 + $0x8] sm:$0xf] %vm196, %v5949
        %v5952 = vld [vmem:[#allocation8] sm:$0x3]
        %v5953 = vld [vmem:[#allocation8 + $0x3] sm:$0x3]
        %v5954 = vmax.f32 %v5952, %v5953
        %v5955 = vpack.c.bf16 %v5954, %v5954
        %v5957 = vunpack.c.l.b16 %v5955
        %v5958 = vpack.c.b16 %v5957, %v5957
        %v5960 = vshrl.u32 %v5958, 16
        %v5962 = vrot.slane %v5960, 5
        %v5963 = vshll.u32 %v5958, 16
        %v5965 = vrot.slane %v5963, 6
        %v5966 = vor.u32 %v5962, %v5965
        %vm5968 = vsmask.f32 3338
        %vm5969 = vmand %vm327, %vm5968
        %v5970 = vld [vmem:[#allocation5] sm:$0xc]
        %v5971 = vsel %vm5969, %v5966, %v5970
        %5972 = vst [vmem:[#allocation5] sm:$0xc] %v5971
        %v5973 = vld [vmem:[#allocation8 + $0x6] sm:$0x3]
        %v5974 = vld [vmem:[#allocation8 + $0x9] sm:$0x3]
        %v5975 = vmax.f32 %v5973, %v5974
        %v5976 = vpack.c.bf16 %v5975, %v5975
        %v5978 = vunpack.c.l.b16 %v5976
        %v5979 = vpack.c.b16 %v5978, %v5978
        %v5981 = vshrl.u32 %v5979, 16
        %v5983 = vrot.slane %v5981, 7
        %v5984 = vshll.u32 %v5979, 16
        %v5986 = vor.u32 %v5983, %v5984
        %vm5988 = vsmask.f32 1282
        %vm5989 = vmand %vm295, %vm5988
        %v5990 = vld [vmem:[#allocation5 + $0x4] sm:$0x3]
        %v5991 = vsel %vm5989, %v5986, %v5990
        %5992 = vst [vmem:[#allocation5 + $0x4] sm:$0x3] %v5991
        %v5993 = vld [vmem:[#allocation5] sm:$0xf]
        %5994 = vst.msk [vmem:[#allocation6] sm:$0xf] %vm196, %v5993
        %v5995 = vld [vmem:[#allocation5] sm:$0xf]
        %v5996 = vld [vmem:[#allocation5 + $0x4] sm:$0x1]
        %v5999 = vunpack.c.l.b16 %v5995
        %v6000 = vunpack.c.l.b16 %v5996
        %v6001 = vpack.c.b16 %v6000, %v5999
        %v6003 = vshrl.u32 %v6001, 16
        %v6005 = vshll.u32 %v6001, 16
        %v6007 = vrot.slane %v6005, 1
        %v6008 = vor.u32 %v6003, %v6007
        %6009 = vrot.lane.b32.xlu0 %v6008, 32
        %v6010 = vpop.permute.xlu0 %6009
        %6012 = vst.msk [vmem:[#allocation6] sm:$0xf] %vm5469, %v6010
        %v6013 = vld [vmem:[#allocation5] sm:$0xe]
        %v6014 = vld [vmem:[#allocation5 + $0x4] sm:$0x1]
        %v6017 = vunpack.c.l.b16 %v6013
        %v6018 = vunpack.c.l.b16 %v6014
        %v6019 = vpack.c.b16 %v6018, %v6017
        %v6020 = vrot.slane %v6019, 1
        %6021 = vrot.lane.b32.xlu0 %v6020, 64
        %v6022 = vpop.permute.xlu0 %6021
        %6024 = vst.msk [vmem:[#allocation6] sm:$0xf] %vm5495, %v6022
        %v6025 = vld [vmem:[#allocation5] sm:$0xc]
        %v6026 = vld [vmem:[#allocation5 + $0x4] sm:$0x3]
        %v6029 = vunpack.c.l.b16 %v6025
        %v6030 = vunpack.c.l.b16 %v6026
        %v6031 = vpack.c.b16 %v6030, %v6029
        %v6032 = vrot.slane %v6031, 2
        %6033 = vrot.lane.b32.xlu0 %v6032, 96
        %v6034 = vpop.permute.xlu0 %6033
        %6036 = vst.msk [vmem:[#allocation6] sm:$0xf] %vm5521, %v6034
        %v6037 = vld [vmem:[#allocation5] sm:$0xc]
        %v6038 = vld [vmem:[#allocation5 + $0x4] sm:$0x7]
        %v6041 = vunpack.c.l.b16 %v6037
        %v6042 = vunpack.c.l.b16 %v6038
        %v6043 = vpack.c.b16 %v6042, %v6041
        %v6045 = vshrl.u32 %v6043, 16
        %v6047 = vrot.slane %v6045, 2
        %v6048 = vshll.u32 %v6043, 16
        %v6050 = vrot.slane %v6048, 3
        %v6051 = vor.u32 %v6047, %v6050
        %6053 = vst.msk [vmem:[#allocation6 + $0x8] sm:$0xf] %vm196, %v6051
        %v6054 = vld [vmem:[#allocation5] sm:$0x8]
        %v6055 = vld [vmem:[#allocation5 + $0x4] sm:$0x7]
        %v6058 = vunpack.c.l.b16 %v6054
        %v6059 = vunpack.c.l.b16 %v6055
        %v6060 = vpack.c.b16 %v6059, %v6058
        %v6061 = vrot.slane %v6060, 3
        %6062 = vrot.lane.b32.xlu0 %v6061, 32
        %v6063 = vpop.permute.xlu0 %6062
        %6065 = vst.msk [vmem:[#allocation6 + $0x8] sm:$0xf] %vm5469, %v6063
        %v6066 = vld [vmem:[#allocation5 + $0x4] sm:$0xf]
        %v6068 = vunpack.c.l.b16 %v6066
        %v6069 = vpack.c.b16 %v6068, %v6068
        %6070 = vrot.lane.b32.xlu0 %v6069, 64
        %v6071 = vpop.permute.xlu0 %6070
        %6073 = vst.msk [vmem:[#allocation6 + $0x8] sm:$0xf] %vm5495, %v6071
        %v6074 = vld [vmem:[#allocation5 + $0x4] sm:$0xf]
        %v6075 = vld [vmem:[#allocation5 + $0x8] sm:$0x1]
        %v6078 = vunpack.c.l.b16 %v6074
        %v6079 = vunpack.c.l.b16 %v6075
        %v6080 = vpack.c.b16 %v6079, %v6078
        %v6082 = vshrl.u32 %v6080, 16
        %v6084 = vshll.u32 %v6080, 16
        %v6086 = vrot.slane %v6084, 1
        %v6087 = vor.u32 %v6082, %v6086
        %6088 = vrot.lane.b32.xlu0 %v6087, 96
        %v6089 = vpop.permute.xlu0 %6088
        %6091 = vst.msk [vmem:[#allocation6 + $0x8] sm:$0xf] %vm5521, %v6089
        %v6092 = vld [vmem:[#allocation5 + $0x4] sm:$0xe]
        %v6093 = vld [vmem:[#allocation5 + $0x8] sm:$0x1]
        %v6096 = vunpack.c.l.b16 %v6092
        %v6097 = vunpack.c.l.b16 %v6093
        %v6098 = vpack.c.b16 %v6097, %v6096
        %v6099 = vrot.slane %v6098, 1
        %6101 = vst.msk [vmem:[#allocation6 + $0x10] sm:$0xf] %vm196, %v6099
        %v6102 = vld [vmem:[#allocation6] sm:$0xf]
        %v6103 = vld [vmem:[#allocation6 + $0x8] sm:$0xf]
        %v6104 = vld [vmem:[#allocation6 + $0x10] sm:$0xf]
        %s6105 = scalar_lea.vmem %s1, 432
        %v6106 = vld [vmem:[%s6105] sm:$0xf]
        %v6107 = vld [vmem:[%s6105 + $0x4] sm:$0xf]
        %v6108 = vld [vmem:[%s6105 + $0x8] sm:$0xf]
        %v6109 = vld [vmem:[%s6105 + $0xc] sm:$0xf]
        %v6110 = vld [vmem:[%s6105 + $0x10] sm:$0xf]
        %v6111 = vld [vmem:[%s6105 + $0x14] sm:$0xf]
        %v6112 = vld [vmem:[%s6105 + $0x18] sm:$0xf]
        %v6113 = vld [vmem:[%s6105 + $0x1c] sm:$0xf]
        %v6114 = vld [vmem:[%s6105 + $0x20] sm:$0xf]
        %v6115 = vld [vmem:[%s6105 + $0x24] sm:$0xf]
        %v6116 = vld [vmem:[%s6105 + $0x28] sm:$0xf]
        %v6117 = vld [vmem:[%s6105 + $0x2c] sm:$0xf]
        %v6118 = vld [vmem:[%s6105 + $0x30] sm:$0xf]
        %v6119 = vld [vmem:[%s6105 + $0x34] sm:$0xf]
        %v6120 = vld [vmem:[%s6105 + $0x38] sm:$0xf]
        %v6121 = vld [vmem:[%s6105 + $0x3c] sm:$0xf]
        %v6122 = vld [vmem:[%s6105 + $0x40] sm:$0xf]
        %v6123 = vld [vmem:[%s6105 + $0x44] sm:$0xf]
        %v6124 = vld [vmem:[%s6105 + $0x48] sm:$0xf]
        %v6125 = vld [vmem:[%s6105 + $0x4c] sm:$0xf]
        %v6126 = vld [vmem:[%s6105 + $0x50] sm:$0xf]
        %v6127 = vld [vmem:[%s6105 + $0x54] sm:$0xf]
        %v6128 = vld [vmem:[%s6105 + $0x58] sm:$0xf]
        %v6129 = vld [vmem:[%s6105 + $0x5c] sm:$0xf]
        %v6130 = vld [vmem:[%s6105 + $0x60] sm:$0xf]
        %v6131 = vld [vmem:[%s6105 + $0x64] sm:$0xf]
        %v6132 = vld [vmem:[%s6105 + $0x68] sm:$0xf]
        %v6133 = vld [vmem:[%s6105 + $0x6c] sm:$0xf]
        %v6134 = vld [vmem:[%s6105 + $0x70] sm:$0xf]
        %v6135 = vld [vmem:[%s6105 + $0x74] sm:$0xf]
        %v6136 = vld [vmem:[%s6105 + $0x78] sm:$0xf]
        %v6137 = vld [vmem:[%s6105 + $0x7c] sm:$0xf]
        %v6138 = vld [vmem:[%s6105 + $0x80] sm:$0xf]
        %v6139 = vld [vmem:[%s6105 + $0x84] sm:$0xf]
        %v6140 = vld [vmem:[%s6105 + $0x88] sm:$0xf]
        %v6141 = vld [vmem:[%s6105 + $0x8c] sm:$0xf]
        %v6178 = vunpack.c.l.b16 %v6106
        %v6179 = vunpack.c.l.b16 %v6107
        %v6180 = vunpack.c.l.b16 %v6108
        %v6181 = vunpack.c.l.b16 %v6109
        %v6182 = vunpack.c.l.b16 %v6110
        %v6183 = vunpack.c.l.b16 %v6111
        %v6184 = vunpack.c.l.b16 %v6112
        %v6185 = vunpack.c.l.b16 %v6113
        %v6186 = vunpack.c.l.b16 %v6114
        %v6187 = vunpack.c.l.b16 %v6115
        %v6188 = vunpack.c.l.b16 %v6116
        %v6189 = vunpack.c.l.b16 %v6117
        %v6190 = vunpack.c.l.b16 %v6118
        %v6191 = vunpack.c.l.b16 %v6119
        %v6192 = vunpack.c.l.b16 %v6120
        %v6193 = vunpack.c.l.b16 %v6121
        %v6194 = vunpack.c.l.b16 %v6122
        %v6195 = vunpack.c.l.b16 %v6123
        %v6196 = vunpack.c.l.b16 %v6124
        %v6197 = vunpack.c.l.b16 %v6125
        %v6198 = vunpack.c.l.b16 %v6126
        %v6199 = vunpack.c.l.b16 %v6127
        %v6200 = vunpack.c.l.b16 %v6128
        %v6201 = vunpack.c.l.b16 %v6129
        %v6202 = vunpack.c.l.b16 %v6130
        %v6203 = vunpack.c.l.b16 %v6131
        %v6204 = vunpack.c.l.b16 %v6132
        %v6205 = vunpack.c.l.b16 %v6133
        %v6206 = vunpack.c.l.b16 %v6134
        %v6207 = vunpack.c.l.b16 %v6135
        %v6208 = vunpack.c.l.b16 %v6136
        %v6209 = vunpack.c.l.b16 %v6137
        %v6210 = vunpack.c.l.b16 %v6138
        %v6211 = vunpack.c.l.b16 %v6139
        %v6212 = vunpack.c.l.b16 %v6140
        %v6213 = vunpack.c.l.b16 %v6141
        %v6214 = vpack.c.b16 %v6179, %v6178
        %v6215 = vpack.c.b16 %v6181, %v6180
        %v6216 = vpack.c.b16 %v6183, %v6182
        %v6217 = vpack.c.b16 %v6185, %v6184
        %v6218 = vpack.c.b16 %v6187, %v6186
        %v6219 = vpack.c.b16 %v6189, %v6188
        %v6220 = vpack.c.b16 %v6191, %v6190
        %v6221 = vpack.c.b16 %v6193, %v6192
        %v6222 = vpack.c.b16 %v6195, %v6194
        %v6223 = vpack.c.b16 %v6197, %v6196
        %v6224 = vpack.c.b16 %v6199, %v6198
        %v6225 = vpack.c.b16 %v6201, %v6200
        %v6226 = vpack.c.b16 %v6203, %v6202
        %v6227 = vpack.c.b16 %v6205, %v6204
        %v6228 = vpack.c.b16 %v6207, %v6206
        %v6229 = vpack.c.b16 %v6209, %v6208
        %v6230 = vpack.c.b16 %v6211, %v6210
        %v6231 = vpack.c.b16 %v6213, %v6212
        %v6251 = vsel %vm924, %v6104, 0
        %6253 = vmatprep.subr.bf16.mxu0 0
        %6254 = vmatpush1.bf16.msra.mxu0 %v6214
        %6255 = vmatprep.subr.bf16.mxu0 0
        %6256 = vmatpush1.bf16.msra.mxu0 %v6215
        %6257 = vmatprep.subr.bf16.mxu0 0
        %6258 = vmatpush1.bf16.msra.mxu0 %v6216
        %6259 = vmatprep.subr.bf16.mxu0 0
        %6260 = vmatpush1.bf16.msra.mxu0 %v6217
        %6261 = vmatprep.subr.bf16.mxu0 0
        %6262 = vmatpush1.bf16.msra.mxu0 %v6218
        %6263 = vmatprep.subr.bf16.mxu0 0
        %6264 = vmatpush1.bf16.msra.mxu0 %v6219
        %6265 = vmatprep.subr.bf16.mxu0 0
        %6266 = vmatpush1.bf16.msra.mxu0 %v6220
        %6267 = vmatprep.subr.bf16.mxu0 0
        %6268 = vmatpush1.bf16.msra.mxu0 %v6221
        %6269 = vmatprep.subr.bf16.mxu0 0
        %6270 = vmatpush1.bf16.msra.mxu0 %v6222
        %6271 = vmatprep.subr.bf16.mxu0 0
        %6272 = vmatpush1.bf16.msra.mxu0 %v6223
        %6273 = vmatprep.subr.bf16.mxu0 0
        %6274 = vmatpush1.bf16.msra.mxu0 %v6224
        %6275 = vmatprep.subr.bf16.mxu0 0
        %6276 = vmatpush1.bf16.msra.mxu0 %v6225
        %6277 = vmatprep.subr.bf16.mxu0 0
        %6278 = vmatpush1.bf16.msra.mxu0 %v6226
        %6279 = vmatprep.subr.bf16.mxu0 0
        %6280 = vmatpush1.bf16.msra.mxu0 %v6227
        %6281 = vmatprep.subr.bf16.mxu0 0
        %6282 = vmatpush1.bf16.msra.mxu0 %v6228
        %6283 = vmatprep.subr.bf16.mxu0 0
        %6284 = vmatpush1.bf16.msra.mxu0 %v6229
        %6285 = vmatprep.mubr.bf16.mxu0 %v6103
        %6286 = vmatmul.mubr.bf16.gmra.mrb[0].mxu0 %v6102
        %v6287 = vpop.f32.mrb[0].mxu0
        %v6288 = vadd.f32 0.0, %v6287
        %v6289 = vpop.f32.mrb[0].mxu0
        %v6290 = vpop.f32.mrb[0].mxu0
        %v6291 = vpop.f32.mrb[0].mxu0
        %6292 = vdwg.mxu0
        %6293 = vmatprep.subr.bf16.mxu0 0
        %6294 = vmatpush1.bf16.msra.mxu0 %v6230
        %6295 = vmatprep.subr.bf16.mxu0 0
        %6296 = vmatpush1.bf16.msra.mxu0 %v6231
        %6297 = vmatprep.subr.bf16.mxu0 0
        %6298 = vmatpush1.bf16.msra.mxu0 0
        %6299 = vmatprep.subr.bf16.mxu0 0
        %6300 = vmatpush1.bf16.msra.mxu0 0
        %6301 = vmatprep.subr.bf16.mxu0 0
        %6302 = vmatpush1.bf16.msra.mxu0 0
        %6303 = vmatprep.subr.bf16.mxu0 0
        %6304 = vmatpush1.bf16.msra.mxu0 0
        %6305 = vmatprep.subr.bf16.mxu0 0
        %6306 = vmatpush1.bf16.msra.mxu0 0
        %6307 = vmatprep.subr.bf16.mxu0 0
        %6308 = vmatpush1.bf16.msra.mxu0 0
        %6309 = vmatprep.subr.bf16.mxu0 0
        %6310 = vmatpush1.bf16.msra.mxu0 0
        %6311 = vmatprep.subr.bf16.mxu0 0
        %6312 = vmatpush1.bf16.msra.mxu0 0
        %6313 = vmatprep.subr.bf16.mxu0 0
        %6314 = vmatpush1.bf16.msra.mxu0 0
        %6315 = vmatprep.subr.bf16.mxu0 0
        %6316 = vmatpush1.bf16.msra.mxu0 0
        %6317 = vmatprep.subr.bf16.mxu0 0
        %6318 = vmatpush1.bf16.msra.mxu0 0
        %6319 = vmatprep.subr.bf16.mxu0 0
        %6320 = vmatpush1.bf16.msra.mxu0 0
        %6321 = vmatprep.subr.bf16.mxu0 0
        %6322 = vmatpush1.bf16.msra.mxu0 0
        %6323 = vmatprep.subr.bf16.mxu0 0
        %6324 = vmatpush1.bf16.msra.mxu0 0
        %6325 = vmatprep.mubr.bf16.mxu0 0
        %6326 = vmatmul.mubr.bf16.gmra.mrb[0].mxu0 %v6251
        %v6327 = vpop.f32.mrb[0].mxu0
        %v6328 = vadd.f32 %v6288, %v6327
        %v6329 = vpop.f32.mrb[0].mxu0
        %v6330 = vpop.f32.mrb[0].mxu0
        %v6331 = vpop.f32.mrb[0].mxu0
        %6332 = vdwg.mxu0
        %s6333 = scalar_lea.vmem %s2, 3
        %v6334 = vld [vmem:[%s6333] sm:$0x1]
        %v6336 = vlaneseq
        %v6337 = vshrl.u32 %v6336, 7
        %v6338 = vsub.s32 0, %v6337
        %v6339 = vrot.slane %v6334, %v6338
        %v6341 = vmul.f32 %v6328, %v6339
        %s6342 = scalar_lea.vmem %s3, 3
        %v6343 = vld [vmem:[%s6342] sm:$0x1]
        %v6345 = vlaneseq
        %v6346 = vshrl.u32 %v6345, 7
        %v6347 = vsub.s32 0, %v6346
        %v6348 = vrot.slane %v6343, %v6347
        %v6350 = vadd.f32 %v6341, %v6348
        %v6351 = vmax.f32 %v6350, 0.0
        %6352 = vst.msk [vmem:[#allocation7] sm:$0xff] %vm924, %v6351
        %v6353 = vld [vmem:[#allocation7] ss:$2 sm:$0xf]
        %v6354 = vld [vmem:[%s3968] ss:$2 sm:$0xf]
        %v6355 = vmax.f32 %v6353, %v6354
        %6356 = vst.msk [vmem:[#allocation8] sm:$0xf] %vm196, %v6355
        %v6357 = vld [vmem:[#allocation8] sm:$0x1]
        %v6358 = vld [vmem:[#allocation8 + $0x2] sm:$0x1]
        %v6359 = vmax.f32 %v6357, %v6358
        %6360 = vst.msk [vmem:[%s189] sm:$0x1] %vm259, %v6359
        %s6361 = sand.u32 %s115, 1
        %s6362 = scalar_lea.sflag [#allocation10], %s6361
        %s6363 = sand.u32 %s115, 1
        %s6364 = scalar_lea.vmem [#allocation9], %s6363
        // Predicated region
        $region37: #{backbone_forward.1} parent=35 // pred_check
          %p6365 = pneg %p125
        $region38: #{backbone_forward.1} parent=35 // pred_check_branch
          %6367 = sbr.rel (%p6365) target = $region40
        $region39: #{backbone_forward.1} parent=35 // pred_region
          %s6369 = ssub.s32 16, 16
          %6370 = vsyncadd %s6362, %s6369
          %s6371 = smul.addr %s18, 16
          %s6372 = scalar_lea.hbm %s4, %s6371
          %s6374 = sshll.u32 %s6364, 4
          %s6375 = int_to_ptr.vmem [resolvable:$true] %s6374
          %6377 = dma.vmem_to_hbm [thread:$0]  %s6375, 16, %s6372, %s6362
        $region40: #{backbone_forward.1} parent=35 // pred_fallthru
          _
      $region36: #{backbone_forward.1} parent=5 // pred_fallthru
        _
      %p6378 = scmp.le.s32.totalorder 2, %s13
      // Predicated region
      $region41: #{backbone_forward.1} parent=5 // pred_check
        %p6379 = pneg %p6378
      $region42: #{backbone_forward.1} parent=5 // pred_check_branch
        %6381 = sbr.rel (%p6379) target = $region44
      $region43: #{backbone_forward.1} parent=5 // pred_region
        %s6382 = ssub.s32 %s13, 2
        // Predicated region
        $region45: #{backbone_forward.1} parent=43 // pred_check
          %p6383 = pneg %p131
        $region46: #{backbone_forward.1} parent=43 // pred_check_branch
          %6385 = sbr.rel (%p6383) target = $region48
        $region47: #{backbone_forward.1} parent=43 // pred_region
          %s6386 = sand.u32 %s116, 1
          %s6387 = scalar_lea.sflag [#allocation10], %s6386
          %s6388 = sand.u32 %s116, 1
          %s6389 = scalar_lea.vmem [#allocation9], %s6388
          %6390 = dma.done %s6387, 16
        $region48: #{backbone_forward.1} parent=43 // pred_fallthru
          _
      $region44: #{backbone_forward.1} parent=5 // pred_fallthru
        _
    $region6: #{backbone_forward.1} parent=1 // loop_footer
      %s17 = sadd.s32 1, %s13
    $region7: #{backbone_forward.1} parent=1 // loop_footer_branch
      %12 = sbr.rel target = $region3
    $region8: #{backbone_forward.1} parent=1 // loop_exit
      _
    %6391 = vsyncpa [#allocation10], 1
    %s6392 = scalar_lea.sflag [#allocation10], 1
    %6393 = vsyncpa %s6392, 1

</llo_original>
